<compile_context>
chip_gen: v7x
topology: tpu7x:2x2x1
jax: 0.10.0
libtpu: 0.0.40
codegen_flags: <defaults>
</compile_context>

<pallas_src>
import functools

import jax
import jax.numpy as jnp
import numpy as np
from jax.experimental import pallas as pl
from jax.experimental.pallas import tpu as pltpu


def _bmm(a, b):
    """bf16 x bf16 -> f32: single native MXU pass, f32 accumulation."""
    return jax.lax.dot_general(
        a, b, (((1,), (0,)), ((), ())),
        preferred_element_type=jnp.float32)


def _mm_f32(a, b):
    """Exact f32 matmul for the small weight-side projections only."""
    return jax.lax.dot_general(
        a, b, (((1,), (0,)), ((), ())),
        precision=jax.lax.Precision.HIGHEST,
        preferred_element_type=jnp.float32)


def aurgcn_kernel(h_ref, state_ref, wfc_ref, alr_ref, as_ref, reltab_ref,
                  s_ref, d_ref, rh_ref, out_ref,
                  gsrc_sc, gdst_sc, m_sc, l_sc, acc_sc, cnt_sc,
                  *, num_heads, out_feat, negative_slope):
    H, F = num_heads, out_feat
    HF = H * F
    f32, bf16 = jnp.float32, jnp.bfloat16
    t = pl.program_id(0)

    # ---- one-time: fc projections, attention logits, accumulator init -------
    @pl.when(t == 0)
    def _init():
        feat = _mm_f32(h_ref[...], wfc_ref[...])        # (N, H*F)
        state_p = _mm_f32(state_ref[...], wfc_ref[...])  # (N, H*F)
        # merged logit matmuls: [el | er] in one, es in the other (review #4)
        elr = _mm_f32(feat, alr_ref[...])               # (N, 2H)
        es = _mm_f32(state_p, as_ref[...])              # (N, H)
        lse = elr[:, :H] + es                           # el + es  (indexed by src)
        er = elr[:, H:]                                 # er       (indexed by dst)
        # hi/lo bf16 split: the per-edge gather below runs on the bf16 MXU, but
        # the reconstructed softmax logits keep ~f32 accuracy.
        lse_hi = lse.astype(bf16)
        lse_lo = (lse - lse_hi.astype(f32)).astype(bf16)
        er_hi = er.astype(bf16)
        er_lo = (er - er_hi.astype(f32)).astype(bf16)
        gsrc_sc[...] = jnp.concatenate([feat.astype(bf16), lse_hi, lse_lo], axis=1)
        gdst_sc[...] = jnp.concatenate([er_hi, er_lo], axis=1)
        m_sc[...] = jnp.full_like(m_sc, -1e30)
        l_sc[...] = jnp.zeros_like(l_sc)
        acc_sc[...] = jnp.zeros_like(acc_sc)
        cnt_sc[...] = jnp.zeros_like(cnt_sc)

    # ---- per edge-tile message passing ---------------------------------------
    S = s_ref[...]                                      # (TE, N) bf16 one-hot(src)
    D = d_ref[...]                                      # (TE, N) bf16 one-hot(dst)

    # merged src-side gather: features + (el+es) logits in one wide matmul
    gsrc = _bmm(S, gsrc_sc[...])                        # (TE, HF + 2H) f32
    feat_src = gsrc[:, :HF]
    lse_src = gsrc[:, HF:HF + H] + gsrc[:, HF + H:]
    gdst = _bmm(D, gdst_sc[...])                        # (TE, 2H)
    er_dst = gdst[:, :H] + gdst[:, H:]

    e = lse_src + er_dst                                # (TE, H) attention logits
    e = jnp.where(e > 0, e, negative_slope * e)         # LeakyReLU(0.2)

    # running per-head shift (softmax-shift-invariant), flash-style rescale
    g = jnp.max(e, axis=0, keepdims=True)               # (1, H) tile max
    m_prev = m_sc[...]
    m_new = jnp.maximum(m_prev, g)
    scale = jnp.exp(m_prev - m_new)                     # (1, H)
    m_sc[...] = m_new
    ex = jnp.exp(e - m_new)                             # (TE, H), <= 1

    # attention-weighted per-head features on the VPU (replaces Expand/Collapse
    # matmuls of rev 1 -- review #5)
    weighted = jnp.concatenate(
        [ex[:, h:h + 1] * feat_src[:, h * F:(h + 1) * F] for h in range(H)],
        axis=1)                                         # (TE, HF) f32

    # one merged scatter-add matmul per tile:
    #   [weighted feats | exp logits | relation one-hot] -> per-destination sums
    payload = jnp.concatenate(
        [weighted.astype(bf16), ex.astype(bf16), rh_ref[...]], axis=1)  # (TE, HF+H+R)
    # D^T reused for the scatter (DT input of rev 1 dropped -- review #2);
    # transpose via the well-supported 32-bit XLU path (0/1 values are exact).
    Dt = D.astype(f32).T.astype(bf16)                   # (N, TE)
    scat = _bmm(Dt, payload)                            # (N, HF + H + R) f32

    acc = acc_sc[...]
    acc_sc[...] = jnp.concatenate(
        [acc[:, h * F:(h + 1) * F] * scale[:, h:h + 1] + scat[:, h * F:(h + 1) * F]
         for h in range(H)], axis=1)                    # rescaled numerators
    l_sc[...] = l_sc[...] * scale + scat[:, HF:HF + H]  # rescaled denominators
    cnt_sc[...] = cnt_sc[...] + scat[:, HF + H:]        # exact (node, rel) counts

    # ---- finalize: softmax normalization + relation messages -----------------
    @pl.when(t == pl.num_programs(0) - 1)
    def _finalize():
        l = l_sc[...]
        inv = jnp.where(l > 0, 1.0 / jnp.where(l > 0, l, 1.0), 0.0)  # 0 for isolated nodes
        # sum over incoming edges of rel_emb[rel_e] @ W_neighbor (folded table)
        out = _mm_f32(cnt_sc[...], reltab_ref[...])     # (N, F)
        acc = acc_sc[...]
        for h in range(H):
            out = out + acc[:, h * F:(h + 1) * F] * inv[:, h:h + 1]
        out_ref[...] = out.astype(out_ref.dtype)


def aurgcn_forward(h, state, rel_emb, src, dst, rel_type, params,
                   num_heads, out_feat, negative_slope=0.2, edge_tile=128):
    f32, bf16 = jnp.float32, jnp.bfloat16
    N, Din = h.shape
    E = int(src.shape[0])
    R = int(rel_emb.shape[0])
    H, F = num_heads, out_feat
    HF = H * F

    assert edge_tile % 16 == 0          # bf16 sublane tiling of the edge axis
    TE = edge_tile
    N_pad = max(128, -(-N // 128) * 128)   # lane-align the node (contraction) dim
    E_pad = -(-E // TE) * TE
    n_tiles = E_pad // TE

    wfc = params["wfc"].astype(f32)                                   # (Din, H*F)
    attn_l = params["attn_l"].astype(f32).reshape(H, F)
    attn_r = params["attn_r"].astype(f32).reshape(H, F)
    attn_s = params["attn_s"].astype(f32).reshape(H, F)

    eye_h = jnp.eye(H, dtype=f32)

    def head_cols(a):  # (H, F) -> (H*F, H) block-diagonal column form
        return (a[:, :, None] * eye_h[:, None, :]).reshape(HF, H)

    alr = jnp.concatenate([head_cols(attn_l), head_cols(attn_r)], axis=1)  # (HF, 2H)
    a_s = head_cols(attn_s)                                                 # (HF, H)

    # relation table: rel_emb @ W_neighbor folded once (review #3)
    reltab = jnp.dot(rel_emb.astype(f32), params["w_neighbor"].astype(f32),
                     precision=jax.lax.Precision.HIGHEST)                   # (R, F)

    # one-hot gather/scatter matrices in bf16 (exact 0/1, half the DMA)
    S = jax.nn.one_hot(src, N_pad, dtype=bf16)
    D = jax.nn.one_hot(dst, N_pad, dtype=bf16)
    Rh = jax.nn.one_hot(rel_type, R, dtype=bf16)
    pad_e = E_pad - E
    if pad_e:   # zero rows = edges that touch nothing; exactly a no-op in the kernel
        S = jnp.pad(S, ((0, pad_e), (0, 0)))
        D = jnp.pad(D, ((0, pad_e), (0, 0)))
        Rh = jnp.pad(Rh, ((0, pad_e), (0, 0)))

    h_p = jnp.pad(h.astype(f32), ((0, N_pad - N), (0, 0)))
    st_p = jnp.pad(state.astype(f32), ((0, N_pad - N), (0, 0)))

    kernel = functools.partial(aurgcn_kernel, num_heads=H, out_feat=F,
                               negative_slope=negative_slope)

    c2 = lambda i: (0, 0)
    in_specs = [
        pl.BlockSpec((N_pad, Din), c2),                 # h
        pl.BlockSpec((N_pad, Din), c2),                 # state
        pl.BlockSpec((Din, HF), c2),                    # fc weight (transposed)
        pl.BlockSpec((HF, 2 * H), c2),                  # [attn_l | attn_r] columns
        pl.BlockSpec((HF, H), c2),                      # attn_s columns
        pl.BlockSpec((R, F), c2),                       # rel_emb @ W_neighbor
        pl.BlockSpec((TE, N_pad), lambda i: (i, 0)),    # S one-hot(src)
        pl.BlockSpec((TE, N_pad), lambda i: (i, 0)),    # D one-hot(dst)
        pl.BlockSpec((TE, R), lambda i: (i, 0)),        # Rh one-hot(rel_type)
    ]
    out_specs = pl.BlockSpec((N_pad, F), c2)            # resident accumulator block
    scratch_shapes = [
        pltpu.VMEM((N_pad, HF + 2 * H), bf16),          # [feat | lse_hi | lse_lo]
        pltpu.VMEM((N_pad, 2 * H), bf16),               # [er_hi | er_lo]
        pltpu.VMEM((1, H), f32),                        # running per-head shift
        pltpu.VMEM((N_pad, H), f32),                    # softmax denominators
        pltpu.VMEM((N_pad, HF), f32),                   # per-head numerators
        pltpu.VMEM((N_pad, R), f32),                    # (node, rel) counts
    ]

    flops = 2 * (2 * N_pad * Din * HF + N_pad * HF * 3 * H
                 + E_pad * N_pad * (HF + 2 * H)          # src gather
                 + E_pad * N_pad * (2 * H)               # dst gather
                 + E_pad * N_pad * (HF + H + R)          # scatter
                 + N_pad * R * F) + 12 * E_pad * HF
    cost = pl.CostEstimate(flops=int(flops),
                           transcendentals=int(E_pad * H + n_tiles * H),
                           bytes_accessed=int(4 * (2 * N_pad * Din + Din * HF
                                                   + HF * 3 * H + R * F + N_pad * F)
                                              + 2 * (2 * E_pad * N_pad + E_pad * R)))

    out = pl.pallas_call(
        kernel,
        grid=(n_tiles,),
        in_specs=in_specs,
        out_specs=out_specs,
        out_shape=jax.ShapeDtypeStruct((N_pad, F), f32),
        scratch_shapes=scratch_shapes,
        compiler_params=pltpu.CompilerParams(
            dimension_semantics=("arbitrary",),          # edge axis is a reduction
            vmem_limit_bytes=32 * 1024 * 1024),
        cost_estimate=cost,
    )(h_p, st_p, wfc, alr, a_s, reltab, S, D, Rh)
    return out[:N]


def reference_forward(h, state, rel_emb, src, dst, rel_type, params,
                      num_heads, out_feat, negative_slope, num_nodes):
    """Pure-JAX reference mirroring the PyTorch/DGL forward (eval mode)."""
    hp = jax.lax.Precision.HIGHEST
    H, F, N = num_heads, out_feat, num_nodes
    feat = jnp.dot(h, params["wfc"], precision=hp).reshape(N, H, F)
    state_p = jnp.dot(state, params["wfc"], precision=hp).reshape(-1, H, F)
    el = jnp.sum(feat * params["attn_l"][None], axis=-1)     # (N, H)
    er = jnp.sum(feat * params["attn_r"][None], axis=-1)
    es = jnp.sum(state_p * params["attn_s"][None], axis=-1)
    e = el[src] + er[dst] + es[src]                          # (E, H)
    e = jnp.where(e > 0, e, negative_slope * e)
    emax = jax.ops.segment_max(e, dst, num_segments=N)
    ex = jnp.exp(e - emax[dst])
    denom = jax.ops.segment_sum(ex, dst, num_segments=N)
    a = ex / denom[dst]                                      # (E, H)
    node_msg = jnp.sum(a[:, :, None] * feat[src], axis=1)    # (E, F)
    rel_msg = jnp.dot(rel_emb[rel_type], params["w_neighbor"], precision=hp)
    msg = node_msg + rel_msg
    return jax.ops.segment_sum(msg, dst, num_segments=N)     # (N, F)


if __name__ == "__main__":
    # in_feat must equal out_feat for the module's torch.mm(relation, W_neighbor).
    N, E, DIN, F, H, R = 16, 40, 32, 32, 4, 8
    NEG_SLOPE = 0.2
    GAIN = float(np.sqrt(2.0))  # nn.init.calculate_gain('relu')

    key = jax.random.PRNGKey(0)
    ks = jax.random.split(key, 12)

    params = {
        # fc: Linear(in_feat, out_feat*num_heads, bias=False); stored transposed.
        "wfc": jax.random.normal(ks[0], (DIN, H * F), jnp.float32)
               * GAIN * np.sqrt(2.0 / (DIN + H * F)),
        "w_neighbor": jax.random.normal(ks[1], (DIN, F), jnp.float32)
                      * GAIN * np.sqrt(2.0 / (DIN + F)),
        "attn_l": jax.random.normal(ks[2], (H, F), jnp.float32)
                  * GAIN * np.sqrt(2.0 / (1 + H * F)),
        "attn_r": jax.random.normal(ks[3], (H, F), jnp.float32)
                  * GAIN * np.sqrt(2.0 / (1 + H * F)),
        "attn_s": jax.random.normal(ks[4], (H, F), jnp.float32)
                  * GAIN * np.sqrt(2.0 / (1 + H * F)),
    }

    h = jax.random.normal(ks[5], (N, DIN), jnp.float32)         # g.ndata['h']
    state = jax.random.normal(ks[6], (N, DIN), jnp.float32)     # recurrent state
    rel_emb = jax.random.normal(ks[7], (R, DIN), jnp.float32)   # relation embeddings
    src = jax.random.randint(ks[8], (E,), 0, N)
    dst = jax.random.randint(ks[9], (E,), 0, N)
    rel_type = jax.random.randint(ks[10], (E,), 0, R)

    out = aurgcn_forward(h, state, rel_emb, src, dst, rel_type, params,
                         num_heads=H, out_feat=F, negative_slope=NEG_SLOPE,
                         edge_tile=16)   # 3 edge tiles -> exercises the pipeline
    out = jax.block_until_ready(out)

    ref = reference_forward(h, state, rel_emb, src, dst, rel_type, params,
                            num_heads=H, out_feat=F,
                            negative_slope=NEG_SLOPE, num_nodes=N)
    # bf16 MXU on the gathered feature/message path (softmax logits are carried
    # hi/lo, fc/logits/accumulation stay f32), so compare at bf16 tolerances.
    np.testing.assert_allclose(np.asarray(out), np.asarray(ref),
                               rtol=2e-2, atol=2e-2)
    print("KERNEL_OK")
</pallas_src>

<mosaic_0001>
module attributes {stable_mosaic.version = 11 : i64} {
  func.func @aurgcn_kernel(%arg0: i32, %arg1: memref<128x32xf32, #tpu.memory_space<vmem>>, %arg2: memref<128x32xf32, #tpu.memory_space<vmem>>, %arg3: memref<32x128xf32, #tpu.memory_space<vmem>>, %arg4: memref<128x8xf32, #tpu.memory_space<vmem>>, %arg5: memref<128x4xf32, #tpu.memory_space<vmem>>, %arg6: memref<8x32xf32, #tpu.memory_space<vmem>>, %arg7: memref<16x128xbf16, #tpu.memory_space<vmem>>, %arg8: memref<16x128xbf16, #tpu.memory_space<vmem>>, %arg9: memref<16x8xbf16, #tpu.memory_space<vmem>>, %arg10: memref<128x32xf32, #tpu.memory_space<vmem>>, %arg11: memref<128x136xbf16, #tpu.memory_space<vmem>>, %arg12: memref<128x8xbf16, #tpu.memory_space<vmem>>, %arg13: memref<1x4xf32, #tpu.memory_space<vmem>>, %arg14: memref<128x4xf32, #tpu.memory_space<vmem>>, %arg15: memref<128x128xf32, #tpu.memory_space<vmem>>, %arg16: memref<128x8xf32, #tpu.memory_space<vmem>>) attributes {dimension_semantics = [#tpu.dimension_semantics<arbitrary>], iteration_bounds = array<i64: 3>, scalar_prefetch = 0 : i64, scratch_operands = 6 : i64, tpu.core_type = #tpu.core_type<tc>, window_params = [{pipeline_mode = #tpu.pipeline_mode<synchronous>, transform_indices = @transform_0, window_bounds = array<i64: 128, 32>}, {pipeline_mode = #tpu.pipeline_mode<synchronous>, transform_indices = @transform_1, window_bounds = array<i64: 128, 32>}, {pipeline_mode = #tpu.pipeline_mode<synchronous>, transform_indices = @transform_2, window_bounds = array<i64: 32, 128>}, {pipeline_mode = #tpu.pipeline_mode<synchronous>, transform_indices = @transform_3, window_bounds = array<i64: 128, 8>}, {pipeline_mode = #tpu.pipeline_mode<synchronous>, transform_indices = @transform_4, window_bounds = array<i64: 128, 4>}, {pipeline_mode = #tpu.pipeline_mode<synchronous>, transform_indices = @transform_5, window_bounds = array<i64: 8, 32>}, {transform_indices = @transform_6, window_bounds = array<i64: 16, 128>}, {transform_indices = @transform_7, window_bounds = array<i64: 16, 128>}, {transform_indices = @transform_8, window_bounds = array<i64: 16, 8>}, {pipeline_mode = #tpu.pipeline_mode<synchronous>, transform_indices = @transform_9, window_bounds = array<i64: 128, 32>}]} {
    %c0_i32 = arith.constant 0 : i32
    %0 = arith.cmpi eq, %arg0, %c0_i32 : i32
    %1 = arith.extui %0 : i1 to i32
    %c0_i32_0 = arith.constant 0 : i32
    %2 = arith.cmpi ne, %1, %c0_i32_0 : i32
    scf.if %2 {
      %c0_32 = arith.constant 0 : index
      %c0_33 = arith.constant 0 : index
      %97 = vector.load %arg1[%c0_32, %c0_33] : memref<128x32xf32, #tpu.memory_space<vmem>>, vector<128x32xf32>
      %c0_34 = arith.constant 0 : index
      %c0_35 = arith.constant 0 : index
      %98 = vector.load %arg3[%c0_34, %c0_35] : memref<32x128xf32, #tpu.memory_space<vmem>>, vector<32x128xf32>
      %cst_36 = arith.constant dense<0.000000e+00> : vector<128x128xf32>
      %99 = tpu.matmul %97, %98, %cst_36 {dimension_numbers = #tpu.dot_dimension_numbers<[1], [0], [0], [1], [0, 0, 1, 1], [], []>, precision = #tpu.contract_precision<fp32>} : vector<128x32xf32>, vector<32x128xf32>, vector<128x128xf32> -> vector<128x128xf32>
      %c0_37 = arith.constant 0 : index
      %c0_38 = arith.constant 0 : index
      %100 = vector.load %arg2[%c0_37, %c0_38] : memref<128x32xf32, #tpu.memory_space<vmem>>, vector<128x32xf32>
      %c0_39 = arith.constant 0 : index
      %c0_40 = arith.constant 0 : index
      %101 = vector.load %arg3[%c0_39, %c0_40] : memref<32x128xf32, #tpu.memory_space<vmem>>, vector<32x128xf32>
      %cst_41 = arith.constant dense<0.000000e+00> : vector<128x128xf32>
      %102 = tpu.matmul %100, %101, %cst_41 {dimension_numbers = #tpu.dot_dimension_numbers<[1], [0], [0], [1], [0, 0, 1, 1], [], []>, precision = #tpu.contract_precision<fp32>} : vector<128x32xf32>, vector<32x128xf32>, vector<128x128xf32> -> vector<128x128xf32>
      %c0_42 = arith.constant 0 : index
      %c0_43 = arith.constant 0 : index
      %103 = vector.load %arg4[%c0_42, %c0_43] : memref<128x8xf32, #tpu.memory_space<vmem>>, vector<128x8xf32>
      %cst_44 = arith.constant dense<0.000000e+00> : vector<128x8xf32>
      %104 = tpu.matmul %99, %103, %cst_44 {dimension_numbers = #tpu.dot_dimension_numbers<[1], [0], [0], [1], [0, 0, 1, 1], [], []>, precision = #tpu.contract_precision<fp32>} : vector<128x128xf32>, vector<128x8xf32>, vector<128x8xf32> -> vector<128x8xf32>
      %c0_45 = arith.constant 0 : index
      %c0_46 = arith.constant 0 : index
      %105 = vector.load %arg5[%c0_45, %c0_46] : memref<128x4xf32, #tpu.memory_space<vmem>>, vector<128x4xf32>
      %cst_47 = arith.constant dense<0.000000e+00> : vector<128x4xf32>
      %106 = tpu.matmul %102, %105, %cst_47 {dimension_numbers = #tpu.dot_dimension_numbers<[1], [0], [0], [1], [0, 0, 1, 1], [], []>, precision = #tpu.contract_precision<fp32>} : vector<128x128xf32>, vector<128x4xf32>, vector<128x4xf32> -> vector<128x4xf32>
      %107 = vector.extract_strided_slice %104 {offsets = [0, 0], sizes = [128, 4], strides = [1, 1]} : vector<128x8xf32> to vector<128x4xf32>
      %108 = arith.addf %107, %106 : vector<128x4xf32>
      %109 = vector.extract_strided_slice %104 {offsets = [0, 4], sizes = [128, 4], strides = [1, 1]} : vector<128x8xf32> to vector<128x4xf32>
      %110 = arith.truncf %108 : vector<128x4xf32> to vector<128x4xbf16>
      %111 = arith.extf %110 : vector<128x4xbf16> to vector<128x4xf32>
      %112 = arith.subf %108, %111 : vector<128x4xf32>
      %113 = arith.truncf %112 : vector<128x4xf32> to vector<128x4xbf16>
      %114 = arith.truncf %109 : vector<128x4xf32> to vector<128x4xbf16>
      %115 = arith.extf %114 : vector<128x4xbf16> to vector<128x4xf32>
      %116 = arith.subf %109, %115 : vector<128x4xf32>
      %117 = arith.truncf %116 : vector<128x4xf32> to vector<128x4xbf16>
      %118 = arith.truncf %99 : vector<128x128xf32> to vector<128x128xbf16>
      %119 = tpu.concatenate %118, %110, %113 in 1 : vector<128x128xbf16>, vector<128x4xbf16>, vector<128x4xbf16> -> vector<128x136xbf16>
      %c0_48 = arith.constant 0 : index
      %c0_49 = arith.constant 0 : index
      %120 = vector.load %arg11[%c0_48, %c0_49] : memref<128x136xbf16, #tpu.memory_space<vmem>>, vector<128x136xbf16>
      tpu.vector_store %arg11[%c0_48, %c0_49], %119 {strides = array<i32>} : memref<128x136xbf16, #tpu.memory_space<vmem>>, vector<128x136xbf16>,
      %121 = tpu.concatenate %114, %117 in 1 : vector<128x4xbf16>, vector<128x4xbf16> -> vector<128x8xbf16>
      %c0_50 = arith.constant 0 : index
      %c0_51 = arith.constant 0 : index
      %122 = vector.load %arg12[%c0_50, %c0_51] : memref<128x8xbf16, #tpu.memory_space<vmem>>, vector<128x8xbf16>
      tpu.vector_store %arg12[%c0_50, %c0_51], %121 {strides = array<i32>} : memref<128x8xbf16, #tpu.memory_space<vmem>>, vector<128x8xbf16>,
      %cst_52 = arith.constant -1.000000e+30 : f32
      %123 = vector.broadcast %cst_52 : f32 to vector<1x4xf32>
      %c0_53 = arith.constant 0 : index
      %c0_54 = arith.constant 0 : index
      %124 = vector.load %arg13[%c0_53, %c0_54] : memref<1x4xf32, #tpu.memory_space<vmem>>, vector<1x4xf32>
      tpu.vector_store %arg13[%c0_53, %c0_54], %123 {strides = array<i32>} : memref<1x4xf32, #tpu.memory_space<vmem>>, vector<1x4xf32>,
      %cst_55 = arith.constant 0.000000e+00 : f32
      %125 = vector.broadcast %cst_55 : f32 to vector<128x4xf32>
      %c0_56 = arith.constant 0 : index
      %c0_57 = arith.constant 0 : index
      %126 = vector.load %arg14[%c0_56, %c0_57] : memref<128x4xf32, #tpu.memory_space<vmem>>, vector<128x4xf32>
      tpu.vector_store %arg14[%c0_56, %c0_57], %125 {strides = array<i32>} : memref<128x4xf32, #tpu.memory_space<vmem>>, vector<128x4xf32>,
      %cst_58 = arith.constant 0.000000e+00 : f32
      %127 = vector.broadcast %cst_58 : f32 to vector<128x128xf32>
      %c0_59 = arith.constant 0 : index
      %c0_60 = arith.constant 0 : index
      %128 = vector.load %arg15[%c0_59, %c0_60] : memref<128x128xf32, #tpu.memory_space<vmem>>, vector<128x128xf32>
      tpu.vector_store %arg15[%c0_59, %c0_60], %127 {strides = array<i32>} : memref<128x128xf32, #tpu.memory_space<vmem>>, vector<128x128xf32>,
      %cst_61 = arith.constant 0.000000e+00 : f32
      %129 = vector.broadcast %cst_61 : f32 to vector<128x8xf32>
      %c0_62 = arith.constant 0 : index
      %c0_63 = arith.constant 0 : index
      %130 = vector.load %arg16[%c0_62, %c0_63] : memref<128x8xf32, #tpu.memory_space<vmem>>, vector<128x8xf32>
      tpu.vector_store %arg16[%c0_62, %c0_63], %129 {strides = array<i32>} : memref<128x8xf32, #tpu.memory_space<vmem>>, vector<128x8xf32>,
    } else {
    }
    %c0 = arith.constant 0 : index
    %c0_1 = arith.constant 0 : index
    %3 = vector.load %arg7[%c0, %c0_1] : memref<16x128xbf16, #tpu.memory_space<vmem>>, vector<16x128xbf16>
    %c0_2 = arith.constant 0 : index
    %c0_3 = arith.constant 0 : index
    %4 = vector.load %arg8[%c0_2, %c0_3] : memref<16x128xbf16, #tpu.memory_space<vmem>>, vector<16x128xbf16>
    %c0_4 = arith.constant 0 : index
    %c0_5 = arith.constant 0 : index
    %5 = vector.load %arg11[%c0_4, %c0_5] : memref<128x136xbf16, #tpu.memory_space<vmem>>, vector<128x136xbf16>
    %cst = arith.constant dense<0.000000e+00> : vector<16x136xf32>
    %6 = tpu.matmul %3, %5, %cst {dimension_numbers = #tpu.dot_dimension_numbers<[1], [0], [0], [1], [0, 0, 1, 1], [], []>} : vector<16x128xbf16>, vector<128x136xbf16>, vector<16x136xf32> -> vector<16x136xf32>
    %7 = vector.extract_strided_slice %6 {offsets = [0, 0], sizes = [16, 128], strides = [1, 1]} : vector<16x136xf32> to vector<16x128xf32>
    %8 = vector.extract_strided_slice %6 {offsets = [0, 128], sizes = [16, 4], strides = [1, 1]} : vector<16x136xf32> to vector<16x4xf32>
    %9 = vector.extract_strided_slice %6 {offsets = [0, 132], sizes = [16, 4], strides = [1, 1]} : vector<16x136xf32> to vector<16x4xf32>
    %10 = arith.addf %8, %9 : vector<16x4xf32>
    %c0_6 = arith.constant 0 : index
    %c0_7 = arith.constant 0 : index
    %11 = vector.load %arg12[%c0_6, %c0_7] : memref<128x8xbf16, #tpu.memory_space<vmem>>, vector<128x8xbf16>
    %cst_8 = arith.constant dense<0.000000e+00> : vector<16x8xf32>
    %12 = tpu.matmul %4, %11, %cst_8 {dimension_numbers = #tpu.dot_dimension_numbers<[1], [0], [0], [1], [0, 0, 1, 1], [], []>} : vector<16x128xbf16>, vector<128x8xbf16>, vector<16x8xf32> -> vector<16x8xf32>
    %13 = vector.extract_strided_slice %12 {offsets = [0, 0], sizes = [16, 4], strides = [1, 1]} : vector<16x8xf32> to vector<16x4xf32>
    %14 = vector.extract_strided_slice %12 {offsets = [0, 4], sizes = [16, 4], strides = [1, 1]} : vector<16x8xf32> to vector<16x4xf32>
    %15 = arith.addf %13, %14 : vector<16x4xf32>
    %16 = arith.addf %10, %15 : vector<16x4xf32>
    %cst_9 = arith.constant 0.000000e+00 : f32
    %17 = vector.broadcast %cst_9 : f32 to vector<16x4xf32>
    %18 = arith.cmpf ogt, %16, %17 : vector<16x4xf32>
    %cst_10 = arith.constant 2.000000e-01 : f32
    %19 = vector.broadcast %cst_10 : f32 to vector<16x4xf32>
    %20 = arith.mulf %19, %16 : vector<16x4xf32>
    %21 = arith.select %18, %16, %20 : vector<16x4xi1>, vector<16x4xf32>
    %cst_11 = arith.constant dense<0xFF800000> : vector<4xf32>
    %22 = vector.multi_reduction <maximumf>, %21, %cst_11 [0] : vector<16x4xf32> to vector<4xf32>
    %23 = vector.shape_cast %22 : vector<4xf32> to vector<1x4xf32>
    %c0_12 = arith.constant 0 : index
    %c0_13 = arith.constant 0 : index
    %24 = vector.load %arg13[%c0_12, %c0_13] : memref<1x4xf32, #tpu.memory_space<vmem>>, vector<1x4xf32>
    %25 = arith.maximumf %24, %23 : vector<1x4xf32>
    %26 = arith.subf %24, %25 : vector<1x4xf32>
    %27 = math.exp %26 : vector<1x4xf32>
    %c0_14 = arith.constant 0 : index
    %c0_15 = arith.constant 0 : index
    %28 = vector.load %arg13[%c0_14, %c0_15] : memref<1x4xf32, #tpu.memory_space<vmem>>, vector<1x4xf32>
    tpu.vector_store %arg13[%c0_14, %c0_15], %25 {strides = array<i32>} : memref<1x4xf32, #tpu.memory_space<vmem>>, vector<1x4xf32>,
    %29 = vector.broadcast %25 : vector<1x4xf32> to vector<16x4xf32>
    %30 = arith.subf %21, %29 : vector<16x4xf32>
    %31 = math.exp %30 : vector<16x4xf32>
    %32 = vector.extract_strided_slice %31 {offsets = [0, 0], sizes = [16, 1], strides = [1, 1]} : vector<16x4xf32> to vector<16x1xf32>
    %33 = vector.extract_strided_slice %7 {offsets = [0, 0], sizes = [16, 32], strides = [1, 1]} : vector<16x128xf32> to vector<16x32xf32>
    %34 = vector.broadcast %32 : vector<16x1xf32> to vector<16x32xf32>
    %35 = arith.mulf %34, %33 : vector<16x32xf32>
    %36 = vector.extract_strided_slice %31 {offsets = [0, 1], sizes = [16, 1], strides = [1, 1]} : vector<16x4xf32> to vector<16x1xf32>
    %37 = vector.extract_strided_slice %7 {offsets = [0, 32], sizes = [16, 32], strides = [1, 1]} : vector<16x128xf32> to vector<16x32xf32>
    %38 = vector.broadcast %36 : vector<16x1xf32> to vector<16x32xf32>
    %39 = arith.mulf %38, %37 : vector<16x32xf32>
    %40 = vector.extract_strided_slice %31 {offsets = [0, 2], sizes = [16, 1], strides = [1, 1]} : vector<16x4xf32> to vector<16x1xf32>
    %41 = vector.extract_strided_slice %7 {offsets = [0, 64], sizes = [16, 32], strides = [1, 1]} : vector<16x128xf32> to vector<16x32xf32>
    %42 = vector.broadcast %40 : vector<16x1xf32> to vector<16x32xf32>
    %43 = arith.mulf %42, %41 : vector<16x32xf32>
    %44 = vector.extract_strided_slice %31 {offsets = [0, 3], sizes = [16, 1], strides = [1, 1]} : vector<16x4xf32> to vector<16x1xf32>
    %45 = vector.extract_strided_slice %7 {offsets = [0, 96], sizes = [16, 32], strides = [1, 1]} : vector<16x128xf32> to vector<16x32xf32>
    %46 = vector.broadcast %44 : vector<16x1xf32> to vector<16x32xf32>
    %47 = arith.mulf %46, %45 : vector<16x32xf32>
    %48 = tpu.concatenate %35, %39, %43, %47 in 1 : vector<16x32xf32>, vector<16x32xf32>, vector<16x32xf32>, vector<16x32xf32> -> vector<16x128xf32>
    %49 = arith.truncf %48 : vector<16x128xf32> to vector<16x128xbf16>
    %50 = arith.truncf %31 : vector<16x4xf32> to vector<16x4xbf16>
    %c0_16 = arith.constant 0 : index
    %c0_17 = arith.constant 0 : index
    %51 = vector.load %arg9[%c0_16, %c0_17] : memref<16x8xbf16, #tpu.memory_space<vmem>>, vector<16x8xbf16>
    %52 = tpu.concatenate %49, %50, %51 in 1 : vector<16x128xbf16>, vector<16x4xbf16>, vector<16x8xbf16> -> vector<16x140xbf16>
    %53 = arith.extf %4 : vector<16x128xbf16> to vector<16x128xf32>
    %54 = tpu.transpose %53, [1, 0] : vector<16x128xf32> -> vector<128x16xf32>
    %55 = arith.truncf %54 : vector<128x16xf32> to vector<128x16xbf16>
    %cst_18 = arith.constant dense<0.000000e+00> : vector<128x140xf32>
    %56 = tpu.matmul %55, %52, %cst_18 {dimension_numbers = #tpu.dot_dimension_numbers<[1], [0], [0], [1], [0, 0, 1, 1], [], []>} : vector<128x16xbf16>, vector<16x140xbf16>, vector<128x140xf32> -> vector<128x140xf32>
    %c0_19 = arith.constant 0 : index
    %c0_20 = arith.constant 0 : index
    %57 = vector.load %arg15[%c0_19, %c0_20] : memref<128x128xf32, #tpu.memory_space<vmem>>, vector<128x128xf32>
    %58 = vector.extract_strided_slice %57 {offsets = [0, 0], sizes = [128, 32], strides = [1, 1]} : vector<128x128xf32> to vector<128x32xf32>
    %59 = vector.extract_strided_slice %27 {offsets = [0, 0], sizes = [1, 1], strides = [1, 1]} : vector<1x4xf32> to vector<1x1xf32>
    %60 = vector.broadcast %59 : vector<1x1xf32> to vector<128x32xf32>
    %61 = arith.mulf %58, %60 : vector<128x32xf32>
    %62 = vector.extract_strided_slice %56 {offsets = [0, 0], sizes = [128, 32], strides = [1, 1]} : vector<128x140xf32> to vector<128x32xf32>
    %63 = arith.addf %61, %62 : vector<128x32xf32>
    %64 = vector.extract_strided_slice %57 {offsets = [0, 32], sizes = [128, 32], strides = [1, 1]} : vector<128x128xf32> to vector<128x32xf32>
    %65 = vector.extract_strided_slice %27 {offsets = [0, 1], sizes = [1, 1], strides = [1, 1]} : vector<1x4xf32> to vector<1x1xf32>
    %66 = vector.broadcast %65 : vector<1x1xf32> to vector<128x32xf32>
    %67 = arith.mulf %64, %66 : vector<128x32xf32>
    %68 = vector.extract_strided_slice %56 {offsets = [0, 32], sizes = [128, 32], strides = [1, 1]} : vector<128x140xf32> to vector<128x32xf32>
    %69 = arith.addf %67, %68 : vector<128x32xf32>
    %70 = vector.extract_strided_slice %57 {offsets = [0, 64], sizes = [128, 32], strides = [1, 1]} : vector<128x128xf32> to vector<128x32xf32>
    %71 = vector.extract_strided_slice %27 {offsets = [0, 2], sizes = [1, 1], strides = [1, 1]} : vector<1x4xf32> to vector<1x1xf32>
    %72 = vector.broadcast %71 : vector<1x1xf32> to vector<128x32xf32>
    %73 = arith.mulf %70, %72 : vector<128x32xf32>
    %74 = vector.extract_strided_slice %56 {offsets = [0, 64], sizes = [128, 32], strides = [1, 1]} : vector<128x140xf32> to vector<128x32xf32>
    %75 = arith.addf %73, %74 : vector<128x32xf32>
    %76 = vector.extract_strided_slice %57 {offsets = [0, 96], sizes = [128, 32], strides = [1, 1]} : vector<128x128xf32> to vector<128x32xf32>
    %77 = vector.extract_strided_slice %27 {offsets = [0, 3], sizes = [1, 1], strides = [1, 1]} : vector<1x4xf32> to vector<1x1xf32>
    %78 = vector.broadcast %77 : vector<1x1xf32> to vector<128x32xf32>
    %79 = arith.mulf %76, %78 : vector<128x32xf32>
    %80 = vector.extract_strided_slice %56 {offsets = [0, 96], sizes = [128, 32], strides = [1, 1]} : vector<128x140xf32> to vector<128x32xf32>
    %81 = arith.addf %79, %80 : vector<128x32xf32>
    %82 = tpu.concatenate %63, %69, %75, %81 in 1 : vector<128x32xf32>, vector<128x32xf32>, vector<128x32xf32>, vector<128x32xf32> -> vector<128x128xf32>
    %c0_21 = arith.constant 0 : index
    %c0_22 = arith.constant 0 : index
    %83 = vector.load %arg15[%c0_21, %c0_22] : memref<128x128xf32, #tpu.memory_space<vmem>>, vector<128x128xf32>
    tpu.vector_store %arg15[%c0_21, %c0_22], %82 {strides = array<i32>} : memref<128x128xf32, #tpu.memory_space<vmem>>, vector<128x128xf32>,
    %c0_23 = arith.constant 0 : index
    %c0_24 = arith.constant 0 : index
    %84 = vector.load %arg14[%c0_23, %c0_24] : memref<128x4xf32, #tpu.memory_space<vmem>>, vector<128x4xf32>
    %85 = vector.broadcast %27 : vector<1x4xf32> to vector<128x4xf32>
    %86 = arith.mulf %84, %85 : vector<128x4xf32>
    %87 = vector.extract_strided_slice %56 {offsets = [0, 128], sizes = [128, 4], strides = [1, 1]} : vector<128x140xf32> to vector<128x4xf32>
    %88 = arith.addf %86, %87 : vector<128x4xf32>
    %c0_25 = arith.constant 0 : index
    %c0_26 = arith.constant 0 : index
    %89 = vector.load %arg14[%c0_25, %c0_26] : memref<128x4xf32, #tpu.memory_space<vmem>>, vector<128x4xf32>
    tpu.vector_store %arg14[%c0_25, %c0_26], %88 {strides = array<i32>} : memref<128x4xf32, #tpu.memory_space<vmem>>, vector<128x4xf32>,
    %c0_27 = arith.constant 0 : index
    %c0_28 = arith.constant 0 : index
    %90 = vector.load %arg16[%c0_27, %c0_28] : memref<128x8xf32, #tpu.memory_space<vmem>>, vector<128x8xf32>
    %91 = vector.extract_strided_slice %56 {offsets = [0, 132], sizes = [128, 8], strides = [1, 1]} : vector<128x140xf32> to vector<128x8xf32>
    %92 = arith.addf %90, %91 : vector<128x8xf32>
    %c0_29 = arith.constant 0 : index
    %c0_30 = arith.constant 0 : index
    %93 = vector.load %arg16[%c0_29, %c0_30] : memref<128x8xf32, #tpu.memory_space<vmem>>, vector<128x8xf32>
    tpu.vector_store %arg16[%c0_29, %c0_30], %92 {strides = array<i32>} : memref<128x8xf32, #tpu.memory_space<vmem>>, vector<128x8xf32>,
    %c2_i32 = arith.constant 2 : i32
    %94 = arith.cmpi eq, %arg0, %c2_i32 : i32
    %95 = arith.extui %94 : i1 to i32
    %c0_i32_31 = arith.constant 0 : i32
    %96 = arith.cmpi ne, %95, %c0_i32_31 : i32
    scf.if %96 {
      %c0_32 = arith.constant 0 : index
      %c0_33 = arith.constant 0 : index
      %97 = vector.load %arg14[%c0_32, %c0_33] : memref<128x4xf32, #tpu.memory_space<vmem>>, vector<128x4xf32>
      %cst_34 = arith.constant 0.000000e+00 : f32
      %98 = vector.broadcast %cst_34 : f32 to vector<128x4xf32>
      %99 = arith.cmpf ogt, %97, %98 : vector<128x4xf32>
      %cst_35 = arith.constant 0.000000e+00 : f32
      %100 = vector.broadcast %cst_35 : f32 to vector<128x4xf32>
      %101 = arith.cmpf ogt, %97, %100 : vector<128x4xf32>
      %cst_36 = arith.constant 1.000000e+00 : f32
      %102 = vector.broadcast %cst_36 : f32 to vector<128x4xf32>
      %103 = arith.select %101, %97, %102 : vector<128x4xi1>, vector<128x4xf32>
      %cst_37 = arith.constant 1.000000e+00 : f32
      %104 = vector.broadcast %cst_37 : f32 to vector<128x4xf32>
      %105 = arith.divf %104, %103 : vector<128x4xf32>
      %cst_38 = arith.constant 0.000000e+00 : f32
      %106 = vector.broadcast %cst_38 : f32 to vector<128x4xf32>
      %107 = arith.select %99, %105, %106 : vector<128x4xi1>, vector<128x4xf32>
      %c0_39 = arith.constant 0 : index
      %c0_40 = arith.constant 0 : index
      %108 = vector.load %arg16[%c0_39, %c0_40] : memref<128x8xf32, #tpu.memory_space<vmem>>, vector<128x8xf32>
      %c0_41 = arith.constant 0 : index
      %c0_42 = arith.constant 0 : index
      %109 = vector.load %arg6[%c0_41, %c0_42] : memref<8x32xf32, #tpu.memory_space<vmem>>, vector<8x32xf32>
      %cst_43 = arith.constant dense<0.000000e+00> : vector<128x32xf32>
      %110 = tpu.matmul %108, %109, %cst_43 {dimension_numbers = #tpu.dot_dimension_numbers<[1], [0], [0], [1], [0, 0, 1, 1], [], []>, precision = #tpu.contract_precision<fp32>} : vector<128x8xf32>, vector<8x32xf32>, vector<128x32xf32> -> vector<128x32xf32>
      %c0_44 = arith.constant 0 : index
      %c0_45 = arith.constant 0 : index
      %111 = vector.load %arg15[%c0_44, %c0_45] : memref<128x128xf32, #tpu.memory_space<vmem>>, vector<128x128xf32>
      %112 = vector.extract_strided_slice %111 {offsets = [0, 0], sizes = [128, 32], strides = [1, 1]} : vector<128x128xf32> to vector<128x32xf32>
      %113 = vector.extract_strided_slice %107 {offsets = [0, 0], sizes = [128, 1], strides = [1, 1]} : vector<128x4xf32> to vector<128x1xf32>
      %114 = vector.broadcast %113 : vector<128x1xf32> to vector<128x32xf32>
      %115 = arith.mulf %112, %114 : vector<128x32xf32>
      %116 = arith.addf %110, %115 : vector<128x32xf32>
      %117 = vector.extract_strided_slice %111 {offsets = [0, 32], sizes = [128, 32], strides = [1, 1]} : vector<128x128xf32> to vector<128x32xf32>
      %118 = vector.extract_strided_slice %107 {offsets = [0, 1], sizes = [128, 1], strides = [1, 1]} : vector<128x4xf32> to vector<128x1xf32>
      %119 = vector.broadcast %118 : vector<128x1xf32> to vector<128x32xf32>
      %120 = arith.mulf %117, %119 : vector<128x32xf32>
      %121 = arith.addf %116, %120 : vector<128x32xf32>
      %122 = vector.extract_strided_slice %111 {offsets = [0, 64], sizes = [128, 32], strides = [1, 1]} : vector<128x128xf32> to vector<128x32xf32>
      %123 = vector.extract_strided_slice %107 {offsets = [0, 2], sizes = [128, 1], strides = [1, 1]} : vector<128x4xf32> to vector<128x1xf32>
      %124 = vector.broadcast %123 : vector<128x1xf32> to vector<128x32xf32>
      %125 = arith.mulf %122, %124 : vector<128x32xf32>
      %126 = arith.addf %121, %125 : vector<128x32xf32>
      %127 = vector.extract_strided_slice %111 {offsets = [0, 96], sizes = [128, 32], strides = [1, 1]} : vector<128x128xf32> to vector<128x32xf32>
      %128 = vector.extract_strided_slice %107 {offsets = [0, 3], sizes = [128, 1], strides = [1, 1]} : vector<128x4xf32> to vector<128x1xf32>
      %129 = vector.broadcast %128 : vector<128x1xf32> to vector<128x32xf32>
      %130 = arith.mulf %127, %129 : vector<128x32xf32>
      %131 = arith.addf %126, %130 : vector<128x32xf32>
      %c0_46 = arith.constant 0 : index
      %c0_47 = arith.constant 0 : index
      %132 = vector.load %arg10[%c0_46, %c0_47] : memref<128x32xf32, #tpu.memory_space<vmem>>, vector<128x32xf32>
      tpu.vector_store %arg10[%c0_46, %c0_47], %131 {strides = array<i32>} : memref<128x32xf32, #tpu.memory_space<vmem>>, vector<128x32xf32>,
    } else {
    }
    return
  }
  func.func @transform_0(%arg0: i32) -> (i32, i32) {
    %c0_i32 = arith.constant 0 : i32
    %c0_i32_0 = arith.constant 0 : i32
    %c0_i32_1 = arith.constant 0 : i32
    return %c0_i32, %c0_i32_0 : i32, i32
  }
  func.func @transform_1(%arg0: i32) -> (i32, i32) {
    %c0_i32 = arith.constant 0 : i32
    %c0_i32_0 = arith.constant 0 : i32
    %c0_i32_1 = arith.constant 0 : i32
    return %c0_i32, %c0_i32_0 : i32, i32
  }
  func.func @transform_2(%arg0: i32) -> (i32, i32) {
    %c0_i32 = arith.constant 0 : i32
    %c0_i32_0 = arith.constant 0 : i32
    %c0_i32_1 = arith.constant 0 : i32
    return %c0_i32, %c0_i32_0 : i32, i32
  }
  func.func @transform_3(%arg0: i32) -> (i32, i32) {
    %c0_i32 = arith.constant 0 : i32
    %c0_i32_0 = arith.constant 0 : i32
    %c0_i32_1 = arith.constant 0 : i32
    return %c0_i32, %c0_i32_0 : i32, i32
  }
  func.func @transform_4(%arg0: i32) -> (i32, i32) {
    %c0_i32 = arith.constant 0 : i32
    %c0_i32_0 = arith.constant 0 : i32
    %c0_i32_1 = arith.constant 0 : i32
    return %c0_i32, %c0_i32_0 : i32, i32
  }
  func.func @transform_5(%arg0: i32) -> (i32, i32) {
    %c0_i32 = arith.constant 0 : i32
    %c0_i32_0 = arith.constant 0 : i32
    %c0_i32_1 = arith.constant 0 : i32
    return %c0_i32, %c0_i32_0 : i32, i32
  }
  func.func @transform_6(%arg0: i32) -> (i32, i32) {
    %c0_i32 = arith.constant 0 : i32
    %c0_i32_0 = arith.constant 0 : i32
    return %arg0, %c0_i32 : i32, i32
  }
  func.func @transform_7(%arg0: i32) -> (i32, i32) {
    %c0_i32 = arith.constant 0 : i32
    %c0_i32_0 = arith.constant 0 : i32
    return %arg0, %c0_i32 : i32, i32
  }
  func.func @transform_8(%arg0: i32) -> (i32, i32) {
    %c0_i32 = arith.constant 0 : i32
    %c0_i32_0 = arith.constant 0 : i32
    return %arg0, %c0_i32 : i32, i32
  }
  func.func @transform_9(%arg0: i32) -> (i32, i32) {
    %c0_i32 = arith.constant 0 : i32
    %c0_i32_0 = arith.constant 0 : i32
    %c0_i32_1 = arith.constant 0 : i32
    return %c0_i32, %c0_i32_0 : i32, i32
  }
}

</mosaic_0001>

<llo_original>
// kernel: tpu_custom_call.1
$region0: #{tpu_custom_call.1}
  #allocation0 [shape = 'u32[]', space=smem, size = 0x4, offset = 0x4, fixed_abs, tag = 'smem constant byte address 0x4 - core index']
  #allocation1 [shape = 'u32[144,128]{1,0:T(1,128)}', space=vmem, size = 0x12000, scoped, tag = 'internal scratch']
  #allocation2 [shape = 'bf16[128,136]{1,0:T(16,128)(2,1)}', space=vmem, size = 0x10000, scoped, tag = 'scratch operand']
  #allocation3 [shape = 'bf16[128,8]{1,0:T(16,128)(2,1)}', space=vmem, size = 0x8000, scoped, tag = 'scratch operand']
  #allocation4 [shape = 'f32[1,4]{1,0:T(1,128)}', space=vmem, size = 0x200, scoped, tag = 'scratch operand']
  #allocation5 [shape = 'f32[128,4]{1,0:T(8,128)}', space=vmem, size = 0x10000, scoped, tag = 'scratch operand']
  #allocation6 [shape = 'f32[128,128]{1,0:T(8,128)}', space=vmem, size = 0x10000, scoped, tag = 'scratch operand']
  #allocation7 [shape = 'f32[128,8]{1,0:T(8,128)}', space=vmem, size = 0x10000, scoped, tag = 'scratch operand']
  %s0 = inlined_call_operand.vmem [shape: f32[128,32], index: 0, kind: input, shape index: {}]
  %s1 = inlined_call_operand.vmem [shape: f32[128,32], index: 1, kind: input, shape index: {}]
  %s2 = inlined_call_operand.vmem [shape: f32[32,128], index: 2, kind: input, shape index: {}]
  %s3 = inlined_call_operand.vmem [shape: f32[128,8], index: 3, kind: input, shape index: {}]
  %s4 = inlined_call_operand.vmem [shape: f32[128,4], index: 4, kind: input, shape index: {}]
  %s5 = inlined_call_operand.vmem [shape: f32[8,32], index: 5, kind: input, shape index: {}]
  %s6 = inlined_call_operand.vmem [shape: bf16[48,128], index: 6, kind: input, shape index: {}]
  %s7 = inlined_call_operand.vmem [shape: bf16[48,128], index: 7, kind: input, shape index: {}]
  %s8 = inlined_call_operand.vmem [shape: bf16[48,8], index: 8, kind: input, shape index: {}]
  %s9 = inlined_call_operand.vmem [shape: f32[128,32], index: 9, kind: output, shape index: {}]
  %s10 = sld [smem:[#allocation0]]
  $region77: #{tpu_custom_call.1} parent=0
    _
  %s12 = ssub.s32 1, %s10
  %s13 = scalar_select 0, %s12, %s10
  loop: start=0, step=1, limit=5
  $region2: #{tpu_custom_call.1} parent=0 // loop_pre_header
    _
  $region3: #{tpu_custom_call.1} parent=0 // loop_header
    %s15 = sphi 0, %s19
    %p16 = scmp.ge.s32.totalorder %s15, 5
    %s23 = sphi 0, %s23
    %s25 = sphi 0, %s23
    %s26 = sphi 0, %s25
    %s40 = sphi 0, %s26
    %s44 = sphi 0, %s44
    %s46 = sphi 0, %s44
    %s47 = sphi 0, %s46
    %s61 = sphi 0, %s47
    %s65 = sphi 0, %s65
    %s67 = sphi 0, %s65
    %s68 = sphi 0, %s67
    %s82 = sphi 0, %s68
    %s86 = sphi 0, %s86
    %s88 = sphi 0, %s86
    %s89 = sphi 0, %s88
    %s103 = sphi 0, %s89
    %s107 = sphi 0, %s107
    %s109 = sphi 0, %s107
    %s110 = sphi 0, %s109
    %s124 = sphi 0, %s110
    %s128 = sphi 0, %s128
    %s130 = sphi 0, %s128
    %s131 = sphi 0, %s130
    %s145 = sphi 0, %s131
    %s151 = sphi 0, %s153
    %s154 = sphi 0, %s151
    %s155 = sphi 0, %s154
    %s171 = sphi 0, %s155
    %s177 = sphi 0, %s179
    %s180 = sphi 0, %s177
    %s181 = sphi 0, %s180
    %s197 = sphi 0, %s181
    %s203 = sphi 0, %s205
    %s206 = sphi 0, %s203
    %s207 = sphi 0, %s206
    %s223 = sphi 0, %s207
    %s227 = sphi 0, %s227
    %s229 = sphi 0, %s227
    %s230 = sphi 0, %s229
    %s244 = sphi 0, %s230
  $region4: #{tpu_custom_call.1} parent=0 // loop_header_branch
    %18 = sbr.rel (%p16) target = $region8
  $region5: #{tpu_custom_call.1} parent=0 // loop_body
    %s20 = ssub.s32 %s15, 1
    %s21 = ssub.s32 %s15, 2
    %s22 = sadd.s32 %s15, 1
    %s24 = sadd.s32 %s23, 1
    %p27 = scmp.eq.s32.totalorder %s15, 2
    %p28 = scmp.ne.s32.totalorder %s23, %s25
    %p29 = scmp.eq.s32.totalorder %s15, 0
    %p30 = por %p28, %p29
    %p31 = scmp.ne.s32.totalorder %s23, %s25
    %p32 = scmp.eq.s32.totalorder %s20, 2
    %p33 = por %p31, %p32
    %p34 = scmp.ne.s32.totalorder %s25, %s26
    %p35 = scmp.eq.s32.totalorder %s20, 0
    %p36 = por %p34, %p35
    %p37 = scmp.ne.s32.totalorder %s25, %s26
    %p38 = scmp.eq.s32.totalorder %s21, 2
    %p39 = por %p37, %p38
    %p41 = scmp.ne.s32.totalorder %s26, %s40
    %p42 = scmp.eq.s32.totalorder %s21, 0
    %p43 = por %p41, %p42
    %s45 = sadd.s32 %s44, 1
    %p48 = scmp.eq.s32.totalorder %s15, 2
    %p49 = scmp.ne.s32.totalorder %s44, %s46
    %p50 = scmp.eq.s32.totalorder %s15, 0
    %p51 = por %p49, %p50
    %p52 = scmp.ne.s32.totalorder %s44, %s46
    %p53 = scmp.eq.s32.totalorder %s20, 2
    %p54 = por %p52, %p53
    %p55 = scmp.ne.s32.totalorder %s46, %s47
    %p56 = scmp.eq.s32.totalorder %s20, 0
    %p57 = por %p55, %p56
    %p58 = scmp.ne.s32.totalorder %s46, %s47
    %p59 = scmp.eq.s32.totalorder %s21, 2
    %p60 = por %p58, %p59
    %p62 = scmp.ne.s32.totalorder %s47, %s61
    %p63 = scmp.eq.s32.totalorder %s21, 0
    %p64 = por %p62, %p63
    %s66 = sadd.s32 %s65, 1
    %p69 = scmp.eq.s32.totalorder %s15, 2
    %p70 = scmp.ne.s32.totalorder %s65, %s67
    %p71 = scmp.eq.s32.totalorder %s15, 0
    %p72 = por %p70, %p71
    %p73 = scmp.ne.s32.totalorder %s65, %s67
    %p74 = scmp.eq.s32.totalorder %s20, 2
    %p75 = por %p73, %p74
    %p76 = scmp.ne.s32.totalorder %s67, %s68
    %p77 = scmp.eq.s32.totalorder %s20, 0
    %p78 = por %p76, %p77
    %p79 = scmp.ne.s32.totalorder %s67, %s68
    %p80 = scmp.eq.s32.totalorder %s21, 2
    %p81 = por %p79, %p80
    %p83 = scmp.ne.s32.totalorder %s68, %s82
    %p84 = scmp.eq.s32.totalorder %s21, 0
    %p85 = por %p83, %p84
    %s87 = sadd.s32 %s86, 1
    %p90 = scmp.eq.s32.totalorder %s15, 2
    %p91 = scmp.ne.s32.totalorder %s86, %s88
    %p92 = scmp.eq.s32.totalorder %s15, 0
    %p93 = por %p91, %p92
    %p94 = scmp.ne.s32.totalorder %s86, %s88
    %p95 = scmp.eq.s32.totalorder %s20, 2
    %p96 = por %p94, %p95
    %p97 = scmp.ne.s32.totalorder %s88, %s89
    %p98 = scmp.eq.s32.totalorder %s20, 0
    %p99 = por %p97, %p98
    %p100 = scmp.ne.s32.totalorder %s88, %s89
    %p101 = scmp.eq.s32.totalorder %s21, 2
    %p102 = por %p100, %p101
    %p104 = scmp.ne.s32.totalorder %s89, %s103
    %p105 = scmp.eq.s32.totalorder %s21, 0
    %p106 = por %p104, %p105
    %s108 = sadd.s32 %s107, 1
    %p111 = scmp.eq.s32.totalorder %s15, 2
    %p112 = scmp.ne.s32.totalorder %s107, %s109
    %p113 = scmp.eq.s32.totalorder %s15, 0
    %p114 = por %p112, %p113
    %p115 = scmp.ne.s32.totalorder %s107, %s109
    %p116 = scmp.eq.s32.totalorder %s20, 2
    %p117 = por %p115, %p116
    %p118 = scmp.ne.s32.totalorder %s109, %s110
    %p119 = scmp.eq.s32.totalorder %s20, 0
    %p120 = por %p118, %p119
    %p121 = scmp.ne.s32.totalorder %s109, %s110
    %p122 = scmp.eq.s32.totalorder %s21, 2
    %p123 = por %p121, %p122
    %p125 = scmp.ne.s32.totalorder %s110, %s124
    %p126 = scmp.eq.s32.totalorder %s21, 0
    %p127 = por %p125, %p126
    %s129 = sadd.s32 %s128, 1
    %p132 = scmp.eq.s32.totalorder %s15, 2
    %p133 = scmp.ne.s32.totalorder %s128, %s130
    %p134 = scmp.eq.s32.totalorder %s15, 0
    %p135 = por %p133, %p134
    %p136 = scmp.ne.s32.totalorder %s128, %s130
    %p137 = scmp.eq.s32.totalorder %s20, 2
    %p138 = por %p136, %p137
    %p139 = scmp.ne.s32.totalorder %s130, %s131
    %p140 = scmp.eq.s32.totalorder %s20, 0
    %p141 = por %p139, %p140
    %p142 = scmp.ne.s32.totalorder %s130, %s131
    %p143 = scmp.eq.s32.totalorder %s21, 2
    %p144 = por %p142, %p143
    %p146 = scmp.ne.s32.totalorder %s131, %s145
    %p147 = scmp.eq.s32.totalorder %s21, 0
    %p148 = por %p146, %p147
    %s149 = ssub.s32 %s15, %s22
    %p150 = scmp.eq.s32.totalorder %s149, 0
    %s152 = sadd.s32 %s151, 1
    %s153 = scalar_select %p150, %s151, %s152
    %p156 = pneg %p150
    %p157 = scmp.eq.s32.totalorder %s15, 2
    %p158 = por %p156, %p157
    %p159 = scmp.ne.s32.totalorder %s151, %s154
    %p160 = scmp.eq.s32.totalorder %s15, 0
    %p161 = por %p159, %p160
    %p162 = scmp.ne.s32.totalorder %s151, %s154
    %p163 = scmp.eq.s32.totalorder %s20, 2
    %p164 = por %p162, %p163
    %p165 = scmp.ne.s32.totalorder %s154, %s155
    %p166 = scmp.eq.s32.totalorder %s20, 0
    %p167 = por %p165, %p166
    %p168 = scmp.ne.s32.totalorder %s154, %s155
    %p169 = scmp.eq.s32.totalorder %s21, 2
    %p170 = por %p168, %p169
    %p172 = scmp.ne.s32.totalorder %s155, %s171
    %p173 = scmp.eq.s32.totalorder %s21, 0
    %p174 = por %p172, %p173
    %s175 = ssub.s32 %s15, %s22
    %p176 = scmp.eq.s32.totalorder %s175, 0
    %s178 = sadd.s32 %s177, 1
    %s179 = scalar_select %p176, %s177, %s178
    %p182 = pneg %p176
    %p183 = scmp.eq.s32.totalorder %s15, 2
    %p184 = por %p182, %p183
    %p185 = scmp.ne.s32.totalorder %s177, %s180
    %p186 = scmp.eq.s32.totalorder %s15, 0
    %p187 = por %p185, %p186
    %p188 = scmp.ne.s32.totalorder %s177, %s180
    %p189 = scmp.eq.s32.totalorder %s20, 2
    %p190 = por %p188, %p189
    %p191 = scmp.ne.s32.totalorder %s180, %s181
    %p192 = scmp.eq.s32.totalorder %s20, 0
    %p193 = por %p191, %p192
    %p194 = scmp.ne.s32.totalorder %s180, %s181
    %p195 = scmp.eq.s32.totalorder %s21, 2
    %p196 = por %p194, %p195
    %p198 = scmp.ne.s32.totalorder %s181, %s197
    %p199 = scmp.eq.s32.totalorder %s21, 0
    %p200 = por %p198, %p199
    %s201 = ssub.s32 %s15, %s22
    %p202 = scmp.eq.s32.totalorder %s201, 0
    %s204 = sadd.s32 %s203, 1
    %s205 = scalar_select %p202, %s203, %s204
    %p208 = pneg %p202
    %p209 = scmp.eq.s32.totalorder %s15, 2
    %p210 = por %p208, %p209
    %p211 = scmp.ne.s32.totalorder %s203, %s206
    %p212 = scmp.eq.s32.totalorder %s15, 0
    %p213 = por %p211, %p212
    %p214 = scmp.ne.s32.totalorder %s203, %s206
    %p215 = scmp.eq.s32.totalorder %s20, 2
    %p216 = por %p214, %p215
    %p217 = scmp.ne.s32.totalorder %s206, %s207
    %p218 = scmp.eq.s32.totalorder %s20, 0
    %p219 = por %p217, %p218
    %p220 = scmp.ne.s32.totalorder %s206, %s207
    %p221 = scmp.eq.s32.totalorder %s21, 2
    %p222 = por %p220, %p221
    %p224 = scmp.ne.s32.totalorder %s207, %s223
    %p225 = scmp.eq.s32.totalorder %s21, 0
    %p226 = por %p224, %p225
    %s228 = sadd.s32 %s227, 1
    %p231 = scmp.eq.s32.totalorder %s15, 2
    %p232 = scmp.ne.s32.totalorder %s227, %s229
    %p233 = scmp.eq.s32.totalorder %s15, 0
    %p234 = por %p232, %p233
    %p235 = scmp.ne.s32.totalorder %s227, %s229
    %p236 = scmp.eq.s32.totalorder %s20, 2
    %p237 = por %p235, %p236
    %p238 = scmp.ne.s32.totalorder %s229, %s230
    %p239 = scmp.eq.s32.totalorder %s20, 0
    %p240 = por %p238, %p239
    %p241 = scmp.ne.s32.totalorder %s229, %s230
    %p242 = scmp.eq.s32.totalorder %s21, 2
    %p243 = por %p241, %p242
    %p245 = scmp.ne.s32.totalorder %s230, %s244
    %p246 = scmp.eq.s32.totalorder %s21, 0
    %p247 = por %p245, %p246
    %p248 = scmp.le.s32.totalorder 1, %s15
    %p249 = scmp.lt.s32.totalorder %s15, 4
    %p250 = pnand %p248, %p249
    %p251 = pneg %p250
    // Predicated region
    $region9: #{tpu_custom_call.1} parent=5 // pred_check
      _
    $region10: #{tpu_custom_call.1} parent=5 // pred_check_branch
      %253 = sbr.rel (%p250) target = $region12
    $region11: #{tpu_custom_call.1} parent=5 // pred_region
      %s254 = ssub.s32 %s15, 1
      // Predicated region
      $region13: #{tpu_custom_call.1} parent=11 // pred_check
        %p255 = pneg %p36
      $region14: #{tpu_custom_call.1} parent=11 // pred_check_branch
        %257 = sbr.rel (%p255) target = $region16
      $region15: #{tpu_custom_call.1} parent=11 // pred_region
        _
      $region16: #{tpu_custom_call.1} parent=11 // pred_fallthru
        _
      // Predicated region
      $region17: #{tpu_custom_call.1} parent=11 // pred_check
        %p258 = pneg %p57
      $region18: #{tpu_custom_call.1} parent=11 // pred_check_branch
        %260 = sbr.rel (%p258) target = $region20
      $region19: #{tpu_custom_call.1} parent=11 // pred_region
        _
      $region20: #{tpu_custom_call.1} parent=11 // pred_fallthru
        _
      // Predicated region
      $region21: #{tpu_custom_call.1} parent=11 // pred_check
        %p261 = pneg %p78
      $region22: #{tpu_custom_call.1} parent=11 // pred_check_branch
        %263 = sbr.rel (%p261) target = $region24
      $region23: #{tpu_custom_call.1} parent=11 // pred_region
        _
      $region24: #{tpu_custom_call.1} parent=11 // pred_fallthru
        _
      // Predicated region
      $region25: #{tpu_custom_call.1} parent=11 // pred_check
        %p264 = pneg %p99
      $region26: #{tpu_custom_call.1} parent=11 // pred_check_branch
        %266 = sbr.rel (%p264) target = $region28
      $region27: #{tpu_custom_call.1} parent=11 // pred_region
        _
      $region28: #{tpu_custom_call.1} parent=11 // pred_fallthru
        _
      // Predicated region
      $region29: #{tpu_custom_call.1} parent=11 // pred_check
        %p267 = pneg %p120
      $region30: #{tpu_custom_call.1} parent=11 // pred_check_branch
        %269 = sbr.rel (%p267) target = $region32
      $region31: #{tpu_custom_call.1} parent=11 // pred_region
        _
      $region32: #{tpu_custom_call.1} parent=11 // pred_fallthru
        _
      // Predicated region
      $region33: #{tpu_custom_call.1} parent=11 // pred_check
        %p270 = pneg %p141
      $region34: #{tpu_custom_call.1} parent=11 // pred_check_branch
        %272 = sbr.rel (%p270) target = $region36
      $region35: #{tpu_custom_call.1} parent=11 // pred_region
        _
      $region36: #{tpu_custom_call.1} parent=11 // pred_fallthru
        _
    $region12: #{tpu_custom_call.1} parent=5 // pred_fallthru
      _
    %p273 = scmp.lt.s32.totalorder %s15, 3
    // Predicated region
    $region37: #{tpu_custom_call.1} parent=5 // pred_check
      %p274 = pneg %p273
    $region38: #{tpu_custom_call.1} parent=5 // pred_check_branch
      %276 = sbr.rel (%p274) target = $region40
    $region39: #{tpu_custom_call.1} parent=5 // pred_region
      // Predicated region
      $region41: #{tpu_custom_call.1} parent=39 // pred_check
        %p277 = pneg %p161
      $region42: #{tpu_custom_call.1} parent=39 // pred_check_branch
        %279 = sbr.rel (%p277) target = $region44
      $region43: #{tpu_custom_call.1} parent=39 // pred_region
        %s280 = smul.u32 2, %s15
        %p281 = scmp.lt.s32.totalorder %s280, 5
        %s282 = scalar_select %p281, %s280, 5
        %s283 = smul.addr %s282, 4
        %s284 = scalar_lea.vmem %s6, %s283
        %s285 = smul.u32 2, %s15
      $region44: #{tpu_custom_call.1} parent=39 // pred_fallthru
        _
      // Predicated region
      $region45: #{tpu_custom_call.1} parent=39 // pred_check
        %p286 = pneg %p187
      $region46: #{tpu_custom_call.1} parent=39 // pred_check_branch
        %288 = sbr.rel (%p286) target = $region48
      $region47: #{tpu_custom_call.1} parent=39 // pred_region
        %s289 = smul.u32 2, %s15
        %p290 = scmp.lt.s32.totalorder %s289, 5
        %s291 = scalar_select %p290, %s289, 5
        %s292 = smul.addr %s291, 4
        %s293 = scalar_lea.vmem %s7, %s292
        %s294 = smul.u32 2, %s15
      $region48: #{tpu_custom_call.1} parent=39 // pred_fallthru
        _
      // Predicated region
      $region49: #{tpu_custom_call.1} parent=39 // pred_check
        %p295 = pneg %p213
      $region50: #{tpu_custom_call.1} parent=39 // pred_check_branch
        %297 = sbr.rel (%p295) target = $region52
      $region51: #{tpu_custom_call.1} parent=39 // pred_region
        %s298 = smul.u32 2, %s15
        %p299 = scmp.lt.s32.totalorder %s298, 5
        %s300 = scalar_select %p299, %s298, 5
        %s301 = smul.addr %s300, 4
        %s302 = scalar_lea.vmem %s8, %s301
        %s303 = smul.u32 2, %s15
      $region52: #{tpu_custom_call.1} parent=39 // pred_fallthru
        _
    $region40: #{tpu_custom_call.1} parent=5 // pred_fallthru
      _
    %p304 = scmp.le.s32.totalorder 1, %s15
    %p305 = scmp.lt.s32.totalorder %s15, 4
    %p306 = pnand %p304, %p305
    %p307 = pneg %p306
    // Predicated region
    $region53: #{tpu_custom_call.1} parent=5 // pred_check
      _
    $region54: #{tpu_custom_call.1} parent=5 // pred_check_branch
      %309 = sbr.rel (%p306) target = $region56
    $region55: #{tpu_custom_call.1} parent=5 // pred_region
      %s310 = ssub.s32 %s15, 1
      %p311 = pneg %p36
      %p312 = pneg %p33
      %p313 = pneg %p57
      %p314 = pneg %p54
      %p315 = pneg %p78
      %p316 = pneg %p75
      %p317 = pneg %p99
      %p318 = pneg %p96
      %p319 = pneg %p120
      %p320 = pneg %p117
      %p321 = pneg %p141
      %p322 = pneg %p138
      %s323 = smul.u32 2, %s20
      %p324 = scmp.lt.s32.totalorder %s323, 5
      %s325 = scalar_select %p324, %s323, 5
      %s326 = smul.addr %s325, 4
      %s327 = scalar_lea.vmem %s6, %s326
      %p328 = pneg %p167
      %p329 = pneg %p164
      %s330 = smul.u32 2, %s20
      %p331 = scmp.lt.s32.totalorder %s330, 5
      %s332 = scalar_select %p331, %s330, 5
      %s333 = smul.addr %s332, 4
      %s334 = scalar_lea.vmem %s7, %s333
      %p335 = pneg %p193
      %p336 = pneg %p190
      %s337 = smul.u32 2, %s20
      %p338 = scmp.lt.s32.totalorder %s337, 5
      %s339 = scalar_select %p338, %s337, 5
      %s340 = smul.addr %s339, 4
      %s341 = scalar_lea.vmem %s8, %s340
      %p342 = pneg %p219
      %p343 = pneg %p216
      %p344 = pneg %p240
      %p345 = pneg %p237
      %s346 = smul.u32 2, %s20
      %p347 = scmp.lt.s32.totalorder %s346, 5
      %s348 = scalar_select %p347, %s346, 5
      %s349 = smul.addr %s348, 4
      %s350 = scalar_lea.vmem %s6, %s349
      %s351 = smul.u32 2, %s20
      %s352 = smul.u32 2, %s20
      %p353 = scmp.lt.s32.totalorder %s352, 5
      %s354 = scalar_select %p353, %s352, 5
      %s355 = smul.addr %s354, 4
      %s356 = scalar_lea.vmem %s7, %s355
      %s357 = smul.u32 2, %s20
      %s358 = smul.u32 2, %s20
      %p359 = scmp.lt.s32.totalorder %s358, 5
      %s360 = scalar_select %p359, %s358, 5
      %s361 = smul.addr %s360, 4
      %s362 = scalar_lea.vmem %s8, %s361
      %s363 = smul.u32 2, %s20
      %p365 = scmp.eq.s32.totalorder %s20, 0
      // Predicated region
      $region57: #{tpu_custom_call.1} parent=55 // pred_check
        %p366 = pneg %p365
      $region58: #{tpu_custom_call.1} parent=55 // pred_check_branch
        %368 = sbr.rel (%p366) target = $region60
      $region59: #{tpu_custom_call.1} parent=55 // pred_region
        %v369 = vld [vmem:[%s0] sm:$0xff]
        %v370 = vld [vmem:[%s0 + $0x8] sm:$0xff]
        %v371 = vld [vmem:[%s0 + $0x10] sm:$0xff]
        %v372 = vld [vmem:[%s0 + $0x18] sm:$0xff]
        %v373 = vld [vmem:[%s0 + $0x20] sm:$0xff]
        %v374 = vld [vmem:[%s0 + $0x28] sm:$0xff]
        %v375 = vld [vmem:[%s0 + $0x30] sm:$0xff]
        %v376 = vld [vmem:[%s0 + $0x38] sm:$0xff]
        %v377 = vld [vmem:[%s0 + $0x40] sm:$0xff]
        %v378 = vld [vmem:[%s0 + $0x48] sm:$0xff]
        %v379 = vld [vmem:[%s0 + $0x50] sm:$0xff]
        %v380 = vld [vmem:[%s0 + $0x58] sm:$0xff]
        %v381 = vld [vmem:[%s0 + $0x60] sm:$0xff]
        %v382 = vld [vmem:[%s0 + $0x68] sm:$0xff]
        %v383 = vld [vmem:[%s0 + $0x70] sm:$0xff]
        %v384 = vld [vmem:[%s0 + $0x78] sm:$0xff]
        %v385 = vld [vmem:[%s2] sm:$0xff]
        %v386 = vld [vmem:[%s2 + $0x8] sm:$0xff]
        %v387 = vld [vmem:[%s2 + $0x10] sm:$0xff]
        %v388 = vld [vmem:[%s2 + $0x18] sm:$0xff]
        %vm389 = vcmask 261120
        %v391 = vsel %vm389, %v369, 0
        %v394 = vsel %vm389, %v370, 0
        %v397 = vsel %vm389, %v371, 0
        %v400 = vsel %vm389, %v372, 0
        %v403 = vsel %vm389, %v373, 0
        %v406 = vsel %vm389, %v374, 0
        %v409 = vsel %vm389, %v375, 0
        %v412 = vsel %vm389, %v376, 0
        %v415 = vsel %vm389, %v377, 0
        %v418 = vsel %vm389, %v378, 0
        %v421 = vsel %vm389, %v379, 0
        %v424 = vsel %vm389, %v380, 0
        %v427 = vsel %vm389, %v381, 0
        %v430 = vsel %vm389, %v382, 0
        %v433 = vsel %vm389, %v383, 0
        %v436 = vsel %vm389, %v384, 0
        %438 = vmatprep.subr.mxu0 0.0
        %v439 = vand.u32 %v385, 4294901760
        %440 = vmatpush1.msra.mxu0 %v439
        %441 = vmatprep.subr.mxu0 0.0
        %v442 = vand.u32 %v386, 4294901760
        %443 = vmatpush1.msra.mxu0 %v442
        %444 = vmatprep.subr.mxu0 0.0
        %v445 = vand.u32 %v387, 4294901760
        %446 = vmatpush1.msra.mxu0 %v445
        %447 = vmatprep.subr.mxu0 0.0
        %v448 = vand.u32 %v388, 4294901760
        %449 = vmatpush1.msra.mxu0 %v448
        %450 = vmatprep.subr.mxu0 0.0
        %451 = vmatpush1.msra.mxu0 0.0
        %452 = vmatprep.subr.mxu0 0.0
        %453 = vmatpush1.msra.mxu0 0.0
        %454 = vmatprep.subr.mxu0 0.0
        %455 = vmatpush1.msra.mxu0 0.0
        %456 = vmatprep.subr.mxu0 0.0
        %457 = vmatpush1.msra.mxu0 0.0
        %458 = vmatprep.subr.mxu0 0.0
        %459 = vmatpush1.msra.mxu0 0.0
        %460 = vmatprep.subr.mxu0 0.0
        %461 = vmatpush1.msra.mxu0 0.0
        %462 = vmatprep.subr.mxu0 0.0
        %463 = vmatpush1.msra.mxu0 0.0
        %464 = vmatprep.subr.mxu0 0.0
        %465 = vmatpush1.msra.mxu0 0.0
        %466 = vmatprep.subr.mxu0 0.0
        %467 = vmatpush1.msra.mxu0 0.0
        %468 = vmatprep.subr.mxu0 0.0
        %469 = vmatpush1.msra.mxu0 0.0
        %470 = vmatprep.subr.mxu0 0.0
        %471 = vmatpush1.msra.mxu0 0.0
        %472 = vmatprep.subr.mxu0 0.0
        %473 = vmatpush1.msra.mxu0 0.0
        %474 = vmatprep.subr.mxu0 0.0
        %475 = vmatpush1.msra.mxu0 0.0
        %476 = vmatprep.subr.mxu0 0.0
        %477 = vmatpush1.msra.mxu0 0.0
        %478 = vmatprep.subr.mxu0 0.0
        %479 = vmatpush1.msra.mxu0 0.0
        %480 = vmatprep.subr.mxu0 0.0
        %481 = vmatpush1.msra.mxu0 0.0
        %482 = vmatprep.subr.mxu0 0.0
        %483 = vmatpush1.msra.mxu0 0.0
        %484 = vmatprep.subr.mxu0 0.0
        %485 = vmatpush1.msra.mxu0 0.0
        %486 = vmatprep.subr.mxu0 0.0
        %487 = vmatpush1.msra.mxu0 0.0
        %488 = vmatprep.subr.mxu0 0.0
        %489 = vmatpush1.msra.mxu0 0.0
        %490 = vmatprep.subr.mxu0 0.0
        %491 = vmatpush1.msra.mxu0 0.0
        %492 = vmatprep.subr.mxu0 0.0
        %493 = vmatpush1.msra.mxu0 0.0
        %494 = vmatprep.subr.mxu0 0.0
        %495 = vmatpush1.msra.mxu0 0.0
        %496 = vmatprep.subr.mxu0 0.0
        %497 = vmatpush1.msra.mxu0 0.0
        %498 = vmatprep.subr.mxu0 0.0
        %499 = vmatpush1.msra.mxu0 0.0
        %500 = vmatprep.subr.mxu0 0.0
        %501 = vmatpush1.msra.mxu0 0.0
        %502 = vmatprep.subr.mxu0 0.0
        %503 = vmatpush1.msra.mxu0 0.0
        %504 = vmatprep.subr.mxu0 0.0
        %505 = vmatpush1.msra.mxu0 0.0
        %506 = vmatprep.mubr.f32.mxu0 0.0
        %v507 = vand.u32 %v391, 4294901760
        %v508 = vsub.f32 %v391, %v507
        %v509 = vand.u32 %v508, 4294901760
        %v510 = vsub.f32 %v508, %v509
        %v511 = vand.u32 %v510, 4294901760
        %512 = vmatmul.mubr.f32.gmra.mrb[0].mxu0 %v511
        %v513 = vpop.f32.mrb[0].mxu0
        %v514 = vadd.f32 0.0, %v513
        %v515 = vpop.f32.mrb[0].mxu0
        %516 = vmatprep.mubr.f32.mxu0 0.0
        %v517 = vand.u32 %v394, 4294901760
        %v518 = vsub.f32 %v394, %v517
        %v519 = vand.u32 %v518, 4294901760
        %v520 = vsub.f32 %v518, %v519
        %v521 = vand.u32 %v520, 4294901760
        %522 = vmatmul.mubr.f32.gmra.mrb[0].mxu0 %v521
        %v523 = vpop.f32.mrb[0].mxu0
        %v524 = vadd.f32 0.0, %v523
        %v525 = vpop.f32.mrb[0].mxu0
        %526 = vmatprep.mubr.f32.mxu0 0.0
        %v527 = vand.u32 %v397, 4294901760
        %v528 = vsub.f32 %v397, %v527
        %v529 = vand.u32 %v528, 4294901760
        %v530 = vsub.f32 %v528, %v529
        %v531 = vand.u32 %v530, 4294901760
        %532 = vmatmul.mubr.f32.gmra.mrb[0].mxu0 %v531
        %v533 = vpop.f32.mrb[0].mxu0
        %v534 = vadd.f32 0.0, %v533
        %v535 = vpop.f32.mrb[0].mxu0
        %536 = vmatprep.mubr.f32.mxu0 0.0
        %v537 = vand.u32 %v400, 4294901760
        %v538 = vsub.f32 %v400, %v537
        %v539 = vand.u32 %v538, 4294901760
        %v540 = vsub.f32 %v538, %v539
        %v541 = vand.u32 %v540, 4294901760
        %542 = vmatmul.mubr.f32.gmra.mrb[0].mxu0 %v541
        %v543 = vpop.f32.mrb[0].mxu0
        %v544 = vadd.f32 0.0, %v543
        %v545 = vpop.f32.mrb[0].mxu0
        %546 = vmatprep.mubr.f32.mxu0 0.0
        %v547 = vand.u32 %v403, 4294901760
        %v548 = vsub.f32 %v403, %v547
        %v549 = vand.u32 %v548, 4294901760
        %v550 = vsub.f32 %v548, %v549
        %v551 = vand.u32 %v550, 4294901760
        %552 = vmatmul.mubr.f32.gmra.mrb[0].mxu0 %v551
        %v553 = vpop.f32.mrb[0].mxu0
        %v554 = vadd.f32 0.0, %v553
        %v555 = vpop.f32.mrb[0].mxu0
        %556 = vmatprep.mubr.f32.mxu0 0.0
        %v557 = vand.u32 %v406, 4294901760
        %v558 = vsub.f32 %v406, %v557
        %v559 = vand.u32 %v558, 4294901760
        %v560 = vsub.f32 %v558, %v559
        %v561 = vand.u32 %v560, 4294901760
        %562 = vmatmul.mubr.f32.gmra.mrb[0].mxu0 %v561
        %v563 = vpop.f32.mrb[0].mxu0
        %v564 = vadd.f32 0.0, %v563
        %v565 = vpop.f32.mrb[0].mxu0
        %566 = vmatprep.mubr.f32.mxu0 0.0
        %v567 = vand.u32 %v409, 4294901760
        %v568 = vsub.f32 %v409, %v567
        %v569 = vand.u32 %v568, 4294901760
        %v570 = vsub.f32 %v568, %v569
        %v571 = vand.u32 %v570, 4294901760
        %572 = vmatmul.mubr.f32.gmra.mrb[0].mxu0 %v571
        %v573 = vpop.f32.mrb[0].mxu0
        %v574 = vadd.f32 0.0, %v573
        %v575 = vpop.f32.mrb[0].mxu0
        %576 = vmatprep.mubr.f32.mxu0 0.0
        %v577 = vand.u32 %v412, 4294901760
        %v578 = vsub.f32 %v412, %v577
        %v579 = vand.u32 %v578, 4294901760
        %v580 = vsub.f32 %v578, %v579
        %v581 = vand.u32 %v580, 4294901760
        %582 = vmatmul.mubr.f32.gmra.mrb[0].mxu0 %v581
        %v583 = vpop.f32.mrb[0].mxu0
        %v584 = vadd.f32 0.0, %v583
        %v585 = vpop.f32.mrb[0].mxu0
        %586 = vmatprep.mubr.f32.mxu0 0.0
        %v587 = vand.u32 %v415, 4294901760
        %v588 = vsub.f32 %v415, %v587
        %v589 = vand.u32 %v588, 4294901760
        %v590 = vsub.f32 %v588, %v589
        %v591 = vand.u32 %v590, 4294901760
        %592 = vmatmul.mubr.f32.gmra.mrb[0].mxu0 %v591
        %v593 = vpop.f32.mrb[0].mxu0
        %v594 = vadd.f32 0.0, %v593
        %v595 = vpop.f32.mrb[0].mxu0
        %596 = vmatprep.mubr.f32.mxu0 0.0
        %v597 = vand.u32 %v418, 4294901760
        %v598 = vsub.f32 %v418, %v597
        %v599 = vand.u32 %v598, 4294901760
        %v600 = vsub.f32 %v598, %v599
        %v601 = vand.u32 %v600, 4294901760
        %602 = vmatmul.mubr.f32.gmra.mrb[0].mxu0 %v601
        %v603 = vpop.f32.mrb[0].mxu0
        %v604 = vadd.f32 0.0, %v603
        %v605 = vpop.f32.mrb[0].mxu0
        %606 = vmatprep.mubr.f32.mxu0 0.0
        %v607 = vand.u32 %v421, 4294901760
        %v608 = vsub.f32 %v421, %v607
        %v609 = vand.u32 %v608, 4294901760
        %v610 = vsub.f32 %v608, %v609
        %v611 = vand.u32 %v610, 4294901760
        %612 = vmatmul.mubr.f32.gmra.mrb[0].mxu0 %v611
        %v613 = vpop.f32.mrb[0].mxu0
        %v614 = vadd.f32 0.0, %v613
        %v615 = vpop.f32.mrb[0].mxu0
        %616 = vmatprep.mubr.f32.mxu0 0.0
        %v617 = vand.u32 %v424, 4294901760
        %v618 = vsub.f32 %v424, %v617
        %v619 = vand.u32 %v618, 4294901760
        %v620 = vsub.f32 %v618, %v619
        %v621 = vand.u32 %v620, 4294901760
        %622 = vmatmul.mubr.f32.gmra.mrb[0].mxu0 %v621
        %v623 = vpop.f32.mrb[0].mxu0
        %v624 = vadd.f32 0.0, %v623
        %v625 = vpop.f32.mrb[0].mxu0
        %626 = vmatprep.mubr.f32.mxu0 0.0
        %v627 = vand.u32 %v427, 4294901760
        %v628 = vsub.f32 %v427, %v627
        %v629 = vand.u32 %v628, 4294901760
        %v630 = vsub.f32 %v628, %v629
        %v631 = vand.u32 %v630, 4294901760
        %632 = vmatmul.mubr.f32.gmra.mrb[0].mxu0 %v631
        %v633 = vpop.f32.mrb[0].mxu0
        %v634 = vadd.f32 0.0, %v633
        %v635 = vpop.f32.mrb[0].mxu0
        %636 = vmatprep.mubr.f32.mxu0 0.0
        %v637 = vand.u32 %v430, 4294901760
        %v638 = vsub.f32 %v430, %v637
        %v639 = vand.u32 %v638, 4294901760
        %v640 = vsub.f32 %v638, %v639
        %v641 = vand.u32 %v640, 4294901760
        %642 = vmatmul.mubr.f32.gmra.mrb[0].mxu0 %v641
        %v643 = vpop.f32.mrb[0].mxu0
        %v644 = vadd.f32 0.0, %v643
        %v645 = vpop.f32.mrb[0].mxu0
        %646 = vmatprep.mubr.f32.mxu0 0.0
        %v647 = vand.u32 %v433, 4294901760
        %v648 = vsub.f32 %v433, %v647
        %v649 = vand.u32 %v648, 4294901760
        %v650 = vsub.f32 %v648, %v649
        %v651 = vand.u32 %v650, 4294901760
        %652 = vmatmul.mubr.f32.gmra.mrb[0].mxu0 %v651
        %v653 = vpop.f32.mrb[0].mxu0
        %v654 = vadd.f32 0.0, %v653
        %v655 = vpop.f32.mrb[0].mxu0
        %656 = vmatprep.mubr.f32.mxu0 0.0
        %v657 = vand.u32 %v436, 4294901760
        %v658 = vsub.f32 %v436, %v657
        %v659 = vand.u32 %v658, 4294901760
        %v660 = vsub.f32 %v658, %v659
        %v661 = vand.u32 %v660, 4294901760
        %662 = vmatmul.mubr.f32.gmra.mrb[0].mxu0 %v661
        %v663 = vpop.f32.mrb[0].mxu0
        %v664 = vadd.f32 0.0, %v663
        %v665 = vpop.f32.mrb[0].mxu0
        %666 = vdwg.mxu0
        %667 = vmatprep.subr.mxu0 0.0
        %v668 = vand.u32 %v385, 4294901760
        %v669 = vsub.f32 %v385, %v668
        %v670 = vand.u32 %v669, 4294901760
        %v671 = vsub.f32 %v669, %v670
        %v672 = vand.u32 %v671, 4294901760
        %673 = vmatpush1.msra.mxu0 %v672
        %674 = vmatprep.subr.mxu0 0.0
        %v675 = vand.u32 %v386, 4294901760
        %v676 = vsub.f32 %v386, %v675
        %v677 = vand.u32 %v676, 4294901760
        %v678 = vsub.f32 %v676, %v677
        %v679 = vand.u32 %v678, 4294901760
        %680 = vmatpush1.msra.mxu0 %v679
        %681 = vmatprep.subr.mxu0 0.0
        %v682 = vand.u32 %v387, 4294901760
        %v683 = vsub.f32 %v387, %v682
        %v684 = vand.u32 %v683, 4294901760
        %v685 = vsub.f32 %v683, %v684
        %v686 = vand.u32 %v685, 4294901760
        %687 = vmatpush1.msra.mxu0 %v686
        %688 = vmatprep.subr.mxu0 0.0
        %v689 = vand.u32 %v388, 4294901760
        %v690 = vsub.f32 %v388, %v689
        %v691 = vand.u32 %v690, 4294901760
        %v692 = vsub.f32 %v690, %v691
        %v693 = vand.u32 %v692, 4294901760
        %694 = vmatpush1.msra.mxu0 %v693
        %695 = vmatprep.subr.mxu0 0.0
        %696 = vmatpush1.msra.mxu0 0.0
        %697 = vmatprep.subr.mxu0 0.0
        %698 = vmatpush1.msra.mxu0 0.0
        %699 = vmatprep.subr.mxu0 0.0
        %700 = vmatpush1.msra.mxu0 0.0
        %701 = vmatprep.subr.mxu0 0.0
        %702 = vmatpush1.msra.mxu0 0.0
        %703 = vmatprep.subr.mxu0 0.0
        %704 = vmatpush1.msra.mxu0 0.0
        %705 = vmatprep.subr.mxu0 0.0
        %706 = vmatpush1.msra.mxu0 0.0
        %707 = vmatprep.subr.mxu0 0.0
        %708 = vmatpush1.msra.mxu0 0.0
        %709 = vmatprep.subr.mxu0 0.0
        %710 = vmatpush1.msra.mxu0 0.0
        %711 = vmatprep.subr.mxu0 0.0
        %712 = vmatpush1.msra.mxu0 0.0
        %713 = vmatprep.subr.mxu0 0.0
        %714 = vmatpush1.msra.mxu0 0.0
        %715 = vmatprep.subr.mxu0 0.0
        %716 = vmatpush1.msra.mxu0 0.0
        %717 = vmatprep.subr.mxu0 0.0
        %718 = vmatpush1.msra.mxu0 0.0
        %719 = vmatprep.subr.mxu0 0.0
        %720 = vmatpush1.msra.mxu0 0.0
        %721 = vmatprep.subr.mxu0 0.0
        %722 = vmatpush1.msra.mxu0 0.0
        %723 = vmatprep.subr.mxu0 0.0
        %724 = vmatpush1.msra.mxu0 0.0
        %725 = vmatprep.subr.mxu0 0.0
        %726 = vmatpush1.msra.mxu0 0.0
        %727 = vmatprep.subr.mxu0 0.0
        %728 = vmatpush1.msra.mxu0 0.0
        %729 = vmatprep.subr.mxu0 0.0
        %730 = vmatpush1.msra.mxu0 0.0
        %731 = vmatprep.subr.mxu0 0.0
        %732 = vmatpush1.msra.mxu0 0.0
        %733 = vmatprep.subr.mxu0 0.0
        %734 = vmatpush1.msra.mxu0 0.0
        %735 = vmatprep.subr.mxu0 0.0
        %736 = vmatpush1.msra.mxu0 0.0
        %737 = vmatprep.subr.mxu0 0.0
        %738 = vmatpush1.msra.mxu0 0.0
        %739 = vmatprep.subr.mxu0 0.0
        %740 = vmatpush1.msra.mxu0 0.0
        %741 = vmatprep.subr.mxu0 0.0
        %742 = vmatpush1.msra.mxu0 0.0
        %743 = vmatprep.subr.mxu0 0.0
        %744 = vmatpush1.msra.mxu0 0.0
        %745 = vmatprep.subr.mxu0 0.0
        %746 = vmatpush1.msra.mxu0 0.0
        %747 = vmatprep.subr.mxu0 0.0
        %748 = vmatpush1.msra.mxu0 0.0
        %749 = vmatprep.subr.mxu0 0.0
        %750 = vmatpush1.msra.mxu0 0.0
        %751 = vmatprep.mubr.f32.mxu0 0.0
        %v752 = vand.u32 %v391, 4294901760
        %753 = vmatmul.mubr.f32.gmra.mrb[0].mxu0 %v752
        %v754 = vpop.f32.mrb[0].mxu0
        %v755 = vadd.f32 %v514, %v754
        %v756 = vpop.f32.mrb[0].mxu0
        %757 = vmatprep.mubr.f32.mxu0 0.0
        %v758 = vand.u32 %v394, 4294901760
        %759 = vmatmul.mubr.f32.gmra.mrb[0].mxu0 %v758
        %v760 = vpop.f32.mrb[0].mxu0
        %v761 = vadd.f32 %v524, %v760
        %v762 = vpop.f32.mrb[0].mxu0
        %763 = vmatprep.mubr.f32.mxu0 0.0
        %v764 = vand.u32 %v397, 4294901760
        %765 = vmatmul.mubr.f32.gmra.mrb[0].mxu0 %v764
        %v766 = vpop.f32.mrb[0].mxu0
        %v767 = vadd.f32 %v534, %v766
        %v768 = vpop.f32.mrb[0].mxu0
        %769 = vmatprep.mubr.f32.mxu0 0.0
        %v770 = vand.u32 %v400, 4294901760
        %771 = vmatmul.mubr.f32.gmra.mrb[0].mxu0 %v770
        %v772 = vpop.f32.mrb[0].mxu0
        %v773 = vadd.f32 %v544, %v772
        %v774 = vpop.f32.mrb[0].mxu0
        %775 = vmatprep.mubr.f32.mxu0 0.0
        %v776 = vand.u32 %v403, 4294901760
        %777 = vmatmul.mubr.f32.gmra.mrb[0].mxu0 %v776
        %v778 = vpop.f32.mrb[0].mxu0
        %v779 = vadd.f32 %v554, %v778
        %v780 = vpop.f32.mrb[0].mxu0
        %781 = vmatprep.mubr.f32.mxu0 0.0
        %v782 = vand.u32 %v406, 4294901760
        %783 = vmatmul.mubr.f32.gmra.mrb[0].mxu0 %v782
        %v784 = vpop.f32.mrb[0].mxu0
        %v785 = vadd.f32 %v564, %v784
        %v786 = vpop.f32.mrb[0].mxu0
        %787 = vmatprep.mubr.f32.mxu0 0.0
        %v788 = vand.u32 %v409, 4294901760
        %789 = vmatmul.mubr.f32.gmra.mrb[0].mxu0 %v788
        %v790 = vpop.f32.mrb[0].mxu0
        %v791 = vadd.f32 %v574, %v790
        %v792 = vpop.f32.mrb[0].mxu0
        %793 = vmatprep.mubr.f32.mxu0 0.0
        %v794 = vand.u32 %v412, 4294901760
        %795 = vmatmul.mubr.f32.gmra.mrb[0].mxu0 %v794
        %v796 = vpop.f32.mrb[0].mxu0
        %v797 = vadd.f32 %v584, %v796
        %v798 = vpop.f32.mrb[0].mxu0
        %799 = vmatprep.mubr.f32.mxu0 0.0
        %v800 = vand.u32 %v415, 4294901760
        %801 = vmatmul.mubr.f32.gmra.mrb[0].mxu0 %v800
        %v802 = vpop.f32.mrb[0].mxu0
        %v803 = vadd.f32 %v594, %v802
        %v804 = vpop.f32.mrb[0].mxu0
        %805 = vmatprep.mubr.f32.mxu0 0.0
        %v806 = vand.u32 %v418, 4294901760
        %807 = vmatmul.mubr.f32.gmra.mrb[0].mxu0 %v806
        %v808 = vpop.f32.mrb[0].mxu0
        %v809 = vadd.f32 %v604, %v808
        %v810 = vpop.f32.mrb[0].mxu0
        %811 = vmatprep.mubr.f32.mxu0 0.0
        %v812 = vand.u32 %v421, 4294901760
        %813 = vmatmul.mubr.f32.gmra.mrb[0].mxu0 %v812
        %v814 = vpop.f32.mrb[0].mxu0
        %v815 = vadd.f32 %v614, %v814
        %v816 = vpop.f32.mrb[0].mxu0
        %817 = vmatprep.mubr.f32.mxu0 0.0
        %v818 = vand.u32 %v424, 4294901760
        %819 = vmatmul.mubr.f32.gmra.mrb[0].mxu0 %v818
        %v820 = vpop.f32.mrb[0].mxu0
        %v821 = vadd.f32 %v624, %v820
        %v822 = vpop.f32.mrb[0].mxu0
        %823 = vmatprep.mubr.f32.mxu0 0.0
        %v824 = vand.u32 %v427, 4294901760
        %825 = vmatmul.mubr.f32.gmra.mrb[0].mxu0 %v824
        %v826 = vpop.f32.mrb[0].mxu0
        %v827 = vadd.f32 %v634, %v826
        %v828 = vpop.f32.mrb[0].mxu0
        %829 = vmatprep.mubr.f32.mxu0 0.0
        %v830 = vand.u32 %v430, 4294901760
        %831 = vmatmul.mubr.f32.gmra.mrb[0].mxu0 %v830
        %v832 = vpop.f32.mrb[0].mxu0
        %v833 = vadd.f32 %v644, %v832
        %v834 = vpop.f32.mrb[0].mxu0
        %835 = vmatprep.mubr.f32.mxu0 0.0
        %v836 = vand.u32 %v433, 4294901760
        %837 = vmatmul.mubr.f32.gmra.mrb[0].mxu0 %v836
        %v838 = vpop.f32.mrb[0].mxu0
        %v839 = vadd.f32 %v654, %v838
        %v840 = vpop.f32.mrb[0].mxu0
        %841 = vmatprep.mubr.f32.mxu0 0.0
        %v842 = vand.u32 %v436, 4294901760
        %843 = vmatmul.mubr.f32.gmra.mrb[0].mxu0 %v842
        %v844 = vpop.f32.mrb[0].mxu0
        %v845 = vadd.f32 %v664, %v844
        %v846 = vpop.f32.mrb[0].mxu0
        %847 = vdwg.mxu0
        %848 = vmatprep.subr.mxu0 0.0
        %v849 = vand.u32 %v385, 4294901760
        %v850 = vsub.f32 %v385, %v849
        %851 = vmatpush1.msra.mxu0 %v850
        %852 = vmatprep.subr.mxu0 0.0
        %v853 = vand.u32 %v386, 4294901760
        %v854 = vsub.f32 %v386, %v853
        %855 = vmatpush1.msra.mxu0 %v854
        %856 = vmatprep.subr.mxu0 0.0
        %v857 = vand.u32 %v387, 4294901760
        %v858 = vsub.f32 %v387, %v857
        %859 = vmatpush1.msra.mxu0 %v858
        %860 = vmatprep.subr.mxu0 0.0
        %v861 = vand.u32 %v388, 4294901760
        %v862 = vsub.f32 %v388, %v861
        %863 = vmatpush1.msra.mxu0 %v862
        %864 = vmatprep.subr.mxu0 0.0
        %865 = vmatpush1.msra.mxu0 0.0
        %866 = vmatprep.subr.mxu0 0.0
        %867 = vmatpush1.msra.mxu0 0.0
        %868 = vmatprep.subr.mxu0 0.0
        %869 = vmatpush1.msra.mxu0 0.0
        %870 = vmatprep.subr.mxu0 0.0
        %871 = vmatpush1.msra.mxu0 0.0
        %872 = vmatprep.subr.mxu0 0.0
        %873 = vmatpush1.msra.mxu0 0.0
        %874 = vmatprep.subr.mxu0 0.0
        %875 = vmatpush1.msra.mxu0 0.0
        %876 = vmatprep.subr.mxu0 0.0
        %877 = vmatpush1.msra.mxu0 0.0
        %878 = vmatprep.subr.mxu0 0.0
        %879 = vmatpush1.msra.mxu0 0.0
        %880 = vmatprep.subr.mxu0 0.0
        %881 = vmatpush1.msra.mxu0 0.0
        %882 = vmatprep.subr.mxu0 0.0
        %883 = vmatpush1.msra.mxu0 0.0
        %884 = vmatprep.subr.mxu0 0.0
        %885 = vmatpush1.msra.mxu0 0.0
        %886 = vmatprep.subr.mxu0 0.0
        %887 = vmatpush1.msra.mxu0 0.0
        %888 = vmatprep.subr.mxu0 0.0
        %889 = vmatpush1.msra.mxu0 0.0
        %890 = vmatprep.subr.mxu0 0.0
        %891 = vmatpush1.msra.mxu0 0.0
        %892 = vmatprep.subr.mxu0 0.0
        %893 = vmatpush1.msra.mxu0 0.0
        %894 = vmatprep.subr.mxu0 0.0
        %895 = vmatpush1.msra.mxu0 0.0
        %896 = vmatprep.subr.mxu0 0.0
        %897 = vmatpush1.msra.mxu0 0.0
        %898 = vmatprep.subr.mxu0 0.0
        %899 = vmatpush1.msra.mxu0 0.0
        %900 = vmatprep.subr.mxu0 0.0
        %901 = vmatpush1.msra.mxu0 0.0
        %902 = vmatprep.subr.mxu0 0.0
        %903 = vmatpush1.msra.mxu0 0.0
        %904 = vmatprep.subr.mxu0 0.0
        %905 = vmatpush1.msra.mxu0 0.0
        %906 = vmatprep.subr.mxu0 0.0
        %907 = vmatpush1.msra.mxu0 0.0
        %908 = vmatprep.subr.mxu0 0.0
        %909 = vmatpush1.msra.mxu0 0.0
        %910 = vmatprep.subr.mxu0 0.0
        %911 = vmatpush1.msra.mxu0 0.0
        %912 = vmatprep.subr.mxu0 0.0
        %913 = vmatpush1.msra.mxu0 0.0
        %914 = vmatprep.subr.mxu0 0.0
        %915 = vmatpush1.msra.mxu0 0.0
        %916 = vmatprep.subr.mxu0 0.0
        %917 = vmatpush1.msra.mxu0 0.0
        %918 = vmatprep.subr.mxu0 0.0
        %919 = vmatpush1.msra.mxu0 0.0
        %920 = vmatprep.mubr.f32.mxu0 0.0
        %v921 = vand.u32 %v391, 4294901760
        %v922 = vsub.f32 %v391, %v921
        %923 = vmatmul.mubr.f32.gmra.mrb[0].mxu0 %v922
        %v924 = vpop.f32.mrb[0].mxu0
        %v925 = vadd.f32 %v755, %v924
        %v926 = vpop.f32.mrb[0].mxu0
        %927 = vmatprep.mubr.f32.mxu0 0.0
        %v928 = vand.u32 %v394, 4294901760
        %v929 = vsub.f32 %v394, %v928
        %930 = vmatmul.mubr.f32.gmra.mrb[0].mxu0 %v929
        %v931 = vpop.f32.mrb[0].mxu0
        %v932 = vadd.f32 %v761, %v931
        %v933 = vpop.f32.mrb[0].mxu0
        %934 = vmatprep.mubr.f32.mxu0 0.0
        %v935 = vand.u32 %v397, 4294901760
        %v936 = vsub.f32 %v397, %v935
        %937 = vmatmul.mubr.f32.gmra.mrb[0].mxu0 %v936
        %v938 = vpop.f32.mrb[0].mxu0
        %v939 = vadd.f32 %v767, %v938
        %v940 = vpop.f32.mrb[0].mxu0
        %941 = vmatprep.mubr.f32.mxu0 0.0
        %v942 = vand.u32 %v400, 4294901760
        %v943 = vsub.f32 %v400, %v942
        %944 = vmatmul.mubr.f32.gmra.mrb[0].mxu0 %v943
        %v945 = vpop.f32.mrb[0].mxu0
        %v946 = vadd.f32 %v773, %v945
        %v947 = vpop.f32.mrb[0].mxu0
        %948 = vmatprep.mubr.f32.mxu0 0.0
        %v949 = vand.u32 %v403, 4294901760
        %v950 = vsub.f32 %v403, %v949
        %951 = vmatmul.mubr.f32.gmra.mrb[0].mxu0 %v950
        %v952 = vpop.f32.mrb[0].mxu0
        %v953 = vadd.f32 %v779, %v952
        %v954 = vpop.f32.mrb[0].mxu0
        %955 = vmatprep.mubr.f32.mxu0 0.0
        %v956 = vand.u32 %v406, 4294901760
        %v957 = vsub.f32 %v406, %v956
        %958 = vmatmul.mubr.f32.gmra.mrb[0].mxu0 %v957
        %v959 = vpop.f32.mrb[0].mxu0
        %v960 = vadd.f32 %v785, %v959
        %v961 = vpop.f32.mrb[0].mxu0
        %962 = vmatprep.mubr.f32.mxu0 0.0
        %v963 = vand.u32 %v409, 4294901760
        %v964 = vsub.f32 %v409, %v963
        %965 = vmatmul.mubr.f32.gmra.mrb[0].mxu0 %v964
        %v966 = vpop.f32.mrb[0].mxu0
        %v967 = vadd.f32 %v791, %v966
        %v968 = vpop.f32.mrb[0].mxu0
        %969 = vmatprep.mubr.f32.mxu0 0.0
        %v970 = vand.u32 %v412, 4294901760
        %v971 = vsub.f32 %v412, %v970
        %972 = vmatmul.mubr.f32.gmra.mrb[0].mxu0 %v971
        %v973 = vpop.f32.mrb[0].mxu0
        %v974 = vadd.f32 %v797, %v973
        %v975 = vpop.f32.mrb[0].mxu0
        %976 = vmatprep.mubr.f32.mxu0 0.0
        %v977 = vand.u32 %v415, 4294901760
        %v978 = vsub.f32 %v415, %v977
        %979 = vmatmul.mubr.f32.gmra.mrb[0].mxu0 %v978
        %v980 = vpop.f32.mrb[0].mxu0
        %v981 = vadd.f32 %v803, %v980
        %v982 = vpop.f32.mrb[0].mxu0
        %983 = vmatprep.mubr.f32.mxu0 0.0
        %v984 = vand.u32 %v418, 4294901760
        %v985 = vsub.f32 %v418, %v984
        %986 = vmatmul.mubr.f32.gmra.mrb[0].mxu0 %v985
        %v987 = vpop.f32.mrb[0].mxu0
        %v988 = vadd.f32 %v809, %v987
        %v989 = vpop.f32.mrb[0].mxu0
        %990 = vmatprep.mubr.f32.mxu0 0.0
        %v991 = vand.u32 %v421, 4294901760
        %v992 = vsub.f32 %v421, %v991
        %993 = vmatmul.mubr.f32.gmra.mrb[0].mxu0 %v992
        %v994 = vpop.f32.mrb[0].mxu0
        %v995 = vadd.f32 %v815, %v994
        %v996 = vpop.f32.mrb[0].mxu0
        %997 = vmatprep.mubr.f32.mxu0 0.0
        %v998 = vand.u32 %v424, 4294901760
        %v999 = vsub.f32 %v424, %v998
        %1000 = vmatmul.mubr.f32.gmra.mrb[0].mxu0 %v999
        %v1001 = vpop.f32.mrb[0].mxu0
        %v1002 = vadd.f32 %v821, %v1001
        %v1003 = vpop.f32.mrb[0].mxu0
        %1004 = vmatprep.mubr.f32.mxu0 0.0
        %v1005 = vand.u32 %v427, 4294901760
        %v1006 = vsub.f32 %v427, %v1005
        %1007 = vmatmul.mubr.f32.gmra.mrb[0].mxu0 %v1006
        %v1008 = vpop.f32.mrb[0].mxu0
        %v1009 = vadd.f32 %v827, %v1008
        %v1010 = vpop.f32.mrb[0].mxu0
        %1011 = vmatprep.mubr.f32.mxu0 0.0
        %v1012 = vand.u32 %v430, 4294901760
        %v1013 = vsub.f32 %v430, %v1012
        %1014 = vmatmul.mubr.f32.gmra.mrb[0].mxu0 %v1013
        %v1015 = vpop.f32.mrb[0].mxu0
        %v1016 = vadd.f32 %v833, %v1015
        %v1017 = vpop.f32.mrb[0].mxu0
        %1018 = vmatprep.mubr.f32.mxu0 0.0
        %v1019 = vand.u32 %v433, 4294901760
        %v1020 = vsub.f32 %v433, %v1019
        %1021 = vmatmul.mubr.f32.gmra.mrb[0].mxu0 %v1020
        %v1022 = vpop.f32.mrb[0].mxu0
        %v1023 = vadd.f32 %v839, %v1022
        %v1024 = vpop.f32.mrb[0].mxu0
        %1025 = vmatprep.mubr.f32.mxu0 0.0
        %v1026 = vand.u32 %v436, 4294901760
        %v1027 = vsub.f32 %v436, %v1026
        %1028 = vmatmul.mubr.f32.gmra.mrb[0].mxu0 %v1027
        %v1029 = vpop.f32.mrb[0].mxu0
        %v1030 = vadd.f32 %v845, %v1029
        %v1031 = vpop.f32.mrb[0].mxu0
        %1032 = vdwg.mxu0
        %1033 = vmatprep.subr.mxu0 0.0
        %v1034 = vand.u32 %v385, 4294901760
        %1035 = vmatpush1.msra.mxu0 %v1034
        %1036 = vmatprep.subr.mxu0 0.0
        %v1037 = vand.u32 %v386, 4294901760
        %1038 = vmatpush1.msra.mxu0 %v1037
        %1039 = vmatprep.subr.mxu0 0.0
        %v1040 = vand.u32 %v387, 4294901760
        %1041 = vmatpush1.msra.mxu0 %v1040
        %1042 = vmatprep.subr.mxu0 0.0
        %v1043 = vand.u32 %v388, 4294901760
        %1044 = vmatpush1.msra.mxu0 %v1043
        %1045 = vmatprep.subr.mxu0 0.0
        %1046 = vmatpush1.msra.mxu0 0.0
        %1047 = vmatprep.subr.mxu0 0.0
        %1048 = vmatpush1.msra.mxu0 0.0
        %1049 = vmatprep.subr.mxu0 0.0
        %1050 = vmatpush1.msra.mxu0 0.0
        %1051 = vmatprep.subr.mxu0 0.0
        %1052 = vmatpush1.msra.mxu0 0.0
        %1053 = vmatprep.subr.mxu0 0.0
        %1054 = vmatpush1.msra.mxu0 0.0
        %1055 = vmatprep.subr.mxu0 0.0
        %1056 = vmatpush1.msra.mxu0 0.0
        %1057 = vmatprep.subr.mxu0 0.0
        %1058 = vmatpush1.msra.mxu0 0.0
        %1059 = vmatprep.subr.mxu0 0.0
        %1060 = vmatpush1.msra.mxu0 0.0
        %1061 = vmatprep.subr.mxu0 0.0
        %1062 = vmatpush1.msra.mxu0 0.0
        %1063 = vmatprep.subr.mxu0 0.0
        %1064 = vmatpush1.msra.mxu0 0.0
        %1065 = vmatprep.subr.mxu0 0.0
        %1066 = vmatpush1.msra.mxu0 0.0
        %1067 = vmatprep.subr.mxu0 0.0
        %1068 = vmatpush1.msra.mxu0 0.0
        %1069 = vmatprep.subr.mxu0 0.0
        %1070 = vmatpush1.msra.mxu0 0.0
        %1071 = vmatprep.subr.mxu0 0.0
        %1072 = vmatpush1.msra.mxu0 0.0
        %1073 = vmatprep.subr.mxu0 0.0
        %1074 = vmatpush1.msra.mxu0 0.0
        %1075 = vmatprep.subr.mxu0 0.0
        %1076 = vmatpush1.msra.mxu0 0.0
        %1077 = vmatprep.subr.mxu0 0.0
        %1078 = vmatpush1.msra.mxu0 0.0
        %1079 = vmatprep.subr.mxu0 0.0
        %1080 = vmatpush1.msra.mxu0 0.0
        %1081 = vmatprep.subr.mxu0 0.0
        %1082 = vmatpush1.msra.mxu0 0.0
        %1083 = vmatprep.subr.mxu0 0.0
        %1084 = vmatpush1.msra.mxu0 0.0
        %1085 = vmatprep.subr.mxu0 0.0
        %1086 = vmatpush1.msra.mxu0 0.0
        %1087 = vmatprep.subr.mxu0 0.0
        %1088 = vmatpush1.msra.mxu0 0.0
        %1089 = vmatprep.subr.mxu0 0.0
        %1090 = vmatpush1.msra.mxu0 0.0
        %1091 = vmatprep.subr.mxu0 0.0
        %1092 = vmatpush1.msra.mxu0 0.0
        %1093 = vmatprep.subr.mxu0 0.0
        %1094 = vmatpush1.msra.mxu0 0.0
        %1095 = vmatprep.subr.mxu0 0.0
        %1096 = vmatpush1.msra.mxu0 0.0
        %1097 = vmatprep.subr.mxu0 0.0
        %1098 = vmatpush1.msra.mxu0 0.0
        %1099 = vmatprep.subr.mxu0 0.0
        %1100 = vmatpush1.msra.mxu0 0.0
        %1101 = vmatprep.mubr.f32.mxu0 0.0
        %v1102 = vand.u32 %v391, 4294901760
        %v1103 = vsub.f32 %v391, %v1102
        %v1104 = vand.u32 %v1103, 4294901760
        %1105 = vmatmul.mubr.f32.gmra.mrb[0].mxu0 %v1104
        %v1106 = vpop.f32.mrb[0].mxu0
        %v1107 = vadd.f32 %v925, %v1106
        %v1108 = vpop.f32.mrb[0].mxu0
        %1109 = vmatprep.mubr.f32.mxu0 0.0
        %v1110 = vand.u32 %v394, 4294901760
        %v1111 = vsub.f32 %v394, %v1110
        %v1112 = vand.u32 %v1111, 4294901760
        %1113 = vmatmul.mubr.f32.gmra.mrb[0].mxu0 %v1112
        %v1114 = vpop.f32.mrb[0].mxu0
        %v1115 = vadd.f32 %v932, %v1114
        %v1116 = vpop.f32.mrb[0].mxu0
        %1117 = vmatprep.mubr.f32.mxu0 0.0
        %v1118 = vand.u32 %v397, 4294901760
        %v1119 = vsub.f32 %v397, %v1118
        %v1120 = vand.u32 %v1119, 4294901760
        %1121 = vmatmul.mubr.f32.gmra.mrb[0].mxu0 %v1120
        %v1122 = vpop.f32.mrb[0].mxu0
        %v1123 = vadd.f32 %v939, %v1122
        %v1124 = vpop.f32.mrb[0].mxu0
        %1125 = vmatprep.mubr.f32.mxu0 0.0
        %v1126 = vand.u32 %v400, 4294901760
        %v1127 = vsub.f32 %v400, %v1126
        %v1128 = vand.u32 %v1127, 4294901760
        %1129 = vmatmul.mubr.f32.gmra.mrb[0].mxu0 %v1128
        %v1130 = vpop.f32.mrb[0].mxu0
        %v1131 = vadd.f32 %v946, %v1130
        %v1132 = vpop.f32.mrb[0].mxu0
        %1133 = vmatprep.mubr.f32.mxu0 0.0
        %v1134 = vand.u32 %v403, 4294901760
        %v1135 = vsub.f32 %v403, %v1134
        %v1136 = vand.u32 %v1135, 4294901760
        %1137 = vmatmul.mubr.f32.gmra.mrb[0].mxu0 %v1136
        %v1138 = vpop.f32.mrb[0].mxu0
        %v1139 = vadd.f32 %v953, %v1138
        %v1140 = vpop.f32.mrb[0].mxu0
        %1141 = vmatprep.mubr.f32.mxu0 0.0
        %v1142 = vand.u32 %v406, 4294901760
        %v1143 = vsub.f32 %v406, %v1142
        %v1144 = vand.u32 %v1143, 4294901760
        %1145 = vmatmul.mubr.f32.gmra.mrb[0].mxu0 %v1144
        %v1146 = vpop.f32.mrb[0].mxu0
        %v1147 = vadd.f32 %v960, %v1146
        %v1148 = vpop.f32.mrb[0].mxu0
        %1149 = vmatprep.mubr.f32.mxu0 0.0
        %v1150 = vand.u32 %v409, 4294901760
        %v1151 = vsub.f32 %v409, %v1150
        %v1152 = vand.u32 %v1151, 4294901760
        %1153 = vmatmul.mubr.f32.gmra.mrb[0].mxu0 %v1152
        %v1154 = vpop.f32.mrb[0].mxu0
        %v1155 = vadd.f32 %v967, %v1154
        %v1156 = vpop.f32.mrb[0].mxu0
        %1157 = vmatprep.mubr.f32.mxu0 0.0
        %v1158 = vand.u32 %v412, 4294901760
        %v1159 = vsub.f32 %v412, %v1158
        %v1160 = vand.u32 %v1159, 4294901760
        %1161 = vmatmul.mubr.f32.gmra.mrb[0].mxu0 %v1160
        %v1162 = vpop.f32.mrb[0].mxu0
        %v1163 = vadd.f32 %v974, %v1162
        %v1164 = vpop.f32.mrb[0].mxu0
        %1165 = vmatprep.mubr.f32.mxu0 0.0
        %v1166 = vand.u32 %v415, 4294901760
        %v1167 = vsub.f32 %v415, %v1166
        %v1168 = vand.u32 %v1167, 4294901760
        %1169 = vmatmul.mubr.f32.gmra.mrb[0].mxu0 %v1168
        %v1170 = vpop.f32.mrb[0].mxu0
        %v1171 = vadd.f32 %v981, %v1170
        %v1172 = vpop.f32.mrb[0].mxu0
        %1173 = vmatprep.mubr.f32.mxu0 0.0
        %v1174 = vand.u32 %v418, 4294901760
        %v1175 = vsub.f32 %v418, %v1174
        %v1176 = vand.u32 %v1175, 4294901760
        %1177 = vmatmul.mubr.f32.gmra.mrb[0].mxu0 %v1176
        %v1178 = vpop.f32.mrb[0].mxu0
        %v1179 = vadd.f32 %v988, %v1178
        %v1180 = vpop.f32.mrb[0].mxu0
        %1181 = vmatprep.mubr.f32.mxu0 0.0
        %v1182 = vand.u32 %v421, 4294901760
        %v1183 = vsub.f32 %v421, %v1182
        %v1184 = vand.u32 %v1183, 4294901760
        %1185 = vmatmul.mubr.f32.gmra.mrb[0].mxu0 %v1184
        %v1186 = vpop.f32.mrb[0].mxu0
        %v1187 = vadd.f32 %v995, %v1186
        %v1188 = vpop.f32.mrb[0].mxu0
        %1189 = vmatprep.mubr.f32.mxu0 0.0
        %v1190 = vand.u32 %v424, 4294901760
        %v1191 = vsub.f32 %v424, %v1190
        %v1192 = vand.u32 %v1191, 4294901760
        %1193 = vmatmul.mubr.f32.gmra.mrb[0].mxu0 %v1192
        %v1194 = vpop.f32.mrb[0].mxu0
        %v1195 = vadd.f32 %v1002, %v1194
        %v1196 = vpop.f32.mrb[0].mxu0
        %1197 = vmatprep.mubr.f32.mxu0 0.0
        %v1198 = vand.u32 %v427, 4294901760
        %v1199 = vsub.f32 %v427, %v1198
        %v1200 = vand.u32 %v1199, 4294901760
        %1201 = vmatmul.mubr.f32.gmra.mrb[0].mxu0 %v1200
        %v1202 = vpop.f32.mrb[0].mxu0
        %v1203 = vadd.f32 %v1009, %v1202
        %v1204 = vpop.f32.mrb[0].mxu0
        %1205 = vmatprep.mubr.f32.mxu0 0.0
        %v1206 = vand.u32 %v430, 4294901760
        %v1207 = vsub.f32 %v430, %v1206
        %v1208 = vand.u32 %v1207, 4294901760
        %1209 = vmatmul.mubr.f32.gmra.mrb[0].mxu0 %v1208
        %v1210 = vpop.f32.mrb[0].mxu0
        %v1211 = vadd.f32 %v1016, %v1210
        %v1212 = vpop.f32.mrb[0].mxu0
        %1213 = vmatprep.mubr.f32.mxu0 0.0
        %v1214 = vand.u32 %v433, 4294901760
        %v1215 = vsub.f32 %v433, %v1214
        %v1216 = vand.u32 %v1215, 4294901760
        %1217 = vmatmul.mubr.f32.gmra.mrb[0].mxu0 %v1216
        %v1218 = vpop.f32.mrb[0].mxu0
        %v1219 = vadd.f32 %v1023, %v1218
        %v1220 = vpop.f32.mrb[0].mxu0
        %1221 = vmatprep.mubr.f32.mxu0 0.0
        %v1222 = vand.u32 %v436, 4294901760
        %v1223 = vsub.f32 %v436, %v1222
        %v1224 = vand.u32 %v1223, 4294901760
        %1225 = vmatmul.mubr.f32.gmra.mrb[0].mxu0 %v1224
        %v1226 = vpop.f32.mrb[0].mxu0
        %v1227 = vadd.f32 %v1030, %v1226
        %v1228 = vpop.f32.mrb[0].mxu0
        %1229 = vdwg.mxu0
        %1230 = vmatprep.subr.mxu0 0.0
        %v1231 = vand.u32 %v385, 4294901760
        %v1232 = vsub.f32 %v385, %v1231
        %v1233 = vand.u32 %v1232, 4294901760
        %1234 = vmatpush1.msra.mxu0 %v1233
        %1235 = vmatprep.subr.mxu0 0.0
        %v1236 = vand.u32 %v386, 4294901760
        %v1237 = vsub.f32 %v386, %v1236
        %v1238 = vand.u32 %v1237, 4294901760
        %1239 = vmatpush1.msra.mxu0 %v1238
        %1240 = vmatprep.subr.mxu0 0.0
        %v1241 = vand.u32 %v387, 4294901760
        %v1242 = vsub.f32 %v387, %v1241
        %v1243 = vand.u32 %v1242, 4294901760
        %1244 = vmatpush1.msra.mxu0 %v1243
        %1245 = vmatprep.subr.mxu0 0.0
        %v1246 = vand.u32 %v388, 4294901760
        %v1247 = vsub.f32 %v388, %v1246
        %v1248 = vand.u32 %v1247, 4294901760
        %1249 = vmatpush1.msra.mxu0 %v1248
        %1250 = vmatprep.subr.mxu0 0.0
        %1251 = vmatpush1.msra.mxu0 0.0
        %1252 = vmatprep.subr.mxu0 0.0
        %1253 = vmatpush1.msra.mxu0 0.0
        %1254 = vmatprep.subr.mxu0 0.0
        %1255 = vmatpush1.msra.mxu0 0.0
        %1256 = vmatprep.subr.mxu0 0.0
        %1257 = vmatpush1.msra.mxu0 0.0
        %1258 = vmatprep.subr.mxu0 0.0
        %1259 = vmatpush1.msra.mxu0 0.0
        %1260 = vmatprep.subr.mxu0 0.0
        %1261 = vmatpush1.msra.mxu0 0.0
        %1262 = vmatprep.subr.mxu0 0.0
        %1263 = vmatpush1.msra.mxu0 0.0
        %1264 = vmatprep.subr.mxu0 0.0
        %1265 = vmatpush1.msra.mxu0 0.0
        %1266 = vmatprep.subr.mxu0 0.0
        %1267 = vmatpush1.msra.mxu0 0.0
        %1268 = vmatprep.subr.mxu0 0.0
        %1269 = vmatpush1.msra.mxu0 0.0
        %1270 = vmatprep.subr.mxu0 0.0
        %1271 = vmatpush1.msra.mxu0 0.0
        %1272 = vmatprep.subr.mxu0 0.0
        %1273 = vmatpush1.msra.mxu0 0.0
        %1274 = vmatprep.subr.mxu0 0.0
        %1275 = vmatpush1.msra.mxu0 0.0
        %1276 = vmatprep.subr.mxu0 0.0
        %1277 = vmatpush1.msra.mxu0 0.0
        %1278 = vmatprep.subr.mxu0 0.0
        %1279 = vmatpush1.msra.mxu0 0.0
        %1280 = vmatprep.subr.mxu0 0.0
        %1281 = vmatpush1.msra.mxu0 0.0
        %1282 = vmatprep.subr.mxu0 0.0
        %1283 = vmatpush1.msra.mxu0 0.0
        %1284 = vmatprep.subr.mxu0 0.0
        %1285 = vmatpush1.msra.mxu0 0.0
        %1286 = vmatprep.subr.mxu0 0.0
        %1287 = vmatpush1.msra.mxu0 0.0
        %1288 = vmatprep.subr.mxu0 0.0
        %1289 = vmatpush1.msra.mxu0 0.0
        %1290 = vmatprep.subr.mxu0 0.0
        %1291 = vmatpush1.msra.mxu0 0.0
        %1292 = vmatprep.subr.mxu0 0.0
        %1293 = vmatpush1.msra.mxu0 0.0
        %1294 = vmatprep.subr.mxu0 0.0
        %1295 = vmatpush1.msra.mxu0 0.0
        %1296 = vmatprep.subr.mxu0 0.0
        %1297 = vmatpush1.msra.mxu0 0.0
        %1298 = vmatprep.subr.mxu0 0.0
        %1299 = vmatpush1.msra.mxu0 0.0
        %1300 = vmatprep.subr.mxu0 0.0
        %1301 = vmatpush1.msra.mxu0 0.0
        %1302 = vmatprep.subr.mxu0 0.0
        %1303 = vmatpush1.msra.mxu0 0.0
        %1304 = vmatprep.subr.mxu0 0.0
        %1305 = vmatpush1.msra.mxu0 0.0
        %1306 = vmatprep.mubr.f32.mxu0 0.0
        %v1307 = vand.u32 %v391, 4294901760
        %1308 = vmatmul.mubr.f32.gmra.mrb[0].mxu0 %v1307
        %v1309 = vpop.f32.mrb[0].mxu0
        %v1310 = vadd.f32 %v1107, %v1309
        %v1311 = vpop.f32.mrb[0].mxu0
        %1312 = vmatprep.mubr.f32.mxu0 0.0
        %v1313 = vand.u32 %v394, 4294901760
        %1314 = vmatmul.mubr.f32.gmra.mrb[0].mxu0 %v1313
        %v1315 = vpop.f32.mrb[0].mxu0
        %v1316 = vadd.f32 %v1115, %v1315
        %v1317 = vpop.f32.mrb[0].mxu0
        %1318 = vmatprep.mubr.f32.mxu0 0.0
        %v1319 = vand.u32 %v397, 4294901760
        %1320 = vmatmul.mubr.f32.gmra.mrb[0].mxu0 %v1319
        %v1321 = vpop.f32.mrb[0].mxu0
        %v1322 = vadd.f32 %v1123, %v1321
        %v1323 = vpop.f32.mrb[0].mxu0
        %1324 = vmatprep.mubr.f32.mxu0 0.0
        %v1325 = vand.u32 %v400, 4294901760
        %1326 = vmatmul.mubr.f32.gmra.mrb[0].mxu0 %v1325
        %v1327 = vpop.f32.mrb[0].mxu0
        %v1328 = vadd.f32 %v1131, %v1327
        %v1329 = vpop.f32.mrb[0].mxu0
        %1330 = vmatprep.mubr.f32.mxu0 0.0
        %v1331 = vand.u32 %v403, 4294901760
        %1332 = vmatmul.mubr.f32.gmra.mrb[0].mxu0 %v1331
        %v1333 = vpop.f32.mrb[0].mxu0
        %v1334 = vadd.f32 %v1139, %v1333
        %v1335 = vpop.f32.mrb[0].mxu0
        %1336 = vmatprep.mubr.f32.mxu0 0.0
        %v1337 = vand.u32 %v406, 4294901760
        %1338 = vmatmul.mubr.f32.gmra.mrb[0].mxu0 %v1337
        %v1339 = vpop.f32.mrb[0].mxu0
        %v1340 = vadd.f32 %v1147, %v1339
        %v1341 = vpop.f32.mrb[0].mxu0
        %1342 = vmatprep.mubr.f32.mxu0 0.0
        %v1343 = vand.u32 %v409, 4294901760
        %1344 = vmatmul.mubr.f32.gmra.mrb[0].mxu0 %v1343
        %v1345 = vpop.f32.mrb[0].mxu0
        %v1346 = vadd.f32 %v1155, %v1345
        %v1347 = vpop.f32.mrb[0].mxu0
        %1348 = vmatprep.mubr.f32.mxu0 0.0
        %v1349 = vand.u32 %v412, 4294901760
        %1350 = vmatmul.mubr.f32.gmra.mrb[0].mxu0 %v1349
        %v1351 = vpop.f32.mrb[0].mxu0
        %v1352 = vadd.f32 %v1163, %v1351
        %v1353 = vpop.f32.mrb[0].mxu0
        %1354 = vmatprep.mubr.f32.mxu0 0.0
        %v1355 = vand.u32 %v415, 4294901760
        %1356 = vmatmul.mubr.f32.gmra.mrb[0].mxu0 %v1355
        %v1357 = vpop.f32.mrb[0].mxu0
        %v1358 = vadd.f32 %v1171, %v1357
        %v1359 = vpop.f32.mrb[0].mxu0
        %1360 = vmatprep.mubr.f32.mxu0 0.0
        %v1361 = vand.u32 %v418, 4294901760
        %1362 = vmatmul.mubr.f32.gmra.mrb[0].mxu0 %v1361
        %v1363 = vpop.f32.mrb[0].mxu0
        %v1364 = vadd.f32 %v1179, %v1363
        %v1365 = vpop.f32.mrb[0].mxu0
        %1366 = vmatprep.mubr.f32.mxu0 0.0
        %v1367 = vand.u32 %v421, 4294901760
        %1368 = vmatmul.mubr.f32.gmra.mrb[0].mxu0 %v1367
        %v1369 = vpop.f32.mrb[0].mxu0
        %v1370 = vadd.f32 %v1187, %v1369
        %v1371 = vpop.f32.mrb[0].mxu0
        %1372 = vmatprep.mubr.f32.mxu0 0.0
        %v1373 = vand.u32 %v424, 4294901760
        %1374 = vmatmul.mubr.f32.gmra.mrb[0].mxu0 %v1373
        %v1375 = vpop.f32.mrb[0].mxu0
        %v1376 = vadd.f32 %v1195, %v1375
        %v1377 = vpop.f32.mrb[0].mxu0
        %1378 = vmatprep.mubr.f32.mxu0 0.0
        %v1379 = vand.u32 %v427, 4294901760
        %1380 = vmatmul.mubr.f32.gmra.mrb[0].mxu0 %v1379
        %v1381 = vpop.f32.mrb[0].mxu0
        %v1382 = vadd.f32 %v1203, %v1381
        %v1383 = vpop.f32.mrb[0].mxu0
        %1384 = vmatprep.mubr.f32.mxu0 0.0
        %v1385 = vand.u32 %v430, 4294901760
        %1386 = vmatmul.mubr.f32.gmra.mrb[0].mxu0 %v1385
        %v1387 = vpop.f32.mrb[0].mxu0
        %v1388 = vadd.f32 %v1211, %v1387
        %v1389 = vpop.f32.mrb[0].mxu0
        %1390 = vmatprep.mubr.f32.mxu0 0.0
        %v1391 = vand.u32 %v433, 4294901760
        %1392 = vmatmul.mubr.f32.gmra.mrb[0].mxu0 %v1391
        %v1393 = vpop.f32.mrb[0].mxu0
        %v1394 = vadd.f32 %v1219, %v1393
        %v1395 = vpop.f32.mrb[0].mxu0
        %1396 = vmatprep.mubr.f32.mxu0 0.0
        %v1397 = vand.u32 %v436, 4294901760
        %1398 = vmatmul.mubr.f32.gmra.mrb[0].mxu0 %v1397
        %v1399 = vpop.f32.mrb[0].mxu0
        %v1400 = vadd.f32 %v1227, %v1399
        %v1401 = vpop.f32.mrb[0].mxu0
        %1402 = vdwg.mxu0
        %1403 = vmatprep.subr.mxu0 0.0
        %v1404 = vand.u32 %v385, 4294901760
        %1405 = vmatpush1.msra.mxu0 %v1404
        %1406 = vmatprep.subr.mxu0 0.0
        %v1407 = vand.u32 %v386, 4294901760
        %1408 = vmatpush1.msra.mxu0 %v1407
        %1409 = vmatprep.subr.mxu0 0.0
        %v1410 = vand.u32 %v387, 4294901760
        %1411 = vmatpush1.msra.mxu0 %v1410
        %1412 = vmatprep.subr.mxu0 0.0
        %v1413 = vand.u32 %v388, 4294901760
        %1414 = vmatpush1.msra.mxu0 %v1413
        %1415 = vmatprep.subr.mxu0 0.0
        %1416 = vmatpush1.msra.mxu0 0.0
        %1417 = vmatprep.subr.mxu0 0.0
        %1418 = vmatpush1.msra.mxu0 0.0
        %1419 = vmatprep.subr.mxu0 0.0
        %1420 = vmatpush1.msra.mxu0 0.0
        %1421 = vmatprep.subr.mxu0 0.0
        %1422 = vmatpush1.msra.mxu0 0.0
        %1423 = vmatprep.subr.mxu0 0.0
        %1424 = vmatpush1.msra.mxu0 0.0
        %1425 = vmatprep.subr.mxu0 0.0
        %1426 = vmatpush1.msra.mxu0 0.0
        %1427 = vmatprep.subr.mxu0 0.0
        %1428 = vmatpush1.msra.mxu0 0.0
        %1429 = vmatprep.subr.mxu0 0.0
        %1430 = vmatpush1.msra.mxu0 0.0
        %1431 = vmatprep.subr.mxu0 0.0
        %1432 = vmatpush1.msra.mxu0 0.0
        %1433 = vmatprep.subr.mxu0 0.0
        %1434 = vmatpush1.msra.mxu0 0.0
        %1435 = vmatprep.subr.mxu0 0.0
        %1436 = vmatpush1.msra.mxu0 0.0
        %1437 = vmatprep.subr.mxu0 0.0
        %1438 = vmatpush1.msra.mxu0 0.0
        %1439 = vmatprep.subr.mxu0 0.0
        %1440 = vmatpush1.msra.mxu0 0.0
        %1441 = vmatprep.subr.mxu0 0.0
        %1442 = vmatpush1.msra.mxu0 0.0
        %1443 = vmatprep.subr.mxu0 0.0
        %1444 = vmatpush1.msra.mxu0 0.0
        %1445 = vmatprep.subr.mxu0 0.0
        %1446 = vmatpush1.msra.mxu0 0.0
        %1447 = vmatprep.subr.mxu0 0.0
        %1448 = vmatpush1.msra.mxu0 0.0
        %1449 = vmatprep.subr.mxu0 0.0
        %1450 = vmatpush1.msra.mxu0 0.0
        %1451 = vmatprep.subr.mxu0 0.0
        %1452 = vmatpush1.msra.mxu0 0.0
        %1453 = vmatprep.subr.mxu0 0.0
        %1454 = vmatpush1.msra.mxu0 0.0
        %1455 = vmatprep.subr.mxu0 0.0
        %1456 = vmatpush1.msra.mxu0 0.0
        %1457 = vmatprep.subr.mxu0 0.0
        %1458 = vmatpush1.msra.mxu0 0.0
        %1459 = vmatprep.subr.mxu0 0.0
        %1460 = vmatpush1.msra.mxu0 0.0
        %1461 = vmatprep.subr.mxu0 0.0
        %1462 = vmatpush1.msra.mxu0 0.0
        %1463 = vmatprep.subr.mxu0 0.0
        %1464 = vmatpush1.msra.mxu0 0.0
        %1465 = vmatprep.subr.mxu0 0.0
        %1466 = vmatpush1.msra.mxu0 0.0
        %1467 = vmatprep.subr.mxu0 0.0
        %1468 = vmatpush1.msra.mxu0 0.0
        %1469 = vmatprep.subr.mxu0 0.0
        %1470 = vmatpush1.msra.mxu0 0.0
        %1471 = vmatprep.mubr.f32.mxu0 0.0
        %v1472 = vand.u32 %v391, 4294901760
        %1473 = vmatmul.mubr.f32.gmra.mrb[0].mxu0 %v1472
        %v1474 = vpop.f32.mrb[0].mxu0
        %v1475 = vadd.f32 %v1310, %v1474
        %v1476 = vpop.f32.mrb[0].mxu0
        %1477 = vmatprep.mubr.f32.mxu0 0.0
        %v1478 = vand.u32 %v394, 4294901760
        %1479 = vmatmul.mubr.f32.gmra.mrb[0].mxu0 %v1478
        %v1480 = vpop.f32.mrb[0].mxu0
        %v1481 = vadd.f32 %v1316, %v1480
        %v1482 = vpop.f32.mrb[0].mxu0
        %1483 = vmatprep.mubr.f32.mxu0 0.0
        %v1484 = vand.u32 %v397, 4294901760
        %1485 = vmatmul.mubr.f32.gmra.mrb[0].mxu0 %v1484
        %v1486 = vpop.f32.mrb[0].mxu0
        %v1487 = vadd.f32 %v1322, %v1486
        %v1488 = vpop.f32.mrb[0].mxu0
        %1489 = vmatprep.mubr.f32.mxu0 0.0
        %v1490 = vand.u32 %v400, 4294901760
        %1491 = vmatmul.mubr.f32.gmra.mrb[0].mxu0 %v1490
        %v1492 = vpop.f32.mrb[0].mxu0
        %v1493 = vadd.f32 %v1328, %v1492
        %v1494 = vpop.f32.mrb[0].mxu0
        %1495 = vmatprep.mubr.f32.mxu0 0.0
        %v1496 = vand.u32 %v403, 4294901760
        %1497 = vmatmul.mubr.f32.gmra.mrb[0].mxu0 %v1496
        %v1498 = vpop.f32.mrb[0].mxu0
        %v1499 = vadd.f32 %v1334, %v1498
        %v1500 = vpop.f32.mrb[0].mxu0
        %1501 = vmatprep.mubr.f32.mxu0 0.0
        %v1502 = vand.u32 %v406, 4294901760
        %1503 = vmatmul.mubr.f32.gmra.mrb[0].mxu0 %v1502
        %v1504 = vpop.f32.mrb[0].mxu0
        %v1505 = vadd.f32 %v1340, %v1504
        %v1506 = vpop.f32.mrb[0].mxu0
        %1507 = vmatprep.mubr.f32.mxu0 0.0
        %v1508 = vand.u32 %v409, 4294901760
        %1509 = vmatmul.mubr.f32.gmra.mrb[0].mxu0 %v1508
        %v1510 = vpop.f32.mrb[0].mxu0
        %v1511 = vadd.f32 %v1346, %v1510
        %v1512 = vpop.f32.mrb[0].mxu0
        %1513 = vmatprep.mubr.f32.mxu0 0.0
        %v1514 = vand.u32 %v412, 4294901760
        %1515 = vmatmul.mubr.f32.gmra.mrb[0].mxu0 %v1514
        %v1516 = vpop.f32.mrb[0].mxu0
        %v1517 = vadd.f32 %v1352, %v1516
        %v1518 = vpop.f32.mrb[0].mxu0
        %1519 = vmatprep.mubr.f32.mxu0 0.0
        %v1520 = vand.u32 %v415, 4294901760
        %1521 = vmatmul.mubr.f32.gmra.mrb[0].mxu0 %v1520
        %v1522 = vpop.f32.mrb[0].mxu0
        %v1523 = vadd.f32 %v1358, %v1522
        %v1524 = vpop.f32.mrb[0].mxu0
        %1525 = vmatprep.mubr.f32.mxu0 0.0
        %v1526 = vand.u32 %v418, 4294901760
        %1527 = vmatmul.mubr.f32.gmra.mrb[0].mxu0 %v1526
        %v1528 = vpop.f32.mrb[0].mxu0
        %v1529 = vadd.f32 %v1364, %v1528
        %v1530 = vpop.f32.mrb[0].mxu0
        %1531 = vmatprep.mubr.f32.mxu0 0.0
        %v1532 = vand.u32 %v421, 4294901760
        %1533 = vmatmul.mubr.f32.gmra.mrb[0].mxu0 %v1532
        %v1534 = vpop.f32.mrb[0].mxu0
        %v1535 = vadd.f32 %v1370, %v1534
        %v1536 = vpop.f32.mrb[0].mxu0
        %1537 = vmatprep.mubr.f32.mxu0 0.0
        %v1538 = vand.u32 %v424, 4294901760
        %1539 = vmatmul.mubr.f32.gmra.mrb[0].mxu0 %v1538
        %v1540 = vpop.f32.mrb[0].mxu0
        %v1541 = vadd.f32 %v1376, %v1540
        %v1542 = vpop.f32.mrb[0].mxu0
        %1543 = vmatprep.mubr.f32.mxu0 0.0
        %v1544 = vand.u32 %v427, 4294901760
        %1545 = vmatmul.mubr.f32.gmra.mrb[0].mxu0 %v1544
        %v1546 = vpop.f32.mrb[0].mxu0
        %v1547 = vadd.f32 %v1382, %v1546
        %v1548 = vpop.f32.mrb[0].mxu0
        %1549 = vmatprep.mubr.f32.mxu0 0.0
        %v1550 = vand.u32 %v430, 4294901760
        %1551 = vmatmul.mubr.f32.gmra.mrb[0].mxu0 %v1550
        %v1552 = vpop.f32.mrb[0].mxu0
        %v1553 = vadd.f32 %v1388, %v1552
        %v1554 = vpop.f32.mrb[0].mxu0
        %1555 = vmatprep.mubr.f32.mxu0 0.0
        %v1556 = vand.u32 %v433, 4294901760
        %1557 = vmatmul.mubr.f32.gmra.mrb[0].mxu0 %v1556
        %v1558 = vpop.f32.mrb[0].mxu0
        %v1559 = vadd.f32 %v1394, %v1558
        %v1560 = vpop.f32.mrb[0].mxu0
        %1561 = vmatprep.mubr.f32.mxu0 0.0
        %v1562 = vand.u32 %v436, 4294901760
        %1563 = vmatmul.mubr.f32.gmra.mrb[0].mxu0 %v1562
        %v1564 = vpop.f32.mrb[0].mxu0
        %v1565 = vadd.f32 %v1400, %v1564
        %v1566 = vpop.f32.mrb[0].mxu0
        %1567 = vdwg.mxu0
        %v1568 = vld [vmem:[%s1] sm:$0xff]
        %v1569 = vld [vmem:[%s1 + $0x8] sm:$0xff]
        %v1570 = vld [vmem:[%s1 + $0x10] sm:$0xff]
        %v1571 = vld [vmem:[%s1 + $0x18] sm:$0xff]
        %v1572 = vld [vmem:[%s1 + $0x20] sm:$0xff]
        %v1573 = vld [vmem:[%s1 + $0x28] sm:$0xff]
        %v1574 = vld [vmem:[%s1 + $0x30] sm:$0xff]
        %v1575 = vld [vmem:[%s1 + $0x38] sm:$0xff]
        %v1576 = vld [vmem:[%s1 + $0x40] sm:$0xff]
        %v1577 = vld [vmem:[%s1 + $0x48] sm:$0xff]
        %v1578 = vld [vmem:[%s1 + $0x50] sm:$0xff]
        %v1579 = vld [vmem:[%s1 + $0x58] sm:$0xff]
        %v1580 = vld [vmem:[%s1 + $0x60] sm:$0xff]
        %v1581 = vld [vmem:[%s1 + $0x68] sm:$0xff]
        %v1582 = vld [vmem:[%s1 + $0x70] sm:$0xff]
        %v1583 = vld [vmem:[%s1 + $0x78] sm:$0xff]
        %v1585 = vsel %vm389, %v1568, 0
        %v1588 = vsel %vm389, %v1569, 0
        %v1591 = vsel %vm389, %v1570, 0
        %v1594 = vsel %vm389, %v1571, 0
        %v1597 = vsel %vm389, %v1572, 0
        %v1600 = vsel %vm389, %v1573, 0
        %v1603 = vsel %vm389, %v1574, 0
        %v1606 = vsel %vm389, %v1575, 0
        %v1609 = vsel %vm389, %v1576, 0
        %v1612 = vsel %vm389, %v1577, 0
        %v1615 = vsel %vm389, %v1578, 0
        %v1618 = vsel %vm389, %v1579, 0
        %v1621 = vsel %vm389, %v1580, 0
        %v1624 = vsel %vm389, %v1581, 0
        %v1627 = vsel %vm389, %v1582, 0
        %v1630 = vsel %vm389, %v1583, 0
        %1632 = vmatprep.subr.mxu0 0.0
        %v1633 = vand.u32 %v385, 4294901760
        %1634 = vmatpush1.msra.mxu0 %v1633
        %1635 = vmatprep.subr.mxu0 0.0
        %v1636 = vand.u32 %v386, 4294901760
        %1637 = vmatpush1.msra.mxu0 %v1636
        %1638 = vmatprep.subr.mxu0 0.0
        %v1639 = vand.u32 %v387, 4294901760
        %1640 = vmatpush1.msra.mxu0 %v1639
        %1641 = vmatprep.subr.mxu0 0.0
        %v1642 = vand.u32 %v388, 4294901760
        %1643 = vmatpush1.msra.mxu0 %v1642
        %1644 = vmatprep.subr.mxu0 0.0
        %1645 = vmatpush1.msra.mxu0 0.0
        %1646 = vmatprep.subr.mxu0 0.0
        %1647 = vmatpush1.msra.mxu0 0.0
        %1648 = vmatprep.subr.mxu0 0.0
        %1649 = vmatpush1.msra.mxu0 0.0
        %1650 = vmatprep.subr.mxu0 0.0
        %1651 = vmatpush1.msra.mxu0 0.0
        %1652 = vmatprep.subr.mxu0 0.0
        %1653 = vmatpush1.msra.mxu0 0.0
        %1654 = vmatprep.subr.mxu0 0.0
        %1655 = vmatpush1.msra.mxu0 0.0
        %1656 = vmatprep.subr.mxu0 0.0
        %1657 = vmatpush1.msra.mxu0 0.0
        %1658 = vmatprep.subr.mxu0 0.0
        %1659 = vmatpush1.msra.mxu0 0.0
        %1660 = vmatprep.subr.mxu0 0.0
        %1661 = vmatpush1.msra.mxu0 0.0
        %1662 = vmatprep.subr.mxu0 0.0
        %1663 = vmatpush1.msra.mxu0 0.0
        %1664 = vmatprep.subr.mxu0 0.0
        %1665 = vmatpush1.msra.mxu0 0.0
        %1666 = vmatprep.subr.mxu0 0.0
        %1667 = vmatpush1.msra.mxu0 0.0
        %1668 = vmatprep.subr.mxu0 0.0
        %1669 = vmatpush1.msra.mxu0 0.0
        %1670 = vmatprep.subr.mxu0 0.0
        %1671 = vmatpush1.msra.mxu0 0.0
        %1672 = vmatprep.subr.mxu0 0.0
        %1673 = vmatpush1.msra.mxu0 0.0
        %1674 = vmatprep.subr.mxu0 0.0
        %1675 = vmatpush1.msra.mxu0 0.0
        %1676 = vmatprep.subr.mxu0 0.0
        %1677 = vmatpush1.msra.mxu0 0.0
        %1678 = vmatprep.subr.mxu0 0.0
        %1679 = vmatpush1.msra.mxu0 0.0
        %1680 = vmatprep.subr.mxu0 0.0
        %1681 = vmatpush1.msra.mxu0 0.0
        %1682 = vmatprep.subr.mxu0 0.0
        %1683 = vmatpush1.msra.mxu0 0.0
        %1684 = vmatprep.subr.mxu0 0.0
        %1685 = vmatpush1.msra.mxu0 0.0
        %1686 = vmatprep.subr.mxu0 0.0
        %1687 = vmatpush1.msra.mxu0 0.0
        %1688 = vmatprep.subr.mxu0 0.0
        %1689 = vmatpush1.msra.mxu0 0.0
        %1690 = vmatprep.subr.mxu0 0.0
        %1691 = vmatpush1.msra.mxu0 0.0
        %1692 = vmatprep.subr.mxu0 0.0
        %1693 = vmatpush1.msra.mxu0 0.0
        %1694 = vmatprep.subr.mxu0 0.0
        %1695 = vmatpush1.msra.mxu0 0.0
        %1696 = vmatprep.subr.mxu0 0.0
        %1697 = vmatpush1.msra.mxu0 0.0
        %1698 = vmatprep.subr.mxu0 0.0
        %1699 = vmatpush1.msra.mxu0 0.0
        %1700 = vmatprep.mubr.f32.mxu0 0.0
        %v1701 = vand.u32 %v1585, 4294901760
        %v1702 = vsub.f32 %v1585, %v1701
        %v1703 = vand.u32 %v1702, 4294901760
        %v1704 = vsub.f32 %v1702, %v1703
        %v1705 = vand.u32 %v1704, 4294901760
        %1706 = vmatmul.mubr.f32.gmra.mrb[0].mxu0 %v1705
        %v1707 = vpop.f32.mrb[0].mxu0
        %v1708 = vadd.f32 0.0, %v1707
        %v1709 = vpop.f32.mrb[0].mxu0
        %1710 = vmatprep.mubr.f32.mxu0 0.0
        %v1711 = vand.u32 %v1588, 4294901760
        %v1712 = vsub.f32 %v1588, %v1711
        %v1713 = vand.u32 %v1712, 4294901760
        %v1714 = vsub.f32 %v1712, %v1713
        %v1715 = vand.u32 %v1714, 4294901760
        %1716 = vmatmul.mubr.f32.gmra.mrb[0].mxu0 %v1715
        %v1717 = vpop.f32.mrb[0].mxu0
        %v1718 = vadd.f32 0.0, %v1717
        %v1719 = vpop.f32.mrb[0].mxu0
        %1720 = vmatprep.mubr.f32.mxu0 0.0
        %v1721 = vand.u32 %v1591, 4294901760
        %v1722 = vsub.f32 %v1591, %v1721
        %v1723 = vand.u32 %v1722, 4294901760
        %v1724 = vsub.f32 %v1722, %v1723
        %v1725 = vand.u32 %v1724, 4294901760
        %1726 = vmatmul.mubr.f32.gmra.mrb[0].mxu0 %v1725
        %v1727 = vpop.f32.mrb[0].mxu0
        %v1728 = vadd.f32 0.0, %v1727
        %v1729 = vpop.f32.mrb[0].mxu0
        %1730 = vmatprep.mubr.f32.mxu0 0.0
        %v1731 = vand.u32 %v1594, 4294901760
        %v1732 = vsub.f32 %v1594, %v1731
        %v1733 = vand.u32 %v1732, 4294901760
        %v1734 = vsub.f32 %v1732, %v1733
        %v1735 = vand.u32 %v1734, 4294901760
        %1736 = vmatmul.mubr.f32.gmra.mrb[0].mxu0 %v1735
        %v1737 = vpop.f32.mrb[0].mxu0
        %v1738 = vadd.f32 0.0, %v1737
        %v1739 = vpop.f32.mrb[0].mxu0
        %1740 = vmatprep.mubr.f32.mxu0 0.0
        %v1741 = vand.u32 %v1597, 4294901760
        %v1742 = vsub.f32 %v1597, %v1741
        %v1743 = vand.u32 %v1742, 4294901760
        %v1744 = vsub.f32 %v1742, %v1743
        %v1745 = vand.u32 %v1744, 4294901760
        %1746 = vmatmul.mubr.f32.gmra.mrb[0].mxu0 %v1745
        %v1747 = vpop.f32.mrb[0].mxu0
        %v1748 = vadd.f32 0.0, %v1747
        %v1749 = vpop.f32.mrb[0].mxu0
        %1750 = vmatprep.mubr.f32.mxu0 0.0
        %v1751 = vand.u32 %v1600, 4294901760
        %v1752 = vsub.f32 %v1600, %v1751
        %v1753 = vand.u32 %v1752, 4294901760
        %v1754 = vsub.f32 %v1752, %v1753
        %v1755 = vand.u32 %v1754, 4294901760
        %1756 = vmatmul.mubr.f32.gmra.mrb[0].mxu0 %v1755
        %v1757 = vpop.f32.mrb[0].mxu0
        %v1758 = vadd.f32 0.0, %v1757
        %v1759 = vpop.f32.mrb[0].mxu0
        %1760 = vmatprep.mubr.f32.mxu0 0.0
        %v1761 = vand.u32 %v1603, 4294901760
        %v1762 = vsub.f32 %v1603, %v1761
        %v1763 = vand.u32 %v1762, 4294901760
        %v1764 = vsub.f32 %v1762, %v1763
        %v1765 = vand.u32 %v1764, 4294901760
        %1766 = vmatmul.mubr.f32.gmra.mrb[0].mxu0 %v1765
        %v1767 = vpop.f32.mrb[0].mxu0
        %v1768 = vadd.f32 0.0, %v1767
        %v1769 = vpop.f32.mrb[0].mxu0
        %1770 = vmatprep.mubr.f32.mxu0 0.0
        %v1771 = vand.u32 %v1606, 4294901760
        %v1772 = vsub.f32 %v1606, %v1771
        %v1773 = vand.u32 %v1772, 4294901760
        %v1774 = vsub.f32 %v1772, %v1773
        %v1775 = vand.u32 %v1774, 4294901760
        %1776 = vmatmul.mubr.f32.gmra.mrb[0].mxu0 %v1775
        %v1777 = vpop.f32.mrb[0].mxu0
        %v1778 = vadd.f32 0.0, %v1777
        %v1779 = vpop.f32.mrb[0].mxu0
        %1780 = vmatprep.mubr.f32.mxu0 0.0
        %v1781 = vand.u32 %v1609, 4294901760
        %v1782 = vsub.f32 %v1609, %v1781
        %v1783 = vand.u32 %v1782, 4294901760
        %v1784 = vsub.f32 %v1782, %v1783
        %v1785 = vand.u32 %v1784, 4294901760
        %1786 = vmatmul.mubr.f32.gmra.mrb[0].mxu0 %v1785
        %v1787 = vpop.f32.mrb[0].mxu0
        %v1788 = vadd.f32 0.0, %v1787
        %v1789 = vpop.f32.mrb[0].mxu0
        %1790 = vmatprep.mubr.f32.mxu0 0.0
        %v1791 = vand.u32 %v1612, 4294901760
        %v1792 = vsub.f32 %v1612, %v1791
        %v1793 = vand.u32 %v1792, 4294901760
        %v1794 = vsub.f32 %v1792, %v1793
        %v1795 = vand.u32 %v1794, 4294901760
        %1796 = vmatmul.mubr.f32.gmra.mrb[0].mxu0 %v1795
        %v1797 = vpop.f32.mrb[0].mxu0
        %v1798 = vadd.f32 0.0, %v1797
        %v1799 = vpop.f32.mrb[0].mxu0
        %1800 = vmatprep.mubr.f32.mxu0 0.0
        %v1801 = vand.u32 %v1615, 4294901760
        %v1802 = vsub.f32 %v1615, %v1801
        %v1803 = vand.u32 %v1802, 4294901760
        %v1804 = vsub.f32 %v1802, %v1803
        %v1805 = vand.u32 %v1804, 4294901760
        %1806 = vmatmul.mubr.f32.gmra.mrb[0].mxu0 %v1805
        %v1807 = vpop.f32.mrb[0].mxu0
        %v1808 = vadd.f32 0.0, %v1807
        %v1809 = vpop.f32.mrb[0].mxu0
        %1810 = vmatprep.mubr.f32.mxu0 0.0
        %v1811 = vand.u32 %v1618, 4294901760
        %v1812 = vsub.f32 %v1618, %v1811
        %v1813 = vand.u32 %v1812, 4294901760
        %v1814 = vsub.f32 %v1812, %v1813
        %v1815 = vand.u32 %v1814, 4294901760
        %1816 = vmatmul.mubr.f32.gmra.mrb[0].mxu0 %v1815
        %v1817 = vpop.f32.mrb[0].mxu0
        %v1818 = vadd.f32 0.0, %v1817
        %v1819 = vpop.f32.mrb[0].mxu0
        %1820 = vmatprep.mubr.f32.mxu0 0.0
        %v1821 = vand.u32 %v1621, 4294901760
        %v1822 = vsub.f32 %v1621, %v1821
        %v1823 = vand.u32 %v1822, 4294901760
        %v1824 = vsub.f32 %v1822, %v1823
        %v1825 = vand.u32 %v1824, 4294901760
        %1826 = vmatmul.mubr.f32.gmra.mrb[0].mxu0 %v1825
        %v1827 = vpop.f32.mrb[0].mxu0
        %v1828 = vadd.f32 0.0, %v1827
        %v1829 = vpop.f32.mrb[0].mxu0
        %1830 = vmatprep.mubr.f32.mxu0 0.0
        %v1831 = vand.u32 %v1624, 4294901760
        %v1832 = vsub.f32 %v1624, %v1831
        %v1833 = vand.u32 %v1832, 4294901760
        %v1834 = vsub.f32 %v1832, %v1833
        %v1835 = vand.u32 %v1834, 4294901760
        %1836 = vmatmul.mubr.f32.gmra.mrb[0].mxu0 %v1835
        %v1837 = vpop.f32.mrb[0].mxu0
        %v1838 = vadd.f32 0.0, %v1837
        %v1839 = vpop.f32.mrb[0].mxu0
        %1840 = vmatprep.mubr.f32.mxu0 0.0
        %v1841 = vand.u32 %v1627, 4294901760
        %v1842 = vsub.f32 %v1627, %v1841
        %v1843 = vand.u32 %v1842, 4294901760
        %v1844 = vsub.f32 %v1842, %v1843
        %v1845 = vand.u32 %v1844, 4294901760
        %1846 = vmatmul.mubr.f32.gmra.mrb[0].mxu0 %v1845
        %v1847 = vpop.f32.mrb[0].mxu0
        %v1848 = vadd.f32 0.0, %v1847
        %v1849 = vpop.f32.mrb[0].mxu0
        %1850 = vmatprep.mubr.f32.mxu0 0.0
        %v1851 = vand.u32 %v1630, 4294901760
        %v1852 = vsub.f32 %v1630, %v1851
        %v1853 = vand.u32 %v1852, 4294901760
        %v1854 = vsub.f32 %v1852, %v1853
        %v1855 = vand.u32 %v1854, 4294901760
        %1856 = vmatmul.mubr.f32.gmra.mrb[0].mxu0 %v1855
        %v1857 = vpop.f32.mrb[0].mxu0
        %v1858 = vadd.f32 0.0, %v1857
        %v1859 = vpop.f32.mrb[0].mxu0
        %1860 = vdwg.mxu0
        %1861 = vmatprep.subr.mxu0 0.0
        %v1862 = vand.u32 %v385, 4294901760
        %v1863 = vsub.f32 %v385, %v1862
        %v1864 = vand.u32 %v1863, 4294901760
        %v1865 = vsub.f32 %v1863, %v1864
        %v1866 = vand.u32 %v1865, 4294901760
        %1867 = vmatpush1.msra.mxu0 %v1866
        %1868 = vmatprep.subr.mxu0 0.0
        %v1869 = vand.u32 %v386, 4294901760
        %v1870 = vsub.f32 %v386, %v1869
        %v1871 = vand.u32 %v1870, 4294901760
        %v1872 = vsub.f32 %v1870, %v1871
        %v1873 = vand.u32 %v1872, 4294901760
        %1874 = vmatpush1.msra.mxu0 %v1873
        %1875 = vmatprep.subr.mxu0 0.0
        %v1876 = vand.u32 %v387, 4294901760
        %v1877 = vsub.f32 %v387, %v1876
        %v1878 = vand.u32 %v1877, 4294901760
        %v1879 = vsub.f32 %v1877, %v1878
        %v1880 = vand.u32 %v1879, 4294901760
        %1881 = vmatpush1.msra.mxu0 %v1880
        %1882 = vmatprep.subr.mxu0 0.0
        %v1883 = vand.u32 %v388, 4294901760
        %v1884 = vsub.f32 %v388, %v1883
        %v1885 = vand.u32 %v1884, 4294901760
        %v1886 = vsub.f32 %v1884, %v1885
        %v1887 = vand.u32 %v1886, 4294901760
        %1888 = vmatpush1.msra.mxu0 %v1887
        %1889 = vmatprep.subr.mxu0 0.0
        %1890 = vmatpush1.msra.mxu0 0.0
        %1891 = vmatprep.subr.mxu0 0.0
        %1892 = vmatpush1.msra.mxu0 0.0
        %1893 = vmatprep.subr.mxu0 0.0
        %1894 = vmatpush1.msra.mxu0 0.0
        %1895 = vmatprep.subr.mxu0 0.0
        %1896 = vmatpush1.msra.mxu0 0.0
        %1897 = vmatprep.subr.mxu0 0.0
        %1898 = vmatpush1.msra.mxu0 0.0
        %1899 = vmatprep.subr.mxu0 0.0
        %1900 = vmatpush1.msra.mxu0 0.0
        %1901 = vmatprep.subr.mxu0 0.0
        %1902 = vmatpush1.msra.mxu0 0.0
        %1903 = vmatprep.subr.mxu0 0.0
        %1904 = vmatpush1.msra.mxu0 0.0
        %1905 = vmatprep.subr.mxu0 0.0
        %1906 = vmatpush1.msra.mxu0 0.0
        %1907 = vmatprep.subr.mxu0 0.0
        %1908 = vmatpush1.msra.mxu0 0.0
        %1909 = vmatprep.subr.mxu0 0.0
        %1910 = vmatpush1.msra.mxu0 0.0
        %1911 = vmatprep.subr.mxu0 0.0
        %1912 = vmatpush1.msra.mxu0 0.0
        %1913 = vmatprep.subr.mxu0 0.0
        %1914 = vmatpush1.msra.mxu0 0.0
        %1915 = vmatprep.subr.mxu0 0.0
        %1916 = vmatpush1.msra.mxu0 0.0
        %1917 = vmatprep.subr.mxu0 0.0
        %1918 = vmatpush1.msra.mxu0 0.0
        %1919 = vmatprep.subr.mxu0 0.0
        %1920 = vmatpush1.msra.mxu0 0.0
        %1921 = vmatprep.subr.mxu0 0.0
        %1922 = vmatpush1.msra.mxu0 0.0
        %1923 = vmatprep.subr.mxu0 0.0
        %1924 = vmatpush1.msra.mxu0 0.0
        %1925 = vmatprep.subr.mxu0 0.0
        %1926 = vmatpush1.msra.mxu0 0.0
        %1927 = vmatprep.subr.mxu0 0.0
        %1928 = vmatpush1.msra.mxu0 0.0
        %1929 = vmatprep.subr.mxu0 0.0
        %1930 = vmatpush1.msra.mxu0 0.0
        %1931 = vmatprep.subr.mxu0 0.0
        %1932 = vmatpush1.msra.mxu0 0.0
        %1933 = vmatprep.subr.mxu0 0.0
        %1934 = vmatpush1.msra.mxu0 0.0
        %1935 = vmatprep.subr.mxu0 0.0
        %1936 = vmatpush1.msra.mxu0 0.0
        %1937 = vmatprep.subr.mxu0 0.0
        %1938 = vmatpush1.msra.mxu0 0.0
        %1939 = vmatprep.subr.mxu0 0.0
        %1940 = vmatpush1.msra.mxu0 0.0
        %1941 = vmatprep.subr.mxu0 0.0
        %1942 = vmatpush1.msra.mxu0 0.0
        %1943 = vmatprep.subr.mxu0 0.0
        %1944 = vmatpush1.msra.mxu0 0.0
        %1945 = vmatprep.mubr.f32.mxu0 0.0
        %v1946 = vand.u32 %v1585, 4294901760
        %1947 = vmatmul.mubr.f32.gmra.mrb[0].mxu0 %v1946
        %v1948 = vpop.f32.mrb[0].mxu0
        %v1949 = vadd.f32 %v1708, %v1948
        %v1950 = vpop.f32.mrb[0].mxu0
        %1951 = vmatprep.mubr.f32.mxu0 0.0
        %v1952 = vand.u32 %v1588, 4294901760
        %1953 = vmatmul.mubr.f32.gmra.mrb[0].mxu0 %v1952
        %v1954 = vpop.f32.mrb[0].mxu0
        %v1955 = vadd.f32 %v1718, %v1954
        %v1956 = vpop.f32.mrb[0].mxu0
        %1957 = vmatprep.mubr.f32.mxu0 0.0
        %v1958 = vand.u32 %v1591, 4294901760
        %1959 = vmatmul.mubr.f32.gmra.mrb[0].mxu0 %v1958
        %v1960 = vpop.f32.mrb[0].mxu0
        %v1961 = vadd.f32 %v1728, %v1960
        %v1962 = vpop.f32.mrb[0].mxu0
        %1963 = vmatprep.mubr.f32.mxu0 0.0
        %v1964 = vand.u32 %v1594, 4294901760
        %1965 = vmatmul.mubr.f32.gmra.mrb[0].mxu0 %v1964
        %v1966 = vpop.f32.mrb[0].mxu0
        %v1967 = vadd.f32 %v1738, %v1966
        %v1968 = vpop.f32.mrb[0].mxu0
        %1969 = vmatprep.mubr.f32.mxu0 0.0
        %v1970 = vand.u32 %v1597, 4294901760
        %1971 = vmatmul.mubr.f32.gmra.mrb[0].mxu0 %v1970
        %v1972 = vpop.f32.mrb[0].mxu0
        %v1973 = vadd.f32 %v1748, %v1972
        %v1974 = vpop.f32.mrb[0].mxu0
        %1975 = vmatprep.mubr.f32.mxu0 0.0
        %v1976 = vand.u32 %v1600, 4294901760
        %1977 = vmatmul.mubr.f32.gmra.mrb[0].mxu0 %v1976
        %v1978 = vpop.f32.mrb[0].mxu0
        %v1979 = vadd.f32 %v1758, %v1978
        %v1980 = vpop.f32.mrb[0].mxu0
        %1981 = vmatprep.mubr.f32.mxu0 0.0
        %v1982 = vand.u32 %v1603, 4294901760
        %1983 = vmatmul.mubr.f32.gmra.mrb[0].mxu0 %v1982
        %v1984 = vpop.f32.mrb[0].mxu0
        %v1985 = vadd.f32 %v1768, %v1984
        %v1986 = vpop.f32.mrb[0].mxu0
        %1987 = vmatprep.mubr.f32.mxu0 0.0
        %v1988 = vand.u32 %v1606, 4294901760
        %1989 = vmatmul.mubr.f32.gmra.mrb[0].mxu0 %v1988
        %v1990 = vpop.f32.mrb[0].mxu0
        %v1991 = vadd.f32 %v1778, %v1990
        %v1992 = vpop.f32.mrb[0].mxu0
        %1993 = vmatprep.mubr.f32.mxu0 0.0
        %v1994 = vand.u32 %v1609, 4294901760
        %1995 = vmatmul.mubr.f32.gmra.mrb[0].mxu0 %v1994
        %v1996 = vpop.f32.mrb[0].mxu0
        %v1997 = vadd.f32 %v1788, %v1996
        %v1998 = vpop.f32.mrb[0].mxu0
        %1999 = vmatprep.mubr.f32.mxu0 0.0
        %v2000 = vand.u32 %v1612, 4294901760
        %2001 = vmatmul.mubr.f32.gmra.mrb[0].mxu0 %v2000
        %v2002 = vpop.f32.mrb[0].mxu0
        %v2003 = vadd.f32 %v1798, %v2002
        %v2004 = vpop.f32.mrb[0].mxu0
        %2005 = vmatprep.mubr.f32.mxu0 0.0
        %v2006 = vand.u32 %v1615, 4294901760
        %2007 = vmatmul.mubr.f32.gmra.mrb[0].mxu0 %v2006
        %v2008 = vpop.f32.mrb[0].mxu0
        %v2009 = vadd.f32 %v1808, %v2008
        %v2010 = vpop.f32.mrb[0].mxu0
        %2011 = vmatprep.mubr.f32.mxu0 0.0
        %v2012 = vand.u32 %v1618, 4294901760
        %2013 = vmatmul.mubr.f32.gmra.mrb[0].mxu0 %v2012
        %v2014 = vpop.f32.mrb[0].mxu0
        %v2015 = vadd.f32 %v1818, %v2014
        %v2016 = vpop.f32.mrb[0].mxu0
        %2017 = vmatprep.mubr.f32.mxu0 0.0
        %v2018 = vand.u32 %v1621, 4294901760
        %2019 = vmatmul.mubr.f32.gmra.mrb[0].mxu0 %v2018
        %v2020 = vpop.f32.mrb[0].mxu0
        %v2021 = vadd.f32 %v1828, %v2020
        %v2022 = vpop.f32.mrb[0].mxu0
        %2023 = vmatprep.mubr.f32.mxu0 0.0
        %v2024 = vand.u32 %v1624, 4294901760
        %2025 = vmatmul.mubr.f32.gmra.mrb[0].mxu0 %v2024
        %v2026 = vpop.f32.mrb[0].mxu0
        %v2027 = vadd.f32 %v1838, %v2026
        %v2028 = vpop.f32.mrb[0].mxu0
        %2029 = vmatprep.mubr.f32.mxu0 0.0
        %v2030 = vand.u32 %v1627, 4294901760
        %2031 = vmatmul.mubr.f32.gmra.mrb[0].mxu0 %v2030
        %v2032 = vpop.f32.mrb[0].mxu0
        %v2033 = vadd.f32 %v1848, %v2032
        %v2034 = vpop.f32.mrb[0].mxu0
        %2035 = vmatprep.mubr.f32.mxu0 0.0
        %v2036 = vand.u32 %v1630, 4294901760
        %2037 = vmatmul.mubr.f32.gmra.mrb[0].mxu0 %v2036
        %v2038 = vpop.f32.mrb[0].mxu0
        %v2039 = vadd.f32 %v1858, %v2038
        %v2040 = vpop.f32.mrb[0].mxu0
        %2041 = vdwg.mxu0
        %2042 = vmatprep.subr.mxu0 0.0
        %v2043 = vand.u32 %v385, 4294901760
        %v2044 = vsub.f32 %v385, %v2043
        %2045 = vmatpush1.msra.mxu0 %v2044
        %2046 = vmatprep.subr.mxu0 0.0
        %v2047 = vand.u32 %v386, 4294901760
        %v2048 = vsub.f32 %v386, %v2047
        %2049 = vmatpush1.msra.mxu0 %v2048
        %2050 = vmatprep.subr.mxu0 0.0
        %v2051 = vand.u32 %v387, 4294901760
        %v2052 = vsub.f32 %v387, %v2051
        %2053 = vmatpush1.msra.mxu0 %v2052
        %2054 = vmatprep.subr.mxu0 0.0
        %v2055 = vand.u32 %v388, 4294901760
        %v2056 = vsub.f32 %v388, %v2055
        %2057 = vmatpush1.msra.mxu0 %v2056
        %2058 = vmatprep.subr.mxu0 0.0
        %2059 = vmatpush1.msra.mxu0 0.0
        %2060 = vmatprep.subr.mxu0 0.0
        %2061 = vmatpush1.msra.mxu0 0.0
        %2062 = vmatprep.subr.mxu0 0.0
        %2063 = vmatpush1.msra.mxu0 0.0
        %2064 = vmatprep.subr.mxu0 0.0
        %2065 = vmatpush1.msra.mxu0 0.0
        %2066 = vmatprep.subr.mxu0 0.0
        %2067 = vmatpush1.msra.mxu0 0.0
        %2068 = vmatprep.subr.mxu0 0.0
        %2069 = vmatpush1.msra.mxu0 0.0
        %2070 = vmatprep.subr.mxu0 0.0
        %2071 = vmatpush1.msra.mxu0 0.0
        %2072 = vmatprep.subr.mxu0 0.0
        %2073 = vmatpush1.msra.mxu0 0.0
        %2074 = vmatprep.subr.mxu0 0.0
        %2075 = vmatpush1.msra.mxu0 0.0
        %2076 = vmatprep.subr.mxu0 0.0
        %2077 = vmatpush1.msra.mxu0 0.0
        %2078 = vmatprep.subr.mxu0 0.0
        %2079 = vmatpush1.msra.mxu0 0.0
        %2080 = vmatprep.subr.mxu0 0.0
        %2081 = vmatpush1.msra.mxu0 0.0
        %2082 = vmatprep.subr.mxu0 0.0
        %2083 = vmatpush1.msra.mxu0 0.0
        %2084 = vmatprep.subr.mxu0 0.0
        %2085 = vmatpush1.msra.mxu0 0.0
        %2086 = vmatprep.subr.mxu0 0.0
        %2087 = vmatpush1.msra.mxu0 0.0
        %2088 = vmatprep.subr.mxu0 0.0
        %2089 = vmatpush1.msra.mxu0 0.0
        %2090 = vmatprep.subr.mxu0 0.0
        %2091 = vmatpush1.msra.mxu0 0.0
        %2092 = vmatprep.subr.mxu0 0.0
        %2093 = vmatpush1.msra.mxu0 0.0
        %2094 = vmatprep.subr.mxu0 0.0
        %2095 = vmatpush1.msra.mxu0 0.0
        %2096 = vmatprep.subr.mxu0 0.0
        %2097 = vmatpush1.msra.mxu0 0.0
        %2098 = vmatprep.subr.mxu0 0.0
        %2099 = vmatpush1.msra.mxu0 0.0
        %2100 = vmatprep.subr.mxu0 0.0
        %2101 = vmatpush1.msra.mxu0 0.0
        %2102 = vmatprep.subr.mxu0 0.0
        %2103 = vmatpush1.msra.mxu0 0.0
        %2104 = vmatprep.subr.mxu0 0.0
        %2105 = vmatpush1.msra.mxu0 0.0
        %2106 = vmatprep.subr.mxu0 0.0
        %2107 = vmatpush1.msra.mxu0 0.0
        %2108 = vmatprep.subr.mxu0 0.0
        %2109 = vmatpush1.msra.mxu0 0.0
        %2110 = vmatprep.subr.mxu0 0.0
        %2111 = vmatpush1.msra.mxu0 0.0
        %2112 = vmatprep.subr.mxu0 0.0
        %2113 = vmatpush1.msra.mxu0 0.0
        %2114 = vmatprep.mubr.f32.mxu0 0.0
        %v2115 = vand.u32 %v1585, 4294901760
        %v2116 = vsub.f32 %v1585, %v2115
        %2117 = vmatmul.mubr.f32.gmra.mrb[0].mxu0 %v2116
        %v2118 = vpop.f32.mrb[0].mxu0
        %v2119 = vadd.f32 %v1949, %v2118
        %v2120 = vpop.f32.mrb[0].mxu0
        %2121 = vmatprep.mubr.f32.mxu0 0.0
        %v2122 = vand.u32 %v1588, 4294901760
        %v2123 = vsub.f32 %v1588, %v2122
        %2124 = vmatmul.mubr.f32.gmra.mrb[0].mxu0 %v2123
        %v2125 = vpop.f32.mrb[0].mxu0
        %v2126 = vadd.f32 %v1955, %v2125
        %v2127 = vpop.f32.mrb[0].mxu0
        %2128 = vmatprep.mubr.f32.mxu0 0.0
        %v2129 = vand.u32 %v1591, 4294901760
        %v2130 = vsub.f32 %v1591, %v2129
        %2131 = vmatmul.mubr.f32.gmra.mrb[0].mxu0 %v2130
        %v2132 = vpop.f32.mrb[0].mxu0
        %v2133 = vadd.f32 %v1961, %v2132
        %v2134 = vpop.f32.mrb[0].mxu0
        %2135 = vmatprep.mubr.f32.mxu0 0.0
        %v2136 = vand.u32 %v1594, 4294901760
        %v2137 = vsub.f32 %v1594, %v2136
        %2138 = vmatmul.mubr.f32.gmra.mrb[0].mxu0 %v2137
        %v2139 = vpop.f32.mrb[0].mxu0
        %v2140 = vadd.f32 %v1967, %v2139
        %v2141 = vpop.f32.mrb[0].mxu0
        %2142 = vmatprep.mubr.f32.mxu0 0.0
        %v2143 = vand.u32 %v1597, 4294901760
        %v2144 = vsub.f32 %v1597, %v2143
        %2145 = vmatmul.mubr.f32.gmra.mrb[0].mxu0 %v2144
        %v2146 = vpop.f32.mrb[0].mxu0
        %v2147 = vadd.f32 %v1973, %v2146
        %v2148 = vpop.f32.mrb[0].mxu0
        %2149 = vmatprep.mubr.f32.mxu0 0.0
        %v2150 = vand.u32 %v1600, 4294901760
        %v2151 = vsub.f32 %v1600, %v2150
        %2152 = vmatmul.mubr.f32.gmra.mrb[0].mxu0 %v2151
        %v2153 = vpop.f32.mrb[0].mxu0
        %v2154 = vadd.f32 %v1979, %v2153
        %v2155 = vpop.f32.mrb[0].mxu0
        %2156 = vmatprep.mubr.f32.mxu0 0.0
        %v2157 = vand.u32 %v1603, 4294901760
        %v2158 = vsub.f32 %v1603, %v2157
        %2159 = vmatmul.mubr.f32.gmra.mrb[0].mxu0 %v2158
        %v2160 = vpop.f32.mrb[0].mxu0
        %v2161 = vadd.f32 %v1985, %v2160
        %v2162 = vpop.f32.mrb[0].mxu0
        %2163 = vmatprep.mubr.f32.mxu0 0.0
        %v2164 = vand.u32 %v1606, 4294901760
        %v2165 = vsub.f32 %v1606, %v2164
        %2166 = vmatmul.mubr.f32.gmra.mrb[0].mxu0 %v2165
        %v2167 = vpop.f32.mrb[0].mxu0
        %v2168 = vadd.f32 %v1991, %v2167
        %v2169 = vpop.f32.mrb[0].mxu0
        %2170 = vmatprep.mubr.f32.mxu0 0.0
        %v2171 = vand.u32 %v1609, 4294901760
        %v2172 = vsub.f32 %v1609, %v2171
        %2173 = vmatmul.mubr.f32.gmra.mrb[0].mxu0 %v2172
        %v2174 = vpop.f32.mrb[0].mxu0
        %v2175 = vadd.f32 %v1997, %v2174
        %v2176 = vpop.f32.mrb[0].mxu0
        %2177 = vmatprep.mubr.f32.mxu0 0.0
        %v2178 = vand.u32 %v1612, 4294901760
        %v2179 = vsub.f32 %v1612, %v2178
        %2180 = vmatmul.mubr.f32.gmra.mrb[0].mxu0 %v2179
        %v2181 = vpop.f32.mrb[0].mxu0
        %v2182 = vadd.f32 %v2003, %v2181
        %v2183 = vpop.f32.mrb[0].mxu0
        %2184 = vmatprep.mubr.f32.mxu0 0.0
        %v2185 = vand.u32 %v1615, 4294901760
        %v2186 = vsub.f32 %v1615, %v2185
        %2187 = vmatmul.mubr.f32.gmra.mrb[0].mxu0 %v2186
        %v2188 = vpop.f32.mrb[0].mxu0
        %v2189 = vadd.f32 %v2009, %v2188
        %v2190 = vpop.f32.mrb[0].mxu0
        %2191 = vmatprep.mubr.f32.mxu0 0.0
        %v2192 = vand.u32 %v1618, 4294901760
        %v2193 = vsub.f32 %v1618, %v2192
        %2194 = vmatmul.mubr.f32.gmra.mrb[0].mxu0 %v2193
        %v2195 = vpop.f32.mrb[0].mxu0
        %v2196 = vadd.f32 %v2015, %v2195
        %v2197 = vpop.f32.mrb[0].mxu0
        %2198 = vmatprep.mubr.f32.mxu0 0.0
        %v2199 = vand.u32 %v1621, 4294901760
        %v2200 = vsub.f32 %v1621, %v2199
        %2201 = vmatmul.mubr.f32.gmra.mrb[0].mxu0 %v2200
        %v2202 = vpop.f32.mrb[0].mxu0
        %v2203 = vadd.f32 %v2021, %v2202
        %v2204 = vpop.f32.mrb[0].mxu0
        %2205 = vmatprep.mubr.f32.mxu0 0.0
        %v2206 = vand.u32 %v1624, 4294901760
        %v2207 = vsub.f32 %v1624, %v2206
        %2208 = vmatmul.mubr.f32.gmra.mrb[0].mxu0 %v2207
        %v2209 = vpop.f32.mrb[0].mxu0
        %v2210 = vadd.f32 %v2027, %v2209
        %v2211 = vpop.f32.mrb[0].mxu0
        %2212 = vmatprep.mubr.f32.mxu0 0.0
        %v2213 = vand.u32 %v1627, 4294901760
        %v2214 = vsub.f32 %v1627, %v2213
        %2215 = vmatmul.mubr.f32.gmra.mrb[0].mxu0 %v2214
        %v2216 = vpop.f32.mrb[0].mxu0
        %v2217 = vadd.f32 %v2033, %v2216
        %v2218 = vpop.f32.mrb[0].mxu0
        %2219 = vmatprep.mubr.f32.mxu0 0.0
        %v2220 = vand.u32 %v1630, 4294901760
        %v2221 = vsub.f32 %v1630, %v2220
        %2222 = vmatmul.mubr.f32.gmra.mrb[0].mxu0 %v2221
        %v2223 = vpop.f32.mrb[0].mxu0
        %v2224 = vadd.f32 %v2039, %v2223
        %v2225 = vpop.f32.mrb[0].mxu0
        %2226 = vdwg.mxu0
        %2227 = vmatprep.subr.mxu0 0.0
        %v2228 = vand.u32 %v385, 4294901760
        %2229 = vmatpush1.msra.mxu0 %v2228
        %2230 = vmatprep.subr.mxu0 0.0
        %v2231 = vand.u32 %v386, 4294901760
        %2232 = vmatpush1.msra.mxu0 %v2231
        %2233 = vmatprep.subr.mxu0 0.0
        %v2234 = vand.u32 %v387, 4294901760
        %2235 = vmatpush1.msra.mxu0 %v2234
        %2236 = vmatprep.subr.mxu0 0.0
        %v2237 = vand.u32 %v388, 4294901760
        %2238 = vmatpush1.msra.mxu0 %v2237
        %2239 = vmatprep.subr.mxu0 0.0
        %2240 = vmatpush1.msra.mxu0 0.0
        %2241 = vmatprep.subr.mxu0 0.0
        %2242 = vmatpush1.msra.mxu0 0.0
        %2243 = vmatprep.subr.mxu0 0.0
        %2244 = vmatpush1.msra.mxu0 0.0
        %2245 = vmatprep.subr.mxu0 0.0
        %2246 = vmatpush1.msra.mxu0 0.0
        %2247 = vmatprep.subr.mxu0 0.0
        %2248 = vmatpush1.msra.mxu0 0.0
        %2249 = vmatprep.subr.mxu0 0.0
        %2250 = vmatpush1.msra.mxu0 0.0
        %2251 = vmatprep.subr.mxu0 0.0
        %2252 = vmatpush1.msra.mxu0 0.0
        %2253 = vmatprep.subr.mxu0 0.0
        %2254 = vmatpush1.msra.mxu0 0.0
        %2255 = vmatprep.subr.mxu0 0.0
        %2256 = vmatpush1.msra.mxu0 0.0
        %2257 = vmatprep.subr.mxu0 0.0
        %2258 = vmatpush1.msra.mxu0 0.0
        %2259 = vmatprep.subr.mxu0 0.0
        %2260 = vmatpush1.msra.mxu0 0.0
        %2261 = vmatprep.subr.mxu0 0.0
        %2262 = vmatpush1.msra.mxu0 0.0
        %2263 = vmatprep.subr.mxu0 0.0
        %2264 = vmatpush1.msra.mxu0 0.0
        %2265 = vmatprep.subr.mxu0 0.0
        %2266 = vmatpush1.msra.mxu0 0.0
        %2267 = vmatprep.subr.mxu0 0.0
        %2268 = vmatpush1.msra.mxu0 0.0
        %2269 = vmatprep.subr.mxu0 0.0
        %2270 = vmatpush1.msra.mxu0 0.0
        %2271 = vmatprep.subr.mxu0 0.0
        %2272 = vmatpush1.msra.mxu0 0.0
        %2273 = vmatprep.subr.mxu0 0.0
        %2274 = vmatpush1.msra.mxu0 0.0
        %2275 = vmatprep.subr.mxu0 0.0
        %2276 = vmatpush1.msra.mxu0 0.0
        %2277 = vmatprep.subr.mxu0 0.0
        %2278 = vmatpush1.msra.mxu0 0.0
        %2279 = vmatprep.subr.mxu0 0.0
        %2280 = vmatpush1.msra.mxu0 0.0
        %2281 = vmatprep.subr.mxu0 0.0
        %2282 = vmatpush1.msra.mxu0 0.0
        %2283 = vmatprep.subr.mxu0 0.0
        %2284 = vmatpush1.msra.mxu0 0.0
        %2285 = vmatprep.subr.mxu0 0.0
        %2286 = vmatpush1.msra.mxu0 0.0
        %2287 = vmatprep.subr.mxu0 0.0
        %2288 = vmatpush1.msra.mxu0 0.0
        %2289 = vmatprep.subr.mxu0 0.0
        %2290 = vmatpush1.msra.mxu0 0.0
        %2291 = vmatprep.subr.mxu0 0.0
        %2292 = vmatpush1.msra.mxu0 0.0
        %2293 = vmatprep.subr.mxu0 0.0
        %2294 = vmatpush1.msra.mxu0 0.0
        %2295 = vmatprep.mubr.f32.mxu0 0.0
        %v2296 = vand.u32 %v1585, 4294901760
        %v2297 = vsub.f32 %v1585, %v2296
        %v2298 = vand.u32 %v2297, 4294901760
        %2299 = vmatmul.mubr.f32.gmra.mrb[0].mxu0 %v2298
        %v2300 = vpop.f32.mrb[0].mxu0
        %v2301 = vadd.f32 %v2119, %v2300
        %v2302 = vpop.f32.mrb[0].mxu0
        %2303 = vmatprep.mubr.f32.mxu0 0.0
        %v2304 = vand.u32 %v1588, 4294901760
        %v2305 = vsub.f32 %v1588, %v2304
        %v2306 = vand.u32 %v2305, 4294901760
        %2307 = vmatmul.mubr.f32.gmra.mrb[0].mxu0 %v2306
        %v2308 = vpop.f32.mrb[0].mxu0
        %v2309 = vadd.f32 %v2126, %v2308
        %v2310 = vpop.f32.mrb[0].mxu0
        %2311 = vmatprep.mubr.f32.mxu0 0.0
        %v2312 = vand.u32 %v1591, 4294901760
        %v2313 = vsub.f32 %v1591, %v2312
        %v2314 = vand.u32 %v2313, 4294901760
        %2315 = vmatmul.mubr.f32.gmra.mrb[0].mxu0 %v2314
        %v2316 = vpop.f32.mrb[0].mxu0
        %v2317 = vadd.f32 %v2133, %v2316
        %v2318 = vpop.f32.mrb[0].mxu0
        %2319 = vmatprep.mubr.f32.mxu0 0.0
        %v2320 = vand.u32 %v1594, 4294901760
        %v2321 = vsub.f32 %v1594, %v2320
        %v2322 = vand.u32 %v2321, 4294901760
        %2323 = vmatmul.mubr.f32.gmra.mrb[0].mxu0 %v2322
        %v2324 = vpop.f32.mrb[0].mxu0
        %v2325 = vadd.f32 %v2140, %v2324
        %v2326 = vpop.f32.mrb[0].mxu0
        %2327 = vmatprep.mubr.f32.mxu0 0.0
        %v2328 = vand.u32 %v1597, 4294901760
        %v2329 = vsub.f32 %v1597, %v2328
        %v2330 = vand.u32 %v2329, 4294901760
        %2331 = vmatmul.mubr.f32.gmra.mrb[0].mxu0 %v2330
        %v2332 = vpop.f32.mrb[0].mxu0
        %v2333 = vadd.f32 %v2147, %v2332
        %v2334 = vpop.f32.mrb[0].mxu0
        %2335 = vmatprep.mubr.f32.mxu0 0.0
        %v2336 = vand.u32 %v1600, 4294901760
        %v2337 = vsub.f32 %v1600, %v2336
        %v2338 = vand.u32 %v2337, 4294901760
        %2339 = vmatmul.mubr.f32.gmra.mrb[0].mxu0 %v2338
        %v2340 = vpop.f32.mrb[0].mxu0
        %v2341 = vadd.f32 %v2154, %v2340
        %v2342 = vpop.f32.mrb[0].mxu0
        %2343 = vmatprep.mubr.f32.mxu0 0.0
        %v2344 = vand.u32 %v1603, 4294901760
        %v2345 = vsub.f32 %v1603, %v2344
        %v2346 = vand.u32 %v2345, 4294901760
        %2347 = vmatmul.mubr.f32.gmra.mrb[0].mxu0 %v2346
        %v2348 = vpop.f32.mrb[0].mxu0
        %v2349 = vadd.f32 %v2161, %v2348
        %v2350 = vpop.f32.mrb[0].mxu0
        %2351 = vmatprep.mubr.f32.mxu0 0.0
        %v2352 = vand.u32 %v1606, 4294901760
        %v2353 = vsub.f32 %v1606, %v2352
        %v2354 = vand.u32 %v2353, 4294901760
        %2355 = vmatmul.mubr.f32.gmra.mrb[0].mxu0 %v2354
        %v2356 = vpop.f32.mrb[0].mxu0
        %v2357 = vadd.f32 %v2168, %v2356
        %v2358 = vpop.f32.mrb[0].mxu0
        %2359 = vmatprep.mubr.f32.mxu0 0.0
        %v2360 = vand.u32 %v1609, 4294901760
        %v2361 = vsub.f32 %v1609, %v2360
        %v2362 = vand.u32 %v2361, 4294901760
        %2363 = vmatmul.mubr.f32.gmra.mrb[0].mxu0 %v2362
        %v2364 = vpop.f32.mrb[0].mxu0
        %v2365 = vadd.f32 %v2175, %v2364
        %v2366 = vpop.f32.mrb[0].mxu0
        %2367 = vmatprep.mubr.f32.mxu0 0.0
        %v2368 = vand.u32 %v1612, 4294901760
        %v2369 = vsub.f32 %v1612, %v2368
        %v2370 = vand.u32 %v2369, 4294901760
        %2371 = vmatmul.mubr.f32.gmra.mrb[0].mxu0 %v2370
        %v2372 = vpop.f32.mrb[0].mxu0
        %v2373 = vadd.f32 %v2182, %v2372
        %v2374 = vpop.f32.mrb[0].mxu0
        %2375 = vmatprep.mubr.f32.mxu0 0.0
        %v2376 = vand.u32 %v1615, 4294901760
        %v2377 = vsub.f32 %v1615, %v2376
        %v2378 = vand.u32 %v2377, 4294901760
        %2379 = vmatmul.mubr.f32.gmra.mrb[0].mxu0 %v2378
        %v2380 = vpop.f32.mrb[0].mxu0
        %v2381 = vadd.f32 %v2189, %v2380
        %v2382 = vpop.f32.mrb[0].mxu0
        %2383 = vmatprep.mubr.f32.mxu0 0.0
        %v2384 = vand.u32 %v1618, 4294901760
        %v2385 = vsub.f32 %v1618, %v2384
        %v2386 = vand.u32 %v2385, 4294901760
        %2387 = vmatmul.mubr.f32.gmra.mrb[0].mxu0 %v2386
        %v2388 = vpop.f32.mrb[0].mxu0
        %v2389 = vadd.f32 %v2196, %v2388
        %v2390 = vpop.f32.mrb[0].mxu0
        %2391 = vmatprep.mubr.f32.mxu0 0.0
        %v2392 = vand.u32 %v1621, 4294901760
        %v2393 = vsub.f32 %v1621, %v2392
        %v2394 = vand.u32 %v2393, 4294901760
        %2395 = vmatmul.mubr.f32.gmra.mrb[0].mxu0 %v2394
        %v2396 = vpop.f32.mrb[0].mxu0
        %v2397 = vadd.f32 %v2203, %v2396
        %v2398 = vpop.f32.mrb[0].mxu0
        %2399 = vmatprep.mubr.f32.mxu0 0.0
        %v2400 = vand.u32 %v1624, 4294901760
        %v2401 = vsub.f32 %v1624, %v2400
        %v2402 = vand.u32 %v2401, 4294901760
        %2403 = vmatmul.mubr.f32.gmra.mrb[0].mxu0 %v2402
        %v2404 = vpop.f32.mrb[0].mxu0
        %v2405 = vadd.f32 %v2210, %v2404
        %v2406 = vpop.f32.mrb[0].mxu0
        %2407 = vmatprep.mubr.f32.mxu0 0.0
        %v2408 = vand.u32 %v1627, 4294901760
        %v2409 = vsub.f32 %v1627, %v2408
        %v2410 = vand.u32 %v2409, 4294901760
        %2411 = vmatmul.mubr.f32.gmra.mrb[0].mxu0 %v2410
        %v2412 = vpop.f32.mrb[0].mxu0
        %v2413 = vadd.f32 %v2217, %v2412
        %v2414 = vpop.f32.mrb[0].mxu0
        %2415 = vmatprep.mubr.f32.mxu0 0.0
        %v2416 = vand.u32 %v1630, 4294901760
        %v2417 = vsub.f32 %v1630, %v2416
        %v2418 = vand.u32 %v2417, 4294901760
        %2419 = vmatmul.mubr.f32.gmra.mrb[0].mxu0 %v2418
        %v2420 = vpop.f32.mrb[0].mxu0
        %v2421 = vadd.f32 %v2224, %v2420
        %v2422 = vpop.f32.mrb[0].mxu0
        %2423 = vdwg.mxu0
        %2424 = vmatprep.subr.mxu0 0.0
        %v2425 = vand.u32 %v385, 4294901760
        %v2426 = vsub.f32 %v385, %v2425
        %v2427 = vand.u32 %v2426, 4294901760
        %2428 = vmatpush1.msra.mxu0 %v2427
        %2429 = vmatprep.subr.mxu0 0.0
        %v2430 = vand.u32 %v386, 4294901760
        %v2431 = vsub.f32 %v386, %v2430
        %v2432 = vand.u32 %v2431, 4294901760
        %2433 = vmatpush1.msra.mxu0 %v2432
        %2434 = vmatprep.subr.mxu0 0.0
        %v2435 = vand.u32 %v387, 4294901760
        %v2436 = vsub.f32 %v387, %v2435
        %v2437 = vand.u32 %v2436, 4294901760
        %2438 = vmatpush1.msra.mxu0 %v2437
        %2439 = vmatprep.subr.mxu0 0.0
        %v2440 = vand.u32 %v388, 4294901760
        %v2441 = vsub.f32 %v388, %v2440
        %v2442 = vand.u32 %v2441, 4294901760
        %2443 = vmatpush1.msra.mxu0 %v2442
        %2444 = vmatprep.subr.mxu0 0.0
        %2445 = vmatpush1.msra.mxu0 0.0
        %2446 = vmatprep.subr.mxu0 0.0
        %2447 = vmatpush1.msra.mxu0 0.0
        %2448 = vmatprep.subr.mxu0 0.0
        %2449 = vmatpush1.msra.mxu0 0.0
        %2450 = vmatprep.subr.mxu0 0.0
        %2451 = vmatpush1.msra.mxu0 0.0
        %2452 = vmatprep.subr.mxu0 0.0
        %2453 = vmatpush1.msra.mxu0 0.0
        %2454 = vmatprep.subr.mxu0 0.0
        %2455 = vmatpush1.msra.mxu0 0.0
        %2456 = vmatprep.subr.mxu0 0.0
        %2457 = vmatpush1.msra.mxu0 0.0
        %2458 = vmatprep.subr.mxu0 0.0
        %2459 = vmatpush1.msra.mxu0 0.0
        %2460 = vmatprep.subr.mxu0 0.0
        %2461 = vmatpush1.msra.mxu0 0.0
        %2462 = vmatprep.subr.mxu0 0.0
        %2463 = vmatpush1.msra.mxu0 0.0
        %2464 = vmatprep.subr.mxu0 0.0
        %2465 = vmatpush1.msra.mxu0 0.0
        %2466 = vmatprep.subr.mxu0 0.0
        %2467 = vmatpush1.msra.mxu0 0.0
        %2468 = vmatprep.subr.mxu0 0.0
        %2469 = vmatpush1.msra.mxu0 0.0
        %2470 = vmatprep.subr.mxu0 0.0
        %2471 = vmatpush1.msra.mxu0 0.0
        %2472 = vmatprep.subr.mxu0 0.0
        %2473 = vmatpush1.msra.mxu0 0.0
        %2474 = vmatprep.subr.mxu0 0.0
        %2475 = vmatpush1.msra.mxu0 0.0
        %2476 = vmatprep.subr.mxu0 0.0
        %2477 = vmatpush1.msra.mxu0 0.0
        %2478 = vmatprep.subr.mxu0 0.0
        %2479 = vmatpush1.msra.mxu0 0.0
        %2480 = vmatprep.subr.mxu0 0.0
        %2481 = vmatpush1.msra.mxu0 0.0
        %2482 = vmatprep.subr.mxu0 0.0
        %2483 = vmatpush1.msra.mxu0 0.0
        %2484 = vmatprep.subr.mxu0 0.0
        %2485 = vmatpush1.msra.mxu0 0.0
        %2486 = vmatprep.subr.mxu0 0.0
        %2487 = vmatpush1.msra.mxu0 0.0
        %2488 = vmatprep.subr.mxu0 0.0
        %2489 = vmatpush1.msra.mxu0 0.0
        %2490 = vmatprep.subr.mxu0 0.0
        %2491 = vmatpush1.msra.mxu0 0.0
        %2492 = vmatprep.subr.mxu0 0.0
        %2493 = vmatpush1.msra.mxu0 0.0
        %2494 = vmatprep.subr.mxu0 0.0
        %2495 = vmatpush1.msra.mxu0 0.0
        %2496 = vmatprep.subr.mxu0 0.0
        %2497 = vmatpush1.msra.mxu0 0.0
        %2498 = vmatprep.subr.mxu0 0.0
        %2499 = vmatpush1.msra.mxu0 0.0
        %2500 = vmatprep.mubr.f32.mxu0 0.0
        %v2501 = vand.u32 %v1585, 4294901760
        %2502 = vmatmul.mubr.f32.gmra.mrb[0].mxu0 %v2501
        %v2503 = vpop.f32.mrb[0].mxu0
        %v2504 = vadd.f32 %v2301, %v2503
        %v2505 = vpop.f32.mrb[0].mxu0
        %2506 = vmatprep.mubr.f32.mxu0 0.0
        %v2507 = vand.u32 %v1588, 4294901760
        %2508 = vmatmul.mubr.f32.gmra.mrb[0].mxu0 %v2507
        %v2509 = vpop.f32.mrb[0].mxu0
        %v2510 = vadd.f32 %v2309, %v2509
        %v2511 = vpop.f32.mrb[0].mxu0
        %2512 = vmatprep.mubr.f32.mxu0 0.0
        %v2513 = vand.u32 %v1591, 4294901760
        %2514 = vmatmul.mubr.f32.gmra.mrb[0].mxu0 %v2513
        %v2515 = vpop.f32.mrb[0].mxu0
        %v2516 = vadd.f32 %v2317, %v2515
        %v2517 = vpop.f32.mrb[0].mxu0
        %2518 = vmatprep.mubr.f32.mxu0 0.0
        %v2519 = vand.u32 %v1594, 4294901760
        %2520 = vmatmul.mubr.f32.gmra.mrb[0].mxu0 %v2519
        %v2521 = vpop.f32.mrb[0].mxu0
        %v2522 = vadd.f32 %v2325, %v2521
        %v2523 = vpop.f32.mrb[0].mxu0
        %2524 = vmatprep.mubr.f32.mxu0 0.0
        %v2525 = vand.u32 %v1597, 4294901760
        %2526 = vmatmul.mubr.f32.gmra.mrb[0].mxu0 %v2525
        %v2527 = vpop.f32.mrb[0].mxu0
        %v2528 = vadd.f32 %v2333, %v2527
        %v2529 = vpop.f32.mrb[0].mxu0
        %2530 = vmatprep.mubr.f32.mxu0 0.0
        %v2531 = vand.u32 %v1600, 4294901760
        %2532 = vmatmul.mubr.f32.gmra.mrb[0].mxu0 %v2531
        %v2533 = vpop.f32.mrb[0].mxu0
        %v2534 = vadd.f32 %v2341, %v2533
        %v2535 = vpop.f32.mrb[0].mxu0
        %2536 = vmatprep.mubr.f32.mxu0 0.0
        %v2537 = vand.u32 %v1603, 4294901760
        %2538 = vmatmul.mubr.f32.gmra.mrb[0].mxu0 %v2537
        %v2539 = vpop.f32.mrb[0].mxu0
        %v2540 = vadd.f32 %v2349, %v2539
        %v2541 = vpop.f32.mrb[0].mxu0
        %2542 = vmatprep.mubr.f32.mxu0 0.0
        %v2543 = vand.u32 %v1606, 4294901760
        %2544 = vmatmul.mubr.f32.gmra.mrb[0].mxu0 %v2543
        %v2545 = vpop.f32.mrb[0].mxu0
        %v2546 = vadd.f32 %v2357, %v2545
        %v2547 = vpop.f32.mrb[0].mxu0
        %2548 = vmatprep.mubr.f32.mxu0 0.0
        %v2549 = vand.u32 %v1609, 4294901760
        %2550 = vmatmul.mubr.f32.gmra.mrb[0].mxu0 %v2549
        %v2551 = vpop.f32.mrb[0].mxu0
        %v2552 = vadd.f32 %v2365, %v2551
        %v2553 = vpop.f32.mrb[0].mxu0
        %2554 = vmatprep.mubr.f32.mxu0 0.0
        %v2555 = vand.u32 %v1612, 4294901760
        %2556 = vmatmul.mubr.f32.gmra.mrb[0].mxu0 %v2555
        %v2557 = vpop.f32.mrb[0].mxu0
        %v2558 = vadd.f32 %v2373, %v2557
        %v2559 = vpop.f32.mrb[0].mxu0
        %2560 = vmatprep.mubr.f32.mxu0 0.0
        %v2561 = vand.u32 %v1615, 4294901760
        %2562 = vmatmul.mubr.f32.gmra.mrb[0].mxu0 %v2561
        %v2563 = vpop.f32.mrb[0].mxu0
        %v2564 = vadd.f32 %v2381, %v2563
        %v2565 = vpop.f32.mrb[0].mxu0
        %2566 = vmatprep.mubr.f32.mxu0 0.0
        %v2567 = vand.u32 %v1618, 4294901760
        %2568 = vmatmul.mubr.f32.gmra.mrb[0].mxu0 %v2567
        %v2569 = vpop.f32.mrb[0].mxu0
        %v2570 = vadd.f32 %v2389, %v2569
        %v2571 = vpop.f32.mrb[0].mxu0
        %2572 = vmatprep.mubr.f32.mxu0 0.0
        %v2573 = vand.u32 %v1621, 4294901760
        %2574 = vmatmul.mubr.f32.gmra.mrb[0].mxu0 %v2573
        %v2575 = vpop.f32.mrb[0].mxu0
        %v2576 = vadd.f32 %v2397, %v2575
        %v2577 = vpop.f32.mrb[0].mxu0
        %2578 = vmatprep.mubr.f32.mxu0 0.0
        %v2579 = vand.u32 %v1624, 4294901760
        %2580 = vmatmul.mubr.f32.gmra.mrb[0].mxu0 %v2579
        %v2581 = vpop.f32.mrb[0].mxu0
        %v2582 = vadd.f32 %v2405, %v2581
        %v2583 = vpop.f32.mrb[0].mxu0
        %2584 = vmatprep.mubr.f32.mxu0 0.0
        %v2585 = vand.u32 %v1627, 4294901760
        %2586 = vmatmul.mubr.f32.gmra.mrb[0].mxu0 %v2585
        %v2587 = vpop.f32.mrb[0].mxu0
        %v2588 = vadd.f32 %v2413, %v2587
        %v2589 = vpop.f32.mrb[0].mxu0
        %2590 = vmatprep.mubr.f32.mxu0 0.0
        %v2591 = vand.u32 %v1630, 4294901760
        %2592 = vmatmul.mubr.f32.gmra.mrb[0].mxu0 %v2591
        %v2593 = vpop.f32.mrb[0].mxu0
        %v2594 = vadd.f32 %v2421, %v2593
        %v2595 = vpop.f32.mrb[0].mxu0
        %2596 = vdwg.mxu0
        %2597 = vmatprep.subr.mxu0 0.0
        %v2598 = vand.u32 %v385, 4294901760
        %2599 = vmatpush1.msra.mxu0 %v2598
        %2600 = vmatprep.subr.mxu0 0.0
        %v2601 = vand.u32 %v386, 4294901760
        %2602 = vmatpush1.msra.mxu0 %v2601
        %2603 = vmatprep.subr.mxu0 0.0
        %v2604 = vand.u32 %v387, 4294901760
        %2605 = vmatpush1.msra.mxu0 %v2604
        %2606 = vmatprep.subr.mxu0 0.0
        %v2607 = vand.u32 %v388, 4294901760
        %2608 = vmatpush1.msra.mxu0 %v2607
        %2609 = vmatprep.subr.mxu0 0.0
        %2610 = vmatpush1.msra.mxu0 0.0
        %2611 = vmatprep.subr.mxu0 0.0
        %2612 = vmatpush1.msra.mxu0 0.0
        %2613 = vmatprep.subr.mxu0 0.0
        %2614 = vmatpush1.msra.mxu0 0.0
        %2615 = vmatprep.subr.mxu0 0.0
        %2616 = vmatpush1.msra.mxu0 0.0
        %2617 = vmatprep.subr.mxu0 0.0
        %2618 = vmatpush1.msra.mxu0 0.0
        %2619 = vmatprep.subr.mxu0 0.0
        %2620 = vmatpush1.msra.mxu0 0.0
        %2621 = vmatprep.subr.mxu0 0.0
        %2622 = vmatpush1.msra.mxu0 0.0
        %2623 = vmatprep.subr.mxu0 0.0
        %2624 = vmatpush1.msra.mxu0 0.0
        %2625 = vmatprep.subr.mxu0 0.0
        %2626 = vmatpush1.msra.mxu0 0.0
        %2627 = vmatprep.subr.mxu0 0.0
        %2628 = vmatpush1.msra.mxu0 0.0
        %2629 = vmatprep.subr.mxu0 0.0
        %2630 = vmatpush1.msra.mxu0 0.0
        %2631 = vmatprep.subr.mxu0 0.0
        %2632 = vmatpush1.msra.mxu0 0.0
        %2633 = vmatprep.subr.mxu0 0.0
        %2634 = vmatpush1.msra.mxu0 0.0
        %2635 = vmatprep.subr.mxu0 0.0
        %2636 = vmatpush1.msra.mxu0 0.0
        %2637 = vmatprep.subr.mxu0 0.0
        %2638 = vmatpush1.msra.mxu0 0.0
        %2639 = vmatprep.subr.mxu0 0.0
        %2640 = vmatpush1.msra.mxu0 0.0
        %2641 = vmatprep.subr.mxu0 0.0
        %2642 = vmatpush1.msra.mxu0 0.0
        %2643 = vmatprep.subr.mxu0 0.0
        %2644 = vmatpush1.msra.mxu0 0.0
        %2645 = vmatprep.subr.mxu0 0.0
        %2646 = vmatpush1.msra.mxu0 0.0
        %2647 = vmatprep.subr.mxu0 0.0
        %2648 = vmatpush1.msra.mxu0 0.0
        %2649 = vmatprep.subr.mxu0 0.0
        %2650 = vmatpush1.msra.mxu0 0.0
        %2651 = vmatprep.subr.mxu0 0.0
        %2652 = vmatpush1.msra.mxu0 0.0
        %2653 = vmatprep.subr.mxu0 0.0
        %2654 = vmatpush1.msra.mxu0 0.0
        %2655 = vmatprep.subr.mxu0 0.0
        %2656 = vmatpush1.msra.mxu0 0.0
        %2657 = vmatprep.subr.mxu0 0.0
        %2658 = vmatpush1.msra.mxu0 0.0
        %2659 = vmatprep.subr.mxu0 0.0
        %2660 = vmatpush1.msra.mxu0 0.0
        %2661 = vmatprep.subr.mxu0 0.0
        %2662 = vmatpush1.msra.mxu0 0.0
        %2663 = vmatprep.subr.mxu0 0.0
        %2664 = vmatpush1.msra.mxu0 0.0
        %2665 = vmatprep.mubr.f32.mxu0 0.0
        %v2666 = vand.u32 %v1585, 4294901760
        %2667 = vmatmul.mubr.f32.gmra.mrb[0].mxu0 %v2666
        %v2668 = vpop.f32.mrb[0].mxu0
        %v2669 = vadd.f32 %v2504, %v2668
        %v2670 = vpop.f32.mrb[0].mxu0
        %2671 = vmatprep.mubr.f32.mxu0 0.0
        %v2672 = vand.u32 %v1588, 4294901760
        %2673 = vmatmul.mubr.f32.gmra.mrb[0].mxu0 %v2672
        %v2674 = vpop.f32.mrb[0].mxu0
        %v2675 = vadd.f32 %v2510, %v2674
        %v2676 = vpop.f32.mrb[0].mxu0
        %2677 = vmatprep.mubr.f32.mxu0 0.0
        %v2678 = vand.u32 %v1591, 4294901760
        %2679 = vmatmul.mubr.f32.gmra.mrb[0].mxu0 %v2678
        %v2680 = vpop.f32.mrb[0].mxu0
        %v2681 = vadd.f32 %v2516, %v2680
        %v2682 = vpop.f32.mrb[0].mxu0
        %2683 = vmatprep.mubr.f32.mxu0 0.0
        %v2684 = vand.u32 %v1594, 4294901760
        %2685 = vmatmul.mubr.f32.gmra.mrb[0].mxu0 %v2684
        %v2686 = vpop.f32.mrb[0].mxu0
        %v2687 = vadd.f32 %v2522, %v2686
        %v2688 = vpop.f32.mrb[0].mxu0
        %2689 = vmatprep.mubr.f32.mxu0 0.0
        %v2690 = vand.u32 %v1597, 4294901760
        %2691 = vmatmul.mubr.f32.gmra.mrb[0].mxu0 %v2690
        %v2692 = vpop.f32.mrb[0].mxu0
        %v2693 = vadd.f32 %v2528, %v2692
        %v2694 = vpop.f32.mrb[0].mxu0
        %2695 = vmatprep.mubr.f32.mxu0 0.0
        %v2696 = vand.u32 %v1600, 4294901760
        %2697 = vmatmul.mubr.f32.gmra.mrb[0].mxu0 %v2696
        %v2698 = vpop.f32.mrb[0].mxu0
        %v2699 = vadd.f32 %v2534, %v2698
        %v2700 = vpop.f32.mrb[0].mxu0
        %2701 = vmatprep.mubr.f32.mxu0 0.0
        %v2702 = vand.u32 %v1603, 4294901760
        %2703 = vmatmul.mubr.f32.gmra.mrb[0].mxu0 %v2702
        %v2704 = vpop.f32.mrb[0].mxu0
        %v2705 = vadd.f32 %v2540, %v2704
        %v2706 = vpop.f32.mrb[0].mxu0
        %2707 = vmatprep.mubr.f32.mxu0 0.0
        %v2708 = vand.u32 %v1606, 4294901760
        %2709 = vmatmul.mubr.f32.gmra.mrb[0].mxu0 %v2708
        %v2710 = vpop.f32.mrb[0].mxu0
        %v2711 = vadd.f32 %v2546, %v2710
        %v2712 = vpop.f32.mrb[0].mxu0
        %2713 = vmatprep.mubr.f32.mxu0 0.0
        %v2714 = vand.u32 %v1609, 4294901760
        %2715 = vmatmul.mubr.f32.gmra.mrb[0].mxu0 %v2714
        %v2716 = vpop.f32.mrb[0].mxu0
        %v2717 = vadd.f32 %v2552, %v2716
        %v2718 = vpop.f32.mrb[0].mxu0
        %2719 = vmatprep.mubr.f32.mxu0 0.0
        %v2720 = vand.u32 %v1612, 4294901760
        %2721 = vmatmul.mubr.f32.gmra.mrb[0].mxu0 %v2720
        %v2722 = vpop.f32.mrb[0].mxu0
        %v2723 = vadd.f32 %v2558, %v2722
        %v2724 = vpop.f32.mrb[0].mxu0
        %2725 = vmatprep.mubr.f32.mxu0 0.0
        %v2726 = vand.u32 %v1615, 4294901760
        %2727 = vmatmul.mubr.f32.gmra.mrb[0].mxu0 %v2726
        %v2728 = vpop.f32.mrb[0].mxu0
        %v2729 = vadd.f32 %v2564, %v2728
        %v2730 = vpop.f32.mrb[0].mxu0
        %2731 = vmatprep.mubr.f32.mxu0 0.0
        %v2732 = vand.u32 %v1618, 4294901760
        %2733 = vmatmul.mubr.f32.gmra.mrb[0].mxu0 %v2732
        %v2734 = vpop.f32.mrb[0].mxu0
        %v2735 = vadd.f32 %v2570, %v2734
        %v2736 = vpop.f32.mrb[0].mxu0
        %2737 = vmatprep.mubr.f32.mxu0 0.0
        %v2738 = vand.u32 %v1621, 4294901760
        %2739 = vmatmul.mubr.f32.gmra.mrb[0].mxu0 %v2738
        %v2740 = vpop.f32.mrb[0].mxu0
        %v2741 = vadd.f32 %v2576, %v2740
        %v2742 = vpop.f32.mrb[0].mxu0
        %2743 = vmatprep.mubr.f32.mxu0 0.0
        %v2744 = vand.u32 %v1624, 4294901760
        %2745 = vmatmul.mubr.f32.gmra.mrb[0].mxu0 %v2744
        %v2746 = vpop.f32.mrb[0].mxu0
        %v2747 = vadd.f32 %v2582, %v2746
        %v2748 = vpop.f32.mrb[0].mxu0
        %2749 = vmatprep.mubr.f32.mxu0 0.0
        %v2750 = vand.u32 %v1627, 4294901760
        %2751 = vmatmul.mubr.f32.gmra.mrb[0].mxu0 %v2750
        %v2752 = vpop.f32.mrb[0].mxu0
        %v2753 = vadd.f32 %v2588, %v2752
        %v2754 = vpop.f32.mrb[0].mxu0
        %2755 = vmatprep.mubr.f32.mxu0 0.0
        %v2756 = vand.u32 %v1630, 4294901760
        %2757 = vmatmul.mubr.f32.gmra.mrb[0].mxu0 %v2756
        %v2758 = vpop.f32.mrb[0].mxu0
        %v2759 = vadd.f32 %v2594, %v2758
        %v2760 = vpop.f32.mrb[0].mxu0
        %2761 = vdwg.mxu0
        %v2762 = vld [vmem:[%s3] sm:$0xff]
        %v2763 = vld [vmem:[%s3 + $0x8] sm:$0xff]
        %v2764 = vld [vmem:[%s3 + $0x10] sm:$0xff]
        %v2765 = vld [vmem:[%s3 + $0x18] sm:$0xff]
        %v2766 = vld [vmem:[%s3 + $0x20] sm:$0xff]
        %v2767 = vld [vmem:[%s3 + $0x28] sm:$0xff]
        %v2768 = vld [vmem:[%s3 + $0x30] sm:$0xff]
        %v2769 = vld [vmem:[%s3 + $0x38] sm:$0xff]
        %v2770 = vld [vmem:[%s3 + $0x40] sm:$0xff]
        %v2771 = vld [vmem:[%s3 + $0x48] sm:$0xff]
        %v2772 = vld [vmem:[%s3 + $0x50] sm:$0xff]
        %v2773 = vld [vmem:[%s3 + $0x58] sm:$0xff]
        %v2774 = vld [vmem:[%s3 + $0x60] sm:$0xff]
        %v2775 = vld [vmem:[%s3 + $0x68] sm:$0xff]
        %v2776 = vld [vmem:[%s3 + $0x70] sm:$0xff]
        %v2777 = vld [vmem:[%s3 + $0x78] sm:$0xff]
        %2778 = vmatprep.subr.mxu0 0.0
        %v2779 = vand.u32 %v2762, 4294901760
        %2780 = vmatpush1.msra.mxu0 %v2779
        %2781 = vmatprep.subr.mxu0 0.0
        %v2782 = vand.u32 %v2763, 4294901760
        %2783 = vmatpush1.msra.mxu0 %v2782
        %2784 = vmatprep.subr.mxu0 0.0
        %v2785 = vand.u32 %v2764, 4294901760
        %2786 = vmatpush1.msra.mxu0 %v2785
        %2787 = vmatprep.subr.mxu0 0.0
        %v2788 = vand.u32 %v2765, 4294901760
        %2789 = vmatpush1.msra.mxu0 %v2788
        %2790 = vmatprep.subr.mxu0 0.0
        %v2791 = vand.u32 %v2766, 4294901760
        %2792 = vmatpush1.msra.mxu0 %v2791
        %2793 = vmatprep.subr.mxu0 0.0
        %v2794 = vand.u32 %v2767, 4294901760
        %2795 = vmatpush1.msra.mxu0 %v2794
        %2796 = vmatprep.subr.mxu0 0.0
        %v2797 = vand.u32 %v2768, 4294901760
        %2798 = vmatpush1.msra.mxu0 %v2797
        %2799 = vmatprep.subr.mxu0 0.0
        %v2800 = vand.u32 %v2769, 4294901760
        %2801 = vmatpush1.msra.mxu0 %v2800
        %2802 = vmatprep.subr.mxu0 0.0
        %v2803 = vand.u32 %v2770, 4294901760
        %2804 = vmatpush1.msra.mxu0 %v2803
        %2805 = vmatprep.subr.mxu0 0.0
        %v2806 = vand.u32 %v2771, 4294901760
        %2807 = vmatpush1.msra.mxu0 %v2806
        %2808 = vmatprep.subr.mxu0 0.0
        %v2809 = vand.u32 %v2772, 4294901760
        %2810 = vmatpush1.msra.mxu0 %v2809
        %2811 = vmatprep.subr.mxu0 0.0
        %v2812 = vand.u32 %v2773, 4294901760
        %2813 = vmatpush1.msra.mxu0 %v2812
        %2814 = vmatprep.subr.mxu0 0.0
        %v2815 = vand.u32 %v2774, 4294901760
        %2816 = vmatpush1.msra.mxu0 %v2815
        %2817 = vmatprep.subr.mxu0 0.0
        %v2818 = vand.u32 %v2775, 4294901760
        %2819 = vmatpush1.msra.mxu0 %v2818
        %2820 = vmatprep.subr.mxu0 0.0
        %v2821 = vand.u32 %v2776, 4294901760
        %2822 = vmatpush1.msra.mxu0 %v2821
        %2823 = vmatprep.subr.mxu0 0.0
        %v2824 = vand.u32 %v2777, 4294901760
        %2825 = vmatpush1.msra.mxu0 %v2824
        %2826 = vmatprep.subr.mxu0 0.0
        %2827 = vmatpush1.msra.mxu0 0.0
        %2828 = vmatprep.subr.mxu0 0.0
        %2829 = vmatpush1.msra.mxu0 0.0
        %2830 = vmatprep.subr.mxu0 0.0
        %2831 = vmatpush1.msra.mxu0 0.0
        %2832 = vmatprep.subr.mxu0 0.0
        %2833 = vmatpush1.msra.mxu0 0.0
        %2834 = vmatprep.subr.mxu0 0.0
        %2835 = vmatpush1.msra.mxu0 0.0
        %2836 = vmatprep.subr.mxu0 0.0
        %2837 = vmatpush1.msra.mxu0 0.0
        %2838 = vmatprep.subr.mxu0 0.0
        %2839 = vmatpush1.msra.mxu0 0.0
        %2840 = vmatprep.subr.mxu0 0.0
        %2841 = vmatpush1.msra.mxu0 0.0
        %2842 = vmatprep.subr.mxu0 0.0
        %2843 = vmatpush1.msra.mxu0 0.0
        %2844 = vmatprep.subr.mxu0 0.0
        %2845 = vmatpush1.msra.mxu0 0.0
        %2846 = vmatprep.subr.mxu0 0.0
        %2847 = vmatpush1.msra.mxu0 0.0
        %2848 = vmatprep.subr.mxu0 0.0
        %2849 = vmatpush1.msra.mxu0 0.0
        %2850 = vmatprep.subr.mxu0 0.0
        %2851 = vmatpush1.msra.mxu0 0.0
        %2852 = vmatprep.subr.mxu0 0.0
        %2853 = vmatpush1.msra.mxu0 0.0
        %2854 = vmatprep.subr.mxu0 0.0
        %2855 = vmatpush1.msra.mxu0 0.0
        %2856 = vmatprep.subr.mxu0 0.0
        %2857 = vmatpush1.msra.mxu0 0.0
        %2858 = vmatprep.mubr.f32.mxu0 0.0
        %v2859 = vand.u32 %v1475, 4294901760
        %v2860 = vsub.f32 %v1475, %v2859
        %v2861 = vand.u32 %v2860, 4294901760
        %v2862 = vsub.f32 %v2860, %v2861
        %v2863 = vand.u32 %v2862, 4294901760
        %2864 = vmatmul.mubr.f32.gmra.mrb[0].mxu0 %v2863
        %v2865 = vpop.f32.mrb[0].mxu0
        %v2866 = vadd.f32 0.0, %v2865
        %v2867 = vpop.f32.mrb[0].mxu0
        %2868 = vmatprep.mubr.f32.mxu0 0.0
        %v2869 = vand.u32 %v1481, 4294901760
        %v2870 = vsub.f32 %v1481, %v2869
        %v2871 = vand.u32 %v2870, 4294901760
        %v2872 = vsub.f32 %v2870, %v2871
        %v2873 = vand.u32 %v2872, 4294901760
        %2874 = vmatmul.mubr.f32.gmra.mrb[0].mxu0 %v2873
        %v2875 = vpop.f32.mrb[0].mxu0
        %v2876 = vadd.f32 0.0, %v2875
        %v2877 = vpop.f32.mrb[0].mxu0
        %2878 = vmatprep.mubr.f32.mxu0 0.0
        %v2879 = vand.u32 %v1487, 4294901760
        %v2880 = vsub.f32 %v1487, %v2879
        %v2881 = vand.u32 %v2880, 4294901760
        %v2882 = vsub.f32 %v2880, %v2881
        %v2883 = vand.u32 %v2882, 4294901760
        %2884 = vmatmul.mubr.f32.gmra.mrb[0].mxu0 %v2883
        %v2885 = vpop.f32.mrb[0].mxu0
        %v2886 = vadd.f32 0.0, %v2885
        %v2887 = vpop.f32.mrb[0].mxu0
        %2888 = vmatprep.mubr.f32.mxu0 0.0
        %v2889 = vand.u32 %v1493, 4294901760
        %v2890 = vsub.f32 %v1493, %v2889
        %v2891 = vand.u32 %v2890, 4294901760
        %v2892 = vsub.f32 %v2890, %v2891
        %v2893 = vand.u32 %v2892, 4294901760
        %2894 = vmatmul.mubr.f32.gmra.mrb[0].mxu0 %v2893
        %v2895 = vpop.f32.mrb[0].mxu0
        %v2896 = vadd.f32 0.0, %v2895
        %v2897 = vpop.f32.mrb[0].mxu0
        %2898 = vmatprep.mubr.f32.mxu0 0.0
        %v2899 = vand.u32 %v1499, 4294901760
        %v2900 = vsub.f32 %v1499, %v2899
        %v2901 = vand.u32 %v2900, 4294901760
        %v2902 = vsub.f32 %v2900, %v2901
        %v2903 = vand.u32 %v2902, 4294901760
        %2904 = vmatmul.mubr.f32.gmra.mrb[0].mxu0 %v2903
        %v2905 = vpop.f32.mrb[0].mxu0
        %v2906 = vadd.f32 0.0, %v2905
        %v2907 = vpop.f32.mrb[0].mxu0
        %2908 = vmatprep.mubr.f32.mxu0 0.0
        %v2909 = vand.u32 %v1505, 4294901760
        %v2910 = vsub.f32 %v1505, %v2909
        %v2911 = vand.u32 %v2910, 4294901760
        %v2912 = vsub.f32 %v2910, %v2911
        %v2913 = vand.u32 %v2912, 4294901760
        %2914 = vmatmul.mubr.f32.gmra.mrb[0].mxu0 %v2913
        %v2915 = vpop.f32.mrb[0].mxu0
        %v2916 = vadd.f32 0.0, %v2915
        %v2917 = vpop.f32.mrb[0].mxu0
        %2918 = vmatprep.mubr.f32.mxu0 0.0
        %v2919 = vand.u32 %v1511, 4294901760
        %v2920 = vsub.f32 %v1511, %v2919
        %v2921 = vand.u32 %v2920, 4294901760
        %v2922 = vsub.f32 %v2920, %v2921
        %v2923 = vand.u32 %v2922, 4294901760
        %2924 = vmatmul.mubr.f32.gmra.mrb[0].mxu0 %v2923
        %v2925 = vpop.f32.mrb[0].mxu0
        %v2926 = vadd.f32 0.0, %v2925
        %v2927 = vpop.f32.mrb[0].mxu0
        %2928 = vmatprep.mubr.f32.mxu0 0.0
        %v2929 = vand.u32 %v1517, 4294901760
        %v2930 = vsub.f32 %v1517, %v2929
        %v2931 = vand.u32 %v2930, 4294901760
        %v2932 = vsub.f32 %v2930, %v2931
        %v2933 = vand.u32 %v2932, 4294901760
        %2934 = vmatmul.mubr.f32.gmra.mrb[0].mxu0 %v2933
        %v2935 = vpop.f32.mrb[0].mxu0
        %v2936 = vadd.f32 0.0, %v2935
        %v2937 = vpop.f32.mrb[0].mxu0
        %2938 = vmatprep.mubr.f32.mxu0 0.0
        %v2939 = vand.u32 %v1523, 4294901760
        %v2940 = vsub.f32 %v1523, %v2939
        %v2941 = vand.u32 %v2940, 4294901760
        %v2942 = vsub.f32 %v2940, %v2941
        %v2943 = vand.u32 %v2942, 4294901760
        %2944 = vmatmul.mubr.f32.gmra.mrb[0].mxu0 %v2943
        %v2945 = vpop.f32.mrb[0].mxu0
        %v2946 = vadd.f32 0.0, %v2945
        %v2947 = vpop.f32.mrb[0].mxu0
        %2948 = vmatprep.mubr.f32.mxu0 0.0
        %v2949 = vand.u32 %v1529, 4294901760
        %v2950 = vsub.f32 %v1529, %v2949
        %v2951 = vand.u32 %v2950, 4294901760
        %v2952 = vsub.f32 %v2950, %v2951
        %v2953 = vand.u32 %v2952, 4294901760
        %2954 = vmatmul.mubr.f32.gmra.mrb[0].mxu0 %v2953
        %v2955 = vpop.f32.mrb[0].mxu0
        %v2956 = vadd.f32 0.0, %v2955
        %v2957 = vpop.f32.mrb[0].mxu0
        %2958 = vmatprep.mubr.f32.mxu0 0.0
        %v2959 = vand.u32 %v1535, 4294901760
        %v2960 = vsub.f32 %v1535, %v2959
        %v2961 = vand.u32 %v2960, 4294901760
        %v2962 = vsub.f32 %v2960, %v2961
        %v2963 = vand.u32 %v2962, 4294901760
        %2964 = vmatmul.mubr.f32.gmra.mrb[0].mxu0 %v2963
        %v2965 = vpop.f32.mrb[0].mxu0
        %v2966 = vadd.f32 0.0, %v2965
        %v2967 = vpop.f32.mrb[0].mxu0
        %2968 = vmatprep.mubr.f32.mxu0 0.0
        %v2969 = vand.u32 %v1541, 4294901760
        %v2970 = vsub.f32 %v1541, %v2969
        %v2971 = vand.u32 %v2970, 4294901760
        %v2972 = vsub.f32 %v2970, %v2971
        %v2973 = vand.u32 %v2972, 4294901760
        %2974 = vmatmul.mubr.f32.gmra.mrb[0].mxu0 %v2973
        %v2975 = vpop.f32.mrb[0].mxu0
        %v2976 = vadd.f32 0.0, %v2975
        %v2977 = vpop.f32.mrb[0].mxu0
        %2978 = vmatprep.mubr.f32.mxu0 0.0
        %v2979 = vand.u32 %v1547, 4294901760
        %v2980 = vsub.f32 %v1547, %v2979
        %v2981 = vand.u32 %v2980, 4294901760
        %v2982 = vsub.f32 %v2980, %v2981
        %v2983 = vand.u32 %v2982, 4294901760
        %2984 = vmatmul.mubr.f32.gmra.mrb[0].mxu0 %v2983
        %v2985 = vpop.f32.mrb[0].mxu0
        %v2986 = vadd.f32 0.0, %v2985
        %v2987 = vpop.f32.mrb[0].mxu0
        %2988 = vmatprep.mubr.f32.mxu0 0.0
        %v2989 = vand.u32 %v1553, 4294901760
        %v2990 = vsub.f32 %v1553, %v2989
        %v2991 = vand.u32 %v2990, 4294901760
        %v2992 = vsub.f32 %v2990, %v2991
        %v2993 = vand.u32 %v2992, 4294901760
        %2994 = vmatmul.mubr.f32.gmra.mrb[0].mxu0 %v2993
        %v2995 = vpop.f32.mrb[0].mxu0
        %v2996 = vadd.f32 0.0, %v2995
        %v2997 = vpop.f32.mrb[0].mxu0
        %2998 = vmatprep.mubr.f32.mxu0 0.0
        %v2999 = vand.u32 %v1559, 4294901760
        %v3000 = vsub.f32 %v1559, %v2999
        %v3001 = vand.u32 %v3000, 4294901760
        %v3002 = vsub.f32 %v3000, %v3001
        %v3003 = vand.u32 %v3002, 4294901760
        %3004 = vmatmul.mubr.f32.gmra.mrb[0].mxu0 %v3003
        %v3005 = vpop.f32.mrb[0].mxu0
        %v3006 = vadd.f32 0.0, %v3005
        %v3007 = vpop.f32.mrb[0].mxu0
        %3008 = vmatprep.mubr.f32.mxu0 0.0
        %v3009 = vand.u32 %v1565, 4294901760
        %v3010 = vsub.f32 %v1565, %v3009
        %v3011 = vand.u32 %v3010, 4294901760
        %v3012 = vsub.f32 %v3010, %v3011
        %v3013 = vand.u32 %v3012, 4294901760
        %3014 = vmatmul.mubr.f32.gmra.mrb[0].mxu0 %v3013
        %v3015 = vpop.f32.mrb[0].mxu0
        %v3016 = vadd.f32 0.0, %v3015
        %v3017 = vpop.f32.mrb[0].mxu0
        %3018 = vdwg.mxu0
        %3019 = vmatprep.subr.mxu0 0.0
        %v3020 = vand.u32 %v2762, 4294901760
        %v3021 = vsub.f32 %v2762, %v3020
        %v3022 = vand.u32 %v3021, 4294901760
        %v3023 = vsub.f32 %v3021, %v3022
        %v3024 = vand.u32 %v3023, 4294901760
        %3025 = vmatpush1.msra.mxu0 %v3024
        %3026 = vmatprep.subr.mxu0 0.0
        %v3027 = vand.u32 %v2763, 4294901760
        %v3028 = vsub.f32 %v2763, %v3027
        %v3029 = vand.u32 %v3028, 4294901760
        %v3030 = vsub.f32 %v3028, %v3029
        %v3031 = vand.u32 %v3030, 4294901760
        %3032 = vmatpush1.msra.mxu0 %v3031
        %3033 = vmatprep.subr.mxu0 0.0
        %v3034 = vand.u32 %v2764, 4294901760
        %v3035 = vsub.f32 %v2764, %v3034
        %v3036 = vand.u32 %v3035, 4294901760
        %v3037 = vsub.f32 %v3035, %v3036
        %v3038 = vand.u32 %v3037, 4294901760
        %3039 = vmatpush1.msra.mxu0 %v3038
        %3040 = vmatprep.subr.mxu0 0.0
        %v3041 = vand.u32 %v2765, 4294901760
        %v3042 = vsub.f32 %v2765, %v3041
        %v3043 = vand.u32 %v3042, 4294901760
        %v3044 = vsub.f32 %v3042, %v3043
        %v3045 = vand.u32 %v3044, 4294901760
        %3046 = vmatpush1.msra.mxu0 %v3045
        %3047 = vmatprep.subr.mxu0 0.0
        %v3048 = vand.u32 %v2766, 4294901760
        %v3049 = vsub.f32 %v2766, %v3048
        %v3050 = vand.u32 %v3049, 4294901760
        %v3051 = vsub.f32 %v3049, %v3050
        %v3052 = vand.u32 %v3051, 4294901760
        %3053 = vmatpush1.msra.mxu0 %v3052
        %3054 = vmatprep.subr.mxu0 0.0
        %v3055 = vand.u32 %v2767, 4294901760
        %v3056 = vsub.f32 %v2767, %v3055
        %v3057 = vand.u32 %v3056, 4294901760
        %v3058 = vsub.f32 %v3056, %v3057
        %v3059 = vand.u32 %v3058, 4294901760
        %3060 = vmatpush1.msra.mxu0 %v3059
        %3061 = vmatprep.subr.mxu0 0.0
        %v3062 = vand.u32 %v2768, 4294901760
        %v3063 = vsub.f32 %v2768, %v3062
        %v3064 = vand.u32 %v3063, 4294901760
        %v3065 = vsub.f32 %v3063, %v3064
        %v3066 = vand.u32 %v3065, 4294901760
        %3067 = vmatpush1.msra.mxu0 %v3066
        %3068 = vmatprep.subr.mxu0 0.0
        %v3069 = vand.u32 %v2769, 4294901760
        %v3070 = vsub.f32 %v2769, %v3069
        %v3071 = vand.u32 %v3070, 4294901760
        %v3072 = vsub.f32 %v3070, %v3071
        %v3073 = vand.u32 %v3072, 4294901760
        %3074 = vmatpush1.msra.mxu0 %v3073
        %3075 = vmatprep.subr.mxu0 0.0
        %v3076 = vand.u32 %v2770, 4294901760
        %v3077 = vsub.f32 %v2770, %v3076
        %v3078 = vand.u32 %v3077, 4294901760
        %v3079 = vsub.f32 %v3077, %v3078
        %v3080 = vand.u32 %v3079, 4294901760
        %3081 = vmatpush1.msra.mxu0 %v3080
        %3082 = vmatprep.subr.mxu0 0.0
        %v3083 = vand.u32 %v2771, 4294901760
        %v3084 = vsub.f32 %v2771, %v3083
        %v3085 = vand.u32 %v3084, 4294901760
        %v3086 = vsub.f32 %v3084, %v3085
        %v3087 = vand.u32 %v3086, 4294901760
        %3088 = vmatpush1.msra.mxu0 %v3087
        %3089 = vmatprep.subr.mxu0 0.0
        %v3090 = vand.u32 %v2772, 4294901760
        %v3091 = vsub.f32 %v2772, %v3090
        %v3092 = vand.u32 %v3091, 4294901760
        %v3093 = vsub.f32 %v3091, %v3092
        %v3094 = vand.u32 %v3093, 4294901760
        %3095 = vmatpush1.msra.mxu0 %v3094
        %3096 = vmatprep.subr.mxu0 0.0
        %v3097 = vand.u32 %v2773, 4294901760
        %v3098 = vsub.f32 %v2773, %v3097
        %v3099 = vand.u32 %v3098, 4294901760
        %v3100 = vsub.f32 %v3098, %v3099
        %v3101 = vand.u32 %v3100, 4294901760
        %3102 = vmatpush1.msra.mxu0 %v3101
        %3103 = vmatprep.subr.mxu0 0.0
        %v3104 = vand.u32 %v2774, 4294901760
        %v3105 = vsub.f32 %v2774, %v3104
        %v3106 = vand.u32 %v3105, 4294901760
        %v3107 = vsub.f32 %v3105, %v3106
        %v3108 = vand.u32 %v3107, 4294901760
        %3109 = vmatpush1.msra.mxu0 %v3108
        %3110 = vmatprep.subr.mxu0 0.0
        %v3111 = vand.u32 %v2775, 4294901760
        %v3112 = vsub.f32 %v2775, %v3111
        %v3113 = vand.u32 %v3112, 4294901760
        %v3114 = vsub.f32 %v3112, %v3113
        %v3115 = vand.u32 %v3114, 4294901760
        %3116 = vmatpush1.msra.mxu0 %v3115
        %3117 = vmatprep.subr.mxu0 0.0
        %v3118 = vand.u32 %v2776, 4294901760
        %v3119 = vsub.f32 %v2776, %v3118
        %v3120 = vand.u32 %v3119, 4294901760
        %v3121 = vsub.f32 %v3119, %v3120
        %v3122 = vand.u32 %v3121, 4294901760
        %3123 = vmatpush1.msra.mxu0 %v3122
        %3124 = vmatprep.subr.mxu0 0.0
        %v3125 = vand.u32 %v2777, 4294901760
        %v3126 = vsub.f32 %v2777, %v3125
        %v3127 = vand.u32 %v3126, 4294901760
        %v3128 = vsub.f32 %v3126, %v3127
        %v3129 = vand.u32 %v3128, 4294901760
        %3130 = vmatpush1.msra.mxu0 %v3129
        %3131 = vmatprep.subr.mxu0 0.0
        %3132 = vmatpush1.msra.mxu0 0.0
        %3133 = vmatprep.subr.mxu0 0.0
        %3134 = vmatpush1.msra.mxu0 0.0
        %3135 = vmatprep.subr.mxu0 0.0
        %3136 = vmatpush1.msra.mxu0 0.0
        %3137 = vmatprep.subr.mxu0 0.0
        %3138 = vmatpush1.msra.mxu0 0.0
        %3139 = vmatprep.subr.mxu0 0.0
        %3140 = vmatpush1.msra.mxu0 0.0
        %3141 = vmatprep.subr.mxu0 0.0
        %3142 = vmatpush1.msra.mxu0 0.0
        %3143 = vmatprep.subr.mxu0 0.0
        %3144 = vmatpush1.msra.mxu0 0.0
        %3145 = vmatprep.subr.mxu0 0.0
        %3146 = vmatpush1.msra.mxu0 0.0
        %3147 = vmatprep.subr.mxu0 0.0
        %3148 = vmatpush1.msra.mxu0 0.0
        %3149 = vmatprep.subr.mxu0 0.0
        %3150 = vmatpush1.msra.mxu0 0.0
        %3151 = vmatprep.subr.mxu0 0.0
        %3152 = vmatpush1.msra.mxu0 0.0
        %3153 = vmatprep.subr.mxu0 0.0
        %3154 = vmatpush1.msra.mxu0 0.0
        %3155 = vmatprep.subr.mxu0 0.0
        %3156 = vmatpush1.msra.mxu0 0.0
        %3157 = vmatprep.subr.mxu0 0.0
        %3158 = vmatpush1.msra.mxu0 0.0
        %3159 = vmatprep.subr.mxu0 0.0
        %3160 = vmatpush1.msra.mxu0 0.0
        %3161 = vmatprep.subr.mxu0 0.0
        %3162 = vmatpush1.msra.mxu0 0.0
        %3163 = vmatprep.mubr.f32.mxu0 0.0
        %v3164 = vand.u32 %v1475, 4294901760
        %3165 = vmatmul.mubr.f32.gmra.mrb[0].mxu0 %v3164
        %v3166 = vpop.f32.mrb[0].mxu0
        %v3167 = vadd.f32 %v2866, %v3166
        %v3168 = vpop.f32.mrb[0].mxu0
        %3169 = vmatprep.mubr.f32.mxu0 0.0
        %v3170 = vand.u32 %v1481, 4294901760
        %3171 = vmatmul.mubr.f32.gmra.mrb[0].mxu0 %v3170
        %v3172 = vpop.f32.mrb[0].mxu0
        %v3173 = vadd.f32 %v2876, %v3172
        %v3174 = vpop.f32.mrb[0].mxu0
        %3175 = vmatprep.mubr.f32.mxu0 0.0
        %v3176 = vand.u32 %v1487, 4294901760
        %3177 = vmatmul.mubr.f32.gmra.mrb[0].mxu0 %v3176
        %v3178 = vpop.f32.mrb[0].mxu0
        %v3179 = vadd.f32 %v2886, %v3178
        %v3180 = vpop.f32.mrb[0].mxu0
        %3181 = vmatprep.mubr.f32.mxu0 0.0
        %v3182 = vand.u32 %v1493, 4294901760
        %3183 = vmatmul.mubr.f32.gmra.mrb[0].mxu0 %v3182
        %v3184 = vpop.f32.mrb[0].mxu0
        %v3185 = vadd.f32 %v2896, %v3184
        %v3186 = vpop.f32.mrb[0].mxu0
        %3187 = vmatprep.mubr.f32.mxu0 0.0
        %v3188 = vand.u32 %v1499, 4294901760
        %3189 = vmatmul.mubr.f32.gmra.mrb[0].mxu0 %v3188
        %v3190 = vpop.f32.mrb[0].mxu0
        %v3191 = vadd.f32 %v2906, %v3190
        %v3192 = vpop.f32.mrb[0].mxu0
        %3193 = vmatprep.mubr.f32.mxu0 0.0
        %v3194 = vand.u32 %v1505, 4294901760
        %3195 = vmatmul.mubr.f32.gmra.mrb[0].mxu0 %v3194
        %v3196 = vpop.f32.mrb[0].mxu0
        %v3197 = vadd.f32 %v2916, %v3196
        %v3198 = vpop.f32.mrb[0].mxu0
        %3199 = vmatprep.mubr.f32.mxu0 0.0
        %v3200 = vand.u32 %v1511, 4294901760
        %3201 = vmatmul.mubr.f32.gmra.mrb[0].mxu0 %v3200
        %v3202 = vpop.f32.mrb[0].mxu0
        %v3203 = vadd.f32 %v2926, %v3202
        %v3204 = vpop.f32.mrb[0].mxu0
        %3205 = vmatprep.mubr.f32.mxu0 0.0
        %v3206 = vand.u32 %v1517, 4294901760
        %3207 = vmatmul.mubr.f32.gmra.mrb[0].mxu0 %v3206
        %v3208 = vpop.f32.mrb[0].mxu0
        %v3209 = vadd.f32 %v2936, %v3208
        %v3210 = vpop.f32.mrb[0].mxu0
        %3211 = vmatprep.mubr.f32.mxu0 0.0
        %v3212 = vand.u32 %v1523, 4294901760
        %3213 = vmatmul.mubr.f32.gmra.mrb[0].mxu0 %v3212
        %v3214 = vpop.f32.mrb[0].mxu0
        %v3215 = vadd.f32 %v2946, %v3214
        %v3216 = vpop.f32.mrb[0].mxu0
        %3217 = vmatprep.mubr.f32.mxu0 0.0
        %v3218 = vand.u32 %v1529, 4294901760
        %3219 = vmatmul.mubr.f32.gmra.mrb[0].mxu0 %v3218
        %v3220 = vpop.f32.mrb[0].mxu0
        %v3221 = vadd.f32 %v2956, %v3220
        %v3222 = vpop.f32.mrb[0].mxu0
        %3223 = vmatprep.mubr.f32.mxu0 0.0
        %v3224 = vand.u32 %v1535, 4294901760
        %3225 = vmatmul.mubr.f32.gmra.mrb[0].mxu0 %v3224
        %v3226 = vpop.f32.mrb[0].mxu0
        %v3227 = vadd.f32 %v2966, %v3226
        %v3228 = vpop.f32.mrb[0].mxu0
        %3229 = vmatprep.mubr.f32.mxu0 0.0
        %v3230 = vand.u32 %v1541, 4294901760
        %3231 = vmatmul.mubr.f32.gmra.mrb[0].mxu0 %v3230
        %v3232 = vpop.f32.mrb[0].mxu0
        %v3233 = vadd.f32 %v2976, %v3232
        %v3234 = vpop.f32.mrb[0].mxu0
        %3235 = vmatprep.mubr.f32.mxu0 0.0
        %v3236 = vand.u32 %v1547, 4294901760
        %3237 = vmatmul.mubr.f32.gmra.mrb[0].mxu0 %v3236
        %v3238 = vpop.f32.mrb[0].mxu0
        %v3239 = vadd.f32 %v2986, %v3238
        %v3240 = vpop.f32.mrb[0].mxu0
        %3241 = vmatprep.mubr.f32.mxu0 0.0
        %v3242 = vand.u32 %v1553, 4294901760
        %3243 = vmatmul.mubr.f32.gmra.mrb[0].mxu0 %v3242
        %v3244 = vpop.f32.mrb[0].mxu0
        %v3245 = vadd.f32 %v2996, %v3244
        %v3246 = vpop.f32.mrb[0].mxu0
        %3247 = vmatprep.mubr.f32.mxu0 0.0
        %v3248 = vand.u32 %v1559, 4294901760
        %3249 = vmatmul.mubr.f32.gmra.mrb[0].mxu0 %v3248
        %v3250 = vpop.f32.mrb[0].mxu0
        %v3251 = vadd.f32 %v3006, %v3250
        %v3252 = vpop.f32.mrb[0].mxu0
        %3253 = vmatprep.mubr.f32.mxu0 0.0
        %v3254 = vand.u32 %v1565, 4294901760
        %3255 = vmatmul.mubr.f32.gmra.mrb[0].mxu0 %v3254
        %v3256 = vpop.f32.mrb[0].mxu0
        %v3257 = vadd.f32 %v3016, %v3256
        %v3258 = vpop.f32.mrb[0].mxu0
        %3259 = vdwg.mxu0
        %3260 = vmatprep.subr.mxu0 0.0
        %v3261 = vand.u32 %v2762, 4294901760
        %v3262 = vsub.f32 %v2762, %v3261
        %3263 = vmatpush1.msra.mxu0 %v3262
        %3264 = vmatprep.subr.mxu0 0.0
        %v3265 = vand.u32 %v2763, 4294901760
        %v3266 = vsub.f32 %v2763, %v3265
        %3267 = vmatpush1.msra.mxu0 %v3266
        %3268 = vmatprep.subr.mxu0 0.0
        %v3269 = vand.u32 %v2764, 4294901760
        %v3270 = vsub.f32 %v2764, %v3269
        %3271 = vmatpush1.msra.mxu0 %v3270
        %3272 = vmatprep.subr.mxu0 0.0
        %v3273 = vand.u32 %v2765, 4294901760
        %v3274 = vsub.f32 %v2765, %v3273
        %3275 = vmatpush1.msra.mxu0 %v3274
        %3276 = vmatprep.subr.mxu0 0.0
        %v3277 = vand.u32 %v2766, 4294901760
        %v3278 = vsub.f32 %v2766, %v3277
        %3279 = vmatpush1.msra.mxu0 %v3278
        %3280 = vmatprep.subr.mxu0 0.0
        %v3281 = vand.u32 %v2767, 4294901760
        %v3282 = vsub.f32 %v2767, %v3281
        %3283 = vmatpush1.msra.mxu0 %v3282
        %3284 = vmatprep.subr.mxu0 0.0
        %v3285 = vand.u32 %v2768, 4294901760
        %v3286 = vsub.f32 %v2768, %v3285
        %3287 = vmatpush1.msra.mxu0 %v3286
        %3288 = vmatprep.subr.mxu0 0.0
        %v3289 = vand.u32 %v2769, 4294901760
        %v3290 = vsub.f32 %v2769, %v3289
        %3291 = vmatpush1.msra.mxu0 %v3290
        %3292 = vmatprep.subr.mxu0 0.0
        %v3293 = vand.u32 %v2770, 4294901760
        %v3294 = vsub.f32 %v2770, %v3293
        %3295 = vmatpush1.msra.mxu0 %v3294
        %3296 = vmatprep.subr.mxu0 0.0
        %v3297 = vand.u32 %v2771, 4294901760
        %v3298 = vsub.f32 %v2771, %v3297
        %3299 = vmatpush1.msra.mxu0 %v3298
        %3300 = vmatprep.subr.mxu0 0.0
        %v3301 = vand.u32 %v2772, 4294901760
        %v3302 = vsub.f32 %v2772, %v3301
        %3303 = vmatpush1.msra.mxu0 %v3302
        %3304 = vmatprep.subr.mxu0 0.0
        %v3305 = vand.u32 %v2773, 4294901760
        %v3306 = vsub.f32 %v2773, %v3305
        %3307 = vmatpush1.msra.mxu0 %v3306
        %3308 = vmatprep.subr.mxu0 0.0
        %v3309 = vand.u32 %v2774, 4294901760
        %v3310 = vsub.f32 %v2774, %v3309
        %3311 = vmatpush1.msra.mxu0 %v3310
        %3312 = vmatprep.subr.mxu0 0.0
        %v3313 = vand.u32 %v2775, 4294901760
        %v3314 = vsub.f32 %v2775, %v3313
        %3315 = vmatpush1.msra.mxu0 %v3314
        %3316 = vmatprep.subr.mxu0 0.0
        %v3317 = vand.u32 %v2776, 4294901760
        %v3318 = vsub.f32 %v2776, %v3317
        %3319 = vmatpush1.msra.mxu0 %v3318
        %3320 = vmatprep.subr.mxu0 0.0
        %v3321 = vand.u32 %v2777, 4294901760
        %v3322 = vsub.f32 %v2777, %v3321
        %3323 = vmatpush1.msra.mxu0 %v3322
        %3324 = vmatprep.subr.mxu0 0.0
        %3325 = vmatpush1.msra.mxu0 0.0
        %3326 = vmatprep.subr.mxu0 0.0
        %3327 = vmatpush1.msra.mxu0 0.0
        %3328 = vmatprep.subr.mxu0 0.0
        %3329 = vmatpush1.msra.mxu0 0.0
        %3330 = vmatprep.subr.mxu0 0.0
        %3331 = vmatpush1.msra.mxu0 0.0
        %3332 = vmatprep.subr.mxu0 0.0
        %3333 = vmatpush1.msra.mxu0 0.0
        %3334 = vmatprep.subr.mxu0 0.0
        %3335 = vmatpush1.msra.mxu0 0.0
        %3336 = vmatprep.subr.mxu0 0.0
        %3337 = vmatpush1.msra.mxu0 0.0
        %3338 = vmatprep.subr.mxu0 0.0
        %3339 = vmatpush1.msra.mxu0 0.0
        %3340 = vmatprep.subr.mxu0 0.0
        %3341 = vmatpush1.msra.mxu0 0.0
        %3342 = vmatprep.subr.mxu0 0.0
        %3343 = vmatpush1.msra.mxu0 0.0
        %3344 = vmatprep.subr.mxu0 0.0
        %3345 = vmatpush1.msra.mxu0 0.0
        %3346 = vmatprep.subr.mxu0 0.0
        %3347 = vmatpush1.msra.mxu0 0.0
        %3348 = vmatprep.subr.mxu0 0.0
        %3349 = vmatpush1.msra.mxu0 0.0
        %3350 = vmatprep.subr.mxu0 0.0
        %3351 = vmatpush1.msra.mxu0 0.0
        %3352 = vmatprep.subr.mxu0 0.0
        %3353 = vmatpush1.msra.mxu0 0.0
        %3354 = vmatprep.subr.mxu0 0.0
        %3355 = vmatpush1.msra.mxu0 0.0
        %3356 = vmatprep.mubr.f32.mxu0 0.0
        %v3357 = vand.u32 %v1475, 4294901760
        %v3358 = vsub.f32 %v1475, %v3357
        %3359 = vmatmul.mubr.f32.gmra.mrb[0].mxu0 %v3358
        %v3360 = vpop.f32.mrb[0].mxu0
        %v3361 = vadd.f32 %v3167, %v3360
        %v3362 = vpop.f32.mrb[0].mxu0
        %3363 = vmatprep.mubr.f32.mxu0 0.0
        %v3364 = vand.u32 %v1481, 4294901760
        %v3365 = vsub.f32 %v1481, %v3364
        %3366 = vmatmul.mubr.f32.gmra.mrb[0].mxu0 %v3365
        %v3367 = vpop.f32.mrb[0].mxu0
        %v3368 = vadd.f32 %v3173, %v3367
        %v3369 = vpop.f32.mrb[0].mxu0
        %3370 = vmatprep.mubr.f32.mxu0 0.0
        %v3371 = vand.u32 %v1487, 4294901760
        %v3372 = vsub.f32 %v1487, %v3371
        %3373 = vmatmul.mubr.f32.gmra.mrb[0].mxu0 %v3372
        %v3374 = vpop.f32.mrb[0].mxu0
        %v3375 = vadd.f32 %v3179, %v3374
        %v3376 = vpop.f32.mrb[0].mxu0
        %3377 = vmatprep.mubr.f32.mxu0 0.0
        %v3378 = vand.u32 %v1493, 4294901760
        %v3379 = vsub.f32 %v1493, %v3378
        %3380 = vmatmul.mubr.f32.gmra.mrb[0].mxu0 %v3379
        %v3381 = vpop.f32.mrb[0].mxu0
        %v3382 = vadd.f32 %v3185, %v3381
        %v3383 = vpop.f32.mrb[0].mxu0
        %3384 = vmatprep.mubr.f32.mxu0 0.0
        %v3385 = vand.u32 %v1499, 4294901760
        %v3386 = vsub.f32 %v1499, %v3385
        %3387 = vmatmul.mubr.f32.gmra.mrb[0].mxu0 %v3386
        %v3388 = vpop.f32.mrb[0].mxu0
        %v3389 = vadd.f32 %v3191, %v3388
        %v3390 = vpop.f32.mrb[0].mxu0
        %3391 = vmatprep.mubr.f32.mxu0 0.0
        %v3392 = vand.u32 %v1505, 4294901760
        %v3393 = vsub.f32 %v1505, %v3392
        %3394 = vmatmul.mubr.f32.gmra.mrb[0].mxu0 %v3393
        %v3395 = vpop.f32.mrb[0].mxu0
        %v3396 = vadd.f32 %v3197, %v3395
        %v3397 = vpop.f32.mrb[0].mxu0
        %3398 = vmatprep.mubr.f32.mxu0 0.0
        %v3399 = vand.u32 %v1511, 4294901760
        %v3400 = vsub.f32 %v1511, %v3399
        %3401 = vmatmul.mubr.f32.gmra.mrb[0].mxu0 %v3400
        %v3402 = vpop.f32.mrb[0].mxu0
        %v3403 = vadd.f32 %v3203, %v3402
        %v3404 = vpop.f32.mrb[0].mxu0
        %3405 = vmatprep.mubr.f32.mxu0 0.0
        %v3406 = vand.u32 %v1517, 4294901760
        %v3407 = vsub.f32 %v1517, %v3406
        %3408 = vmatmul.mubr.f32.gmra.mrb[0].mxu0 %v3407
        %v3409 = vpop.f32.mrb[0].mxu0
        %v3410 = vadd.f32 %v3209, %v3409
        %v3411 = vpop.f32.mrb[0].mxu0
        %3412 = vmatprep.mubr.f32.mxu0 0.0
        %v3413 = vand.u32 %v1523, 4294901760
        %v3414 = vsub.f32 %v1523, %v3413
        %3415 = vmatmul.mubr.f32.gmra.mrb[0].mxu0 %v3414
        %v3416 = vpop.f32.mrb[0].mxu0
        %v3417 = vadd.f32 %v3215, %v3416
        %v3418 = vpop.f32.mrb[0].mxu0
        %3419 = vmatprep.mubr.f32.mxu0 0.0
        %v3420 = vand.u32 %v1529, 4294901760
        %v3421 = vsub.f32 %v1529, %v3420
        %3422 = vmatmul.mubr.f32.gmra.mrb[0].mxu0 %v3421
        %v3423 = vpop.f32.mrb[0].mxu0
        %v3424 = vadd.f32 %v3221, %v3423
        %v3425 = vpop.f32.mrb[0].mxu0
        %3426 = vmatprep.mubr.f32.mxu0 0.0
        %v3427 = vand.u32 %v1535, 4294901760
        %v3428 = vsub.f32 %v1535, %v3427
        %3429 = vmatmul.mubr.f32.gmra.mrb[0].mxu0 %v3428
        %v3430 = vpop.f32.mrb[0].mxu0
        %v3431 = vadd.f32 %v3227, %v3430
        %v3432 = vpop.f32.mrb[0].mxu0
        %3433 = vmatprep.mubr.f32.mxu0 0.0
        %v3434 = vand.u32 %v1541, 4294901760
        %v3435 = vsub.f32 %v1541, %v3434
        %3436 = vmatmul.mubr.f32.gmra.mrb[0].mxu0 %v3435
        %v3437 = vpop.f32.mrb[0].mxu0
        %v3438 = vadd.f32 %v3233, %v3437
        %v3439 = vpop.f32.mrb[0].mxu0
        %3440 = vmatprep.mubr.f32.mxu0 0.0
        %v3441 = vand.u32 %v1547, 4294901760
        %v3442 = vsub.f32 %v1547, %v3441
        %3443 = vmatmul.mubr.f32.gmra.mrb[0].mxu0 %v3442
        %v3444 = vpop.f32.mrb[0].mxu0
        %v3445 = vadd.f32 %v3239, %v3444
        %v3446 = vpop.f32.mrb[0].mxu0
        %3447 = vmatprep.mubr.f32.mxu0 0.0
        %v3448 = vand.u32 %v1553, 4294901760
        %v3449 = vsub.f32 %v1553, %v3448
        %3450 = vmatmul.mubr.f32.gmra.mrb[0].mxu0 %v3449
        %v3451 = vpop.f32.mrb[0].mxu0
        %v3452 = vadd.f32 %v3245, %v3451
        %v3453 = vpop.f32.mrb[0].mxu0
        %3454 = vmatprep.mubr.f32.mxu0 0.0
        %v3455 = vand.u32 %v1559, 4294901760
        %v3456 = vsub.f32 %v1559, %v3455
        %3457 = vmatmul.mubr.f32.gmra.mrb[0].mxu0 %v3456
        %v3458 = vpop.f32.mrb[0].mxu0
        %v3459 = vadd.f32 %v3251, %v3458
        %v3460 = vpop.f32.mrb[0].mxu0
        %3461 = vmatprep.mubr.f32.mxu0 0.0
        %v3462 = vand.u32 %v1565, 4294901760
        %v3463 = vsub.f32 %v1565, %v3462
        %3464 = vmatmul.mubr.f32.gmra.mrb[0].mxu0 %v3463
        %v3465 = vpop.f32.mrb[0].mxu0
        %v3466 = vadd.f32 %v3257, %v3465
        %v3467 = vpop.f32.mrb[0].mxu0
        %3468 = vdwg.mxu0
        %3469 = vmatprep.subr.mxu0 0.0
        %v3470 = vand.u32 %v2762, 4294901760
        %3471 = vmatpush1.msra.mxu0 %v3470
        %3472 = vmatprep.subr.mxu0 0.0
        %v3473 = vand.u32 %v2763, 4294901760
        %3474 = vmatpush1.msra.mxu0 %v3473
        %3475 = vmatprep.subr.mxu0 0.0
        %v3476 = vand.u32 %v2764, 4294901760
        %3477 = vmatpush1.msra.mxu0 %v3476
        %3478 = vmatprep.subr.mxu0 0.0
        %v3479 = vand.u32 %v2765, 4294901760
        %3480 = vmatpush1.msra.mxu0 %v3479
        %3481 = vmatprep.subr.mxu0 0.0
        %v3482 = vand.u32 %v2766, 4294901760
        %3483 = vmatpush1.msra.mxu0 %v3482
        %3484 = vmatprep.subr.mxu0 0.0
        %v3485 = vand.u32 %v2767, 4294901760
        %3486 = vmatpush1.msra.mxu0 %v3485
        %3487 = vmatprep.subr.mxu0 0.0
        %v3488 = vand.u32 %v2768, 4294901760
        %3489 = vmatpush1.msra.mxu0 %v3488
        %3490 = vmatprep.subr.mxu0 0.0
        %v3491 = vand.u32 %v2769, 4294901760
        %3492 = vmatpush1.msra.mxu0 %v3491
        %3493 = vmatprep.subr.mxu0 0.0
        %v3494 = vand.u32 %v2770, 4294901760
        %3495 = vmatpush1.msra.mxu0 %v3494
        %3496 = vmatprep.subr.mxu0 0.0
        %v3497 = vand.u32 %v2771, 4294901760
        %3498 = vmatpush1.msra.mxu0 %v3497
        %3499 = vmatprep.subr.mxu0 0.0
        %v3500 = vand.u32 %v2772, 4294901760
        %3501 = vmatpush1.msra.mxu0 %v3500
        %3502 = vmatprep.subr.mxu0 0.0
        %v3503 = vand.u32 %v2773, 4294901760
        %3504 = vmatpush1.msra.mxu0 %v3503
        %3505 = vmatprep.subr.mxu0 0.0
        %v3506 = vand.u32 %v2774, 4294901760
        %3507 = vmatpush1.msra.mxu0 %v3506
        %3508 = vmatprep.subr.mxu0 0.0
        %v3509 = vand.u32 %v2775, 4294901760
        %3510 = vmatpush1.msra.mxu0 %v3509
        %3511 = vmatprep.subr.mxu0 0.0
        %v3512 = vand.u32 %v2776, 4294901760
        %3513 = vmatpush1.msra.mxu0 %v3512
        %3514 = vmatprep.subr.mxu0 0.0
        %v3515 = vand.u32 %v2777, 4294901760
        %3516 = vmatpush1.msra.mxu0 %v3515
        %3517 = vmatprep.subr.mxu0 0.0
        %3518 = vmatpush1.msra.mxu0 0.0
        %3519 = vmatprep.subr.mxu0 0.0
        %3520 = vmatpush1.msra.mxu0 0.0
        %3521 = vmatprep.subr.mxu0 0.0
        %3522 = vmatpush1.msra.mxu0 0.0
        %3523 = vmatprep.subr.mxu0 0.0
        %3524 = vmatpush1.msra.mxu0 0.0
        %3525 = vmatprep.subr.mxu0 0.0
        %3526 = vmatpush1.msra.mxu0 0.0
        %3527 = vmatprep.subr.mxu0 0.0
        %3528 = vmatpush1.msra.mxu0 0.0
        %3529 = vmatprep.subr.mxu0 0.0
        %3530 = vmatpush1.msra.mxu0 0.0
        %3531 = vmatprep.subr.mxu0 0.0
        %3532 = vmatpush1.msra.mxu0 0.0
        %3533 = vmatprep.subr.mxu0 0.0
        %3534 = vmatpush1.msra.mxu0 0.0
        %3535 = vmatprep.subr.mxu0 0.0
        %3536 = vmatpush1.msra.mxu0 0.0
        %3537 = vmatprep.subr.mxu0 0.0
        %3538 = vmatpush1.msra.mxu0 0.0
        %3539 = vmatprep.subr.mxu0 0.0
        %3540 = vmatpush1.msra.mxu0 0.0
        %3541 = vmatprep.subr.mxu0 0.0
        %3542 = vmatpush1.msra.mxu0 0.0
        %3543 = vmatprep.subr.mxu0 0.0
        %3544 = vmatpush1.msra.mxu0 0.0
        %3545 = vmatprep.subr.mxu0 0.0
        %3546 = vmatpush1.msra.mxu0 0.0
        %3547 = vmatprep.subr.mxu0 0.0
        %3548 = vmatpush1.msra.mxu0 0.0
        %3549 = vmatprep.mubr.f32.mxu0 0.0
        %v3550 = vand.u32 %v1475, 4294901760
        %v3551 = vsub.f32 %v1475, %v3550
        %v3552 = vand.u32 %v3551, 4294901760
        %3553 = vmatmul.mubr.f32.gmra.mrb[0].mxu0 %v3552
        %v3554 = vpop.f32.mrb[0].mxu0
        %v3555 = vadd.f32 %v3361, %v3554
        %v3556 = vpop.f32.mrb[0].mxu0
        %3557 = vmatprep.mubr.f32.mxu0 0.0
        %v3558 = vand.u32 %v1481, 4294901760
        %v3559 = vsub.f32 %v1481, %v3558
        %v3560 = vand.u32 %v3559, 4294901760
        %3561 = vmatmul.mubr.f32.gmra.mrb[0].mxu0 %v3560
        %v3562 = vpop.f32.mrb[0].mxu0
        %v3563 = vadd.f32 %v3368, %v3562
        %v3564 = vpop.f32.mrb[0].mxu0
        %3565 = vmatprep.mubr.f32.mxu0 0.0
        %v3566 = vand.u32 %v1487, 4294901760
        %v3567 = vsub.f32 %v1487, %v3566
        %v3568 = vand.u32 %v3567, 4294901760
        %3569 = vmatmul.mubr.f32.gmra.mrb[0].mxu0 %v3568
        %v3570 = vpop.f32.mrb[0].mxu0
        %v3571 = vadd.f32 %v3375, %v3570
        %v3572 = vpop.f32.mrb[0].mxu0
        %3573 = vmatprep.mubr.f32.mxu0 0.0
        %v3574 = vand.u32 %v1493, 4294901760
        %v3575 = vsub.f32 %v1493, %v3574
        %v3576 = vand.u32 %v3575, 4294901760
        %3577 = vmatmul.mubr.f32.gmra.mrb[0].mxu0 %v3576
        %v3578 = vpop.f32.mrb[0].mxu0
        %v3579 = vadd.f32 %v3382, %v3578
        %v3580 = vpop.f32.mrb[0].mxu0
        %3581 = vmatprep.mubr.f32.mxu0 0.0
        %v3582 = vand.u32 %v1499, 4294901760
        %v3583 = vsub.f32 %v1499, %v3582
        %v3584 = vand.u32 %v3583, 4294901760
        %3585 = vmatmul.mubr.f32.gmra.mrb[0].mxu0 %v3584
        %v3586 = vpop.f32.mrb[0].mxu0
        %v3587 = vadd.f32 %v3389, %v3586
        %v3588 = vpop.f32.mrb[0].mxu0
        %3589 = vmatprep.mubr.f32.mxu0 0.0
        %v3590 = vand.u32 %v1505, 4294901760
        %v3591 = vsub.f32 %v1505, %v3590
        %v3592 = vand.u32 %v3591, 4294901760
        %3593 = vmatmul.mubr.f32.gmra.mrb[0].mxu0 %v3592
        %v3594 = vpop.f32.mrb[0].mxu0
        %v3595 = vadd.f32 %v3396, %v3594
        %v3596 = vpop.f32.mrb[0].mxu0
        %3597 = vmatprep.mubr.f32.mxu0 0.0
        %v3598 = vand.u32 %v1511, 4294901760
        %v3599 = vsub.f32 %v1511, %v3598
        %v3600 = vand.u32 %v3599, 4294901760
        %3601 = vmatmul.mubr.f32.gmra.mrb[0].mxu0 %v3600
        %v3602 = vpop.f32.mrb[0].mxu0
        %v3603 = vadd.f32 %v3403, %v3602
        %v3604 = vpop.f32.mrb[0].mxu0
        %3605 = vmatprep.mubr.f32.mxu0 0.0
        %v3606 = vand.u32 %v1517, 4294901760
        %v3607 = vsub.f32 %v1517, %v3606
        %v3608 = vand.u32 %v3607, 4294901760
        %3609 = vmatmul.mubr.f32.gmra.mrb[0].mxu0 %v3608
        %v3610 = vpop.f32.mrb[0].mxu0
        %v3611 = vadd.f32 %v3410, %v3610
        %v3612 = vpop.f32.mrb[0].mxu0
        %3613 = vmatprep.mubr.f32.mxu0 0.0
        %v3614 = vand.u32 %v1523, 4294901760
        %v3615 = vsub.f32 %v1523, %v3614
        %v3616 = vand.u32 %v3615, 4294901760
        %3617 = vmatmul.mubr.f32.gmra.mrb[0].mxu0 %v3616
        %v3618 = vpop.f32.mrb[0].mxu0
        %v3619 = vadd.f32 %v3417, %v3618
        %v3620 = vpop.f32.mrb[0].mxu0
        %3621 = vmatprep.mubr.f32.mxu0 0.0
        %v3622 = vand.u32 %v1529, 4294901760
        %v3623 = vsub.f32 %v1529, %v3622
        %v3624 = vand.u32 %v3623, 4294901760
        %3625 = vmatmul.mubr.f32.gmra.mrb[0].mxu0 %v3624
        %v3626 = vpop.f32.mrb[0].mxu0
        %v3627 = vadd.f32 %v3424, %v3626
        %v3628 = vpop.f32.mrb[0].mxu0
        %3629 = vmatprep.mubr.f32.mxu0 0.0
        %v3630 = vand.u32 %v1535, 4294901760
        %v3631 = vsub.f32 %v1535, %v3630
        %v3632 = vand.u32 %v3631, 4294901760
        %3633 = vmatmul.mubr.f32.gmra.mrb[0].mxu0 %v3632
        %v3634 = vpop.f32.mrb[0].mxu0
        %v3635 = vadd.f32 %v3431, %v3634
        %v3636 = vpop.f32.mrb[0].mxu0
        %3637 = vmatprep.mubr.f32.mxu0 0.0
        %v3638 = vand.u32 %v1541, 4294901760
        %v3639 = vsub.f32 %v1541, %v3638
        %v3640 = vand.u32 %v3639, 4294901760
        %3641 = vmatmul.mubr.f32.gmra.mrb[0].mxu0 %v3640
        %v3642 = vpop.f32.mrb[0].mxu0
        %v3643 = vadd.f32 %v3438, %v3642
        %v3644 = vpop.f32.mrb[0].mxu0
        %3645 = vmatprep.mubr.f32.mxu0 0.0
        %v3646 = vand.u32 %v1547, 4294901760
        %v3647 = vsub.f32 %v1547, %v3646
        %v3648 = vand.u32 %v3647, 4294901760
        %3649 = vmatmul.mubr.f32.gmra.mrb[0].mxu0 %v3648
        %v3650 = vpop.f32.mrb[0].mxu0
        %v3651 = vadd.f32 %v3445, %v3650
        %v3652 = vpop.f32.mrb[0].mxu0
        %3653 = vmatprep.mubr.f32.mxu0 0.0
        %v3654 = vand.u32 %v1553, 4294901760
        %v3655 = vsub.f32 %v1553, %v3654
        %v3656 = vand.u32 %v3655, 4294901760
        %3657 = vmatmul.mubr.f32.gmra.mrb[0].mxu0 %v3656
        %v3658 = vpop.f32.mrb[0].mxu0
        %v3659 = vadd.f32 %v3452, %v3658
        %v3660 = vpop.f32.mrb[0].mxu0
        %3661 = vmatprep.mubr.f32.mxu0 0.0
        %v3662 = vand.u32 %v1559, 4294901760
        %v3663 = vsub.f32 %v1559, %v3662
        %v3664 = vand.u32 %v3663, 4294901760
        %3665 = vmatmul.mubr.f32.gmra.mrb[0].mxu0 %v3664
        %v3666 = vpop.f32.mrb[0].mxu0
        %v3667 = vadd.f32 %v3459, %v3666
        %v3668 = vpop.f32.mrb[0].mxu0
        %3669 = vmatprep.mubr.f32.mxu0 0.0
        %v3670 = vand.u32 %v1565, 4294901760
        %v3671 = vsub.f32 %v1565, %v3670
        %v3672 = vand.u32 %v3671, 4294901760
        %3673 = vmatmul.mubr.f32.gmra.mrb[0].mxu0 %v3672
        %v3674 = vpop.f32.mrb[0].mxu0
        %v3675 = vadd.f32 %v3466, %v3674
        %v3676 = vpop.f32.mrb[0].mxu0
        %3677 = vdwg.mxu0
        %3678 = vmatprep.subr.mxu0 0.0
        %v3679 = vand.u32 %v2762, 4294901760
        %v3680 = vsub.f32 %v2762, %v3679
        %v3681 = vand.u32 %v3680, 4294901760
        %3682 = vmatpush1.msra.mxu0 %v3681
        %3683 = vmatprep.subr.mxu0 0.0
        %v3684 = vand.u32 %v2763, 4294901760
        %v3685 = vsub.f32 %v2763, %v3684
        %v3686 = vand.u32 %v3685, 4294901760
        %3687 = vmatpush1.msra.mxu0 %v3686
        %3688 = vmatprep.subr.mxu0 0.0
        %v3689 = vand.u32 %v2764, 4294901760
        %v3690 = vsub.f32 %v2764, %v3689
        %v3691 = vand.u32 %v3690, 4294901760
        %3692 = vmatpush1.msra.mxu0 %v3691
        %3693 = vmatprep.subr.mxu0 0.0
        %v3694 = vand.u32 %v2765, 4294901760
        %v3695 = vsub.f32 %v2765, %v3694
        %v3696 = vand.u32 %v3695, 4294901760
        %3697 = vmatpush1.msra.mxu0 %v3696
        %3698 = vmatprep.subr.mxu0 0.0
        %v3699 = vand.u32 %v2766, 4294901760
        %v3700 = vsub.f32 %v2766, %v3699
        %v3701 = vand.u32 %v3700, 4294901760
        %3702 = vmatpush1.msra.mxu0 %v3701
        %3703 = vmatprep.subr.mxu0 0.0
        %v3704 = vand.u32 %v2767, 4294901760
        %v3705 = vsub.f32 %v2767, %v3704
        %v3706 = vand.u32 %v3705, 4294901760
        %3707 = vmatpush1.msra.mxu0 %v3706
        %3708 = vmatprep.subr.mxu0 0.0
        %v3709 = vand.u32 %v2768, 4294901760
        %v3710 = vsub.f32 %v2768, %v3709
        %v3711 = vand.u32 %v3710, 4294901760
        %3712 = vmatpush1.msra.mxu0 %v3711
        %3713 = vmatprep.subr.mxu0 0.0
        %v3714 = vand.u32 %v2769, 4294901760
        %v3715 = vsub.f32 %v2769, %v3714
        %v3716 = vand.u32 %v3715, 4294901760
        %3717 = vmatpush1.msra.mxu0 %v3716
        %3718 = vmatprep.subr.mxu0 0.0
        %v3719 = vand.u32 %v2770, 4294901760
        %v3720 = vsub.f32 %v2770, %v3719
        %v3721 = vand.u32 %v3720, 4294901760
        %3722 = vmatpush1.msra.mxu0 %v3721
        %3723 = vmatprep.subr.mxu0 0.0
        %v3724 = vand.u32 %v2771, 4294901760
        %v3725 = vsub.f32 %v2771, %v3724
        %v3726 = vand.u32 %v3725, 4294901760
        %3727 = vmatpush1.msra.mxu0 %v3726
        %3728 = vmatprep.subr.mxu0 0.0
        %v3729 = vand.u32 %v2772, 4294901760
        %v3730 = vsub.f32 %v2772, %v3729
        %v3731 = vand.u32 %v3730, 4294901760
        %3732 = vmatpush1.msra.mxu0 %v3731
        %3733 = vmatprep.subr.mxu0 0.0
        %v3734 = vand.u32 %v2773, 4294901760
        %v3735 = vsub.f32 %v2773, %v3734
        %v3736 = vand.u32 %v3735, 4294901760
        %3737 = vmatpush1.msra.mxu0 %v3736
        %3738 = vmatprep.subr.mxu0 0.0
        %v3739 = vand.u32 %v2774, 4294901760
        %v3740 = vsub.f32 %v2774, %v3739
        %v3741 = vand.u32 %v3740, 4294901760
        %3742 = vmatpush1.msra.mxu0 %v3741
        %3743 = vmatprep.subr.mxu0 0.0
        %v3744 = vand.u32 %v2775, 4294901760
        %v3745 = vsub.f32 %v2775, %v3744
        %v3746 = vand.u32 %v3745, 4294901760
        %3747 = vmatpush1.msra.mxu0 %v3746
        %3748 = vmatprep.subr.mxu0 0.0
        %v3749 = vand.u32 %v2776, 4294901760
        %v3750 = vsub.f32 %v2776, %v3749
        %v3751 = vand.u32 %v3750, 4294901760
        %3752 = vmatpush1.msra.mxu0 %v3751
        %3753 = vmatprep.subr.mxu0 0.0
        %v3754 = vand.u32 %v2777, 4294901760
        %v3755 = vsub.f32 %v2777, %v3754
        %v3756 = vand.u32 %v3755, 4294901760
        %3757 = vmatpush1.msra.mxu0 %v3756
        %3758 = vmatprep.subr.mxu0 0.0
        %3759 = vmatpush1.msra.mxu0 0.0
        %3760 = vmatprep.subr.mxu0 0.0
        %3761 = vmatpush1.msra.mxu0 0.0
        %3762 = vmatprep.subr.mxu0 0.0
        %3763 = vmatpush1.msra.mxu0 0.0
        %3764 = vmatprep.subr.mxu0 0.0
        %3765 = vmatpush1.msra.mxu0 0.0
        %3766 = vmatprep.subr.mxu0 0.0
        %3767 = vmatpush1.msra.mxu0 0.0
        %3768 = vmatprep.subr.mxu0 0.0
        %3769 = vmatpush1.msra.mxu0 0.0
        %3770 = vmatprep.subr.mxu0 0.0
        %3771 = vmatpush1.msra.mxu0 0.0
        %3772 = vmatprep.subr.mxu0 0.0
        %3773 = vmatpush1.msra.mxu0 0.0
        %3774 = vmatprep.subr.mxu0 0.0
        %3775 = vmatpush1.msra.mxu0 0.0
        %3776 = vmatprep.subr.mxu0 0.0
        %3777 = vmatpush1.msra.mxu0 0.0
        %3778 = vmatprep.subr.mxu0 0.0
        %3779 = vmatpush1.msra.mxu0 0.0
        %3780 = vmatprep.subr.mxu0 0.0
        %3781 = vmatpush1.msra.mxu0 0.0
        %3782 = vmatprep.subr.mxu0 0.0
        %3783 = vmatpush1.msra.mxu0 0.0
        %3784 = vmatprep.subr.mxu0 0.0
        %3785 = vmatpush1.msra.mxu0 0.0
        %3786 = vmatprep.subr.mxu0 0.0
        %3787 = vmatpush1.msra.mxu0 0.0
        %3788 = vmatprep.subr.mxu0 0.0
        %3789 = vmatpush1.msra.mxu0 0.0
        %3790 = vmatprep.mubr.f32.mxu0 0.0
        %v3791 = vand.u32 %v1475, 4294901760
        %3792 = vmatmul.mubr.f32.gmra.mrb[0].mxu0 %v3791
        %v3793 = vpop.f32.mrb[0].mxu0
        %v3794 = vadd.f32 %v3555, %v3793
        %v3795 = vpop.f32.mrb[0].mxu0
        %3796 = vmatprep.mubr.f32.mxu0 0.0
        %v3797 = vand.u32 %v1481, 4294901760
        %3798 = vmatmul.mubr.f32.gmra.mrb[0].mxu0 %v3797
        %v3799 = vpop.f32.mrb[0].mxu0
        %v3800 = vadd.f32 %v3563, %v3799
        %v3801 = vpop.f32.mrb[0].mxu0
        %3802 = vmatprep.mubr.f32.mxu0 0.0
        %v3803 = vand.u32 %v1487, 4294901760
        %3804 = vmatmul.mubr.f32.gmra.mrb[0].mxu0 %v3803
        %v3805 = vpop.f32.mrb[0].mxu0
        %v3806 = vadd.f32 %v3571, %v3805
        %v3807 = vpop.f32.mrb[0].mxu0
        %3808 = vmatprep.mubr.f32.mxu0 0.0
        %v3809 = vand.u32 %v1493, 4294901760
        %3810 = vmatmul.mubr.f32.gmra.mrb[0].mxu0 %v3809
        %v3811 = vpop.f32.mrb[0].mxu0
        %v3812 = vadd.f32 %v3579, %v3811
        %v3813 = vpop.f32.mrb[0].mxu0
        %3814 = vmatprep.mubr.f32.mxu0 0.0
        %v3815 = vand.u32 %v1499, 4294901760
        %3816 = vmatmul.mubr.f32.gmra.mrb[0].mxu0 %v3815
        %v3817 = vpop.f32.mrb[0].mxu0
        %v3818 = vadd.f32 %v3587, %v3817
        %v3819 = vpop.f32.mrb[0].mxu0
        %3820 = vmatprep.mubr.f32.mxu0 0.0
        %v3821 = vand.u32 %v1505, 4294901760
        %3822 = vmatmul.mubr.f32.gmra.mrb[0].mxu0 %v3821
        %v3823 = vpop.f32.mrb[0].mxu0
        %v3824 = vadd.f32 %v3595, %v3823
        %v3825 = vpop.f32.mrb[0].mxu0
        %3826 = vmatprep.mubr.f32.mxu0 0.0
        %v3827 = vand.u32 %v1511, 4294901760
        %3828 = vmatmul.mubr.f32.gmra.mrb[0].mxu0 %v3827
        %v3829 = vpop.f32.mrb[0].mxu0
        %v3830 = vadd.f32 %v3603, %v3829
        %v3831 = vpop.f32.mrb[0].mxu0
        %3832 = vmatprep.mubr.f32.mxu0 0.0
        %v3833 = vand.u32 %v1517, 4294901760
        %3834 = vmatmul.mubr.f32.gmra.mrb[0].mxu0 %v3833
        %v3835 = vpop.f32.mrb[0].mxu0
        %v3836 = vadd.f32 %v3611, %v3835
        %v3837 = vpop.f32.mrb[0].mxu0
        %3838 = vmatprep.mubr.f32.mxu0 0.0
        %v3839 = vand.u32 %v1523, 4294901760
        %3840 = vmatmul.mubr.f32.gmra.mrb[0].mxu0 %v3839
        %v3841 = vpop.f32.mrb[0].mxu0
        %v3842 = vadd.f32 %v3619, %v3841
        %v3843 = vpop.f32.mrb[0].mxu0
        %3844 = vmatprep.mubr.f32.mxu0 0.0
        %v3845 = vand.u32 %v1529, 4294901760
        %3846 = vmatmul.mubr.f32.gmra.mrb[0].mxu0 %v3845
        %v3847 = vpop.f32.mrb[0].mxu0
        %v3848 = vadd.f32 %v3627, %v3847
        %v3849 = vpop.f32.mrb[0].mxu0
        %3850 = vmatprep.mubr.f32.mxu0 0.0
        %v3851 = vand.u32 %v1535, 4294901760
        %3852 = vmatmul.mubr.f32.gmra.mrb[0].mxu0 %v3851
        %v3853 = vpop.f32.mrb[0].mxu0
        %v3854 = vadd.f32 %v3635, %v3853
        %v3855 = vpop.f32.mrb[0].mxu0
        %3856 = vmatprep.mubr.f32.mxu0 0.0
        %v3857 = vand.u32 %v1541, 4294901760
        %3858 = vmatmul.mubr.f32.gmra.mrb[0].mxu0 %v3857
        %v3859 = vpop.f32.mrb[0].mxu0
        %v3860 = vadd.f32 %v3643, %v3859
        %v3861 = vpop.f32.mrb[0].mxu0
        %3862 = vmatprep.mubr.f32.mxu0 0.0
        %v3863 = vand.u32 %v1547, 4294901760
        %3864 = vmatmul.mubr.f32.gmra.mrb[0].mxu0 %v3863
        %v3865 = vpop.f32.mrb[0].mxu0
        %v3866 = vadd.f32 %v3651, %v3865
        %v3867 = vpop.f32.mrb[0].mxu0
        %3868 = vmatprep.mubr.f32.mxu0 0.0
        %v3869 = vand.u32 %v1553, 4294901760
        %3870 = vmatmul.mubr.f32.gmra.mrb[0].mxu0 %v3869
        %v3871 = vpop.f32.mrb[0].mxu0
        %v3872 = vadd.f32 %v3659, %v3871
        %v3873 = vpop.f32.mrb[0].mxu0
        %3874 = vmatprep.mubr.f32.mxu0 0.0
        %v3875 = vand.u32 %v1559, 4294901760
        %3876 = vmatmul.mubr.f32.gmra.mrb[0].mxu0 %v3875
        %v3877 = vpop.f32.mrb[0].mxu0
        %v3878 = vadd.f32 %v3667, %v3877
        %v3879 = vpop.f32.mrb[0].mxu0
        %3880 = vmatprep.mubr.f32.mxu0 0.0
        %v3881 = vand.u32 %v1565, 4294901760
        %3882 = vmatmul.mubr.f32.gmra.mrb[0].mxu0 %v3881
        %v3883 = vpop.f32.mrb[0].mxu0
        %v3884 = vadd.f32 %v3675, %v3883
        %v3885 = vpop.f32.mrb[0].mxu0
        %3886 = vdwg.mxu0
        %3887 = vmatprep.subr.mxu0 0.0
        %v3888 = vand.u32 %v2762, 4294901760
        %3889 = vmatpush1.msra.mxu0 %v3888
        %3890 = vmatprep.subr.mxu0 0.0
        %v3891 = vand.u32 %v2763, 4294901760
        %3892 = vmatpush1.msra.mxu0 %v3891
        %3893 = vmatprep.subr.mxu0 0.0
        %v3894 = vand.u32 %v2764, 4294901760
        %3895 = vmatpush1.msra.mxu0 %v3894
        %3896 = vmatprep.subr.mxu0 0.0
        %v3897 = vand.u32 %v2765, 4294901760
        %3898 = vmatpush1.msra.mxu0 %v3897
        %3899 = vmatprep.subr.mxu0 0.0
        %v3900 = vand.u32 %v2766, 4294901760
        %3901 = vmatpush1.msra.mxu0 %v3900
        %3902 = vmatprep.subr.mxu0 0.0
        %v3903 = vand.u32 %v2767, 4294901760
        %3904 = vmatpush1.msra.mxu0 %v3903
        %3905 = vmatprep.subr.mxu0 0.0
        %v3906 = vand.u32 %v2768, 4294901760
        %3907 = vmatpush1.msra.mxu0 %v3906
        %3908 = vmatprep.subr.mxu0 0.0
        %v3909 = vand.u32 %v2769, 4294901760
        %3910 = vmatpush1.msra.mxu0 %v3909
        %3911 = vmatprep.subr.mxu0 0.0
        %v3912 = vand.u32 %v2770, 4294901760
        %3913 = vmatpush1.msra.mxu0 %v3912
        %3914 = vmatprep.subr.mxu0 0.0
        %v3915 = vand.u32 %v2771, 4294901760
        %3916 = vmatpush1.msra.mxu0 %v3915
        %3917 = vmatprep.subr.mxu0 0.0
        %v3918 = vand.u32 %v2772, 4294901760
        %3919 = vmatpush1.msra.mxu0 %v3918
        %3920 = vmatprep.subr.mxu0 0.0
        %v3921 = vand.u32 %v2773, 4294901760
        %3922 = vmatpush1.msra.mxu0 %v3921
        %3923 = vmatprep.subr.mxu0 0.0
        %v3924 = vand.u32 %v2774, 4294901760
        %3925 = vmatpush1.msra.mxu0 %v3924
        %3926 = vmatprep.subr.mxu0 0.0
        %v3927 = vand.u32 %v2775, 4294901760
        %3928 = vmatpush1.msra.mxu0 %v3927
        %3929 = vmatprep.subr.mxu0 0.0
        %v3930 = vand.u32 %v2776, 4294901760
        %3931 = vmatpush1.msra.mxu0 %v3930
        %3932 = vmatprep.subr.mxu0 0.0
        %v3933 = vand.u32 %v2777, 4294901760
        %3934 = vmatpush1.msra.mxu0 %v3933
        %3935 = vmatprep.subr.mxu0 0.0
        %3936 = vmatpush1.msra.mxu0 0.0
        %3937 = vmatprep.subr.mxu0 0.0
        %3938 = vmatpush1.msra.mxu0 0.0
        %3939 = vmatprep.subr.mxu0 0.0
        %3940 = vmatpush1.msra.mxu0 0.0
        %3941 = vmatprep.subr.mxu0 0.0
        %3942 = vmatpush1.msra.mxu0 0.0
        %3943 = vmatprep.subr.mxu0 0.0
        %3944 = vmatpush1.msra.mxu0 0.0
        %3945 = vmatprep.subr.mxu0 0.0
        %3946 = vmatpush1.msra.mxu0 0.0
        %3947 = vmatprep.subr.mxu0 0.0
        %3948 = vmatpush1.msra.mxu0 0.0
        %3949 = vmatprep.subr.mxu0 0.0
        %3950 = vmatpush1.msra.mxu0 0.0
        %3951 = vmatprep.subr.mxu0 0.0
        %3952 = vmatpush1.msra.mxu0 0.0
        %3953 = vmatprep.subr.mxu0 0.0
        %3954 = vmatpush1.msra.mxu0 0.0
        %3955 = vmatprep.subr.mxu0 0.0
        %3956 = vmatpush1.msra.mxu0 0.0
        %3957 = vmatprep.subr.mxu0 0.0
        %3958 = vmatpush1.msra.mxu0 0.0
        %3959 = vmatprep.subr.mxu0 0.0
        %3960 = vmatpush1.msra.mxu0 0.0
        %3961 = vmatprep.subr.mxu0 0.0
        %3962 = vmatpush1.msra.mxu0 0.0
        %3963 = vmatprep.subr.mxu0 0.0
        %3964 = vmatpush1.msra.mxu0 0.0
        %3965 = vmatprep.subr.mxu0 0.0
        %3966 = vmatpush1.msra.mxu0 0.0
        %3967 = vmatprep.mubr.f32.mxu0 0.0
        %v3968 = vand.u32 %v1475, 4294901760
        %3969 = vmatmul.mubr.f32.gmra.mrb[0].mxu0 %v3968
        %v3970 = vpop.f32.mrb[0].mxu0
        %v3971 = vadd.f32 %v3794, %v3970
        %v3972 = vpop.f32.mrb[0].mxu0
        %3973 = vmatprep.mubr.f32.mxu0 0.0
        %v3974 = vand.u32 %v1481, 4294901760
        %3975 = vmatmul.mubr.f32.gmra.mrb[0].mxu0 %v3974
        %v3976 = vpop.f32.mrb[0].mxu0
        %v3977 = vadd.f32 %v3800, %v3976
        %v3978 = vpop.f32.mrb[0].mxu0
        %3979 = vmatprep.mubr.f32.mxu0 0.0
        %v3980 = vand.u32 %v1487, 4294901760
        %3981 = vmatmul.mubr.f32.gmra.mrb[0].mxu0 %v3980
        %v3982 = vpop.f32.mrb[0].mxu0
        %v3983 = vadd.f32 %v3806, %v3982
        %v3984 = vpop.f32.mrb[0].mxu0
        %3985 = vmatprep.mubr.f32.mxu0 0.0
        %v3986 = vand.u32 %v1493, 4294901760
        %3987 = vmatmul.mubr.f32.gmra.mrb[0].mxu0 %v3986
        %v3988 = vpop.f32.mrb[0].mxu0
        %v3989 = vadd.f32 %v3812, %v3988
        %v3990 = vpop.f32.mrb[0].mxu0
        %3991 = vmatprep.mubr.f32.mxu0 0.0
        %v3992 = vand.u32 %v1499, 4294901760
        %3993 = vmatmul.mubr.f32.gmra.mrb[0].mxu0 %v3992
        %v3994 = vpop.f32.mrb[0].mxu0
        %v3995 = vadd.f32 %v3818, %v3994
        %v3996 = vpop.f32.mrb[0].mxu0
        %3997 = vmatprep.mubr.f32.mxu0 0.0
        %v3998 = vand.u32 %v1505, 4294901760
        %3999 = vmatmul.mubr.f32.gmra.mrb[0].mxu0 %v3998
        %v4000 = vpop.f32.mrb[0].mxu0
        %v4001 = vadd.f32 %v3824, %v4000
        %v4002 = vpop.f32.mrb[0].mxu0
        %4003 = vmatprep.mubr.f32.mxu0 0.0
        %v4004 = vand.u32 %v1511, 4294901760
        %4005 = vmatmul.mubr.f32.gmra.mrb[0].mxu0 %v4004
        %v4006 = vpop.f32.mrb[0].mxu0
        %v4007 = vadd.f32 %v3830, %v4006
        %v4008 = vpop.f32.mrb[0].mxu0
        %4009 = vmatprep.mubr.f32.mxu0 0.0
        %v4010 = vand.u32 %v1517, 4294901760
        %4011 = vmatmul.mubr.f32.gmra.mrb[0].mxu0 %v4010
        %v4012 = vpop.f32.mrb[0].mxu0
        %v4013 = vadd.f32 %v3836, %v4012
        %v4014 = vpop.f32.mrb[0].mxu0
        %4015 = vmatprep.mubr.f32.mxu0 0.0
        %v4016 = vand.u32 %v1523, 4294901760
        %4017 = vmatmul.mubr.f32.gmra.mrb[0].mxu0 %v4016
        %v4018 = vpop.f32.mrb[0].mxu0
        %v4019 = vadd.f32 %v3842, %v4018
        %v4020 = vpop.f32.mrb[0].mxu0
        %4021 = vmatprep.mubr.f32.mxu0 0.0
        %v4022 = vand.u32 %v1529, 4294901760
        %4023 = vmatmul.mubr.f32.gmra.mrb[0].mxu0 %v4022
        %v4024 = vpop.f32.mrb[0].mxu0
        %v4025 = vadd.f32 %v3848, %v4024
        %v4026 = vpop.f32.mrb[0].mxu0
        %4027 = vmatprep.mubr.f32.mxu0 0.0
        %v4028 = vand.u32 %v1535, 4294901760
        %4029 = vmatmul.mubr.f32.gmra.mrb[0].mxu0 %v4028
        %v4030 = vpop.f32.mrb[0].mxu0
        %v4031 = vadd.f32 %v3854, %v4030
        %v4032 = vpop.f32.mrb[0].mxu0
        %4033 = vmatprep.mubr.f32.mxu0 0.0
        %v4034 = vand.u32 %v1541, 4294901760
        %4035 = vmatmul.mubr.f32.gmra.mrb[0].mxu0 %v4034
        %v4036 = vpop.f32.mrb[0].mxu0
        %v4037 = vadd.f32 %v3860, %v4036
        %v4038 = vpop.f32.mrb[0].mxu0
        %4039 = vmatprep.mubr.f32.mxu0 0.0
        %v4040 = vand.u32 %v1547, 4294901760
        %4041 = vmatmul.mubr.f32.gmra.mrb[0].mxu0 %v4040
        %v4042 = vpop.f32.mrb[0].mxu0
        %v4043 = vadd.f32 %v3866, %v4042
        %v4044 = vpop.f32.mrb[0].mxu0
        %4045 = vmatprep.mubr.f32.mxu0 0.0
        %v4046 = vand.u32 %v1553, 4294901760
        %4047 = vmatmul.mubr.f32.gmra.mrb[0].mxu0 %v4046
        %v4048 = vpop.f32.mrb[0].mxu0
        %v4049 = vadd.f32 %v3872, %v4048
        %v4050 = vpop.f32.mrb[0].mxu0
        %4051 = vmatprep.mubr.f32.mxu0 0.0
        %v4052 = vand.u32 %v1559, 4294901760
        %4053 = vmatmul.mubr.f32.gmra.mrb[0].mxu0 %v4052
        %v4054 = vpop.f32.mrb[0].mxu0
        %v4055 = vadd.f32 %v3878, %v4054
        %v4056 = vpop.f32.mrb[0].mxu0
        %4057 = vmatprep.mubr.f32.mxu0 0.0
        %v4058 = vand.u32 %v1565, 4294901760
        %4059 = vmatmul.mubr.f32.gmra.mrb[0].mxu0 %v4058
        %v4060 = vpop.f32.mrb[0].mxu0
        %v4061 = vadd.f32 %v3884, %v4060
        %v4062 = vpop.f32.mrb[0].mxu0
        %4063 = vdwg.mxu0
        %v4064 = vld [vmem:[%s4] sm:$0xff]
        %v4065 = vld [vmem:[%s4 + $0x8] sm:$0xff]
        %v4066 = vld [vmem:[%s4 + $0x10] sm:$0xff]
        %v4067 = vld [vmem:[%s4 + $0x18] sm:$0xff]
        %v4068 = vld [vmem:[%s4 + $0x20] sm:$0xff]
        %v4069 = vld [vmem:[%s4 + $0x28] sm:$0xff]
        %v4070 = vld [vmem:[%s4 + $0x30] sm:$0xff]
        %v4071 = vld [vmem:[%s4 + $0x38] sm:$0xff]
        %v4072 = vld [vmem:[%s4 + $0x40] sm:$0xff]
        %v4073 = vld [vmem:[%s4 + $0x48] sm:$0xff]
        %v4074 = vld [vmem:[%s4 + $0x50] sm:$0xff]
        %v4075 = vld [vmem:[%s4 + $0x58] sm:$0xff]
        %v4076 = vld [vmem:[%s4 + $0x60] sm:$0xff]
        %v4077 = vld [vmem:[%s4 + $0x68] sm:$0xff]
        %v4078 = vld [vmem:[%s4 + $0x70] sm:$0xff]
        %v4079 = vld [vmem:[%s4 + $0x78] sm:$0xff]
        %4080 = vmatprep.subr.mxu0 0.0
        %v4081 = vand.u32 %v4064, 4294901760
        %4082 = vmatpush1.msra.mxu0 %v4081
        %4083 = vmatprep.subr.mxu0 0.0
        %v4084 = vand.u32 %v4065, 4294901760
        %4085 = vmatpush1.msra.mxu0 %v4084
        %4086 = vmatprep.subr.mxu0 0.0
        %v4087 = vand.u32 %v4066, 4294901760
        %4088 = vmatpush1.msra.mxu0 %v4087
        %4089 = vmatprep.subr.mxu0 0.0
        %v4090 = vand.u32 %v4067, 4294901760
        %4091 = vmatpush1.msra.mxu0 %v4090
        %4092 = vmatprep.subr.mxu0 0.0
        %v4093 = vand.u32 %v4068, 4294901760
        %4094 = vmatpush1.msra.mxu0 %v4093
        %4095 = vmatprep.subr.mxu0 0.0
        %v4096 = vand.u32 %v4069, 4294901760
        %4097 = vmatpush1.msra.mxu0 %v4096
        %4098 = vmatprep.subr.mxu0 0.0
        %v4099 = vand.u32 %v4070, 4294901760
        %4100 = vmatpush1.msra.mxu0 %v4099
        %4101 = vmatprep.subr.mxu0 0.0
        %v4102 = vand.u32 %v4071, 4294901760
        %4103 = vmatpush1.msra.mxu0 %v4102
        %4104 = vmatprep.subr.mxu0 0.0
        %v4105 = vand.u32 %v4072, 4294901760
        %4106 = vmatpush1.msra.mxu0 %v4105
        %4107 = vmatprep.subr.mxu0 0.0
        %v4108 = vand.u32 %v4073, 4294901760
        %4109 = vmatpush1.msra.mxu0 %v4108
        %4110 = vmatprep.subr.mxu0 0.0
        %v4111 = vand.u32 %v4074, 4294901760
        %4112 = vmatpush1.msra.mxu0 %v4111
        %4113 = vmatprep.subr.mxu0 0.0
        %v4114 = vand.u32 %v4075, 4294901760
        %4115 = vmatpush1.msra.mxu0 %v4114
        %4116 = vmatprep.subr.mxu0 0.0
        %v4117 = vand.u32 %v4076, 4294901760
        %4118 = vmatpush1.msra.mxu0 %v4117
        %4119 = vmatprep.subr.mxu0 0.0
        %v4120 = vand.u32 %v4077, 4294901760
        %4121 = vmatpush1.msra.mxu0 %v4120
        %4122 = vmatprep.subr.mxu0 0.0
        %v4123 = vand.u32 %v4078, 4294901760
        %4124 = vmatpush1.msra.mxu0 %v4123
        %4125 = vmatprep.subr.mxu0 0.0
        %v4126 = vand.u32 %v4079, 4294901760
        %4127 = vmatpush1.msra.mxu0 %v4126
        %4128 = vmatprep.subr.mxu0 0.0
        %4129 = vmatpush1.msra.mxu0 0.0
        %4130 = vmatprep.subr.mxu0 0.0
        %4131 = vmatpush1.msra.mxu0 0.0
        %4132 = vmatprep.subr.mxu0 0.0
        %4133 = vmatpush1.msra.mxu0 0.0
        %4134 = vmatprep.subr.mxu0 0.0
        %4135 = vmatpush1.msra.mxu0 0.0
        %4136 = vmatprep.subr.mxu0 0.0
        %4137 = vmatpush1.msra.mxu0 0.0
        %4138 = vmatprep.subr.mxu0 0.0
        %4139 = vmatpush1.msra.mxu0 0.0
        %4140 = vmatprep.subr.mxu0 0.0
        %4141 = vmatpush1.msra.mxu0 0.0
        %4142 = vmatprep.subr.mxu0 0.0
        %4143 = vmatpush1.msra.mxu0 0.0
        %4144 = vmatprep.subr.mxu0 0.0
        %4145 = vmatpush1.msra.mxu0 0.0
        %4146 = vmatprep.subr.mxu0 0.0
        %4147 = vmatpush1.msra.mxu0 0.0
        %4148 = vmatprep.subr.mxu0 0.0
        %4149 = vmatpush1.msra.mxu0 0.0
        %4150 = vmatprep.subr.mxu0 0.0
        %4151 = vmatpush1.msra.mxu0 0.0
        %4152 = vmatprep.subr.mxu0 0.0
        %4153 = vmatpush1.msra.mxu0 0.0
        %4154 = vmatprep.subr.mxu0 0.0
        %4155 = vmatpush1.msra.mxu0 0.0
        %4156 = vmatprep.subr.mxu0 0.0
        %4157 = vmatpush1.msra.mxu0 0.0
        %4158 = vmatprep.subr.mxu0 0.0
        %4159 = vmatpush1.msra.mxu0 0.0
        %4160 = vmatprep.mubr.f32.mxu0 0.0
        %v4161 = vand.u32 %v2669, 4294901760
        %v4162 = vsub.f32 %v2669, %v4161
        %v4163 = vand.u32 %v4162, 4294901760
        %v4164 = vsub.f32 %v4162, %v4163
        %v4165 = vand.u32 %v4164, 4294901760
        %4166 = vmatmul.mubr.f32.gmra.mrb[0].mxu0 %v4165
        %v4167 = vpop.f32.mrb[0].mxu0
        %v4168 = vadd.f32 0.0, %v4167
        %v4169 = vpop.f32.mrb[0].mxu0
        %4170 = vmatprep.mubr.f32.mxu0 0.0
        %v4171 = vand.u32 %v2675, 4294901760
        %v4172 = vsub.f32 %v2675, %v4171
        %v4173 = vand.u32 %v4172, 4294901760
        %v4174 = vsub.f32 %v4172, %v4173
        %v4175 = vand.u32 %v4174, 4294901760
        %4176 = vmatmul.mubr.f32.gmra.mrb[0].mxu0 %v4175
        %v4177 = vpop.f32.mrb[0].mxu0
        %v4178 = vadd.f32 0.0, %v4177
        %v4179 = vpop.f32.mrb[0].mxu0
        %4180 = vmatprep.mubr.f32.mxu0 0.0
        %v4181 = vand.u32 %v2681, 4294901760
        %v4182 = vsub.f32 %v2681, %v4181
        %v4183 = vand.u32 %v4182, 4294901760
        %v4184 = vsub.f32 %v4182, %v4183
        %v4185 = vand.u32 %v4184, 4294901760
        %4186 = vmatmul.mubr.f32.gmra.mrb[0].mxu0 %v4185
        %v4187 = vpop.f32.mrb[0].mxu0
        %v4188 = vadd.f32 0.0, %v4187
        %v4189 = vpop.f32.mrb[0].mxu0
        %4190 = vmatprep.mubr.f32.mxu0 0.0
        %v4191 = vand.u32 %v2687, 4294901760
        %v4192 = vsub.f32 %v2687, %v4191
        %v4193 = vand.u32 %v4192, 4294901760
        %v4194 = vsub.f32 %v4192, %v4193
        %v4195 = vand.u32 %v4194, 4294901760
        %4196 = vmatmul.mubr.f32.gmra.mrb[0].mxu0 %v4195
        %v4197 = vpop.f32.mrb[0].mxu0
        %v4198 = vadd.f32 0.0, %v4197
        %v4199 = vpop.f32.mrb[0].mxu0
        %4200 = vmatprep.mubr.f32.mxu0 0.0
        %v4201 = vand.u32 %v2693, 4294901760
        %v4202 = vsub.f32 %v2693, %v4201
        %v4203 = vand.u32 %v4202, 4294901760
        %v4204 = vsub.f32 %v4202, %v4203
        %v4205 = vand.u32 %v4204, 4294901760
        %4206 = vmatmul.mubr.f32.gmra.mrb[0].mxu0 %v4205
        %v4207 = vpop.f32.mrb[0].mxu0
        %v4208 = vadd.f32 0.0, %v4207
        %v4209 = vpop.f32.mrb[0].mxu0
        %4210 = vmatprep.mubr.f32.mxu0 0.0
        %v4211 = vand.u32 %v2699, 4294901760
        %v4212 = vsub.f32 %v2699, %v4211
        %v4213 = vand.u32 %v4212, 4294901760
        %v4214 = vsub.f32 %v4212, %v4213
        %v4215 = vand.u32 %v4214, 4294901760
        %4216 = vmatmul.mubr.f32.gmra.mrb[0].mxu0 %v4215
        %v4217 = vpop.f32.mrb[0].mxu0
        %v4218 = vadd.f32 0.0, %v4217
        %v4219 = vpop.f32.mrb[0].mxu0
        %4220 = vmatprep.mubr.f32.mxu0 0.0
        %v4221 = vand.u32 %v2705, 4294901760
        %v4222 = vsub.f32 %v2705, %v4221
        %v4223 = vand.u32 %v4222, 4294901760
        %v4224 = vsub.f32 %v4222, %v4223
        %v4225 = vand.u32 %v4224, 4294901760
        %4226 = vmatmul.mubr.f32.gmra.mrb[0].mxu0 %v4225
        %v4227 = vpop.f32.mrb[0].mxu0
        %v4228 = vadd.f32 0.0, %v4227
        %v4229 = vpop.f32.mrb[0].mxu0
        %4230 = vmatprep.mubr.f32.mxu0 0.0
        %v4231 = vand.u32 %v2711, 4294901760
        %v4232 = vsub.f32 %v2711, %v4231
        %v4233 = vand.u32 %v4232, 4294901760
        %v4234 = vsub.f32 %v4232, %v4233
        %v4235 = vand.u32 %v4234, 4294901760
        %4236 = vmatmul.mubr.f32.gmra.mrb[0].mxu0 %v4235
        %v4237 = vpop.f32.mrb[0].mxu0
        %v4238 = vadd.f32 0.0, %v4237
        %v4239 = vpop.f32.mrb[0].mxu0
        %4240 = vmatprep.mubr.f32.mxu0 0.0
        %v4241 = vand.u32 %v2717, 4294901760
        %v4242 = vsub.f32 %v2717, %v4241
        %v4243 = vand.u32 %v4242, 4294901760
        %v4244 = vsub.f32 %v4242, %v4243
        %v4245 = vand.u32 %v4244, 4294901760
        %4246 = vmatmul.mubr.f32.gmra.mrb[0].mxu0 %v4245
        %v4247 = vpop.f32.mrb[0].mxu0
        %v4248 = vadd.f32 0.0, %v4247
        %v4249 = vpop.f32.mrb[0].mxu0
        %4250 = vmatprep.mubr.f32.mxu0 0.0
        %v4251 = vand.u32 %v2723, 4294901760
        %v4252 = vsub.f32 %v2723, %v4251
        %v4253 = vand.u32 %v4252, 4294901760
        %v4254 = vsub.f32 %v4252, %v4253
        %v4255 = vand.u32 %v4254, 4294901760
        %4256 = vmatmul.mubr.f32.gmra.mrb[0].mxu0 %v4255
        %v4257 = vpop.f32.mrb[0].mxu0
        %v4258 = vadd.f32 0.0, %v4257
        %v4259 = vpop.f32.mrb[0].mxu0
        %4260 = vmatprep.mubr.f32.mxu0 0.0
        %v4261 = vand.u32 %v2729, 4294901760
        %v4262 = vsub.f32 %v2729, %v4261
        %v4263 = vand.u32 %v4262, 4294901760
        %v4264 = vsub.f32 %v4262, %v4263
        %v4265 = vand.u32 %v4264, 4294901760
        %4266 = vmatmul.mubr.f32.gmra.mrb[0].mxu0 %v4265
        %v4267 = vpop.f32.mrb[0].mxu0
        %v4268 = vadd.f32 0.0, %v4267
        %v4269 = vpop.f32.mrb[0].mxu0
        %4270 = vmatprep.mubr.f32.mxu0 0.0
        %v4271 = vand.u32 %v2735, 4294901760
        %v4272 = vsub.f32 %v2735, %v4271
        %v4273 = vand.u32 %v4272, 4294901760
        %v4274 = vsub.f32 %v4272, %v4273
        %v4275 = vand.u32 %v4274, 4294901760
        %4276 = vmatmul.mubr.f32.gmra.mrb[0].mxu0 %v4275
        %v4277 = vpop.f32.mrb[0].mxu0
        %v4278 = vadd.f32 0.0, %v4277
        %v4279 = vpop.f32.mrb[0].mxu0
        %4280 = vmatprep.mubr.f32.mxu0 0.0
        %v4281 = vand.u32 %v2741, 4294901760
        %v4282 = vsub.f32 %v2741, %v4281
        %v4283 = vand.u32 %v4282, 4294901760
        %v4284 = vsub.f32 %v4282, %v4283
        %v4285 = vand.u32 %v4284, 4294901760
        %4286 = vmatmul.mubr.f32.gmra.mrb[0].mxu0 %v4285
        %v4287 = vpop.f32.mrb[0].mxu0
        %v4288 = vadd.f32 0.0, %v4287
        %v4289 = vpop.f32.mrb[0].mxu0
        %4290 = vmatprep.mubr.f32.mxu0 0.0
        %v4291 = vand.u32 %v2747, 4294901760
        %v4292 = vsub.f32 %v2747, %v4291
        %v4293 = vand.u32 %v4292, 4294901760
        %v4294 = vsub.f32 %v4292, %v4293
        %v4295 = vand.u32 %v4294, 4294901760
        %4296 = vmatmul.mubr.f32.gmra.mrb[0].mxu0 %v4295
        %v4297 = vpop.f32.mrb[0].mxu0
        %v4298 = vadd.f32 0.0, %v4297
        %v4299 = vpop.f32.mrb[0].mxu0
        %4300 = vmatprep.mubr.f32.mxu0 0.0
        %v4301 = vand.u32 %v2753, 4294901760
        %v4302 = vsub.f32 %v2753, %v4301
        %v4303 = vand.u32 %v4302, 4294901760
        %v4304 = vsub.f32 %v4302, %v4303
        %v4305 = vand.u32 %v4304, 4294901760
        %4306 = vmatmul.mubr.f32.gmra.mrb[0].mxu0 %v4305
        %v4307 = vpop.f32.mrb[0].mxu0
        %v4308 = vadd.f32 0.0, %v4307
        %v4309 = vpop.f32.mrb[0].mxu0
        %4310 = vmatprep.mubr.f32.mxu0 0.0
        %v4311 = vand.u32 %v2759, 4294901760
        %v4312 = vsub.f32 %v2759, %v4311
        %v4313 = vand.u32 %v4312, 4294901760
        %v4314 = vsub.f32 %v4312, %v4313
        %v4315 = vand.u32 %v4314, 4294901760
        %4316 = vmatmul.mubr.f32.gmra.mrb[0].mxu0 %v4315
        %v4317 = vpop.f32.mrb[0].mxu0
        %v4318 = vadd.f32 0.0, %v4317
        %v4319 = vpop.f32.mrb[0].mxu0
        %4320 = vdwg.mxu0
        %4321 = vmatprep.subr.mxu0 0.0
        %v4322 = vand.u32 %v4064, 4294901760
        %v4323 = vsub.f32 %v4064, %v4322
        %v4324 = vand.u32 %v4323, 4294901760
        %v4325 = vsub.f32 %v4323, %v4324
        %v4326 = vand.u32 %v4325, 4294901760
        %4327 = vmatpush1.msra.mxu0 %v4326
        %4328 = vmatprep.subr.mxu0 0.0
        %v4329 = vand.u32 %v4065, 4294901760
        %v4330 = vsub.f32 %v4065, %v4329
        %v4331 = vand.u32 %v4330, 4294901760
        %v4332 = vsub.f32 %v4330, %v4331
        %v4333 = vand.u32 %v4332, 4294901760
        %4334 = vmatpush1.msra.mxu0 %v4333
        %4335 = vmatprep.subr.mxu0 0.0
        %v4336 = vand.u32 %v4066, 4294901760
        %v4337 = vsub.f32 %v4066, %v4336
        %v4338 = vand.u32 %v4337, 4294901760
        %v4339 = vsub.f32 %v4337, %v4338
        %v4340 = vand.u32 %v4339, 4294901760
        %4341 = vmatpush1.msra.mxu0 %v4340
        %4342 = vmatprep.subr.mxu0 0.0
        %v4343 = vand.u32 %v4067, 4294901760
        %v4344 = vsub.f32 %v4067, %v4343
        %v4345 = vand.u32 %v4344, 4294901760
        %v4346 = vsub.f32 %v4344, %v4345
        %v4347 = vand.u32 %v4346, 4294901760
        %4348 = vmatpush1.msra.mxu0 %v4347
        %4349 = vmatprep.subr.mxu0 0.0
        %v4350 = vand.u32 %v4068, 4294901760
        %v4351 = vsub.f32 %v4068, %v4350
        %v4352 = vand.u32 %v4351, 4294901760
        %v4353 = vsub.f32 %v4351, %v4352
        %v4354 = vand.u32 %v4353, 4294901760
        %4355 = vmatpush1.msra.mxu0 %v4354
        %4356 = vmatprep.subr.mxu0 0.0
        %v4357 = vand.u32 %v4069, 4294901760
        %v4358 = vsub.f32 %v4069, %v4357
        %v4359 = vand.u32 %v4358, 4294901760
        %v4360 = vsub.f32 %v4358, %v4359
        %v4361 = vand.u32 %v4360, 4294901760
        %4362 = vmatpush1.msra.mxu0 %v4361
        %4363 = vmatprep.subr.mxu0 0.0
        %v4364 = vand.u32 %v4070, 4294901760
        %v4365 = vsub.f32 %v4070, %v4364
        %v4366 = vand.u32 %v4365, 4294901760
        %v4367 = vsub.f32 %v4365, %v4366
        %v4368 = vand.u32 %v4367, 4294901760
        %4369 = vmatpush1.msra.mxu0 %v4368
        %4370 = vmatprep.subr.mxu0 0.0
        %v4371 = vand.u32 %v4071, 4294901760
        %v4372 = vsub.f32 %v4071, %v4371
        %v4373 = vand.u32 %v4372, 4294901760
        %v4374 = vsub.f32 %v4372, %v4373
        %v4375 = vand.u32 %v4374, 4294901760
        %4376 = vmatpush1.msra.mxu0 %v4375
        %4377 = vmatprep.subr.mxu0 0.0
        %v4378 = vand.u32 %v4072, 4294901760
        %v4379 = vsub.f32 %v4072, %v4378
        %v4380 = vand.u32 %v4379, 4294901760
        %v4381 = vsub.f32 %v4379, %v4380
        %v4382 = vand.u32 %v4381, 4294901760
        %4383 = vmatpush1.msra.mxu0 %v4382
        %4384 = vmatprep.subr.mxu0 0.0
        %v4385 = vand.u32 %v4073, 4294901760
        %v4386 = vsub.f32 %v4073, %v4385
        %v4387 = vand.u32 %v4386, 4294901760
        %v4388 = vsub.f32 %v4386, %v4387
        %v4389 = vand.u32 %v4388, 4294901760
        %4390 = vmatpush1.msra.mxu0 %v4389
        %4391 = vmatprep.subr.mxu0 0.0
        %v4392 = vand.u32 %v4074, 4294901760
        %v4393 = vsub.f32 %v4074, %v4392
        %v4394 = vand.u32 %v4393, 4294901760
        %v4395 = vsub.f32 %v4393, %v4394
        %v4396 = vand.u32 %v4395, 4294901760
        %4397 = vmatpush1.msra.mxu0 %v4396
        %4398 = vmatprep.subr.mxu0 0.0
        %v4399 = vand.u32 %v4075, 4294901760
        %v4400 = vsub.f32 %v4075, %v4399
        %v4401 = vand.u32 %v4400, 4294901760
        %v4402 = vsub.f32 %v4400, %v4401
        %v4403 = vand.u32 %v4402, 4294901760
        %4404 = vmatpush1.msra.mxu0 %v4403
        %4405 = vmatprep.subr.mxu0 0.0
        %v4406 = vand.u32 %v4076, 4294901760
        %v4407 = vsub.f32 %v4076, %v4406
        %v4408 = vand.u32 %v4407, 4294901760
        %v4409 = vsub.f32 %v4407, %v4408
        %v4410 = vand.u32 %v4409, 4294901760
        %4411 = vmatpush1.msra.mxu0 %v4410
        %4412 = vmatprep.subr.mxu0 0.0
        %v4413 = vand.u32 %v4077, 4294901760
        %v4414 = vsub.f32 %v4077, %v4413
        %v4415 = vand.u32 %v4414, 4294901760
        %v4416 = vsub.f32 %v4414, %v4415
        %v4417 = vand.u32 %v4416, 4294901760
        %4418 = vmatpush1.msra.mxu0 %v4417
        %4419 = vmatprep.subr.mxu0 0.0
        %v4420 = vand.u32 %v4078, 4294901760
        %v4421 = vsub.f32 %v4078, %v4420
        %v4422 = vand.u32 %v4421, 4294901760
        %v4423 = vsub.f32 %v4421, %v4422
        %v4424 = vand.u32 %v4423, 4294901760
        %4425 = vmatpush1.msra.mxu0 %v4424
        %4426 = vmatprep.subr.mxu0 0.0
        %v4427 = vand.u32 %v4079, 4294901760
        %v4428 = vsub.f32 %v4079, %v4427
        %v4429 = vand.u32 %v4428, 4294901760
        %v4430 = vsub.f32 %v4428, %v4429
        %v4431 = vand.u32 %v4430, 4294901760
        %4432 = vmatpush1.msra.mxu0 %v4431
        %4433 = vmatprep.subr.mxu0 0.0
        %4434 = vmatpush1.msra.mxu0 0.0
        %4435 = vmatprep.subr.mxu0 0.0
        %4436 = vmatpush1.msra.mxu0 0.0
        %4437 = vmatprep.subr.mxu0 0.0
        %4438 = vmatpush1.msra.mxu0 0.0
        %4439 = vmatprep.subr.mxu0 0.0
        %4440 = vmatpush1.msra.mxu0 0.0
        %4441 = vmatprep.subr.mxu0 0.0
        %4442 = vmatpush1.msra.mxu0 0.0
        %4443 = vmatprep.subr.mxu0 0.0
        %4444 = vmatpush1.msra.mxu0 0.0
        %4445 = vmatprep.subr.mxu0 0.0
        %4446 = vmatpush1.msra.mxu0 0.0
        %4447 = vmatprep.subr.mxu0 0.0
        %4448 = vmatpush1.msra.mxu0 0.0
        %4449 = vmatprep.subr.mxu0 0.0
        %4450 = vmatpush1.msra.mxu0 0.0
        %4451 = vmatprep.subr.mxu0 0.0
        %4452 = vmatpush1.msra.mxu0 0.0
        %4453 = vmatprep.subr.mxu0 0.0
        %4454 = vmatpush1.msra.mxu0 0.0
        %4455 = vmatprep.subr.mxu0 0.0
        %4456 = vmatpush1.msra.mxu0 0.0
        %4457 = vmatprep.subr.mxu0 0.0
        %4458 = vmatpush1.msra.mxu0 0.0
        %4459 = vmatprep.subr.mxu0 0.0
        %4460 = vmatpush1.msra.mxu0 0.0
        %4461 = vmatprep.subr.mxu0 0.0
        %4462 = vmatpush1.msra.mxu0 0.0
        %4463 = vmatprep.subr.mxu0 0.0
        %4464 = vmatpush1.msra.mxu0 0.0
        %4465 = vmatprep.mubr.f32.mxu0 0.0
        %v4466 = vand.u32 %v2669, 4294901760
        %4467 = vmatmul.mubr.f32.gmra.mrb[0].mxu0 %v4466
        %v4468 = vpop.f32.mrb[0].mxu0
        %v4469 = vadd.f32 %v4168, %v4468
        %v4470 = vpop.f32.mrb[0].mxu0
        %4471 = vmatprep.mubr.f32.mxu0 0.0
        %v4472 = vand.u32 %v2675, 4294901760
        %4473 = vmatmul.mubr.f32.gmra.mrb[0].mxu0 %v4472
        %v4474 = vpop.f32.mrb[0].mxu0
        %v4475 = vadd.f32 %v4178, %v4474
        %v4476 = vpop.f32.mrb[0].mxu0
        %4477 = vmatprep.mubr.f32.mxu0 0.0
        %v4478 = vand.u32 %v2681, 4294901760
        %4479 = vmatmul.mubr.f32.gmra.mrb[0].mxu0 %v4478
        %v4480 = vpop.f32.mrb[0].mxu0
        %v4481 = vadd.f32 %v4188, %v4480
        %v4482 = vpop.f32.mrb[0].mxu0
        %4483 = vmatprep.mubr.f32.mxu0 0.0
        %v4484 = vand.u32 %v2687, 4294901760
        %4485 = vmatmul.mubr.f32.gmra.mrb[0].mxu0 %v4484
        %v4486 = vpop.f32.mrb[0].mxu0
        %v4487 = vadd.f32 %v4198, %v4486
        %v4488 = vpop.f32.mrb[0].mxu0
        %4489 = vmatprep.mubr.f32.mxu0 0.0
        %v4490 = vand.u32 %v2693, 4294901760
        %4491 = vmatmul.mubr.f32.gmra.mrb[0].mxu0 %v4490
        %v4492 = vpop.f32.mrb[0].mxu0
        %v4493 = vadd.f32 %v4208, %v4492
        %v4494 = vpop.f32.mrb[0].mxu0
        %4495 = vmatprep.mubr.f32.mxu0 0.0
        %v4496 = vand.u32 %v2699, 4294901760
        %4497 = vmatmul.mubr.f32.gmra.mrb[0].mxu0 %v4496
        %v4498 = vpop.f32.mrb[0].mxu0
        %v4499 = vadd.f32 %v4218, %v4498
        %v4500 = vpop.f32.mrb[0].mxu0
        %4501 = vmatprep.mubr.f32.mxu0 0.0
        %v4502 = vand.u32 %v2705, 4294901760
        %4503 = vmatmul.mubr.f32.gmra.mrb[0].mxu0 %v4502
        %v4504 = vpop.f32.mrb[0].mxu0
        %v4505 = vadd.f32 %v4228, %v4504
        %v4506 = vpop.f32.mrb[0].mxu0
        %4507 = vmatprep.mubr.f32.mxu0 0.0
        %v4508 = vand.u32 %v2711, 4294901760
        %4509 = vmatmul.mubr.f32.gmra.mrb[0].mxu0 %v4508
        %v4510 = vpop.f32.mrb[0].mxu0
        %v4511 = vadd.f32 %v4238, %v4510
        %v4512 = vpop.f32.mrb[0].mxu0
        %4513 = vmatprep.mubr.f32.mxu0 0.0
        %v4514 = vand.u32 %v2717, 4294901760
        %4515 = vmatmul.mubr.f32.gmra.mrb[0].mxu0 %v4514
        %v4516 = vpop.f32.mrb[0].mxu0
        %v4517 = vadd.f32 %v4248, %v4516
        %v4518 = vpop.f32.mrb[0].mxu0
        %4519 = vmatprep.mubr.f32.mxu0 0.0
        %v4520 = vand.u32 %v2723, 4294901760
        %4521 = vmatmul.mubr.f32.gmra.mrb[0].mxu0 %v4520
        %v4522 = vpop.f32.mrb[0].mxu0
        %v4523 = vadd.f32 %v4258, %v4522
        %v4524 = vpop.f32.mrb[0].mxu0
        %4525 = vmatprep.mubr.f32.mxu0 0.0
        %v4526 = vand.u32 %v2729, 4294901760
        %4527 = vmatmul.mubr.f32.gmra.mrb[0].mxu0 %v4526
        %v4528 = vpop.f32.mrb[0].mxu0
        %v4529 = vadd.f32 %v4268, %v4528
        %v4530 = vpop.f32.mrb[0].mxu0
        %4531 = vmatprep.mubr.f32.mxu0 0.0
        %v4532 = vand.u32 %v2735, 4294901760
        %4533 = vmatmul.mubr.f32.gmra.mrb[0].mxu0 %v4532
        %v4534 = vpop.f32.mrb[0].mxu0
        %v4535 = vadd.f32 %v4278, %v4534
        %v4536 = vpop.f32.mrb[0].mxu0
        %4537 = vmatprep.mubr.f32.mxu0 0.0
        %v4538 = vand.u32 %v2741, 4294901760
        %4539 = vmatmul.mubr.f32.gmra.mrb[0].mxu0 %v4538
        %v4540 = vpop.f32.mrb[0].mxu0
        %v4541 = vadd.f32 %v4288, %v4540
        %v4542 = vpop.f32.mrb[0].mxu0
        %4543 = vmatprep.mubr.f32.mxu0 0.0
        %v4544 = vand.u32 %v2747, 4294901760
        %4545 = vmatmul.mubr.f32.gmra.mrb[0].mxu0 %v4544
        %v4546 = vpop.f32.mrb[0].mxu0
        %v4547 = vadd.f32 %v4298, %v4546
        %v4548 = vpop.f32.mrb[0].mxu0
        %4549 = vmatprep.mubr.f32.mxu0 0.0
        %v4550 = vand.u32 %v2753, 4294901760
        %4551 = vmatmul.mubr.f32.gmra.mrb[0].mxu0 %v4550
        %v4552 = vpop.f32.mrb[0].mxu0
        %v4553 = vadd.f32 %v4308, %v4552
        %v4554 = vpop.f32.mrb[0].mxu0
        %4555 = vmatprep.mubr.f32.mxu0 0.0
        %v4556 = vand.u32 %v2759, 4294901760
        %4557 = vmatmul.mubr.f32.gmra.mrb[0].mxu0 %v4556
        %v4558 = vpop.f32.mrb[0].mxu0
        %v4559 = vadd.f32 %v4318, %v4558
        %v4560 = vpop.f32.mrb[0].mxu0
        %4561 = vdwg.mxu0
        %4562 = vmatprep.subr.mxu0 0.0
        %v4563 = vand.u32 %v4064, 4294901760
        %v4564 = vsub.f32 %v4064, %v4563
        %4565 = vmatpush1.msra.mxu0 %v4564
        %4566 = vmatprep.subr.mxu0 0.0
        %v4567 = vand.u32 %v4065, 4294901760
        %v4568 = vsub.f32 %v4065, %v4567
        %4569 = vmatpush1.msra.mxu0 %v4568
        %4570 = vmatprep.subr.mxu0 0.0
        %v4571 = vand.u32 %v4066, 4294901760
        %v4572 = vsub.f32 %v4066, %v4571
        %4573 = vmatpush1.msra.mxu0 %v4572
        %4574 = vmatprep.subr.mxu0 0.0
        %v4575 = vand.u32 %v4067, 4294901760
        %v4576 = vsub.f32 %v4067, %v4575
        %4577 = vmatpush1.msra.mxu0 %v4576
        %4578 = vmatprep.subr.mxu0 0.0
        %v4579 = vand.u32 %v4068, 4294901760
        %v4580 = vsub.f32 %v4068, %v4579
        %4581 = vmatpush1.msra.mxu0 %v4580
        %4582 = vmatprep.subr.mxu0 0.0
        %v4583 = vand.u32 %v4069, 4294901760
        %v4584 = vsub.f32 %v4069, %v4583
        %4585 = vmatpush1.msra.mxu0 %v4584
        %4586 = vmatprep.subr.mxu0 0.0
        %v4587 = vand.u32 %v4070, 4294901760
        %v4588 = vsub.f32 %v4070, %v4587
        %4589 = vmatpush1.msra.mxu0 %v4588
        %4590 = vmatprep.subr.mxu0 0.0
        %v4591 = vand.u32 %v4071, 4294901760
        %v4592 = vsub.f32 %v4071, %v4591
        %4593 = vmatpush1.msra.mxu0 %v4592
        %4594 = vmatprep.subr.mxu0 0.0
        %v4595 = vand.u32 %v4072, 4294901760
        %v4596 = vsub.f32 %v4072, %v4595
        %4597 = vmatpush1.msra.mxu0 %v4596
        %4598 = vmatprep.subr.mxu0 0.0
        %v4599 = vand.u32 %v4073, 4294901760
        %v4600 = vsub.f32 %v4073, %v4599
        %4601 = vmatpush1.msra.mxu0 %v4600
        %4602 = vmatprep.subr.mxu0 0.0
        %v4603 = vand.u32 %v4074, 4294901760
        %v4604 = vsub.f32 %v4074, %v4603
        %4605 = vmatpush1.msra.mxu0 %v4604
        %4606 = vmatprep.subr.mxu0 0.0
        %v4607 = vand.u32 %v4075, 4294901760
        %v4608 = vsub.f32 %v4075, %v4607
        %4609 = vmatpush1.msra.mxu0 %v4608
        %4610 = vmatprep.subr.mxu0 0.0
        %v4611 = vand.u32 %v4076, 4294901760
        %v4612 = vsub.f32 %v4076, %v4611
        %4613 = vmatpush1.msra.mxu0 %v4612
        %4614 = vmatprep.subr.mxu0 0.0
        %v4615 = vand.u32 %v4077, 4294901760
        %v4616 = vsub.f32 %v4077, %v4615
        %4617 = vmatpush1.msra.mxu0 %v4616
        %4618 = vmatprep.subr.mxu0 0.0
        %v4619 = vand.u32 %v4078, 4294901760
        %v4620 = vsub.f32 %v4078, %v4619
        %4621 = vmatpush1.msra.mxu0 %v4620
        %4622 = vmatprep.subr.mxu0 0.0
        %v4623 = vand.u32 %v4079, 4294901760
        %v4624 = vsub.f32 %v4079, %v4623
        %4625 = vmatpush1.msra.mxu0 %v4624
        %4626 = vmatprep.subr.mxu0 0.0
        %4627 = vmatpush1.msra.mxu0 0.0
        %4628 = vmatprep.subr.mxu0 0.0
        %4629 = vmatpush1.msra.mxu0 0.0
        %4630 = vmatprep.subr.mxu0 0.0
        %4631 = vmatpush1.msra.mxu0 0.0
        %4632 = vmatprep.subr.mxu0 0.0
        %4633 = vmatpush1.msra.mxu0 0.0
        %4634 = vmatprep.subr.mxu0 0.0
        %4635 = vmatpush1.msra.mxu0 0.0
        %4636 = vmatprep.subr.mxu0 0.0
        %4637 = vmatpush1.msra.mxu0 0.0
        %4638 = vmatprep.subr.mxu0 0.0
        %4639 = vmatpush1.msra.mxu0 0.0
        %4640 = vmatprep.subr.mxu0 0.0
        %4641 = vmatpush1.msra.mxu0 0.0
        %4642 = vmatprep.subr.mxu0 0.0
        %4643 = vmatpush1.msra.mxu0 0.0
        %4644 = vmatprep.subr.mxu0 0.0
        %4645 = vmatpush1.msra.mxu0 0.0
        %4646 = vmatprep.subr.mxu0 0.0
        %4647 = vmatpush1.msra.mxu0 0.0
        %4648 = vmatprep.subr.mxu0 0.0
        %4649 = vmatpush1.msra.mxu0 0.0
        %4650 = vmatprep.subr.mxu0 0.0
        %4651 = vmatpush1.msra.mxu0 0.0
        %4652 = vmatprep.subr.mxu0 0.0
        %4653 = vmatpush1.msra.mxu0 0.0
        %4654 = vmatprep.subr.mxu0 0.0
        %4655 = vmatpush1.msra.mxu0 0.0
        %4656 = vmatprep.subr.mxu0 0.0
        %4657 = vmatpush1.msra.mxu0 0.0
        %4658 = vmatprep.mubr.f32.mxu0 0.0
        %v4659 = vand.u32 %v2669, 4294901760
        %v4660 = vsub.f32 %v2669, %v4659
        %4661 = vmatmul.mubr.f32.gmra.mrb[0].mxu0 %v4660
        %v4662 = vpop.f32.mrb[0].mxu0
        %v4663 = vadd.f32 %v4469, %v4662
        %v4664 = vpop.f32.mrb[0].mxu0
        %4665 = vmatprep.mubr.f32.mxu0 0.0
        %v4666 = vand.u32 %v2675, 4294901760
        %v4667 = vsub.f32 %v2675, %v4666
        %4668 = vmatmul.mubr.f32.gmra.mrb[0].mxu0 %v4667
        %v4669 = vpop.f32.mrb[0].mxu0
        %v4670 = vadd.f32 %v4475, %v4669
        %v4671 = vpop.f32.mrb[0].mxu0
        %4672 = vmatprep.mubr.f32.mxu0 0.0
        %v4673 = vand.u32 %v2681, 4294901760
        %v4674 = vsub.f32 %v2681, %v4673
        %4675 = vmatmul.mubr.f32.gmra.mrb[0].mxu0 %v4674
        %v4676 = vpop.f32.mrb[0].mxu0
        %v4677 = vadd.f32 %v4481, %v4676
        %v4678 = vpop.f32.mrb[0].mxu0
        %4679 = vmatprep.mubr.f32.mxu0 0.0
        %v4680 = vand.u32 %v2687, 4294901760
        %v4681 = vsub.f32 %v2687, %v4680
        %4682 = vmatmul.mubr.f32.gmra.mrb[0].mxu0 %v4681
        %v4683 = vpop.f32.mrb[0].mxu0
        %v4684 = vadd.f32 %v4487, %v4683
        %v4685 = vpop.f32.mrb[0].mxu0
        %4686 = vmatprep.mubr.f32.mxu0 0.0
        %v4687 = vand.u32 %v2693, 4294901760
        %v4688 = vsub.f32 %v2693, %v4687
        %4689 = vmatmul.mubr.f32.gmra.mrb[0].mxu0 %v4688
        %v4690 = vpop.f32.mrb[0].mxu0
        %v4691 = vadd.f32 %v4493, %v4690
        %v4692 = vpop.f32.mrb[0].mxu0
        %4693 = vmatprep.mubr.f32.mxu0 0.0
        %v4694 = vand.u32 %v2699, 4294901760
        %v4695 = vsub.f32 %v2699, %v4694
        %4696 = vmatmul.mubr.f32.gmra.mrb[0].mxu0 %v4695
        %v4697 = vpop.f32.mrb[0].mxu0
        %v4698 = vadd.f32 %v4499, %v4697
        %v4699 = vpop.f32.mrb[0].mxu0
        %4700 = vmatprep.mubr.f32.mxu0 0.0
        %v4701 = vand.u32 %v2705, 4294901760
        %v4702 = vsub.f32 %v2705, %v4701
        %4703 = vmatmul.mubr.f32.gmra.mrb[0].mxu0 %v4702
        %v4704 = vpop.f32.mrb[0].mxu0
        %v4705 = vadd.f32 %v4505, %v4704
        %v4706 = vpop.f32.mrb[0].mxu0
        %4707 = vmatprep.mubr.f32.mxu0 0.0
        %v4708 = vand.u32 %v2711, 4294901760
        %v4709 = vsub.f32 %v2711, %v4708
        %4710 = vmatmul.mubr.f32.gmra.mrb[0].mxu0 %v4709
        %v4711 = vpop.f32.mrb[0].mxu0
        %v4712 = vadd.f32 %v4511, %v4711
        %v4713 = vpop.f32.mrb[0].mxu0
        %4714 = vmatprep.mubr.f32.mxu0 0.0
        %v4715 = vand.u32 %v2717, 4294901760
        %v4716 = vsub.f32 %v2717, %v4715
        %4717 = vmatmul.mubr.f32.gmra.mrb[0].mxu0 %v4716
        %v4718 = vpop.f32.mrb[0].mxu0
        %v4719 = vadd.f32 %v4517, %v4718
        %v4720 = vpop.f32.mrb[0].mxu0
        %4721 = vmatprep.mubr.f32.mxu0 0.0
        %v4722 = vand.u32 %v2723, 4294901760
        %v4723 = vsub.f32 %v2723, %v4722
        %4724 = vmatmul.mubr.f32.gmra.mrb[0].mxu0 %v4723
        %v4725 = vpop.f32.mrb[0].mxu0
        %v4726 = vadd.f32 %v4523, %v4725
        %v4727 = vpop.f32.mrb[0].mxu0
        %4728 = vmatprep.mubr.f32.mxu0 0.0
        %v4729 = vand.u32 %v2729, 4294901760
        %v4730 = vsub.f32 %v2729, %v4729
        %4731 = vmatmul.mubr.f32.gmra.mrb[0].mxu0 %v4730
        %v4732 = vpop.f32.mrb[0].mxu0
        %v4733 = vadd.f32 %v4529, %v4732
        %v4734 = vpop.f32.mrb[0].mxu0
        %4735 = vmatprep.mubr.f32.mxu0 0.0
        %v4736 = vand.u32 %v2735, 4294901760
        %v4737 = vsub.f32 %v2735, %v4736
        %4738 = vmatmul.mubr.f32.gmra.mrb[0].mxu0 %v4737
        %v4739 = vpop.f32.mrb[0].mxu0
        %v4740 = vadd.f32 %v4535, %v4739
        %v4741 = vpop.f32.mrb[0].mxu0
        %4742 = vmatprep.mubr.f32.mxu0 0.0
        %v4743 = vand.u32 %v2741, 4294901760
        %v4744 = vsub.f32 %v2741, %v4743
        %4745 = vmatmul.mubr.f32.gmra.mrb[0].mxu0 %v4744
        %v4746 = vpop.f32.mrb[0].mxu0
        %v4747 = vadd.f32 %v4541, %v4746
        %v4748 = vpop.f32.mrb[0].mxu0
        %4749 = vmatprep.mubr.f32.mxu0 0.0
        %v4750 = vand.u32 %v2747, 4294901760
        %v4751 = vsub.f32 %v2747, %v4750
        %4752 = vmatmul.mubr.f32.gmra.mrb[0].mxu0 %v4751
        %v4753 = vpop.f32.mrb[0].mxu0
        %v4754 = vadd.f32 %v4547, %v4753
        %v4755 = vpop.f32.mrb[0].mxu0
        %4756 = vmatprep.mubr.f32.mxu0 0.0
        %v4757 = vand.u32 %v2753, 4294901760
        %v4758 = vsub.f32 %v2753, %v4757
        %4759 = vmatmul.mubr.f32.gmra.mrb[0].mxu0 %v4758
        %v4760 = vpop.f32.mrb[0].mxu0
        %v4761 = vadd.f32 %v4553, %v4760
        %v4762 = vpop.f32.mrb[0].mxu0
        %4763 = vmatprep.mubr.f32.mxu0 0.0
        %v4764 = vand.u32 %v2759, 4294901760
        %v4765 = vsub.f32 %v2759, %v4764
        %4766 = vmatmul.mubr.f32.gmra.mrb[0].mxu0 %v4765
        %v4767 = vpop.f32.mrb[0].mxu0
        %v4768 = vadd.f32 %v4559, %v4767
        %v4769 = vpop.f32.mrb[0].mxu0
        %4770 = vdwg.mxu0
        %4771 = vmatprep.subr.mxu0 0.0
        %v4772 = vand.u32 %v4064, 4294901760
        %4773 = vmatpush1.msra.mxu0 %v4772
        %4774 = vmatprep.subr.mxu0 0.0
        %v4775 = vand.u32 %v4065, 4294901760
        %4776 = vmatpush1.msra.mxu0 %v4775
        %4777 = vmatprep.subr.mxu0 0.0
        %v4778 = vand.u32 %v4066, 4294901760
        %4779 = vmatpush1.msra.mxu0 %v4778
        %4780 = vmatprep.subr.mxu0 0.0
        %v4781 = vand.u32 %v4067, 4294901760
        %4782 = vmatpush1.msra.mxu0 %v4781
        %4783 = vmatprep.subr.mxu0 0.0
        %v4784 = vand.u32 %v4068, 4294901760
        %4785 = vmatpush1.msra.mxu0 %v4784
        %4786 = vmatprep.subr.mxu0 0.0
        %v4787 = vand.u32 %v4069, 4294901760
        %4788 = vmatpush1.msra.mxu0 %v4787
        %4789 = vmatprep.subr.mxu0 0.0
        %v4790 = vand.u32 %v4070, 4294901760
        %4791 = vmatpush1.msra.mxu0 %v4790
        %4792 = vmatprep.subr.mxu0 0.0
        %v4793 = vand.u32 %v4071, 4294901760
        %4794 = vmatpush1.msra.mxu0 %v4793
        %4795 = vmatprep.subr.mxu0 0.0
        %v4796 = vand.u32 %v4072, 4294901760
        %4797 = vmatpush1.msra.mxu0 %v4796
        %4798 = vmatprep.subr.mxu0 0.0
        %v4799 = vand.u32 %v4073, 4294901760
        %4800 = vmatpush1.msra.mxu0 %v4799
        %4801 = vmatprep.subr.mxu0 0.0
        %v4802 = vand.u32 %v4074, 4294901760
        %4803 = vmatpush1.msra.mxu0 %v4802
        %4804 = vmatprep.subr.mxu0 0.0
        %v4805 = vand.u32 %v4075, 4294901760
        %4806 = vmatpush1.msra.mxu0 %v4805
        %4807 = vmatprep.subr.mxu0 0.0
        %v4808 = vand.u32 %v4076, 4294901760
        %4809 = vmatpush1.msra.mxu0 %v4808
        %4810 = vmatprep.subr.mxu0 0.0
        %v4811 = vand.u32 %v4077, 4294901760
        %4812 = vmatpush1.msra.mxu0 %v4811
        %4813 = vmatprep.subr.mxu0 0.0
        %v4814 = vand.u32 %v4078, 4294901760
        %4815 = vmatpush1.msra.mxu0 %v4814
        %4816 = vmatprep.subr.mxu0 0.0
        %v4817 = vand.u32 %v4079, 4294901760
        %4818 = vmatpush1.msra.mxu0 %v4817
        %4819 = vmatprep.subr.mxu0 0.0
        %4820 = vmatpush1.msra.mxu0 0.0
        %4821 = vmatprep.subr.mxu0 0.0
        %4822 = vmatpush1.msra.mxu0 0.0
        %4823 = vmatprep.subr.mxu0 0.0
        %4824 = vmatpush1.msra.mxu0 0.0
        %4825 = vmatprep.subr.mxu0 0.0
        %4826 = vmatpush1.msra.mxu0 0.0
        %4827 = vmatprep.subr.mxu0 0.0
        %4828 = vmatpush1.msra.mxu0 0.0
        %4829 = vmatprep.subr.mxu0 0.0
        %4830 = vmatpush1.msra.mxu0 0.0
        %4831 = vmatprep.subr.mxu0 0.0
        %4832 = vmatpush1.msra.mxu0 0.0
        %4833 = vmatprep.subr.mxu0 0.0
        %4834 = vmatpush1.msra.mxu0 0.0
        %4835 = vmatprep.subr.mxu0 0.0
        %4836 = vmatpush1.msra.mxu0 0.0
        %4837 = vmatprep.subr.mxu0 0.0
        %4838 = vmatpush1.msra.mxu0 0.0
        %4839 = vmatprep.subr.mxu0 0.0
        %4840 = vmatpush1.msra.mxu0 0.0
        %4841 = vmatprep.subr.mxu0 0.0
        %4842 = vmatpush1.msra.mxu0 0.0
        %4843 = vmatprep.subr.mxu0 0.0
        %4844 = vmatpush1.msra.mxu0 0.0
        %4845 = vmatprep.subr.mxu0 0.0
        %4846 = vmatpush1.msra.mxu0 0.0
        %4847 = vmatprep.subr.mxu0 0.0
        %4848 = vmatpush1.msra.mxu0 0.0
        %4849 = vmatprep.subr.mxu0 0.0
        %4850 = vmatpush1.msra.mxu0 0.0
        %4851 = vmatprep.mubr.f32.mxu0 0.0
        %v4852 = vand.u32 %v2669, 4294901760
        %v4853 = vsub.f32 %v2669, %v4852
        %v4854 = vand.u32 %v4853, 4294901760
        %4855 = vmatmul.mubr.f32.gmra.mrb[0].mxu0 %v4854
        %v4856 = vpop.f32.mrb[0].mxu0
        %v4857 = vadd.f32 %v4663, %v4856
        %v4858 = vpop.f32.mrb[0].mxu0
        %4859 = vmatprep.mubr.f32.mxu0 0.0
        %v4860 = vand.u32 %v2675, 4294901760
        %v4861 = vsub.f32 %v2675, %v4860
        %v4862 = vand.u32 %v4861, 4294901760
        %4863 = vmatmul.mubr.f32.gmra.mrb[0].mxu0 %v4862
        %v4864 = vpop.f32.mrb[0].mxu0
        %v4865 = vadd.f32 %v4670, %v4864
        %v4866 = vpop.f32.mrb[0].mxu0
        %4867 = vmatprep.mubr.f32.mxu0 0.0
        %v4868 = vand.u32 %v2681, 4294901760
        %v4869 = vsub.f32 %v2681, %v4868
        %v4870 = vand.u32 %v4869, 4294901760
        %4871 = vmatmul.mubr.f32.gmra.mrb[0].mxu0 %v4870
        %v4872 = vpop.f32.mrb[0].mxu0
        %v4873 = vadd.f32 %v4677, %v4872
        %v4874 = vpop.f32.mrb[0].mxu0
        %4875 = vmatprep.mubr.f32.mxu0 0.0
        %v4876 = vand.u32 %v2687, 4294901760
        %v4877 = vsub.f32 %v2687, %v4876
        %v4878 = vand.u32 %v4877, 4294901760
        %4879 = vmatmul.mubr.f32.gmra.mrb[0].mxu0 %v4878
        %v4880 = vpop.f32.mrb[0].mxu0
        %v4881 = vadd.f32 %v4684, %v4880
        %v4882 = vpop.f32.mrb[0].mxu0
        %4883 = vmatprep.mubr.f32.mxu0 0.0
        %v4884 = vand.u32 %v2693, 4294901760
        %v4885 = vsub.f32 %v2693, %v4884
        %v4886 = vand.u32 %v4885, 4294901760
        %4887 = vmatmul.mubr.f32.gmra.mrb[0].mxu0 %v4886
        %v4888 = vpop.f32.mrb[0].mxu0
        %v4889 = vadd.f32 %v4691, %v4888
        %v4890 = vpop.f32.mrb[0].mxu0
        %4891 = vmatprep.mubr.f32.mxu0 0.0
        %v4892 = vand.u32 %v2699, 4294901760
        %v4893 = vsub.f32 %v2699, %v4892
        %v4894 = vand.u32 %v4893, 4294901760
        %4895 = vmatmul.mubr.f32.gmra.mrb[0].mxu0 %v4894
        %v4896 = vpop.f32.mrb[0].mxu0
        %v4897 = vadd.f32 %v4698, %v4896
        %v4898 = vpop.f32.mrb[0].mxu0
        %4899 = vmatprep.mubr.f32.mxu0 0.0
        %v4900 = vand.u32 %v2705, 4294901760
        %v4901 = vsub.f32 %v2705, %v4900
        %v4902 = vand.u32 %v4901, 4294901760
        %4903 = vmatmul.mubr.f32.gmra.mrb[0].mxu0 %v4902
        %v4904 = vpop.f32.mrb[0].mxu0
        %v4905 = vadd.f32 %v4705, %v4904
        %v4906 = vpop.f32.mrb[0].mxu0
        %4907 = vmatprep.mubr.f32.mxu0 0.0
        %v4908 = vand.u32 %v2711, 4294901760
        %v4909 = vsub.f32 %v2711, %v4908
        %v4910 = vand.u32 %v4909, 4294901760
        %4911 = vmatmul.mubr.f32.gmra.mrb[0].mxu0 %v4910
        %v4912 = vpop.f32.mrb[0].mxu0
        %v4913 = vadd.f32 %v4712, %v4912
        %v4914 = vpop.f32.mrb[0].mxu0
        %4915 = vmatprep.mubr.f32.mxu0 0.0
        %v4916 = vand.u32 %v2717, 4294901760
        %v4917 = vsub.f32 %v2717, %v4916
        %v4918 = vand.u32 %v4917, 4294901760
        %4919 = vmatmul.mubr.f32.gmra.mrb[0].mxu0 %v4918
        %v4920 = vpop.f32.mrb[0].mxu0
        %v4921 = vadd.f32 %v4719, %v4920
        %v4922 = vpop.f32.mrb[0].mxu0
        %4923 = vmatprep.mubr.f32.mxu0 0.0
        %v4924 = vand.u32 %v2723, 4294901760
        %v4925 = vsub.f32 %v2723, %v4924
        %v4926 = vand.u32 %v4925, 4294901760
        %4927 = vmatmul.mubr.f32.gmra.mrb[0].mxu0 %v4926
        %v4928 = vpop.f32.mrb[0].mxu0
        %v4929 = vadd.f32 %v4726, %v4928
        %v4930 = vpop.f32.mrb[0].mxu0
        %4931 = vmatprep.mubr.f32.mxu0 0.0
        %v4932 = vand.u32 %v2729, 4294901760
        %v4933 = vsub.f32 %v2729, %v4932
        %v4934 = vand.u32 %v4933, 4294901760
        %4935 = vmatmul.mubr.f32.gmra.mrb[0].mxu0 %v4934
        %v4936 = vpop.f32.mrb[0].mxu0
        %v4937 = vadd.f32 %v4733, %v4936
        %v4938 = vpop.f32.mrb[0].mxu0
        %4939 = vmatprep.mubr.f32.mxu0 0.0
        %v4940 = vand.u32 %v2735, 4294901760
        %v4941 = vsub.f32 %v2735, %v4940
        %v4942 = vand.u32 %v4941, 4294901760
        %4943 = vmatmul.mubr.f32.gmra.mrb[0].mxu0 %v4942
        %v4944 = vpop.f32.mrb[0].mxu0
        %v4945 = vadd.f32 %v4740, %v4944
        %v4946 = vpop.f32.mrb[0].mxu0
        %4947 = vmatprep.mubr.f32.mxu0 0.0
        %v4948 = vand.u32 %v2741, 4294901760
        %v4949 = vsub.f32 %v2741, %v4948
        %v4950 = vand.u32 %v4949, 4294901760
        %4951 = vmatmul.mubr.f32.gmra.mrb[0].mxu0 %v4950
        %v4952 = vpop.f32.mrb[0].mxu0
        %v4953 = vadd.f32 %v4747, %v4952
        %v4954 = vpop.f32.mrb[0].mxu0
        %4955 = vmatprep.mubr.f32.mxu0 0.0
        %v4956 = vand.u32 %v2747, 4294901760
        %v4957 = vsub.f32 %v2747, %v4956
        %v4958 = vand.u32 %v4957, 4294901760
        %4959 = vmatmul.mubr.f32.gmra.mrb[0].mxu0 %v4958
        %v4960 = vpop.f32.mrb[0].mxu0
        %v4961 = vadd.f32 %v4754, %v4960
        %v4962 = vpop.f32.mrb[0].mxu0
        %4963 = vmatprep.mubr.f32.mxu0 0.0
        %v4964 = vand.u32 %v2753, 4294901760
        %v4965 = vsub.f32 %v2753, %v4964
        %v4966 = vand.u32 %v4965, 4294901760
        %4967 = vmatmul.mubr.f32.gmra.mrb[0].mxu0 %v4966
        %v4968 = vpop.f32.mrb[0].mxu0
        %v4969 = vadd.f32 %v4761, %v4968
        %v4970 = vpop.f32.mrb[0].mxu0
        %4971 = vmatprep.mubr.f32.mxu0 0.0
        %v4972 = vand.u32 %v2759, 4294901760
        %v4973 = vsub.f32 %v2759, %v4972
        %v4974 = vand.u32 %v4973, 4294901760
        %4975 = vmatmul.mubr.f32.gmra.mrb[0].mxu0 %v4974
        %v4976 = vpop.f32.mrb[0].mxu0
        %v4977 = vadd.f32 %v4768, %v4976
        %v4978 = vpop.f32.mrb[0].mxu0
        %4979 = vdwg.mxu0
        %4980 = vmatprep.subr.mxu0 0.0
        %v4981 = vand.u32 %v4064, 4294901760
        %v4982 = vsub.f32 %v4064, %v4981
        %v4983 = vand.u32 %v4982, 4294901760
        %4984 = vmatpush1.msra.mxu0 %v4983
        %4985 = vmatprep.subr.mxu0 0.0
        %v4986 = vand.u32 %v4065, 4294901760
        %v4987 = vsub.f32 %v4065, %v4986
        %v4988 = vand.u32 %v4987, 4294901760
        %4989 = vmatpush1.msra.mxu0 %v4988
        %4990 = vmatprep.subr.mxu0 0.0
        %v4991 = vand.u32 %v4066, 4294901760
        %v4992 = vsub.f32 %v4066, %v4991
        %v4993 = vand.u32 %v4992, 4294901760
        %4994 = vmatpush1.msra.mxu0 %v4993
        %4995 = vmatprep.subr.mxu0 0.0
        %v4996 = vand.u32 %v4067, 4294901760
        %v4997 = vsub.f32 %v4067, %v4996
        %v4998 = vand.u32 %v4997, 4294901760
        %4999 = vmatpush1.msra.mxu0 %v4998
        %5000 = vmatprep.subr.mxu0 0.0
        %v5001 = vand.u32 %v4068, 4294901760
        %v5002 = vsub.f32 %v4068, %v5001
        %v5003 = vand.u32 %v5002, 4294901760
        %5004 = vmatpush1.msra.mxu0 %v5003
        %5005 = vmatprep.subr.mxu0 0.0
        %v5006 = vand.u32 %v4069, 4294901760
        %v5007 = vsub.f32 %v4069, %v5006
        %v5008 = vand.u32 %v5007, 4294901760
        %5009 = vmatpush1.msra.mxu0 %v5008
        %5010 = vmatprep.subr.mxu0 0.0
        %v5011 = vand.u32 %v4070, 4294901760
        %v5012 = vsub.f32 %v4070, %v5011
        %v5013 = vand.u32 %v5012, 4294901760
        %5014 = vmatpush1.msra.mxu0 %v5013
        %5015 = vmatprep.subr.mxu0 0.0
        %v5016 = vand.u32 %v4071, 4294901760
        %v5017 = vsub.f32 %v4071, %v5016
        %v5018 = vand.u32 %v5017, 4294901760
        %5019 = vmatpush1.msra.mxu0 %v5018
        %5020 = vmatprep.subr.mxu0 0.0
        %v5021 = vand.u32 %v4072, 4294901760
        %v5022 = vsub.f32 %v4072, %v5021
        %v5023 = vand.u32 %v5022, 4294901760
        %5024 = vmatpush1.msra.mxu0 %v5023
        %5025 = vmatprep.subr.mxu0 0.0
        %v5026 = vand.u32 %v4073, 4294901760
        %v5027 = vsub.f32 %v4073, %v5026
        %v5028 = vand.u32 %v5027, 4294901760
        %5029 = vmatpush1.msra.mxu0 %v5028
        %5030 = vmatprep.subr.mxu0 0.0
        %v5031 = vand.u32 %v4074, 4294901760
        %v5032 = vsub.f32 %v4074, %v5031
        %v5033 = vand.u32 %v5032, 4294901760
        %5034 = vmatpush1.msra.mxu0 %v5033
        %5035 = vmatprep.subr.mxu0 0.0
        %v5036 = vand.u32 %v4075, 4294901760
        %v5037 = vsub.f32 %v4075, %v5036
        %v5038 = vand.u32 %v5037, 4294901760
        %5039 = vmatpush1.msra.mxu0 %v5038
        %5040 = vmatprep.subr.mxu0 0.0
        %v5041 = vand.u32 %v4076, 4294901760
        %v5042 = vsub.f32 %v4076, %v5041
        %v5043 = vand.u32 %v5042, 4294901760
        %5044 = vmatpush1.msra.mxu0 %v5043
        %5045 = vmatprep.subr.mxu0 0.0
        %v5046 = vand.u32 %v4077, 4294901760
        %v5047 = vsub.f32 %v4077, %v5046
        %v5048 = vand.u32 %v5047, 4294901760
        %5049 = vmatpush1.msra.mxu0 %v5048
        %5050 = vmatprep.subr.mxu0 0.0
        %v5051 = vand.u32 %v4078, 4294901760
        %v5052 = vsub.f32 %v4078, %v5051
        %v5053 = vand.u32 %v5052, 4294901760
        %5054 = vmatpush1.msra.mxu0 %v5053
        %5055 = vmatprep.subr.mxu0 0.0
        %v5056 = vand.u32 %v4079, 4294901760
        %v5057 = vsub.f32 %v4079, %v5056
        %v5058 = vand.u32 %v5057, 4294901760
        %5059 = vmatpush1.msra.mxu0 %v5058
        %5060 = vmatprep.subr.mxu0 0.0
        %5061 = vmatpush1.msra.mxu0 0.0
        %5062 = vmatprep.subr.mxu0 0.0
        %5063 = vmatpush1.msra.mxu0 0.0
        %5064 = vmatprep.subr.mxu0 0.0
        %5065 = vmatpush1.msra.mxu0 0.0
        %5066 = vmatprep.subr.mxu0 0.0
        %5067 = vmatpush1.msra.mxu0 0.0
        %5068 = vmatprep.subr.mxu0 0.0
        %5069 = vmatpush1.msra.mxu0 0.0
        %5070 = vmatprep.subr.mxu0 0.0
        %5071 = vmatpush1.msra.mxu0 0.0
        %5072 = vmatprep.subr.mxu0 0.0
        %5073 = vmatpush1.msra.mxu0 0.0
        %5074 = vmatprep.subr.mxu0 0.0
        %5075 = vmatpush1.msra.mxu0 0.0
        %5076 = vmatprep.subr.mxu0 0.0
        %5077 = vmatpush1.msra.mxu0 0.0
        %5078 = vmatprep.subr.mxu0 0.0
        %5079 = vmatpush1.msra.mxu0 0.0
        %5080 = vmatprep.subr.mxu0 0.0
        %5081 = vmatpush1.msra.mxu0 0.0
        %5082 = vmatprep.subr.mxu0 0.0
        %5083 = vmatpush1.msra.mxu0 0.0
        %5084 = vmatprep.subr.mxu0 0.0
        %5085 = vmatpush1.msra.mxu0 0.0
        %5086 = vmatprep.subr.mxu0 0.0
        %5087 = vmatpush1.msra.mxu0 0.0
        %5088 = vmatprep.subr.mxu0 0.0
        %5089 = vmatpush1.msra.mxu0 0.0
        %5090 = vmatprep.subr.mxu0 0.0
        %5091 = vmatpush1.msra.mxu0 0.0
        %5092 = vmatprep.mubr.f32.mxu0 0.0
        %v5093 = vand.u32 %v2669, 4294901760
        %5094 = vmatmul.mubr.f32.gmra.mrb[0].mxu0 %v5093
        %v5095 = vpop.f32.mrb[0].mxu0
        %v5096 = vadd.f32 %v4857, %v5095
        %v5097 = vpop.f32.mrb[0].mxu0
        %5098 = vmatprep.mubr.f32.mxu0 0.0
        %v5099 = vand.u32 %v2675, 4294901760
        %5100 = vmatmul.mubr.f32.gmra.mrb[0].mxu0 %v5099
        %v5101 = vpop.f32.mrb[0].mxu0
        %v5102 = vadd.f32 %v4865, %v5101
        %v5103 = vpop.f32.mrb[0].mxu0
        %5104 = vmatprep.mubr.f32.mxu0 0.0
        %v5105 = vand.u32 %v2681, 4294901760
        %5106 = vmatmul.mubr.f32.gmra.mrb[0].mxu0 %v5105
        %v5107 = vpop.f32.mrb[0].mxu0
        %v5108 = vadd.f32 %v4873, %v5107
        %v5109 = vpop.f32.mrb[0].mxu0
        %5110 = vmatprep.mubr.f32.mxu0 0.0
        %v5111 = vand.u32 %v2687, 4294901760
        %5112 = vmatmul.mubr.f32.gmra.mrb[0].mxu0 %v5111
        %v5113 = vpop.f32.mrb[0].mxu0
        %v5114 = vadd.f32 %v4881, %v5113
        %v5115 = vpop.f32.mrb[0].mxu0
        %5116 = vmatprep.mubr.f32.mxu0 0.0
        %v5117 = vand.u32 %v2693, 4294901760
        %5118 = vmatmul.mubr.f32.gmra.mrb[0].mxu0 %v5117
        %v5119 = vpop.f32.mrb[0].mxu0
        %v5120 = vadd.f32 %v4889, %v5119
        %v5121 = vpop.f32.mrb[0].mxu0
        %5122 = vmatprep.mubr.f32.mxu0 0.0
        %v5123 = vand.u32 %v2699, 4294901760
        %5124 = vmatmul.mubr.f32.gmra.mrb[0].mxu0 %v5123
        %v5125 = vpop.f32.mrb[0].mxu0
        %v5126 = vadd.f32 %v4897, %v5125
        %v5127 = vpop.f32.mrb[0].mxu0
        %5128 = vmatprep.mubr.f32.mxu0 0.0
        %v5129 = vand.u32 %v2705, 4294901760
        %5130 = vmatmul.mubr.f32.gmra.mrb[0].mxu0 %v5129
        %v5131 = vpop.f32.mrb[0].mxu0
        %v5132 = vadd.f32 %v4905, %v5131
        %v5133 = vpop.f32.mrb[0].mxu0
        %5134 = vmatprep.mubr.f32.mxu0 0.0
        %v5135 = vand.u32 %v2711, 4294901760
        %5136 = vmatmul.mubr.f32.gmra.mrb[0].mxu0 %v5135
        %v5137 = vpop.f32.mrb[0].mxu0
        %v5138 = vadd.f32 %v4913, %v5137
        %v5139 = vpop.f32.mrb[0].mxu0
        %5140 = vmatprep.mubr.f32.mxu0 0.0
        %v5141 = vand.u32 %v2717, 4294901760
        %5142 = vmatmul.mubr.f32.gmra.mrb[0].mxu0 %v5141
        %v5143 = vpop.f32.mrb[0].mxu0
        %v5144 = vadd.f32 %v4921, %v5143
        %v5145 = vpop.f32.mrb[0].mxu0
        %5146 = vmatprep.mubr.f32.mxu0 0.0
        %v5147 = vand.u32 %v2723, 4294901760
        %5148 = vmatmul.mubr.f32.gmra.mrb[0].mxu0 %v5147
        %v5149 = vpop.f32.mrb[0].mxu0
        %v5150 = vadd.f32 %v4929, %v5149
        %v5151 = vpop.f32.mrb[0].mxu0
        %5152 = vmatprep.mubr.f32.mxu0 0.0
        %v5153 = vand.u32 %v2729, 4294901760
        %5154 = vmatmul.mubr.f32.gmra.mrb[0].mxu0 %v5153
        %v5155 = vpop.f32.mrb[0].mxu0
        %v5156 = vadd.f32 %v4937, %v5155
        %v5157 = vpop.f32.mrb[0].mxu0
        %5158 = vmatprep.mubr.f32.mxu0 0.0
        %v5159 = vand.u32 %v2735, 4294901760
        %5160 = vmatmul.mubr.f32.gmra.mrb[0].mxu0 %v5159
        %v5161 = vpop.f32.mrb[0].mxu0
        %v5162 = vadd.f32 %v4945, %v5161
        %v5163 = vpop.f32.mrb[0].mxu0
        %5164 = vmatprep.mubr.f32.mxu0 0.0
        %v5165 = vand.u32 %v2741, 4294901760
        %5166 = vmatmul.mubr.f32.gmra.mrb[0].mxu0 %v5165
        %v5167 = vpop.f32.mrb[0].mxu0
        %v5168 = vadd.f32 %v4953, %v5167
        %v5169 = vpop.f32.mrb[0].mxu0
        %5170 = vmatprep.mubr.f32.mxu0 0.0
        %v5171 = vand.u32 %v2747, 4294901760
        %5172 = vmatmul.mubr.f32.gmra.mrb[0].mxu0 %v5171
        %v5173 = vpop.f32.mrb[0].mxu0
        %v5174 = vadd.f32 %v4961, %v5173
        %v5175 = vpop.f32.mrb[0].mxu0
        %5176 = vmatprep.mubr.f32.mxu0 0.0
        %v5177 = vand.u32 %v2753, 4294901760
        %5178 = vmatmul.mubr.f32.gmra.mrb[0].mxu0 %v5177
        %v5179 = vpop.f32.mrb[0].mxu0
        %v5180 = vadd.f32 %v4969, %v5179
        %v5181 = vpop.f32.mrb[0].mxu0
        %5182 = vmatprep.mubr.f32.mxu0 0.0
        %v5183 = vand.u32 %v2759, 4294901760
        %5184 = vmatmul.mubr.f32.gmra.mrb[0].mxu0 %v5183
        %v5185 = vpop.f32.mrb[0].mxu0
        %v5186 = vadd.f32 %v4977, %v5185
        %v5187 = vpop.f32.mrb[0].mxu0
        %5188 = vdwg.mxu0
        %5189 = vmatprep.subr.mxu0 0.0
        %v5190 = vand.u32 %v4064, 4294901760
        %5191 = vmatpush1.msra.mxu0 %v5190
        %5192 = vmatprep.subr.mxu0 0.0
        %v5193 = vand.u32 %v4065, 4294901760
        %5194 = vmatpush1.msra.mxu0 %v5193
        %5195 = vmatprep.subr.mxu0 0.0
        %v5196 = vand.u32 %v4066, 4294901760
        %5197 = vmatpush1.msra.mxu0 %v5196
        %5198 = vmatprep.subr.mxu0 0.0
        %v5199 = vand.u32 %v4067, 4294901760
        %5200 = vmatpush1.msra.mxu0 %v5199
        %5201 = vmatprep.subr.mxu0 0.0
        %v5202 = vand.u32 %v4068, 4294901760
        %5203 = vmatpush1.msra.mxu0 %v5202
        %5204 = vmatprep.subr.mxu0 0.0
        %v5205 = vand.u32 %v4069, 4294901760
        %5206 = vmatpush1.msra.mxu0 %v5205
        %5207 = vmatprep.subr.mxu0 0.0
        %v5208 = vand.u32 %v4070, 4294901760
        %5209 = vmatpush1.msra.mxu0 %v5208
        %5210 = vmatprep.subr.mxu0 0.0
        %v5211 = vand.u32 %v4071, 4294901760
        %5212 = vmatpush1.msra.mxu0 %v5211
        %5213 = vmatprep.subr.mxu0 0.0
        %v5214 = vand.u32 %v4072, 4294901760
        %5215 = vmatpush1.msra.mxu0 %v5214
        %5216 = vmatprep.subr.mxu0 0.0
        %v5217 = vand.u32 %v4073, 4294901760
        %5218 = vmatpush1.msra.mxu0 %v5217
        %5219 = vmatprep.subr.mxu0 0.0
        %v5220 = vand.u32 %v4074, 4294901760
        %5221 = vmatpush1.msra.mxu0 %v5220
        %5222 = vmatprep.subr.mxu0 0.0
        %v5223 = vand.u32 %v4075, 4294901760
        %5224 = vmatpush1.msra.mxu0 %v5223
        %5225 = vmatprep.subr.mxu0 0.0
        %v5226 = vand.u32 %v4076, 4294901760
        %5227 = vmatpush1.msra.mxu0 %v5226
        %5228 = vmatprep.subr.mxu0 0.0
        %v5229 = vand.u32 %v4077, 4294901760
        %5230 = vmatpush1.msra.mxu0 %v5229
        %5231 = vmatprep.subr.mxu0 0.0
        %v5232 = vand.u32 %v4078, 4294901760
        %5233 = vmatpush1.msra.mxu0 %v5232
        %5234 = vmatprep.subr.mxu0 0.0
        %v5235 = vand.u32 %v4079, 4294901760
        %5236 = vmatpush1.msra.mxu0 %v5235
        %5237 = vmatprep.subr.mxu0 0.0
        %5238 = vmatpush1.msra.mxu0 0.0
        %5239 = vmatprep.subr.mxu0 0.0
        %5240 = vmatpush1.msra.mxu0 0.0
        %5241 = vmatprep.subr.mxu0 0.0
        %5242 = vmatpush1.msra.mxu0 0.0
        %5243 = vmatprep.subr.mxu0 0.0
        %5244 = vmatpush1.msra.mxu0 0.0
        %5245 = vmatprep.subr.mxu0 0.0
        %5246 = vmatpush1.msra.mxu0 0.0
        %5247 = vmatprep.subr.mxu0 0.0
        %5248 = vmatpush1.msra.mxu0 0.0
        %5249 = vmatprep.subr.mxu0 0.0
        %5250 = vmatpush1.msra.mxu0 0.0
        %5251 = vmatprep.subr.mxu0 0.0
        %5252 = vmatpush1.msra.mxu0 0.0
        %5253 = vmatprep.subr.mxu0 0.0
        %5254 = vmatpush1.msra.mxu0 0.0
        %5255 = vmatprep.subr.mxu0 0.0
        %5256 = vmatpush1.msra.mxu0 0.0
        %5257 = vmatprep.subr.mxu0 0.0
        %5258 = vmatpush1.msra.mxu0 0.0
        %5259 = vmatprep.subr.mxu0 0.0
        %5260 = vmatpush1.msra.mxu0 0.0
        %5261 = vmatprep.subr.mxu0 0.0
        %5262 = vmatpush1.msra.mxu0 0.0
        %5263 = vmatprep.subr.mxu0 0.0
        %5264 = vmatpush1.msra.mxu0 0.0
        %5265 = vmatprep.subr.mxu0 0.0
        %5266 = vmatpush1.msra.mxu0 0.0
        %5267 = vmatprep.subr.mxu0 0.0
        %5268 = vmatpush1.msra.mxu0 0.0
        %5269 = vmatprep.mubr.f32.mxu0 0.0
        %v5270 = vand.u32 %v2669, 4294901760
        %5271 = vmatmul.mubr.f32.gmra.mrb[0].mxu0 %v5270
        %v5272 = vpop.f32.mrb[0].mxu0
        %v5273 = vadd.f32 %v5096, %v5272
        %v5274 = vpop.f32.mrb[0].mxu0
        %5275 = vmatprep.mubr.f32.mxu0 0.0
        %v5276 = vand.u32 %v2675, 4294901760
        %5277 = vmatmul.mubr.f32.gmra.mrb[0].mxu0 %v5276
        %v5278 = vpop.f32.mrb[0].mxu0
        %v5279 = vadd.f32 %v5102, %v5278
        %v5280 = vpop.f32.mrb[0].mxu0
        %5281 = vmatprep.mubr.f32.mxu0 0.0
        %v5282 = vand.u32 %v2681, 4294901760
        %5283 = vmatmul.mubr.f32.gmra.mrb[0].mxu0 %v5282
        %v5284 = vpop.f32.mrb[0].mxu0
        %v5285 = vadd.f32 %v5108, %v5284
        %v5286 = vpop.f32.mrb[0].mxu0
        %5287 = vmatprep.mubr.f32.mxu0 0.0
        %v5288 = vand.u32 %v2687, 4294901760
        %5289 = vmatmul.mubr.f32.gmra.mrb[0].mxu0 %v5288
        %v5290 = vpop.f32.mrb[0].mxu0
        %v5291 = vadd.f32 %v5114, %v5290
        %v5292 = vpop.f32.mrb[0].mxu0
        %5293 = vmatprep.mubr.f32.mxu0 0.0
        %v5294 = vand.u32 %v2693, 4294901760
        %5295 = vmatmul.mubr.f32.gmra.mrb[0].mxu0 %v5294
        %v5296 = vpop.f32.mrb[0].mxu0
        %v5297 = vadd.f32 %v5120, %v5296
        %v5298 = vpop.f32.mrb[0].mxu0
        %5299 = vmatprep.mubr.f32.mxu0 0.0
        %v5300 = vand.u32 %v2699, 4294901760
        %5301 = vmatmul.mubr.f32.gmra.mrb[0].mxu0 %v5300
        %v5302 = vpop.f32.mrb[0].mxu0
        %v5303 = vadd.f32 %v5126, %v5302
        %v5304 = vpop.f32.mrb[0].mxu0
        %5305 = vmatprep.mubr.f32.mxu0 0.0
        %v5306 = vand.u32 %v2705, 4294901760
        %5307 = vmatmul.mubr.f32.gmra.mrb[0].mxu0 %v5306
        %v5308 = vpop.f32.mrb[0].mxu0
        %v5309 = vadd.f32 %v5132, %v5308
        %v5310 = vpop.f32.mrb[0].mxu0
        %5311 = vmatprep.mubr.f32.mxu0 0.0
        %v5312 = vand.u32 %v2711, 4294901760
        %5313 = vmatmul.mubr.f32.gmra.mrb[0].mxu0 %v5312
        %v5314 = vpop.f32.mrb[0].mxu0
        %v5315 = vadd.f32 %v5138, %v5314
        %v5316 = vpop.f32.mrb[0].mxu0
        %5317 = vmatprep.mubr.f32.mxu0 0.0
        %v5318 = vand.u32 %v2717, 4294901760
        %5319 = vmatmul.mubr.f32.gmra.mrb[0].mxu0 %v5318
        %v5320 = vpop.f32.mrb[0].mxu0
        %v5321 = vadd.f32 %v5144, %v5320
        %v5322 = vpop.f32.mrb[0].mxu0
        %5323 = vmatprep.mubr.f32.mxu0 0.0
        %v5324 = vand.u32 %v2723, 4294901760
        %5325 = vmatmul.mubr.f32.gmra.mrb[0].mxu0 %v5324
        %v5326 = vpop.f32.mrb[0].mxu0
        %v5327 = vadd.f32 %v5150, %v5326
        %v5328 = vpop.f32.mrb[0].mxu0
        %5329 = vmatprep.mubr.f32.mxu0 0.0
        %v5330 = vand.u32 %v2729, 4294901760
        %5331 = vmatmul.mubr.f32.gmra.mrb[0].mxu0 %v5330
        %v5332 = vpop.f32.mrb[0].mxu0
        %v5333 = vadd.f32 %v5156, %v5332
        %v5334 = vpop.f32.mrb[0].mxu0
        %5335 = vmatprep.mubr.f32.mxu0 0.0
        %v5336 = vand.u32 %v2735, 4294901760
        %5337 = vmatmul.mubr.f32.gmra.mrb[0].mxu0 %v5336
        %v5338 = vpop.f32.mrb[0].mxu0
        %v5339 = vadd.f32 %v5162, %v5338
        %v5340 = vpop.f32.mrb[0].mxu0
        %5341 = vmatprep.mubr.f32.mxu0 0.0
        %v5342 = vand.u32 %v2741, 4294901760
        %5343 = vmatmul.mubr.f32.gmra.mrb[0].mxu0 %v5342
        %v5344 = vpop.f32.mrb[0].mxu0
        %v5345 = vadd.f32 %v5168, %v5344
        %v5346 = vpop.f32.mrb[0].mxu0
        %5347 = vmatprep.mubr.f32.mxu0 0.0
        %v5348 = vand.u32 %v2747, 4294901760
        %5349 = vmatmul.mubr.f32.gmra.mrb[0].mxu0 %v5348
        %v5350 = vpop.f32.mrb[0].mxu0
        %v5351 = vadd.f32 %v5174, %v5350
        %v5352 = vpop.f32.mrb[0].mxu0
        %5353 = vmatprep.mubr.f32.mxu0 0.0
        %v5354 = vand.u32 %v2753, 4294901760
        %5355 = vmatmul.mubr.f32.gmra.mrb[0].mxu0 %v5354
        %v5356 = vpop.f32.mrb[0].mxu0
        %v5357 = vadd.f32 %v5180, %v5356
        %v5358 = vpop.f32.mrb[0].mxu0
        %5359 = vmatprep.mubr.f32.mxu0 0.0
        %v5360 = vand.u32 %v2759, 4294901760
        %5361 = vmatmul.mubr.f32.gmra.mrb[0].mxu0 %v5360
        %v5362 = vpop.f32.mrb[0].mxu0
        %v5363 = vadd.f32 %v5186, %v5362
        %v5364 = vpop.f32.mrb[0].mxu0
        %5365 = vdwg.mxu0
        %v5366 = vadd.f32 %v3971, %v5273
        %v5367 = vadd.f32 %v3977, %v5279
        %v5368 = vadd.f32 %v3983, %v5285
        %v5369 = vadd.f32 %v3989, %v5291
        %v5370 = vadd.f32 %v3995, %v5297
        %v5371 = vadd.f32 %v4001, %v5303
        %v5372 = vadd.f32 %v4007, %v5309
        %v5373 = vadd.f32 %v4013, %v5315
        %v5374 = vadd.f32 %v4019, %v5321
        %v5375 = vadd.f32 %v4025, %v5327
        %v5376 = vadd.f32 %v4031, %v5333
        %v5377 = vadd.f32 %v4037, %v5339
        %v5378 = vadd.f32 %v4043, %v5345
        %v5379 = vadd.f32 %v4049, %v5351
        %v5380 = vadd.f32 %v4055, %v5357
        %v5381 = vadd.f32 %v4061, %v5363
        %v5382 = vpack.c.bf16 %v5367, %v5366
        %v5383 = vpack.c.bf16 %v5369, %v5368
        %v5384 = vpack.c.bf16 %v5371, %v5370
        %v5385 = vpack.c.bf16 %v5373, %v5372
        %v5386 = vpack.c.bf16 %v5375, %v5374
        %v5387 = vpack.c.bf16 %v5377, %v5376
        %v5388 = vpack.c.bf16 %v5379, %v5378
        %v5389 = vpack.c.bf16 %v5381, %v5380
        %v5390 = vunpack.c.l.bf16 %v5382
        %v5391 = vunpack.c.h.bf16 %v5382
        %v5392 = vunpack.c.l.bf16 %v5383
        %v5393 = vunpack.c.h.bf16 %v5383
        %v5394 = vunpack.c.l.bf16 %v5384
        %v5395 = vunpack.c.h.bf16 %v5384
        %v5396 = vunpack.c.l.bf16 %v5385
        %v5397 = vunpack.c.h.bf16 %v5385
        %v5398 = vunpack.c.l.bf16 %v5386
        %v5399 = vunpack.c.h.bf16 %v5386
        %v5400 = vunpack.c.l.bf16 %v5387
        %v5401 = vunpack.c.h.bf16 %v5387
        %v5402 = vunpack.c.l.bf16 %v5388
        %v5403 = vunpack.c.h.bf16 %v5388
        %v5404 = vunpack.c.l.bf16 %v5389
        %v5405 = vunpack.c.h.bf16 %v5389
        %v5406 = vsub.f32 %v5366, %v5390
        %v5407 = vsub.f32 %v5367, %v5391
        %v5408 = vsub.f32 %v5368, %v5392
        %v5409 = vsub.f32 %v5369, %v5393
        %v5410 = vsub.f32 %v5370, %v5394
        %v5411 = vsub.f32 %v5371, %v5395
        %v5412 = vsub.f32 %v5372, %v5396
        %v5413 = vsub.f32 %v5373, %v5397
        %v5414 = vsub.f32 %v5374, %v5398
        %v5415 = vsub.f32 %v5375, %v5399
        %v5416 = vsub.f32 %v5376, %v5400
        %v5417 = vsub.f32 %v5377, %v5401
        %v5418 = vsub.f32 %v5378, %v5402
        %v5419 = vsub.f32 %v5379, %v5403
        %v5420 = vsub.f32 %v5380, %v5404
        %v5421 = vsub.f32 %v5381, %v5405
        %v5422 = vpack.c.bf16 %v5407, %v5406
        %v5423 = vpack.c.bf16 %v5409, %v5408
        %v5424 = vpack.c.bf16 %v5411, %v5410
        %v5425 = vpack.c.bf16 %v5413, %v5412
        %v5426 = vpack.c.bf16 %v5415, %v5414
        %v5427 = vpack.c.bf16 %v5417, %v5416
        %v5428 = vpack.c.bf16 %v5419, %v5418
        %v5429 = vpack.c.bf16 %v5421, %v5420
        %v5430 = vpack.c.bf16 %v3977, %v3971
        %v5431 = vpack.c.bf16 %v3989, %v3983
        %v5432 = vpack.c.bf16 %v4001, %v3995
        %v5433 = vpack.c.bf16 %v4013, %v4007
        %v5434 = vpack.c.bf16 %v4025, %v4019
        %v5435 = vpack.c.bf16 %v4037, %v4031
        %v5436 = vpack.c.bf16 %v4049, %v4043
        %v5437 = vpack.c.bf16 %v4061, %v4055
        %v5438 = vunpack.c.l.bf16 %v5430
        %v5439 = vunpack.c.h.bf16 %v5430
        %v5440 = vunpack.c.l.bf16 %v5431
        %v5441 = vunpack.c.h.bf16 %v5431
        %v5442 = vunpack.c.l.bf16 %v5432
        %v5443 = vunpack.c.h.bf16 %v5432
        %v5444 = vunpack.c.l.bf16 %v5433
        %v5445 = vunpack.c.h.bf16 %v5433
        %v5446 = vunpack.c.l.bf16 %v5434
        %v5447 = vunpack.c.h.bf16 %v5434
        %v5448 = vunpack.c.l.bf16 %v5435
        %v5449 = vunpack.c.h.bf16 %v5435
        %v5450 = vunpack.c.l.bf16 %v5436
        %v5451 = vunpack.c.h.bf16 %v5436
        %v5452 = vunpack.c.l.bf16 %v5437
        %v5453 = vunpack.c.h.bf16 %v5437
        %v5454 = vsub.f32 %v3971, %v5438
        %v5455 = vsub.f32 %v3977, %v5439
        %v5456 = vsub.f32 %v3983, %v5440
        %v5457 = vsub.f32 %v3989, %v5441
        %v5458 = vsub.f32 %v3995, %v5442
        %v5459 = vsub.f32 %v4001, %v5443
        %v5460 = vsub.f32 %v4007, %v5444
        %v5461 = vsub.f32 %v4013, %v5445
        %v5462 = vsub.f32 %v4019, %v5446
        %v5463 = vsub.f32 %v4025, %v5447
        %v5464 = vsub.f32 %v4031, %v5448
        %v5465 = vsub.f32 %v4037, %v5449
        %v5466 = vsub.f32 %v4043, %v5450
        %v5467 = vsub.f32 %v4049, %v5451
        %v5468 = vsub.f32 %v4055, %v5452
        %v5469 = vsub.f32 %v4061, %v5453
        %v5470 = vpack.c.bf16 %v5455, %v5454
        %v5471 = vpack.c.bf16 %v5457, %v5456
        %v5472 = vpack.c.bf16 %v5459, %v5458
        %v5473 = vpack.c.bf16 %v5461, %v5460
        %v5474 = vpack.c.bf16 %v5463, %v5462
        %v5475 = vpack.c.bf16 %v5465, %v5464
        %v5476 = vpack.c.bf16 %v5467, %v5466
        %v5477 = vpack.c.bf16 %v5469, %v5468
        %v5478 = vpack.c.bf16 %v1481, %v1475
        %v5479 = vpack.c.bf16 %v1493, %v1487
        %v5480 = vpack.c.bf16 %v1505, %v1499
        %v5481 = vpack.c.bf16 %v1517, %v1511
        %v5482 = vpack.c.bf16 %v1529, %v1523
        %v5483 = vpack.c.bf16 %v1541, %v1535
        %v5484 = vpack.c.bf16 %v1553, %v1547
        %v5485 = vpack.c.bf16 %v1565, %v1559
        %5494 = vrot.lane.b32.xlu0 %v5422, 4
        %v5495 = vpop.permute.xlu0 %5494
        %5496 = vrot.lane.b32.xlu0 %v5423, 4
        %v5497 = vpop.permute.xlu0 %5496
        %5498 = vrot.lane.b32.xlu0 %v5424, 4
        %v5499 = vpop.permute.xlu0 %5498
        %5500 = vrot.lane.b32.xlu0 %v5425, 4
        %v5501 = vpop.permute.xlu0 %5500
        %5502 = vrot.lane.b32.xlu0 %v5426, 4
        %v5503 = vpop.permute.xlu0 %5502
        %5504 = vrot.lane.b32.xlu0 %v5427, 4
        %v5505 = vpop.permute.xlu0 %5504
        %5506 = vrot.lane.b32.xlu0 %v5428, 4
        %v5507 = vpop.permute.xlu0 %5506
        %5508 = vrot.lane.b32.xlu0 %v5429, 4
        %v5509 = vpop.permute.xlu0 %5508
        %vm5510 = vcmask 31744
        %v5513 = vsel %vm5510, %v5382, %v5495
        %v5517 = vsel %vm5510, %v5383, %v5497
        %v5521 = vsel %vm5510, %v5384, %v5499
        %v5525 = vsel %vm5510, %v5385, %v5501
        %v5529 = vsel %vm5510, %v5386, %v5503
        %v5533 = vsel %vm5510, %v5387, %v5505
        %v5537 = vsel %vm5510, %v5388, %v5507
        %v5541 = vsel %vm5510, %v5389, %v5509
        %5543 = vst [vmem:[#allocation2] sm:$0xff] %v5478
        %vm5544 = vcmask 64512
        %5545 = vst.msk [vmem:[#allocation2 + $0x8] sm:$0xff] %vm5544, %v5513
        %5546 = vst [vmem:[#allocation2 + $0x10] sm:$0xff] %v5479
        %5547 = vst.msk [vmem:[#allocation2 + $0x18] sm:$0xff] %vm5544, %v5517
        %5548 = vst [vmem:[#allocation2 + $0x20] sm:$0xff] %v5480
        %5549 = vst.msk [vmem:[#allocation2 + $0x28] sm:$0xff] %vm5544, %v5521
        %5550 = vst [vmem:[#allocation2 + $0x30] sm:$0xff] %v5481
        %5551 = vst.msk [vmem:[#allocation2 + $0x38] sm:$0xff] %vm5544, %v5525
        %5552 = vst [vmem:[#allocation2 + $0x40] sm:$0xff] %v5482
        %5553 = vst.msk [vmem:[#allocation2 + $0x48] sm:$0xff] %vm5544, %v5529
        %5554 = vst [vmem:[#allocation2 + $0x50] sm:$0xff] %v5483
        %5555 = vst.msk [vmem:[#allocation2 + $0x58] sm:$0xff] %vm5544, %v5533
        %5556 = vst [vmem:[#allocation2 + $0x60] sm:$0xff] %v5484
        %5557 = vst.msk [vmem:[#allocation2 + $0x68] sm:$0xff] %vm5544, %v5537
        %5558 = vst [vmem:[#allocation2 + $0x70] sm:$0xff] %v5485
        %5559 = vst.msk [vmem:[#allocation2 + $0x78] sm:$0xff] %vm5544, %v5541
        %5568 = vrot.lane.b32.xlu0 %v5430, 124
        %v5569 = vpop.permute.xlu0 %5568
        %5570 = vrot.lane.b32.xlu0 %v5431, 124
        %v5571 = vpop.permute.xlu0 %5570
        %5572 = vrot.lane.b32.xlu0 %v5432, 124
        %v5573 = vpop.permute.xlu0 %5572
        %5574 = vrot.lane.b32.xlu0 %v5433, 124
        %v5575 = vpop.permute.xlu0 %5574
        %5576 = vrot.lane.b32.xlu0 %v5434, 124
        %v5577 = vpop.permute.xlu0 %5576
        %5578 = vrot.lane.b32.xlu0 %v5435, 124
        %v5579 = vpop.permute.xlu0 %5578
        %5580 = vrot.lane.b32.xlu0 %v5436, 124
        %v5581 = vpop.permute.xlu0 %5580
        %5582 = vrot.lane.b32.xlu0 %v5437, 124
        %v5583 = vpop.permute.xlu0 %5582
        %v5586 = vsel %vm5510, %v5569, %v5470
        %v5590 = vsel %vm5510, %v5571, %v5471
        %v5594 = vsel %vm5510, %v5573, %v5472
        %v5598 = vsel %vm5510, %v5575, %v5473
        %v5602 = vsel %vm5510, %v5577, %v5474
        %v5606 = vsel %vm5510, %v5579, %v5475
        %v5610 = vsel %vm5510, %v5581, %v5476
        %v5614 = vsel %vm5510, %v5583, %v5477
        %5616 = vst.msk [vmem:[#allocation3] sm:$0xff] %vm5544, %v5586
        %5617 = vst.msk [vmem:[#allocation3 + $0x8] sm:$0xff] %vm5544, %v5590
        %5618 = vst.msk [vmem:[#allocation3 + $0x10] sm:$0xff] %vm5544, %v5594
        %5619 = vst.msk [vmem:[#allocation3 + $0x18] sm:$0xff] %vm5544, %v5598
        %5620 = vst.msk [vmem:[#allocation3 + $0x20] sm:$0xff] %vm5544, %v5602
        %5621 = vst.msk [vmem:[#allocation3 + $0x28] sm:$0xff] %vm5544, %v5606
        %5622 = vst.msk [vmem:[#allocation3 + $0x30] sm:$0xff] %vm5544, %v5610
        %5623 = vst.msk [vmem:[#allocation3 + $0x38] sm:$0xff] %vm5544, %v5614
        %vm5624 = vcmask 24576
        %5625 = vst.msk [vmem:[#allocation4] sm:$0x1] %vm5624, -1e+30
        %5626 = vst.msk [vmem:[#allocation5] sm:$0xff] %vm5510, 0.0
        %5627 = vst.msk [vmem:[#allocation5 + $0x8] sm:$0xff] %vm5510, 0.0
        %5628 = vst.msk [vmem:[#allocation5 + $0x10] sm:$0xff] %vm5510, 0.0
        %5629 = vst.msk [vmem:[#allocation5 + $0x18] sm:$0xff] %vm5510, 0.0
        %5630 = vst.msk [vmem:[#allocation5 + $0x20] sm:$0xff] %vm5510, 0.0
        %5631 = vst.msk [vmem:[#allocation5 + $0x28] sm:$0xff] %vm5510, 0.0
        %5632 = vst.msk [vmem:[#allocation5 + $0x30] sm:$0xff] %vm5510, 0.0
        %5633 = vst.msk [vmem:[#allocation5 + $0x38] sm:$0xff] %vm5510, 0.0
        %5634 = vst.msk [vmem:[#allocation5 + $0x40] sm:$0xff] %vm5510, 0.0
        %5635 = vst.msk [vmem:[#allocation5 + $0x48] sm:$0xff] %vm5510, 0.0
        %5636 = vst.msk [vmem:[#allocation5 + $0x50] sm:$0xff] %vm5510, 0.0
        %5637 = vst.msk [vmem:[#allocation5 + $0x58] sm:$0xff] %vm5510, 0.0
        %5638 = vst.msk [vmem:[#allocation5 + $0x60] sm:$0xff] %vm5510, 0.0
        %5639 = vst.msk [vmem:[#allocation5 + $0x68] sm:$0xff] %vm5510, 0.0
        %5640 = vst.msk [vmem:[#allocation5 + $0x70] sm:$0xff] %vm5510, 0.0
        %5641 = vst.msk [vmem:[#allocation5 + $0x78] sm:$0xff] %vm5510, 0.0
        %5642 = vst [vmem:[#allocation6] sm:$0xff] 0.0
        %5643 = vst [vmem:[#allocation6 + $0x8] sm:$0xff] 0.0
        %5644 = vst [vmem:[#allocation6 + $0x10] sm:$0xff] 0.0
        %5645 = vst [vmem:[#allocation6 + $0x18] sm:$0xff] 0.0
        %5646 = vst [vmem:[#allocation6 + $0x20] sm:$0xff] 0.0
        %5647 = vst [vmem:[#allocation6 + $0x28] sm:$0xff] 0.0
        %5648 = vst [vmem:[#allocation6 + $0x30] sm:$0xff] 0.0
        %5649 = vst [vmem:[#allocation6 + $0x38] sm:$0xff] 0.0
        %5650 = vst [vmem:[#allocation6 + $0x40] sm:$0xff] 0.0
        %5651 = vst [vmem:[#allocation6 + $0x48] sm:$0xff] 0.0
        %5652 = vst [vmem:[#allocation6 + $0x50] sm:$0xff] 0.0
        %5653 = vst [vmem:[#allocation6 + $0x58] sm:$0xff] 0.0
        %5654 = vst [vmem:[#allocation6 + $0x60] sm:$0xff] 0.0
        %5655 = vst [vmem:[#allocation6 + $0x68] sm:$0xff] 0.0
        %5656 = vst [vmem:[#allocation6 + $0x70] sm:$0xff] 0.0
        %5657 = vst [vmem:[#allocation6 + $0x78] sm:$0xff] 0.0
        %5658 = vst.msk [vmem:[#allocation7] sm:$0xff] %vm5544, 0.0
        %5659 = vst.msk [vmem:[#allocation7 + $0x8] sm:$0xff] %vm5544, 0.0
        %5660 = vst.msk [vmem:[#allocation7 + $0x10] sm:$0xff] %vm5544, 0.0
        %5661 = vst.msk [vmem:[#allocation7 + $0x18] sm:$0xff] %vm5544, 0.0
        %5662 = vst.msk [vmem:[#allocation7 + $0x20] sm:$0xff] %vm5544, 0.0
        %5663 = vst.msk [vmem:[#allocation7 + $0x28] sm:$0xff] %vm5544, 0.0
        %5664 = vst.msk [vmem:[#allocation7 + $0x30] sm:$0xff] %vm5544, 0.0
        %5665 = vst.msk [vmem:[#allocation7 + $0x38] sm:$0xff] %vm5544, 0.0
        %5666 = vst.msk [vmem:[#allocation7 + $0x40] sm:$0xff] %vm5544, 0.0
        %5667 = vst.msk [vmem:[#allocation7 + $0x48] sm:$0xff] %vm5544, 0.0
        %5668 = vst.msk [vmem:[#allocation7 + $0x50] sm:$0xff] %vm5544, 0.0
        %5669 = vst.msk [vmem:[#allocation7 + $0x58] sm:$0xff] %vm5544, 0.0
        %5670 = vst.msk [vmem:[#allocation7 + $0x60] sm:$0xff] %vm5544, 0.0
        %5671 = vst.msk [vmem:[#allocation7 + $0x68] sm:$0xff] %vm5544, 0.0
        %5672 = vst.msk [vmem:[#allocation7 + $0x70] sm:$0xff] %vm5544, 0.0
        %5673 = vst.msk [vmem:[#allocation7 + $0x78] sm:$0xff] %vm5544, 0.0
      $region60: #{tpu_custom_call.1} parent=55 // pred_fallthru
        _
      %v5674 = vld [vmem:[%s350] sm:$0xf]
      %v5675 = vld [vmem:[%s350 + $0x4] sm:$0xf]
      %v5676 = vld [vmem:[%s356] sm:$0xf]
      %v5677 = vld [vmem:[%s356 + $0x4] sm:$0xf]
      %v5678 = vld [vmem:[#allocation2] sm:$0xff]
      %v5679 = vld [vmem:[#allocation2 + $0x8] sm:$0xff]
      %v5680 = vld [vmem:[#allocation2 + $0x10] sm:$0xff]
      %v5681 = vld [vmem:[#allocation2 + $0x18] sm:$0xff]
      %v5682 = vld [vmem:[#allocation2 + $0x20] sm:$0xff]
      %v5683 = vld [vmem:[#allocation2 + $0x28] sm:$0xff]
      %v5684 = vld [vmem:[#allocation2 + $0x30] sm:$0xff]
      %v5685 = vld [vmem:[#allocation2 + $0x38] sm:$0xff]
      %v5686 = vld [vmem:[#allocation2 + $0x40] sm:$0xff]
      %v5687 = vld [vmem:[#allocation2 + $0x48] sm:$0xff]
      %v5688 = vld [vmem:[#allocation2 + $0x50] sm:$0xff]
      %v5689 = vld [vmem:[#allocation2 + $0x58] sm:$0xff]
      %v5690 = vld [vmem:[#allocation2 + $0x60] sm:$0xff]
      %v5691 = vld [vmem:[#allocation2 + $0x68] sm:$0xff]
      %v5692 = vld [vmem:[#allocation2 + $0x70] sm:$0xff]
      %v5693 = vld [vmem:[#allocation2 + $0x78] sm:$0xff]
      %v5696 = vunpack.c.l.b16 %v5674
      %v5697 = vunpack.c.l.b16 %v5675
      %v5698 = vpack.c.b16 %v5697, %v5696
      %5700 = vmatprep.subr.bf16.mxu0 %v5679
      %5701 = vmatpush1.bf16.msra.mxu0 %v5678
      %5702 = vmatprep.subr.bf16.mxu0 %v5681
      %5703 = vmatpush1.bf16.msra.mxu0 %v5680
      %5704 = vmatprep.subr.bf16.mxu0 %v5683
      %5705 = vmatpush1.bf16.msra.mxu0 %v5682
      %5706 = vmatprep.subr.bf16.mxu0 %v5685
      %5707 = vmatpush1.bf16.msra.mxu0 %v5684
      %5708 = vmatprep.subr.bf16.mxu0 %v5687
      %5709 = vmatpush1.bf16.msra.mxu0 %v5686
      %5710 = vmatprep.subr.bf16.mxu0 %v5689
      %5711 = vmatpush1.bf16.msra.mxu0 %v5688
      %5712 = vmatprep.subr.bf16.mxu0 %v5691
      %5713 = vmatpush1.bf16.msra.mxu0 %v5690
      %5714 = vmatprep.subr.bf16.mxu0 %v5693
      %5715 = vmatpush1.bf16.msra.mxu0 %v5692
      %5716 = vmatprep.subr.bf16.mxu0 0
      %5717 = vmatpush1.bf16.msra.mxu0 0
      %5718 = vmatprep.subr.bf16.mxu0 0
      %5719 = vmatpush1.bf16.msra.mxu0 0
      %5720 = vmatprep.subr.bf16.mxu0 0
      %5721 = vmatpush1.bf16.msra.mxu0 0
      %5722 = vmatprep.subr.bf16.mxu0 0
      %5723 = vmatpush1.bf16.msra.mxu0 0
      %5724 = vmatprep.subr.bf16.mxu0 0
      %5725 = vmatpush1.bf16.msra.mxu0 0
      %5726 = vmatprep.subr.bf16.mxu0 0
      %5727 = vmatpush1.bf16.msra.mxu0 0
      %5728 = vmatprep.subr.bf16.mxu0 0
      %5729 = vmatpush1.bf16.msra.mxu0 0
      %5730 = vmatprep.subr.bf16.mxu0 0
      %5731 = vmatpush1.bf16.msra.mxu0 0
      %5732 = vmatprep.mubr.bf16.mxu0 0
      %5733 = vmatmul.mubr.bf16.gmra.mrb[0].mxu0 %v5698
      %v5734 = vpop.f32.mrb[0].mxu0
      %v5735 = vadd.f32 0.0, %v5734
      %v5736 = vpop.f32.mrb[0].mxu0
      %v5737 = vadd.f32 0.0, %v5736
      %v5738 = vpop.f32.mrb[0].mxu0
      %v5739 = vadd.f32 0.0, %v5738
      %v5740 = vpop.f32.mrb[0].mxu0
      %v5741 = vadd.f32 0.0, %v5740
      %5742 = vdwg.mxu0
      %5745 = vrot.lane.b32.xlu0 %v5737, 124
      %v5746 = vpop.permute.xlu0 %5745
      %5747 = vrot.lane.b32.xlu0 %v5741, 124
      %v5748 = vpop.permute.xlu0 %5747
      %v5751 = vadd.f32 %v5737, %v5746
      %v5752 = vadd.f32 %v5741, %v5748
      %v5753 = vld [vmem:[#allocation3] sm:$0xff]
      %v5754 = vld [vmem:[#allocation3 + $0x8] sm:$0xff]
      %v5755 = vld [vmem:[#allocation3 + $0x10] sm:$0xff]
      %v5756 = vld [vmem:[#allocation3 + $0x18] sm:$0xff]
      %v5757 = vld [vmem:[#allocation3 + $0x20] sm:$0xff]
      %v5758 = vld [vmem:[#allocation3 + $0x28] sm:$0xff]
      %v5759 = vld [vmem:[#allocation3 + $0x30] sm:$0xff]
      %v5760 = vld [vmem:[#allocation3 + $0x38] sm:$0xff]
      %v5763 = vunpack.c.l.b16 %v5676
      %v5764 = vunpack.c.l.b16 %v5677
      %v5765 = vpack.c.b16 %v5764, %v5763
      %5767 = vmatprep.subr.bf16.mxu0 0
      %5768 = vmatpush1.bf16.msra.mxu0 %v5753
      %5769 = vmatprep.subr.bf16.mxu0 0
      %5770 = vmatpush1.bf16.msra.mxu0 %v5754
      %5771 = vmatprep.subr.bf16.mxu0 0
      %5772 = vmatpush1.bf16.msra.mxu0 %v5755
      %5773 = vmatprep.subr.bf16.mxu0 0
      %5774 = vmatpush1.bf16.msra.mxu0 %v5756
      %5775 = vmatprep.subr.bf16.mxu0 0
      %5776 = vmatpush1.bf16.msra.mxu0 %v5757
      %5777 = vmatprep.subr.bf16.mxu0 0
      %5778 = vmatpush1.bf16.msra.mxu0 %v5758
      %5779 = vmatprep.subr.bf16.mxu0 0
      %5780 = vmatpush1.bf16.msra.mxu0 %v5759
      %5781 = vmatprep.subr.bf16.mxu0 0
      %5782 = vmatpush1.bf16.msra.mxu0 %v5760
      %5783 = vmatprep.subr.bf16.mxu0 0
      %5784 = vmatpush1.bf16.msra.mxu0 0
      %5785 = vmatprep.subr.bf16.mxu0 0
      %5786 = vmatpush1.bf16.msra.mxu0 0
      %5787 = vmatprep.subr.bf16.mxu0 0
      %5788 = vmatpush1.bf16.msra.mxu0 0
      %5789 = vmatprep.subr.bf16.mxu0 0
      %5790 = vmatpush1.bf16.msra.mxu0 0
      %5791 = vmatprep.subr.bf16.mxu0 0
      %5792 = vmatpush1.bf16.msra.mxu0 0
      %5793 = vmatprep.subr.bf16.mxu0 0
      %5794 = vmatpush1.bf16.msra.mxu0 0
      %5795 = vmatprep.subr.bf16.mxu0 0
      %5796 = vmatpush1.bf16.msra.mxu0 0
      %5797 = vmatprep.subr.bf16.mxu0 0
      %5798 = vmatpush1.bf16.msra.mxu0 0
      %5799 = vmatprep.mubr.bf16.mxu0 0
      %5800 = vmatmul.mubr.bf16.gmra.mrb[0].mxu0 %v5765
      %v5801 = vpop.f32.mrb[0].mxu0
      %v5802 = vadd.f32 0.0, %v5801
      %v5803 = vpop.f32.mrb[0].mxu0
      %v5804 = vpop.f32.mrb[0].mxu0
      %v5805 = vadd.f32 0.0, %v5804
      %v5806 = vpop.f32.mrb[0].mxu0
      %5807 = vdwg.mxu0
      %5810 = vrot.lane.b32.xlu0 %v5802, 124
      %v5811 = vpop.permute.xlu0 %5810
      %5812 = vrot.lane.b32.xlu0 %v5805, 124
      %v5813 = vpop.permute.xlu0 %5812
      %v5816 = vadd.f32 %v5802, %v5811
      %v5817 = vadd.f32 %v5805, %v5813
      %v5818 = vadd.f32 %v5751, %v5816
      %v5819 = vadd.f32 %v5752, %v5817
      %vm5820 = vcmp.gt.f32.partialorder %v5818, 0.0
      %vm5821 = vcmp.gt.f32.partialorder %v5819, 0.0
      %v5822 = vmul.f32 %v5818, 0.2
      %v5823 = vmul.f32 %v5819, 0.2
      %v5824 = vsel %vm5820, %v5818, %v5822
      %v5825 = vsel %vm5821, %v5819, %v5823
      %vm5826 = vcmask 31744
      %v5827 = vsel %vm5826, %v5824, -inf
      %v5828 = vsel %vm5826, %v5825, -inf
      %v5829 = vmax.f32 %v5827, %v5828
      %v5830 = vrot.slane %v5829, 4
      %v5831 = vmax.f32 %v5829, %v5830
      %v5832 = vrot.slane %v5831, 2
      %v5833 = vmax.f32 %v5831, %v5832
      %v5834 = vrot.slane %v5833, 1
      %v5835 = vmax.f32 %v5833, %v5834
      %v5836 = vld [vmem:[#allocation4] sm:$0x1]
      %v5837 = vmax.f32 %v5836, %v5835
      %v5838 = vsub.f32 %v5836, %v5837
      %v5839 = vmul.f32 %v5838, 1.442695
      %v5840 = vpow.pop %v5839
      %vm5841 = vcmask 24576
      %5842 = vst.msk [vmem:[#allocation4] sm:$0x1] %vm5841, %v5837
      %v5844 = vlaneseq
      %v5845 = vshrl.u32 %v5844, 7
      %v5846 = vsub.s32 0, %v5845
      %v5847 = vrot.slane %v5837, %v5846
      %v5849 = vsub.f32 %v5824, %v5847
      %v5850 = vsub.f32 %v5825, %v5847
      %v5851 = vmul.f32 %v5849, 1.442695
      %v5852 = vpow.pop %v5851
      %v5853 = vmul.f32 %v5850, 1.442695
      %v5854 = vpow.pop %v5853
      %5856 = vset.pattern.permute.xlu0 0
      %5857 = vperm.xlu0 %5856, %v5852
      %v5858 = vpop.permute.xlu0 %5857
      %5861 = vset.pattern.permute.xlu0 0
      %5862 = vperm.xlu0 %5861, %v5854
      %v5863 = vpop.permute.xlu0 %5862
      %v5865 = vmul.f32 %v5858, %v5735
      %v5866 = vmul.f32 %v5863, %v5739
      %5867 = vset.pattern.permute.xlu0 1
      %5868 = vperm.xlu0 %5867, %v5852
      %v5869 = vpop.permute.xlu0 %5868
      %5871 = vset.pattern.permute.xlu0 1
      %5872 = vperm.xlu0 %5871, %v5854
      %v5873 = vpop.permute.xlu0 %5872
      %v5875 = vmul.f32 %v5869, %v5735
      %v5876 = vmul.f32 %v5873, %v5739
      %5877 = vset.pattern.permute.xlu0 2
      %5878 = vperm.xlu0 %5877, %v5852
      %v5879 = vpop.permute.xlu0 %5878
      %5881 = vset.pattern.permute.xlu0 2
      %5882 = vperm.xlu0 %5881, %v5854
      %v5883 = vpop.permute.xlu0 %5882
      %v5885 = vmul.f32 %v5879, %v5735
      %v5886 = vmul.f32 %v5883, %v5739
      %5887 = vset.pattern.permute.xlu0 3
      %5888 = vperm.xlu0 %5887, %v5852
      %v5889 = vpop.permute.xlu0 %5888
      %5891 = vset.pattern.permute.xlu0 3
      %5892 = vperm.xlu0 %5891, %v5854
      %v5893 = vpop.permute.xlu0 %5892
      %v5895 = vmul.f32 %v5889, %v5735
      %v5896 = vmul.f32 %v5893, %v5739
      %vm5897 = vcmask 261120
      %v5898 = vsel %vm5897, %v5865, %v5875
      %v5899 = vsel %vm5897, %v5866, %v5876
      %vm5900 = vcmask 523264
      %v5901 = vsel %vm5900, %v5898, %v5885
      %v5902 = vsel %vm5900, %v5899, %v5886
      %vm5903 = vcmask 785408
      %v5904 = vsel %vm5903, %v5901, %v5895
      %v5905 = vsel %vm5903, %v5902, %v5896
      %v5906 = vpack.c.bf16 %v5905, %v5904
      %v5907 = vpack.c.bf16 %v5854, %v5852
      %v5908 = vld [vmem:[%s362] sm:$0xf]
      %v5909 = vld [vmem:[%s362 + $0x4] sm:$0xf]
      %v5912 = vunpack.c.l.b16 %v5908
      %v5913 = vunpack.c.l.b16 %v5909
      %v5914 = vpack.c.b16 %v5913, %v5912
      %5915 = vrot.lane.b32.xlu0 %v5914, 4
      %v5916 = vpop.permute.xlu0 %5915
      %v5919 = vsel %vm5826, %v5907, %v5916
      %v5921 = vunpack.c.l.bf16 %v5676
      %v5922 = vunpack.c.l.bf16 %v5677
      %5923 = vxpose.xlu0.b32.start [1/16] %v5921, 128
      %5924 = vxpose.xlu0.b32.cont [2/16] %v5922, 128
      %5925 = vxpose.xlu0.b32.cont [3/16] 0.0, 128
      %5926 = vxpose.xlu0.b32.cont [4/16] 0.0, 128
      %5927 = vxpose.xlu0.b32.cont [5/16] 0.0, 128
      %5928 = vxpose.xlu0.b32.cont [6/16] 0.0, 128
      %5929 = vxpose.xlu0.b32.cont [7/16] 0.0, 128
      %5930 = vxpose.xlu0.b32.cont [8/16] 0.0, 128
      %5931 = vxpose.xlu0.b32.cont [9/16] 0.0, 128
      %5932 = vxpose.xlu0.b32.cont [10/16] 0.0, 128
      %5933 = vxpose.xlu0.b32.cont [11/16] 0.0, 128
      %5934 = vxpose.xlu0.b32.cont [12/16] 0.0, 128
      %5935 = vxpose.xlu0.b32.cont [13/16] 0.0, 128
      %5936 = vxpose.xlu0.b32.cont [14/16] 0.0, 128
      %5937 = vxpose.xlu0.b32.cont [15/16] 0.0, 128
      %5938 = vxpose.xlu0.b32.end [16/16] 0.0, 128
      %v5939 = vpop.trf.xlu0
      %v5940 = vpop.trf.xlu0
      %v5941 = vpop.trf.xlu0
      %v5942 = vpop.trf.xlu0
      %v5943 = vpop.trf.xlu0
      %v5944 = vpop.trf.xlu0
      %v5945 = vpop.trf.xlu0
      %v5946 = vpop.trf.xlu0
      %v5947 = vpop.trf.xlu0
      %v5948 = vpop.trf.xlu0
      %v5949 = vpop.trf.xlu0
      %v5950 = vpop.trf.xlu0
      %v5951 = vpop.trf.xlu0
      %v5952 = vpop.trf.xlu0
      %v5953 = vpop.trf.xlu0
      %v5954 = vpop.trf.xlu0
      %v5955 = vpack.c.bf16 %v5940, %v5939
      %v5956 = vpack.c.bf16 %v5942, %v5941
      %v5957 = vpack.c.bf16 %v5944, %v5943
      %v5958 = vpack.c.bf16 %v5946, %v5945
      %v5959 = vpack.c.bf16 %v5948, %v5947
      %v5960 = vpack.c.bf16 %v5950, %v5949
      %v5961 = vpack.c.bf16 %v5952, %v5951
      %v5962 = vpack.c.bf16 %v5954, %v5953
      %vm5963 = vcmask 130048
      %v5965 = vsel %vm5963, %v5955, 0
      %v5968 = vsel %vm5963, %v5956, 0
      %v5971 = vsel %vm5963, %v5957, 0
      %v5974 = vsel %vm5963, %v5958, 0
      %v5977 = vsel %vm5963, %v5959, 0
      %v5980 = vsel %vm5963, %v5960, 0
      %v5983 = vsel %vm5963, %v5961, 0
      %v5986 = vsel %vm5963, %v5962, 0
      %5988 = vmatprep.subr.bf16.mxu0 %v5919
      %5989 = vmatpush1.bf16.msra.mxu0 %v5906
      %5990 = vmatprep.subr.bf16.mxu0 0
      %5991 = vmatpush1.bf16.msra.mxu0 0
      %5992 = vmatprep.subr.bf16.mxu0 0
      %5993 = vmatpush1.bf16.msra.mxu0 0
      %5994 = vmatprep.subr.bf16.mxu0 0
      %5995 = vmatpush1.bf16.msra.mxu0 0
      %5996 = vmatprep.subr.bf16.mxu0 0
      %5997 = vmatpush1.bf16.msra.mxu0 0
      %5998 = vmatprep.subr.bf16.mxu0 0
      %5999 = vmatpush1.bf16.msra.mxu0 0
      %6000 = vmatprep.subr.bf16.mxu0 0
      %6001 = vmatpush1.bf16.msra.mxu0 0
      %6002 = vmatprep.subr.bf16.mxu0 0
      %6003 = vmatpush1.bf16.msra.mxu0 0
      %6004 = vmatprep.subr.bf16.mxu0 0
      %6005 = vmatpush1.bf16.msra.mxu0 0
      %6006 = vmatprep.subr.bf16.mxu0 0
      %6007 = vmatpush1.bf16.msra.mxu0 0
      %6008 = vmatprep.subr.bf16.mxu0 0
      %6009 = vmatpush1.bf16.msra.mxu0 0
      %6010 = vmatprep.subr.bf16.mxu0 0
      %6011 = vmatpush1.bf16.msra.mxu0 0
      %6012 = vmatprep.subr.bf16.mxu0 0
      %6013 = vmatpush1.bf16.msra.mxu0 0
      %6014 = vmatprep.subr.bf16.mxu0 0
      %6015 = vmatpush1.bf16.msra.mxu0 0
      %6016 = vmatprep.subr.bf16.mxu0 0
      %6017 = vmatpush1.bf16.msra.mxu0 0
      %6018 = vmatprep.subr.bf16.mxu0 0
      %6019 = vmatpush1.bf16.msra.mxu0 0
      %6020 = vmatprep.mubr.bf16.mxu0 0
      %6021 = vmatmul.mubr.bf16.gmra.mrb[0].mxu0 %v5965
      %v6022 = vpop.f32.mrb[0].mxu0
      %v6023 = vadd.f32 0.0, %v6022
      %v6024 = vpop.f32.mrb[0].mxu0
      %v6025 = vadd.f32 0.0, %v6024
      %v6026 = vpop.f32.mrb[0].mxu0
      %v6027 = vadd.f32 0.0, %v6026
      %v6028 = vpop.f32.mrb[0].mxu0
      %v6029 = vadd.f32 0.0, %v6028
      %6030 = vmatprep.mubr.bf16.mxu0 0
      %6031 = vmatmul.mubr.bf16.gmra.mrb[0].mxu0 %v5968
      %v6032 = vpop.f32.mrb[0].mxu0
      %v6033 = vadd.f32 0.0, %v6032
      %v6034 = vpop.f32.mrb[0].mxu0
      %v6035 = vadd.f32 0.0, %v6034
      %v6036 = vpop.f32.mrb[0].mxu0
      %v6037 = vadd.f32 0.0, %v6036
      %v6038 = vpop.f32.mrb[0].mxu0
      %v6039 = vadd.f32 0.0, %v6038
      %6040 = vmatprep.mubr.bf16.mxu0 0
      %6041 = vmatmul.mubr.bf16.gmra.mrb[0].mxu0 %v5971
      %v6042 = vpop.f32.mrb[0].mxu0
      %v6043 = vadd.f32 0.0, %v6042
      %v6044 = vpop.f32.mrb[0].mxu0
      %v6045 = vadd.f32 0.0, %v6044
      %v6046 = vpop.f32.mrb[0].mxu0
      %v6047 = vadd.f32 0.0, %v6046
      %v6048 = vpop.f32.mrb[0].mxu0
      %v6049 = vadd.f32 0.0, %v6048
      %6050 = vmatprep.mubr.bf16.mxu0 0
      %6051 = vmatmul.mubr.bf16.gmra.mrb[0].mxu0 %v5974
      %v6052 = vpop.f32.mrb[0].mxu0
      %v6053 = vadd.f32 0.0, %v6052
      %v6054 = vpop.f32.mrb[0].mxu0
      %v6055 = vadd.f32 0.0, %v6054
      %v6056 = vpop.f32.mrb[0].mxu0
      %v6057 = vadd.f32 0.0, %v6056
      %v6058 = vpop.f32.mrb[0].mxu0
      %v6059 = vadd.f32 0.0, %v6058
      %6060 = vmatprep.mubr.bf16.mxu0 0
      %6061 = vmatmul.mubr.bf16.gmra.mrb[0].mxu0 %v5977
      %v6062 = vpop.f32.mrb[0].mxu0
      %v6063 = vadd.f32 0.0, %v6062
      %v6064 = vpop.f32.mrb[0].mxu0
      %v6065 = vadd.f32 0.0, %v6064
      %v6066 = vpop.f32.mrb[0].mxu0
      %v6067 = vadd.f32 0.0, %v6066
      %v6068 = vpop.f32.mrb[0].mxu0
      %v6069 = vadd.f32 0.0, %v6068
      %6070 = vmatprep.mubr.bf16.mxu0 0
      %6071 = vmatmul.mubr.bf16.gmra.mrb[0].mxu0 %v5980
      %v6072 = vpop.f32.mrb[0].mxu0
      %v6073 = vadd.f32 0.0, %v6072
      %v6074 = vpop.f32.mrb[0].mxu0
      %v6075 = vadd.f32 0.0, %v6074
      %v6076 = vpop.f32.mrb[0].mxu0
      %v6077 = vadd.f32 0.0, %v6076
      %v6078 = vpop.f32.mrb[0].mxu0
      %v6079 = vadd.f32 0.0, %v6078
      %6080 = vmatprep.mubr.bf16.mxu0 0
      %6081 = vmatmul.mubr.bf16.gmra.mrb[0].mxu0 %v5983
      %v6082 = vpop.f32.mrb[0].mxu0
      %v6083 = vadd.f32 0.0, %v6082
      %v6084 = vpop.f32.mrb[0].mxu0
      %v6085 = vadd.f32 0.0, %v6084
      %v6086 = vpop.f32.mrb[0].mxu0
      %v6087 = vadd.f32 0.0, %v6086
      %v6088 = vpop.f32.mrb[0].mxu0
      %v6089 = vadd.f32 0.0, %v6088
      %6090 = vmatprep.mubr.bf16.mxu0 0
      %6091 = vmatmul.mubr.bf16.gmra.mrb[0].mxu0 %v5986
      %v6092 = vpop.f32.mrb[0].mxu0
      %v6093 = vadd.f32 0.0, %v6092
      %v6094 = vpop.f32.mrb[0].mxu0
      %v6095 = vadd.f32 0.0, %v6094
      %v6096 = vpop.f32.mrb[0].mxu0
      %v6097 = vadd.f32 0.0, %v6096
      %v6098 = vpop.f32.mrb[0].mxu0
      %v6099 = vadd.f32 0.0, %v6098
      %6100 = vdwg.mxu0
      %v6101 = vld [vmem:[#allocation6] sm:$0xff]
      %v6102 = vld [vmem:[#allocation6 + $0x8] sm:$0xff]
      %v6103 = vld [vmem:[#allocation6 + $0x10] sm:$0xff]
      %v6104 = vld [vmem:[#allocation6 + $0x18] sm:$0xff]
      %v6105 = vld [vmem:[#allocation6 + $0x20] sm:$0xff]
      %v6106 = vld [vmem:[#allocation6 + $0x28] sm:$0xff]
      %v6107 = vld [vmem:[#allocation6 + $0x30] sm:$0xff]
      %v6108 = vld [vmem:[#allocation6 + $0x38] sm:$0xff]
      %v6109 = vld [vmem:[#allocation6 + $0x40] sm:$0xff]
      %v6110 = vld [vmem:[#allocation6 + $0x48] sm:$0xff]
      %v6111 = vld [vmem:[#allocation6 + $0x50] sm:$0xff]
      %v6112 = vld [vmem:[#allocation6 + $0x58] sm:$0xff]
      %v6113 = vld [vmem:[#allocation6 + $0x60] sm:$0xff]
      %v6114 = vld [vmem:[#allocation6 + $0x68] sm:$0xff]
      %v6115 = vld [vmem:[#allocation6 + $0x70] sm:$0xff]
      %v6116 = vld [vmem:[#allocation6 + $0x78] sm:$0xff]
      %v6118 = vlaneseq
      %v6119 = vshrl.u32 %v6118, 7
      %v6120 = vsub.s32 0, %v6119
      %v6121 = vrot.slane %v5840, %v6120
      %6122 = vset.pattern.permute.xlu0 0
      %6123 = vperm.xlu0 %6122, %v6121
      %v6124 = vpop.permute.xlu0 %6123
      %v6126 = vmul.f32 %v6101, %v6124
      %v6127 = vmul.f32 %v6102, %v6124
      %v6128 = vmul.f32 %v6103, %v6124
      %v6129 = vmul.f32 %v6104, %v6124
      %v6130 = vmul.f32 %v6105, %v6124
      %v6131 = vmul.f32 %v6106, %v6124
      %v6132 = vmul.f32 %v6107, %v6124
      %v6133 = vmul.f32 %v6108, %v6124
      %v6134 = vmul.f32 %v6109, %v6124
      %v6135 = vmul.f32 %v6110, %v6124
      %v6136 = vmul.f32 %v6111, %v6124
      %v6137 = vmul.f32 %v6112, %v6124
      %v6138 = vmul.f32 %v6113, %v6124
      %v6139 = vmul.f32 %v6114, %v6124
      %v6140 = vmul.f32 %v6115, %v6124
      %v6141 = vmul.f32 %v6116, %v6124
      %v6142 = vadd.f32 %v6126, %v6023
      %v6143 = vadd.f32 %v6127, %v6027
      %v6144 = vadd.f32 %v6128, %v6033
      %v6145 = vadd.f32 %v6129, %v6037
      %v6146 = vadd.f32 %v6130, %v6043
      %v6147 = vadd.f32 %v6131, %v6047
      %v6148 = vadd.f32 %v6132, %v6053
      %v6149 = vadd.f32 %v6133, %v6057
      %v6150 = vadd.f32 %v6134, %v6063
      %v6151 = vadd.f32 %v6135, %v6067
      %v6152 = vadd.f32 %v6136, %v6073
      %v6153 = vadd.f32 %v6137, %v6077
      %v6154 = vadd.f32 %v6138, %v6083
      %v6155 = vadd.f32 %v6139, %v6087
      %v6156 = vadd.f32 %v6140, %v6093
      %v6157 = vadd.f32 %v6141, %v6097
      %6158 = vset.pattern.permute.xlu0 1
      %6159 = vperm.xlu0 %6158, %v6121
      %v6160 = vpop.permute.xlu0 %6159
      %v6162 = vmul.f32 %v6101, %v6160
      %v6163 = vmul.f32 %v6102, %v6160
      %v6164 = vmul.f32 %v6103, %v6160
      %v6165 = vmul.f32 %v6104, %v6160
      %v6166 = vmul.f32 %v6105, %v6160
      %v6167 = vmul.f32 %v6106, %v6160
      %v6168 = vmul.f32 %v6107, %v6160
      %v6169 = vmul.f32 %v6108, %v6160
      %v6170 = vmul.f32 %v6109, %v6160
      %v6171 = vmul.f32 %v6110, %v6160
      %v6172 = vmul.f32 %v6111, %v6160
      %v6173 = vmul.f32 %v6112, %v6160
      %v6174 = vmul.f32 %v6113, %v6160
      %v6175 = vmul.f32 %v6114, %v6160
      %v6176 = vmul.f32 %v6115, %v6160
      %v6177 = vmul.f32 %v6116, %v6160
      %v6178 = vadd.f32 %v6162, %v6023
      %v6179 = vadd.f32 %v6163, %v6027
      %v6180 = vadd.f32 %v6164, %v6033
      %v6181 = vadd.f32 %v6165, %v6037
      %v6182 = vadd.f32 %v6166, %v6043
      %v6183 = vadd.f32 %v6167, %v6047
      %v6184 = vadd.f32 %v6168, %v6053
      %v6185 = vadd.f32 %v6169, %v6057
      %v6186 = vadd.f32 %v6170, %v6063
      %v6187 = vadd.f32 %v6171, %v6067
      %v6188 = vadd.f32 %v6172, %v6073
      %v6189 = vadd.f32 %v6173, %v6077
      %v6190 = vadd.f32 %v6174, %v6083
      %v6191 = vadd.f32 %v6175, %v6087
      %v6192 = vadd.f32 %v6176, %v6093
      %v6193 = vadd.f32 %v6177, %v6097
      %6194 = vset.pattern.permute.xlu0 2
      %6195 = vperm.xlu0 %6194, %v6121
      %v6196 = vpop.permute.xlu0 %6195
      %v6198 = vmul.f32 %v6101, %v6196
      %v6199 = vmul.f32 %v6102, %v6196
      %v6200 = vmul.f32 %v6103, %v6196
      %v6201 = vmul.f32 %v6104, %v6196
      %v6202 = vmul.f32 %v6105, %v6196
      %v6203 = vmul.f32 %v6106, %v6196
      %v6204 = vmul.f32 %v6107, %v6196
      %v6205 = vmul.f32 %v6108, %v6196
      %v6206 = vmul.f32 %v6109, %v6196
      %v6207 = vmul.f32 %v6110, %v6196
      %v6208 = vmul.f32 %v6111, %v6196
      %v6209 = vmul.f32 %v6112, %v6196
      %v6210 = vmul.f32 %v6113, %v6196
      %v6211 = vmul.f32 %v6114, %v6196
      %v6212 = vmul.f32 %v6115, %v6196
      %v6213 = vmul.f32 %v6116, %v6196
      %v6214 = vadd.f32 %v6198, %v6023
      %v6215 = vadd.f32 %v6199, %v6027
      %v6216 = vadd.f32 %v6200, %v6033
      %v6217 = vadd.f32 %v6201, %v6037
      %v6218 = vadd.f32 %v6202, %v6043
      %v6219 = vadd.f32 %v6203, %v6047
      %v6220 = vadd.f32 %v6204, %v6053
      %v6221 = vadd.f32 %v6205, %v6057
      %v6222 = vadd.f32 %v6206, %v6063
      %v6223 = vadd.f32 %v6207, %v6067
      %v6224 = vadd.f32 %v6208, %v6073
      %v6225 = vadd.f32 %v6209, %v6077
      %v6226 = vadd.f32 %v6210, %v6083
      %v6227 = vadd.f32 %v6211, %v6087
      %v6228 = vadd.f32 %v6212, %v6093
      %v6229 = vadd.f32 %v6213, %v6097
      %6230 = vset.pattern.permute.xlu0 3
      %6231 = vperm.xlu0 %6230, %v6121
      %v6232 = vpop.permute.xlu0 %6231
      %v6234 = vmul.f32 %v6101, %v6232
      %v6235 = vmul.f32 %v6102, %v6232
      %v6236 = vmul.f32 %v6103, %v6232
      %v6237 = vmul.f32 %v6104, %v6232
      %v6238 = vmul.f32 %v6105, %v6232
      %v6239 = vmul.f32 %v6106, %v6232
      %v6240 = vmul.f32 %v6107, %v6232
      %v6241 = vmul.f32 %v6108, %v6232
      %v6242 = vmul.f32 %v6109, %v6232
      %v6243 = vmul.f32 %v6110, %v6232
      %v6244 = vmul.f32 %v6111, %v6232
      %v6245 = vmul.f32 %v6112, %v6232
      %v6246 = vmul.f32 %v6113, %v6232
      %v6247 = vmul.f32 %v6114, %v6232
      %v6248 = vmul.f32 %v6115, %v6232
      %v6249 = vmul.f32 %v6116, %v6232
      %v6250 = vadd.f32 %v6234, %v6023
      %v6251 = vadd.f32 %v6235, %v6027
      %v6252 = vadd.f32 %v6236, %v6033
      %v6253 = vadd.f32 %v6237, %v6037
      %v6254 = vadd.f32 %v6238, %v6043
      %v6255 = vadd.f32 %v6239, %v6047
      %v6256 = vadd.f32 %v6240, %v6053
      %v6257 = vadd.f32 %v6241, %v6057
      %v6258 = vadd.f32 %v6242, %v6063
      %v6259 = vadd.f32 %v6243, %v6067
      %v6260 = vadd.f32 %v6244, %v6073
      %v6261 = vadd.f32 %v6245, %v6077
      %v6262 = vadd.f32 %v6246, %v6083
      %v6263 = vadd.f32 %v6247, %v6087
      %v6264 = vadd.f32 %v6248, %v6093
      %v6265 = vadd.f32 %v6249, %v6097
      %v6266 = vsel %vm5897, %v6142, %v6178
      %v6267 = vsel %vm5897, %v6143, %v6179
      %v6268 = vsel %vm5897, %v6144, %v6180
      %v6269 = vsel %vm5897, %v6145, %v6181
      %v6270 = vsel %vm5897, %v6146, %v6182
      %v6271 = vsel %vm5897, %v6147, %v6183
      %v6272 = vsel %vm5897, %v6148, %v6184
      %v6273 = vsel %vm5897, %v6149, %v6185
      %v6274 = vsel %vm5897, %v6150, %v6186
      %v6275 = vsel %vm5897, %v6151, %v6187
      %v6276 = vsel %vm5897, %v6152, %v6188
      %v6277 = vsel %vm5897, %v6153, %v6189
      %v6278 = vsel %vm5897, %v6154, %v6190
      %v6279 = vsel %vm5897, %v6155, %v6191
      %v6280 = vsel %vm5897, %v6156, %v6192
      %v6281 = vsel %vm5897, %v6157, %v6193
      %v6282 = vsel %vm5900, %v6266, %v6214
      %v6283 = vsel %vm5900, %v6267, %v6215
      %v6284 = vsel %vm5900, %v6268, %v6216
      %v6285 = vsel %vm5900, %v6269, %v6217
      %v6286 = vsel %vm5900, %v6270, %v6218
      %v6287 = vsel %vm5900, %v6271, %v6219
      %v6288 = vsel %vm5900, %v6272, %v6220
      %v6289 = vsel %vm5900, %v6273, %v6221
      %v6290 = vsel %vm5900, %v6274, %v6222
      %v6291 = vsel %vm5900, %v6275, %v6223
      %v6292 = vsel %vm5900, %v6276, %v6224
      %v6293 = vsel %vm5900, %v6277, %v6225
      %v6294 = vsel %vm5900, %v6278, %v6226
      %v6295 = vsel %vm5900, %v6279, %v6227
      %v6296 = vsel %vm5900, %v6280, %v6228
      %v6297 = vsel %vm5900, %v6281, %v6229
      %v6298 = vsel %vm5903, %v6282, %v6250
      %v6299 = vsel %vm5903, %v6283, %v6251
      %v6300 = vsel %vm5903, %v6284, %v6252
      %v6301 = vsel %vm5903, %v6285, %v6253
      %v6302 = vsel %vm5903, %v6286, %v6254
      %v6303 = vsel %vm5903, %v6287, %v6255
      %v6304 = vsel %vm5903, %v6288, %v6256
      %v6305 = vsel %vm5903, %v6289, %v6257
      %v6306 = vsel %vm5903, %v6290, %v6258
      %v6307 = vsel %vm5903, %v6291, %v6259
      %v6308 = vsel %vm5903, %v6292, %v6260
      %v6309 = vsel %vm5903, %v6293, %v6261
      %v6310 = vsel %vm5903, %v6294, %v6262
      %v6311 = vsel %vm5903, %v6295, %v6263
      %v6312 = vsel %vm5903, %v6296, %v6264
      %v6313 = vsel %vm5903, %v6297, %v6265
      %6314 = vst [vmem:[#allocation6] sm:$0xff] %v6298
      %6315 = vst [vmem:[#allocation6 + $0x8] sm:$0xff] %v6299
      %6316 = vst [vmem:[#allocation6 + $0x10] sm:$0xff] %v6300
      %6317 = vst [vmem:[#allocation6 + $0x18] sm:$0xff] %v6301
      %6318 = vst [vmem:[#allocation6 + $0x20] sm:$0xff] %v6302
      %6319 = vst [vmem:[#allocation6 + $0x28] sm:$0xff] %v6303
      %6320 = vst [vmem:[#allocation6 + $0x30] sm:$0xff] %v6304
      %6321 = vst [vmem:[#allocation6 + $0x38] sm:$0xff] %v6305
      %6322 = vst [vmem:[#allocation6 + $0x40] sm:$0xff] %v6306
      %6323 = vst [vmem:[#allocation6 + $0x48] sm:$0xff] %v6307
      %6324 = vst [vmem:[#allocation6 + $0x50] sm:$0xff] %v6308
      %6325 = vst [vmem:[#allocation6 + $0x58] sm:$0xff] %v6309
      %6326 = vst [vmem:[#allocation6 + $0x60] sm:$0xff] %v6310
      %6327 = vst [vmem:[#allocation6 + $0x68] sm:$0xff] %v6311
      %6328 = vst [vmem:[#allocation6 + $0x70] sm:$0xff] %v6312
      %6329 = vst [vmem:[#allocation6 + $0x78] sm:$0xff] %v6313
      %v6330 = vld [vmem:[#allocation5] sm:$0xff]
      %v6331 = vld [vmem:[#allocation5 + $0x8] sm:$0xff]
      %v6332 = vld [vmem:[#allocation5 + $0x10] sm:$0xff]
      %v6333 = vld [vmem:[#allocation5 + $0x18] sm:$0xff]
      %v6334 = vld [vmem:[#allocation5 + $0x20] sm:$0xff]
      %v6335 = vld [vmem:[#allocation5 + $0x28] sm:$0xff]
      %v6336 = vld [vmem:[#allocation5 + $0x30] sm:$0xff]
      %v6337 = vld [vmem:[#allocation5 + $0x38] sm:$0xff]
      %v6338 = vld [vmem:[#allocation5 + $0x40] sm:$0xff]
      %v6339 = vld [vmem:[#allocation5 + $0x48] sm:$0xff]
      %v6340 = vld [vmem:[#allocation5 + $0x50] sm:$0xff]
      %v6341 = vld [vmem:[#allocation5 + $0x58] sm:$0xff]
      %v6342 = vld [vmem:[#allocation5 + $0x60] sm:$0xff]
      %v6343 = vld [vmem:[#allocation5 + $0x68] sm:$0xff]
      %v6344 = vld [vmem:[#allocation5 + $0x70] sm:$0xff]
      %v6345 = vld [vmem:[#allocation5 + $0x78] sm:$0xff]
      %v6347 = vmul.f32 %v6330, %v6121
      %v6348 = vmul.f32 %v6331, %v6121
      %v6349 = vmul.f32 %v6332, %v6121
      %v6350 = vmul.f32 %v6333, %v6121
      %v6351 = vmul.f32 %v6334, %v6121
      %v6352 = vmul.f32 %v6335, %v6121
      %v6353 = vmul.f32 %v6336, %v6121
      %v6354 = vmul.f32 %v6337, %v6121
      %v6355 = vmul.f32 %v6338, %v6121
      %v6356 = vmul.f32 %v6339, %v6121
      %v6357 = vmul.f32 %v6340, %v6121
      %v6358 = vmul.f32 %v6341, %v6121
      %v6359 = vmul.f32 %v6342, %v6121
      %v6360 = vmul.f32 %v6343, %v6121
      %v6361 = vmul.f32 %v6344, %v6121
      %v6362 = vmul.f32 %v6345, %v6121
      %v6363 = vadd.f32 %v6347, %v6025
      %v6364 = vadd.f32 %v6348, %v6029
      %v6365 = vadd.f32 %v6349, %v6035
      %v6366 = vadd.f32 %v6350, %v6039
      %v6367 = vadd.f32 %v6351, %v6045
      %v6368 = vadd.f32 %v6352, %v6049
      %v6369 = vadd.f32 %v6353, %v6055
      %v6370 = vadd.f32 %v6354, %v6059
      %v6371 = vadd.f32 %v6355, %v6065
      %v6372 = vadd.f32 %v6356, %v6069
      %v6373 = vadd.f32 %v6357, %v6075
      %v6374 = vadd.f32 %v6358, %v6079
      %v6375 = vadd.f32 %v6359, %v6085
      %v6376 = vadd.f32 %v6360, %v6089
      %v6377 = vadd.f32 %v6361, %v6095
      %v6378 = vadd.f32 %v6362, %v6099
      %6379 = vst.msk [vmem:[#allocation5] sm:$0xff] %vm5826, %v6363
      %6380 = vst.msk [vmem:[#allocation5 + $0x8] sm:$0xff] %vm5826, %v6364
      %6381 = vst.msk [vmem:[#allocation5 + $0x10] sm:$0xff] %vm5826, %v6365
      %6382 = vst.msk [vmem:[#allocation5 + $0x18] sm:$0xff] %vm5826, %v6366
      %6383 = vst.msk [vmem:[#allocation5 + $0x20] sm:$0xff] %vm5826, %v6367
      %6384 = vst.msk [vmem:[#allocation5 + $0x28] sm:$0xff] %vm5826, %v6368
      %6385 = vst.msk [vmem:[#allocation5 + $0x30] sm:$0xff] %vm5826, %v6369
      %6386 = vst.msk [vmem:[#allocation5 + $0x38] sm:$0xff] %vm5826, %v6370
      %6387 = vst.msk [vmem:[#allocation5 + $0x40] sm:$0xff] %vm5826, %v6371
      %6388 = vst.msk [vmem:[#allocation5 + $0x48] sm:$0xff] %vm5826, %v6372
      %6389 = vst.msk [vmem:[#allocation5 + $0x50] sm:$0xff] %vm5826, %v6373
      %6390 = vst.msk [vmem:[#allocation5 + $0x58] sm:$0xff] %vm5826, %v6374
      %6391 = vst.msk [vmem:[#allocation5 + $0x60] sm:$0xff] %vm5826, %v6375
      %6392 = vst.msk [vmem:[#allocation5 + $0x68] sm:$0xff] %vm5826, %v6376
      %6393 = vst.msk [vmem:[#allocation5 + $0x70] sm:$0xff] %vm5826, %v6377
      %6394 = vst.msk [vmem:[#allocation5 + $0x78] sm:$0xff] %vm5826, %v6378
      %v6395 = vld [vmem:[#allocation7] sm:$0xff]
      %v6396 = vld [vmem:[#allocation7 + $0x8] sm:$0xff]
      %v6397 = vld [vmem:[#allocation7 + $0x10] sm:$0xff]
      %v6398 = vld [vmem:[#allocation7 + $0x18] sm:$0xff]
      %v6399 = vld [vmem:[#allocation7 + $0x20] sm:$0xff]
      %v6400 = vld [vmem:[#allocation7 + $0x28] sm:$0xff]
      %v6401 = vld [vmem:[#allocation7 + $0x30] sm:$0xff]
      %v6402 = vld [vmem:[#allocation7 + $0x38] sm:$0xff]
      %v6403 = vld [vmem:[#allocation7 + $0x40] sm:$0xff]
      %v6404 = vld [vmem:[#allocation7 + $0x48] sm:$0xff]
      %v6405 = vld [vmem:[#allocation7 + $0x50] sm:$0xff]
      %v6406 = vld [vmem:[#allocation7 + $0x58] sm:$0xff]
      %v6407 = vld [vmem:[#allocation7 + $0x60] sm:$0xff]
      %v6408 = vld [vmem:[#allocation7 + $0x68] sm:$0xff]
      %v6409 = vld [vmem:[#allocation7 + $0x70] sm:$0xff]
      %v6410 = vld [vmem:[#allocation7 + $0x78] sm:$0xff]
      %6427 = vrot.lane.b32.xlu0 %v6025, 124
      %v6428 = vpop.permute.xlu0 %6427
      %6429 = vrot.lane.b32.xlu0 %v6029, 124
      %v6430 = vpop.permute.xlu0 %6429
      %6431 = vrot.lane.b32.xlu0 %v6035, 124
      %v6432 = vpop.permute.xlu0 %6431
      %6433 = vrot.lane.b32.xlu0 %v6039, 124
      %v6434 = vpop.permute.xlu0 %6433
      %6435 = vrot.lane.b32.xlu0 %v6045, 124
      %v6436 = vpop.permute.xlu0 %6435
      %6437 = vrot.lane.b32.xlu0 %v6049, 124
      %v6438 = vpop.permute.xlu0 %6437
      %6439 = vrot.lane.b32.xlu0 %v6055, 124
      %v6440 = vpop.permute.xlu0 %6439
      %6441 = vrot.lane.b32.xlu0 %v6059, 124
      %v6442 = vpop.permute.xlu0 %6441
      %6443 = vrot.lane.b32.xlu0 %v6065, 124
      %v6444 = vpop.permute.xlu0 %6443
      %6445 = vrot.lane.b32.xlu0 %v6069, 124
      %v6446 = vpop.permute.xlu0 %6445
      %6447 = vrot.lane.b32.xlu0 %v6075, 124
      %v6448 = vpop.permute.xlu0 %6447
      %6449 = vrot.lane.b32.xlu0 %v6079, 124
      %v6450 = vpop.permute.xlu0 %6449
      %6451 = vrot.lane.b32.xlu0 %v6085, 124
      %v6452 = vpop.permute.xlu0 %6451
      %6453 = vrot.lane.b32.xlu0 %v6089, 124
      %v6454 = vpop.permute.xlu0 %6453
      %6455 = vrot.lane.b32.xlu0 %v6095, 124
      %v6456 = vpop.permute.xlu0 %6455
      %6457 = vrot.lane.b32.xlu0 %v6099, 124
      %v6458 = vpop.permute.xlu0 %6457
      %v6475 = vadd.f32 %v6395, %v6428
      %v6476 = vadd.f32 %v6396, %v6430
      %v6477 = vadd.f32 %v6397, %v6432
      %v6478 = vadd.f32 %v6398, %v6434
      %v6479 = vadd.f32 %v6399, %v6436
      %v6480 = vadd.f32 %v6400, %v6438
      %v6481 = vadd.f32 %v6401, %v6440
      %v6482 = vadd.f32 %v6402, %v6442
      %v6483 = vadd.f32 %v6403, %v6444
      %v6484 = vadd.f32 %v6404, %v6446
      %v6485 = vadd.f32 %v6405, %v6448
      %v6486 = vadd.f32 %v6406, %v6450
      %v6487 = vadd.f32 %v6407, %v6452
      %v6488 = vadd.f32 %v6408, %v6454
      %v6489 = vadd.f32 %v6409, %v6456
      %v6490 = vadd.f32 %v6410, %v6458
      %vm6491 = vcmask 64512
      %6492 = vst.msk [vmem:[#allocation7] sm:$0xff] %vm6491, %v6475
      %6493 = vst.msk [vmem:[#allocation7 + $0x8] sm:$0xff] %vm6491, %v6476
      %6494 = vst.msk [vmem:[#allocation7 + $0x10] sm:$0xff] %vm6491, %v6477
      %6495 = vst.msk [vmem:[#allocation7 + $0x18] sm:$0xff] %vm6491, %v6478
      %6496 = vst.msk [vmem:[#allocation7 + $0x20] sm:$0xff] %vm6491, %v6479
      %6497 = vst.msk [vmem:[#allocation7 + $0x28] sm:$0xff] %vm6491, %v6480
      %6498 = vst.msk [vmem:[#allocation7 + $0x30] sm:$0xff] %vm6491, %v6481
      %6499 = vst.msk [vmem:[#allocation7 + $0x38] sm:$0xff] %vm6491, %v6482
      %6500 = vst.msk [vmem:[#allocation7 + $0x40] sm:$0xff] %vm6491, %v6483
      %6501 = vst.msk [vmem:[#allocation7 + $0x48] sm:$0xff] %vm6491, %v6484
      %6502 = vst.msk [vmem:[#allocation7 + $0x50] sm:$0xff] %vm6491, %v6485
      %6503 = vst.msk [vmem:[#allocation7 + $0x58] sm:$0xff] %vm6491, %v6486
      %6504 = vst.msk [vmem:[#allocation7 + $0x60] sm:$0xff] %vm6491, %v6487
      %6505 = vst.msk [vmem:[#allocation7 + $0x68] sm:$0xff] %vm6491, %v6488
      %6506 = vst.msk [vmem:[#allocation7 + $0x70] sm:$0xff] %vm6491, %v6489
      %6507 = vst.msk [vmem:[#allocation7 + $0x78] sm:$0xff] %vm6491, %v6490
      %p6508 = scmp.eq.s32.totalorder %s20, 2
      // Predicated region
      $region61: #{tpu_custom_call.1} parent=55 // pred_check
        %p6509 = pneg %p6508
      $region62: #{tpu_custom_call.1} parent=55 // pred_check_branch
        %6511 = sbr.rel (%p6509) target = $region64
      $region63: #{tpu_custom_call.1} parent=55 // pred_region
        %v6512 = vld [vmem:[#allocation5] sm:$0xff]
        %v6513 = vld [vmem:[#allocation5 + $0x8] sm:$0xff]
        %v6514 = vld [vmem:[#allocation5 + $0x10] sm:$0xff]
        %v6515 = vld [vmem:[#allocation5 + $0x18] sm:$0xff]
        %v6516 = vld [vmem:[#allocation5 + $0x20] sm:$0xff]
        %v6517 = vld [vmem:[#allocation5 + $0x28] sm:$0xff]
        %v6518 = vld [vmem:[#allocation5 + $0x30] sm:$0xff]
        %v6519 = vld [vmem:[#allocation5 + $0x38] sm:$0xff]
        %v6520 = vld [vmem:[#allocation5 + $0x40] sm:$0xff]
        %v6521 = vld [vmem:[#allocation5 + $0x48] sm:$0xff]
        %v6522 = vld [vmem:[#allocation5 + $0x50] sm:$0xff]
        %v6523 = vld [vmem:[#allocation5 + $0x58] sm:$0xff]
        %v6524 = vld [vmem:[#allocation5 + $0x60] sm:$0xff]
        %v6525 = vld [vmem:[#allocation5 + $0x68] sm:$0xff]
        %v6526 = vld [vmem:[#allocation5 + $0x70] sm:$0xff]
        %v6527 = vld [vmem:[#allocation5 + $0x78] sm:$0xff]
        %vm6528 = vcmp.gt.f32.partialorder %v6512, 0.0
        %vm6529 = vcmp.gt.f32.partialorder %v6513, 0.0
        %vm6530 = vcmp.gt.f32.partialorder %v6514, 0.0
        %vm6531 = vcmp.gt.f32.partialorder %v6515, 0.0
        %vm6532 = vcmp.gt.f32.partialorder %v6516, 0.0
        %vm6533 = vcmp.gt.f32.partialorder %v6517, 0.0
        %vm6534 = vcmp.gt.f32.partialorder %v6518, 0.0
        %vm6535 = vcmp.gt.f32.partialorder %v6519, 0.0
        %vm6536 = vcmp.gt.f32.partialorder %v6520, 0.0
        %vm6537 = vcmp.gt.f32.partialorder %v6521, 0.0
        %vm6538 = vcmp.gt.f32.partialorder %v6522, 0.0
        %vm6539 = vcmp.gt.f32.partialorder %v6523, 0.0
        %vm6540 = vcmp.gt.f32.partialorder %v6524, 0.0
        %vm6541 = vcmp.gt.f32.partialorder %v6525, 0.0
        %vm6542 = vcmp.gt.f32.partialorder %v6526, 0.0
        %vm6543 = vcmp.gt.f32.partialorder %v6527, 0.0
        %v6544 = vsel %vm6528, %v6512, 1.0
        %v6545 = vsel %vm6529, %v6513, 1.0
        %v6546 = vsel %vm6530, %v6514, 1.0
        %v6547 = vsel %vm6531, %v6515, 1.0
        %v6548 = vsel %vm6532, %v6516, 1.0
        %v6549 = vsel %vm6533, %v6517, 1.0
        %v6550 = vsel %vm6534, %v6518, 1.0
        %v6551 = vsel %vm6535, %v6519, 1.0
        %v6552 = vsel %vm6536, %v6520, 1.0
        %v6553 = vsel %vm6537, %v6521, 1.0
        %v6554 = vsel %vm6538, %v6522, 1.0
        %v6555 = vsel %vm6539, %v6523, 1.0
        %v6556 = vsel %vm6540, %v6524, 1.0
        %v6557 = vsel %vm6541, %v6525, 1.0
        %v6558 = vsel %vm6542, %v6526, 1.0
        %v6559 = vsel %vm6543, %v6527, 1.0
        %v6560 = vrcp.pop %v6544
        %v6561 = vmul.f32 1.0, %v6560
        %v6562 = vrcp.pop %v6545
        %v6563 = vmul.f32 1.0, %v6562
        %v6564 = vrcp.pop %v6546
        %v6565 = vmul.f32 1.0, %v6564
        %v6566 = vrcp.pop %v6547
        %v6567 = vmul.f32 1.0, %v6566
        %v6568 = vrcp.pop %v6548
        %v6569 = vmul.f32 1.0, %v6568
        %v6570 = vrcp.pop %v6549
        %v6571 = vmul.f32 1.0, %v6570
        %v6572 = vrcp.pop %v6550
        %v6573 = vmul.f32 1.0, %v6572
        %v6574 = vrcp.pop %v6551
        %v6575 = vmul.f32 1.0, %v6574
        %v6576 = vrcp.pop %v6552
        %v6577 = vmul.f32 1.0, %v6576
        %v6578 = vrcp.pop %v6553
        %v6579 = vmul.f32 1.0, %v6578
        %v6580 = vrcp.pop %v6554
        %v6581 = vmul.f32 1.0, %v6580
        %v6582 = vrcp.pop %v6555
        %v6583 = vmul.f32 1.0, %v6582
        %v6584 = vrcp.pop %v6556
        %v6585 = vmul.f32 1.0, %v6584
        %v6586 = vrcp.pop %v6557
        %v6587 = vmul.f32 1.0, %v6586
        %v6588 = vrcp.pop %v6558
        %v6589 = vmul.f32 1.0, %v6588
        %v6590 = vrcp.pop %v6559
        %v6591 = vmul.f32 1.0, %v6590
        %v6592 = vsel %vm6528, %v6561, 0.0
        %v6593 = vsel %vm6529, %v6563, 0.0
        %v6594 = vsel %vm6530, %v6565, 0.0
        %v6595 = vsel %vm6531, %v6567, 0.0
        %v6596 = vsel %vm6532, %v6569, 0.0
        %v6597 = vsel %vm6533, %v6571, 0.0
        %v6598 = vsel %vm6534, %v6573, 0.0
        %v6599 = vsel %vm6535, %v6575, 0.0
        %v6600 = vsel %vm6536, %v6577, 0.0
        %v6601 = vsel %vm6537, %v6579, 0.0
        %v6602 = vsel %vm6538, %v6581, 0.0
        %v6603 = vsel %vm6539, %v6583, 0.0
        %v6604 = vsel %vm6540, %v6585, 0.0
        %v6605 = vsel %vm6541, %v6587, 0.0
        %v6606 = vsel %vm6542, %v6589, 0.0
        %v6607 = vsel %vm6543, %v6591, 0.0
        %v6608 = vld [vmem:[#allocation7] sm:$0xff]
        %v6609 = vld [vmem:[#allocation7 + $0x8] sm:$0xff]
        %v6610 = vld [vmem:[#allocation7 + $0x10] sm:$0xff]
        %v6611 = vld [vmem:[#allocation7 + $0x18] sm:$0xff]
        %v6612 = vld [vmem:[#allocation7 + $0x20] sm:$0xff]
        %v6613 = vld [vmem:[#allocation7 + $0x28] sm:$0xff]
        %v6614 = vld [vmem:[#allocation7 + $0x30] sm:$0xff]
        %v6615 = vld [vmem:[#allocation7 + $0x38] sm:$0xff]
        %v6616 = vld [vmem:[#allocation7 + $0x40] sm:$0xff]
        %v6617 = vld [vmem:[#allocation7 + $0x48] sm:$0xff]
        %v6618 = vld [vmem:[#allocation7 + $0x50] sm:$0xff]
        %v6619 = vld [vmem:[#allocation7 + $0x58] sm:$0xff]
        %v6620 = vld [vmem:[#allocation7 + $0x60] sm:$0xff]
        %v6621 = vld [vmem:[#allocation7 + $0x68] sm:$0xff]
        %v6622 = vld [vmem:[#allocation7 + $0x70] sm:$0xff]
        %v6623 = vld [vmem:[#allocation7 + $0x78] sm:$0xff]
        %v6624 = vld [vmem:[%s5] sm:$0xff]
        %v6625 = vld [vmem:[#allocation6] sm:$0xff]
        %v6626 = vld [vmem:[#allocation6 + $0x8] sm:$0xff]
        %v6627 = vld [vmem:[#allocation6 + $0x10] sm:$0xff]
        %v6628 = vld [vmem:[#allocation6 + $0x18] sm:$0xff]
        %v6629 = vld [vmem:[#allocation6 + $0x20] sm:$0xff]
        %v6630 = vld [vmem:[#allocation6 + $0x28] sm:$0xff]
        %v6631 = vld [vmem:[#allocation6 + $0x30] sm:$0xff]
        %v6632 = vld [vmem:[#allocation6 + $0x38] sm:$0xff]
        %v6633 = vld [vmem:[#allocation6 + $0x40] sm:$0xff]
        %v6634 = vld [vmem:[#allocation6 + $0x48] sm:$0xff]
        %v6635 = vld [vmem:[#allocation6 + $0x50] sm:$0xff]
        %v6636 = vld [vmem:[#allocation6 + $0x58] sm:$0xff]
        %v6637 = vld [vmem:[#allocation6 + $0x60] sm:$0xff]
        %v6638 = vld [vmem:[#allocation6 + $0x68] sm:$0xff]
        %v6639 = vld [vmem:[#allocation6 + $0x70] sm:$0xff]
        %v6640 = vld [vmem:[#allocation6 + $0x78] sm:$0xff]
        %6642 = vset.pattern.permute.xlu0 0
        %6643 = vperm.xlu0 %6642, %v6592
        %v6644 = vpop.permute.xlu0 %6643
        %6647 = vset.pattern.permute.xlu0 0
        %6648 = vperm.xlu0 %6647, %v6593
        %v6649 = vpop.permute.xlu0 %6648
        %6652 = vset.pattern.permute.xlu0 0
        %6653 = vperm.xlu0 %6652, %v6594
        %v6654 = vpop.permute.xlu0 %6653
        %6657 = vset.pattern.permute.xlu0 0
        %6658 = vperm.xlu0 %6657, %v6595
        %v6659 = vpop.permute.xlu0 %6658
        %6662 = vset.pattern.permute.xlu0 0
        %6663 = vperm.xlu0 %6662, %v6596
        %v6664 = vpop.permute.xlu0 %6663
        %6667 = vset.pattern.permute.xlu0 0
        %6668 = vperm.xlu0 %6667, %v6597
        %v6669 = vpop.permute.xlu0 %6668
        %6672 = vset.pattern.permute.xlu0 0
        %6673 = vperm.xlu0 %6672, %v6598
        %v6674 = vpop.permute.xlu0 %6673
        %6677 = vset.pattern.permute.xlu0 0
        %6678 = vperm.xlu0 %6677, %v6599
        %v6679 = vpop.permute.xlu0 %6678
        %6682 = vset.pattern.permute.xlu0 0
        %6683 = vperm.xlu0 %6682, %v6600
        %v6684 = vpop.permute.xlu0 %6683
        %6687 = vset.pattern.permute.xlu0 0
        %6688 = vperm.xlu0 %6687, %v6601
        %v6689 = vpop.permute.xlu0 %6688
        %6692 = vset.pattern.permute.xlu0 0
        %6693 = vperm.xlu0 %6692, %v6602
        %v6694 = vpop.permute.xlu0 %6693
        %6697 = vset.pattern.permute.xlu0 0
        %6698 = vperm.xlu0 %6697, %v6603
        %v6699 = vpop.permute.xlu0 %6698
        %6702 = vset.pattern.permute.xlu0 0
        %6703 = vperm.xlu0 %6702, %v6604
        %v6704 = vpop.permute.xlu0 %6703
        %6707 = vset.pattern.permute.xlu0 0
        %6708 = vperm.xlu0 %6707, %v6605
        %v6709 = vpop.permute.xlu0 %6708
        %6712 = vset.pattern.permute.xlu0 0
        %6713 = vperm.xlu0 %6712, %v6606
        %v6714 = vpop.permute.xlu0 %6713
        %6717 = vset.pattern.permute.xlu0 0
        %6718 = vperm.xlu0 %6717, %v6607
        %v6719 = vpop.permute.xlu0 %6718
        %v6721 = vmul.f32 %v6625, %v6644
        %v6722 = vmul.f32 %v6626, %v6649
        %v6723 = vmul.f32 %v6627, %v6654
        %v6724 = vmul.f32 %v6628, %v6659
        %v6725 = vmul.f32 %v6629, %v6664
        %v6726 = vmul.f32 %v6630, %v6669
        %v6727 = vmul.f32 %v6631, %v6674
        %v6728 = vmul.f32 %v6632, %v6679
        %v6729 = vmul.f32 %v6633, %v6684
        %v6730 = vmul.f32 %v6634, %v6689
        %v6731 = vmul.f32 %v6635, %v6694
        %v6732 = vmul.f32 %v6636, %v6699
        %v6733 = vmul.f32 %v6637, %v6704
        %v6734 = vmul.f32 %v6638, %v6709
        %v6735 = vmul.f32 %v6639, %v6714
        %v6736 = vmul.f32 %v6640, %v6719
        %v6738 = vsel %vm6491, %v6608, 0
        %v6741 = vsel %vm6491, %v6609, 0
        %v6744 = vsel %vm6491, %v6610, 0
        %v6747 = vsel %vm6491, %v6611, 0
        %v6750 = vsel %vm6491, %v6612, 0
        %v6753 = vsel %vm6491, %v6613, 0
        %v6756 = vsel %vm6491, %v6614, 0
        %v6759 = vsel %vm6491, %v6615, 0
        %v6762 = vsel %vm6491, %v6616, 0
        %v6765 = vsel %vm6491, %v6617, 0
        %v6768 = vsel %vm6491, %v6618, 0
        %v6771 = vsel %vm6491, %v6619, 0
        %v6774 = vsel %vm6491, %v6620, 0
        %v6777 = vsel %vm6491, %v6621, 0
        %v6780 = vsel %vm6491, %v6622, 0
        %v6783 = vsel %vm6491, %v6623, 0
        %6785 = vmatprep.subr.mxu0 0.0
        %v6786 = vand.u32 %v6624, 4294901760
        %6787 = vmatpush1.msra.mxu0 %v6786
        %6788 = vmatprep.subr.mxu0 0.0
        %6789 = vmatpush1.msra.mxu0 0.0
        %6790 = vmatprep.subr.mxu0 0.0
        %6791 = vmatpush1.msra.mxu0 0.0
        %6792 = vmatprep.subr.mxu0 0.0
        %6793 = vmatpush1.msra.mxu0 0.0
        %6794 = vmatprep.subr.mxu0 0.0
        %6795 = vmatpush1.msra.mxu0 0.0
        %6796 = vmatprep.subr.mxu0 0.0
        %6797 = vmatpush1.msra.mxu0 0.0
        %6798 = vmatprep.subr.mxu0 0.0
        %6799 = vmatpush1.msra.mxu0 0.0
        %6800 = vmatprep.subr.mxu0 0.0
        %6801 = vmatpush1.msra.mxu0 0.0
        %6802 = vmatprep.subr.mxu0 0.0
        %6803 = vmatpush1.msra.mxu0 0.0
        %6804 = vmatprep.subr.mxu0 0.0
        %6805 = vmatpush1.msra.mxu0 0.0
        %6806 = vmatprep.subr.mxu0 0.0
        %6807 = vmatpush1.msra.mxu0 0.0
        %6808 = vmatprep.subr.mxu0 0.0
        %6809 = vmatpush1.msra.mxu0 0.0
        %6810 = vmatprep.subr.mxu0 0.0
        %6811 = vmatpush1.msra.mxu0 0.0
        %6812 = vmatprep.subr.mxu0 0.0
        %6813 = vmatpush1.msra.mxu0 0.0
        %6814 = vmatprep.subr.mxu0 0.0
        %6815 = vmatpush1.msra.mxu0 0.0
        %6816 = vmatprep.subr.mxu0 0.0
        %6817 = vmatpush1.msra.mxu0 0.0
        %6818 = vmatprep.subr.mxu0 0.0
        %6819 = vmatpush1.msra.mxu0 0.0
        %6820 = vmatprep.subr.mxu0 0.0
        %6821 = vmatpush1.msra.mxu0 0.0
        %6822 = vmatprep.subr.mxu0 0.0
        %6823 = vmatpush1.msra.mxu0 0.0
        %6824 = vmatprep.subr.mxu0 0.0
        %6825 = vmatpush1.msra.mxu0 0.0
        %6826 = vmatprep.subr.mxu0 0.0
        %6827 = vmatpush1.msra.mxu0 0.0
        %6828 = vmatprep.subr.mxu0 0.0
        %6829 = vmatpush1.msra.mxu0 0.0
        %6830 = vmatprep.subr.mxu0 0.0
        %6831 = vmatpush1.msra.mxu0 0.0
        %6832 = vmatprep.subr.mxu0 0.0
        %6833 = vmatpush1.msra.mxu0 0.0
        %6834 = vmatprep.subr.mxu0 0.0
        %6835 = vmatpush1.msra.mxu0 0.0
        %6836 = vmatprep.subr.mxu0 0.0
        %6837 = vmatpush1.msra.mxu0 0.0
        %6838 = vmatprep.subr.mxu0 0.0
        %6839 = vmatpush1.msra.mxu0 0.0
        %6840 = vmatprep.subr.mxu0 0.0
        %6841 = vmatpush1.msra.mxu0 0.0
        %6842 = vmatprep.subr.mxu0 0.0
        %6843 = vmatpush1.msra.mxu0 0.0
        %6844 = vmatprep.subr.mxu0 0.0
        %6845 = vmatpush1.msra.mxu0 0.0
        %6846 = vmatprep.subr.mxu0 0.0
        %6847 = vmatpush1.msra.mxu0 0.0
        %6848 = vmatprep.subr.mxu0 0.0
        %6849 = vmatpush1.msra.mxu0 0.0
        %6850 = vmatprep.mubr.f32.mxu0 0.0
        %v6851 = vand.u32 %v6738, 4294901760
        %v6852 = vsub.f32 %v6738, %v6851
        %v6853 = vand.u32 %v6852, 4294901760
        %v6854 = vsub.f32 %v6852, %v6853
        %v6855 = vand.u32 %v6854, 4294901760
        %6856 = vmatmul.mubr.f32.gmra.mrb[0].mxu0 %v6855
        %v6857 = vpop.f32.mrb[0].mxu0
        %v6858 = vadd.f32 %v6721, %v6857
        %v6859 = vpop.f32.mrb[0].mxu0
        %6860 = vmatprep.mubr.f32.mxu0 0.0
        %v6861 = vand.u32 %v6741, 4294901760
        %v6862 = vsub.f32 %v6741, %v6861
        %v6863 = vand.u32 %v6862, 4294901760
        %v6864 = vsub.f32 %v6862, %v6863
        %v6865 = vand.u32 %v6864, 4294901760
        %6866 = vmatmul.mubr.f32.gmra.mrb[0].mxu0 %v6865
        %v6867 = vpop.f32.mrb[0].mxu0
        %v6868 = vadd.f32 %v6722, %v6867
        %v6869 = vpop.f32.mrb[0].mxu0
        %6870 = vmatprep.mubr.f32.mxu0 0.0
        %v6871 = vand.u32 %v6744, 4294901760
        %v6872 = vsub.f32 %v6744, %v6871
        %v6873 = vand.u32 %v6872, 4294901760
        %v6874 = vsub.f32 %v6872, %v6873
        %v6875 = vand.u32 %v6874, 4294901760
        %6876 = vmatmul.mubr.f32.gmra.mrb[0].mxu0 %v6875
        %v6877 = vpop.f32.mrb[0].mxu0
        %v6878 = vadd.f32 %v6723, %v6877
        %v6879 = vpop.f32.mrb[0].mxu0
        %6880 = vmatprep.mubr.f32.mxu0 0.0
        %v6881 = vand.u32 %v6747, 4294901760
        %v6882 = vsub.f32 %v6747, %v6881
        %v6883 = vand.u32 %v6882, 4294901760
        %v6884 = vsub.f32 %v6882, %v6883
        %v6885 = vand.u32 %v6884, 4294901760
        %6886 = vmatmul.mubr.f32.gmra.mrb[0].mxu0 %v6885
        %v6887 = vpop.f32.mrb[0].mxu0
        %v6888 = vadd.f32 %v6724, %v6887
        %v6889 = vpop.f32.mrb[0].mxu0
        %6890 = vmatprep.mubr.f32.mxu0 0.0
        %v6891 = vand.u32 %v6750, 4294901760
        %v6892 = vsub.f32 %v6750, %v6891
        %v6893 = vand.u32 %v6892, 4294901760
        %v6894 = vsub.f32 %v6892, %v6893
        %v6895 = vand.u32 %v6894, 4294901760
        %6896 = vmatmul.mubr.f32.gmra.mrb[0].mxu0 %v6895
        %v6897 = vpop.f32.mrb[0].mxu0
        %v6898 = vadd.f32 %v6725, %v6897
        %v6899 = vpop.f32.mrb[0].mxu0
        %6900 = vmatprep.mubr.f32.mxu0 0.0
        %v6901 = vand.u32 %v6753, 4294901760
        %v6902 = vsub.f32 %v6753, %v6901
        %v6903 = vand.u32 %v6902, 4294901760
        %v6904 = vsub.f32 %v6902, %v6903
        %v6905 = vand.u32 %v6904, 4294901760
        %6906 = vmatmul.mubr.f32.gmra.mrb[0].mxu0 %v6905
        %v6907 = vpop.f32.mrb[0].mxu0
        %v6908 = vadd.f32 %v6726, %v6907
        %v6909 = vpop.f32.mrb[0].mxu0
        %6910 = vmatprep.mubr.f32.mxu0 0.0
        %v6911 = vand.u32 %v6756, 4294901760
        %v6912 = vsub.f32 %v6756, %v6911
        %v6913 = vand.u32 %v6912, 4294901760
        %v6914 = vsub.f32 %v6912, %v6913
        %v6915 = vand.u32 %v6914, 4294901760
        %6916 = vmatmul.mubr.f32.gmra.mrb[0].mxu0 %v6915
        %v6917 = vpop.f32.mrb[0].mxu0
        %v6918 = vadd.f32 %v6727, %v6917
        %v6919 = vpop.f32.mrb[0].mxu0
        %6920 = vmatprep.mubr.f32.mxu0 0.0
        %v6921 = vand.u32 %v6759, 4294901760
        %v6922 = vsub.f32 %v6759, %v6921
        %v6923 = vand.u32 %v6922, 4294901760
        %v6924 = vsub.f32 %v6922, %v6923
        %v6925 = vand.u32 %v6924, 4294901760
        %6926 = vmatmul.mubr.f32.gmra.mrb[0].mxu0 %v6925
        %v6927 = vpop.f32.mrb[0].mxu0
        %v6928 = vadd.f32 %v6728, %v6927
        %v6929 = vpop.f32.mrb[0].mxu0
        %6930 = vmatprep.mubr.f32.mxu0 0.0
        %v6931 = vand.u32 %v6762, 4294901760
        %v6932 = vsub.f32 %v6762, %v6931
        %v6933 = vand.u32 %v6932, 4294901760
        %v6934 = vsub.f32 %v6932, %v6933
        %v6935 = vand.u32 %v6934, 4294901760
        %6936 = vmatmul.mubr.f32.gmra.mrb[0].mxu0 %v6935
        %v6937 = vpop.f32.mrb[0].mxu0
        %v6938 = vadd.f32 %v6729, %v6937
        %v6939 = vpop.f32.mrb[0].mxu0
        %6940 = vmatprep.mubr.f32.mxu0 0.0
        %v6941 = vand.u32 %v6765, 4294901760
        %v6942 = vsub.f32 %v6765, %v6941
        %v6943 = vand.u32 %v6942, 4294901760
        %v6944 = vsub.f32 %v6942, %v6943
        %v6945 = vand.u32 %v6944, 4294901760
        %6946 = vmatmul.mubr.f32.gmra.mrb[0].mxu0 %v6945
        %v6947 = vpop.f32.mrb[0].mxu0
        %v6948 = vadd.f32 %v6730, %v6947
        %v6949 = vpop.f32.mrb[0].mxu0
        %6950 = vmatprep.mubr.f32.mxu0 0.0
        %v6951 = vand.u32 %v6768, 4294901760
        %v6952 = vsub.f32 %v6768, %v6951
        %v6953 = vand.u32 %v6952, 4294901760
        %v6954 = vsub.f32 %v6952, %v6953
        %v6955 = vand.u32 %v6954, 4294901760
        %6956 = vmatmul.mubr.f32.gmra.mrb[0].mxu0 %v6955
        %v6957 = vpop.f32.mrb[0].mxu0
        %v6958 = vadd.f32 %v6731, %v6957
        %v6959 = vpop.f32.mrb[0].mxu0
        %6960 = vmatprep.mubr.f32.mxu0 0.0
        %v6961 = vand.u32 %v6771, 4294901760
        %v6962 = vsub.f32 %v6771, %v6961
        %v6963 = vand.u32 %v6962, 4294901760
        %v6964 = vsub.f32 %v6962, %v6963
        %v6965 = vand.u32 %v6964, 4294901760
        %6966 = vmatmul.mubr.f32.gmra.mrb[0].mxu0 %v6965
        %v6967 = vpop.f32.mrb[0].mxu0
        %v6968 = vadd.f32 %v6732, %v6967
        %v6969 = vpop.f32.mrb[0].mxu0
        %6970 = vmatprep.mubr.f32.mxu0 0.0
        %v6971 = vand.u32 %v6774, 4294901760
        %v6972 = vsub.f32 %v6774, %v6971
        %v6973 = vand.u32 %v6972, 4294901760
        %v6974 = vsub.f32 %v6972, %v6973
        %v6975 = vand.u32 %v6974, 4294901760
        %6976 = vmatmul.mubr.f32.gmra.mrb[0].mxu0 %v6975
        %v6977 = vpop.f32.mrb[0].mxu0
        %v6978 = vadd.f32 %v6733, %v6977
        %v6979 = vpop.f32.mrb[0].mxu0
        %6980 = vmatprep.mubr.f32.mxu0 0.0
        %v6981 = vand.u32 %v6777, 4294901760
        %v6982 = vsub.f32 %v6777, %v6981
        %v6983 = vand.u32 %v6982, 4294901760
        %v6984 = vsub.f32 %v6982, %v6983
        %v6985 = vand.u32 %v6984, 4294901760
        %6986 = vmatmul.mubr.f32.gmra.mrb[0].mxu0 %v6985
        %v6987 = vpop.f32.mrb[0].mxu0
        %v6988 = vadd.f32 %v6734, %v6987
        %v6989 = vpop.f32.mrb[0].mxu0
        %6990 = vmatprep.mubr.f32.mxu0 0.0
        %v6991 = vand.u32 %v6780, 4294901760
        %v6992 = vsub.f32 %v6780, %v6991
        %v6993 = vand.u32 %v6992, 4294901760
        %v6994 = vsub.f32 %v6992, %v6993
        %v6995 = vand.u32 %v6994, 4294901760
        %6996 = vmatmul.mubr.f32.gmra.mrb[0].mxu0 %v6995
        %v6997 = vpop.f32.mrb[0].mxu0
        %v6998 = vadd.f32 %v6735, %v6997
        %v6999 = vpop.f32.mrb[0].mxu0
        %7000 = vmatprep.mubr.f32.mxu0 0.0
        %v7001 = vand.u32 %v6783, 4294901760
        %v7002 = vsub.f32 %v6783, %v7001
        %v7003 = vand.u32 %v7002, 4294901760
        %v7004 = vsub.f32 %v7002, %v7003
        %v7005 = vand.u32 %v7004, 4294901760
        %7006 = vmatmul.mubr.f32.gmra.mrb[0].mxu0 %v7005
        %v7007 = vpop.f32.mrb[0].mxu0
        %v7008 = vadd.f32 %v6736, %v7007
        %v7009 = vpop.f32.mrb[0].mxu0
        %7010 = vdwg.mxu0
        %7011 = vmatprep.subr.mxu0 0.0
        %v7012 = vand.u32 %v6624, 4294901760
        %v7013 = vsub.f32 %v6624, %v7012
        %v7014 = vand.u32 %v7013, 4294901760
        %v7015 = vsub.f32 %v7013, %v7014
        %v7016 = vand.u32 %v7015, 4294901760
        %7017 = vmatpush1.msra.mxu0 %v7016
        %7018 = vmatprep.subr.mxu0 0.0
        %7019 = vmatpush1.msra.mxu0 0.0
        %7020 = vmatprep.subr.mxu0 0.0
        %7021 = vmatpush1.msra.mxu0 0.0
        %7022 = vmatprep.subr.mxu0 0.0
        %7023 = vmatpush1.msra.mxu0 0.0
        %7024 = vmatprep.subr.mxu0 0.0
        %7025 = vmatpush1.msra.mxu0 0.0
        %7026 = vmatprep.subr.mxu0 0.0
        %7027 = vmatpush1.msra.mxu0 0.0
        %7028 = vmatprep.subr.mxu0 0.0
        %7029 = vmatpush1.msra.mxu0 0.0
        %7030 = vmatprep.subr.mxu0 0.0
        %7031 = vmatpush1.msra.mxu0 0.0
        %7032 = vmatprep.subr.mxu0 0.0
        %7033 = vmatpush1.msra.mxu0 0.0
        %7034 = vmatprep.subr.mxu0 0.0
        %7035 = vmatpush1.msra.mxu0 0.0
        %7036 = vmatprep.subr.mxu0 0.0
        %7037 = vmatpush1.msra.mxu0 0.0
        %7038 = vmatprep.subr.mxu0 0.0
        %7039 = vmatpush1.msra.mxu0 0.0
        %7040 = vmatprep.subr.mxu0 0.0
        %7041 = vmatpush1.msra.mxu0 0.0
        %7042 = vmatprep.subr.mxu0 0.0
        %7043 = vmatpush1.msra.mxu0 0.0
        %7044 = vmatprep.subr.mxu0 0.0
        %7045 = vmatpush1.msra.mxu0 0.0
        %7046 = vmatprep.subr.mxu0 0.0
        %7047 = vmatpush1.msra.mxu0 0.0
        %7048 = vmatprep.subr.mxu0 0.0
        %7049 = vmatpush1.msra.mxu0 0.0
        %7050 = vmatprep.subr.mxu0 0.0
        %7051 = vmatpush1.msra.mxu0 0.0
        %7052 = vmatprep.subr.mxu0 0.0
        %7053 = vmatpush1.msra.mxu0 0.0
        %7054 = vmatprep.subr.mxu0 0.0
        %7055 = vmatpush1.msra.mxu0 0.0
        %7056 = vmatprep.subr.mxu0 0.0
        %7057 = vmatpush1.msra.mxu0 0.0
        %7058 = vmatprep.subr.mxu0 0.0
        %7059 = vmatpush1.msra.mxu0 0.0
        %7060 = vmatprep.subr.mxu0 0.0
        %7061 = vmatpush1.msra.mxu0 0.0
        %7062 = vmatprep.subr.mxu0 0.0
        %7063 = vmatpush1.msra.mxu0 0.0
        %7064 = vmatprep.subr.mxu0 0.0
        %7065 = vmatpush1.msra.mxu0 0.0
        %7066 = vmatprep.subr.mxu0 0.0
        %7067 = vmatpush1.msra.mxu0 0.0
        %7068 = vmatprep.subr.mxu0 0.0
        %7069 = vmatpush1.msra.mxu0 0.0
        %7070 = vmatprep.subr.mxu0 0.0
        %7071 = vmatpush1.msra.mxu0 0.0
        %7072 = vmatprep.subr.mxu0 0.0
        %7073 = vmatpush1.msra.mxu0 0.0
        %7074 = vmatprep.subr.mxu0 0.0
        %7075 = vmatpush1.msra.mxu0 0.0
        %7076 = vmatprep.subr.mxu0 0.0
        %7077 = vmatpush1.msra.mxu0 0.0
        %7078 = vmatprep.subr.mxu0 0.0
        %7079 = vmatpush1.msra.mxu0 0.0
        %7080 = vmatprep.mubr.f32.mxu0 0.0
        %v7081 = vand.u32 %v6738, 4294901760
        %7082 = vmatmul.mubr.f32.gmra.mrb[0].mxu0 %v7081
        %v7083 = vpop.f32.mrb[0].mxu0
        %v7084 = vadd.f32 %v6858, %v7083
        %v7085 = vpop.f32.mrb[0].mxu0
        %7086 = vmatprep.mubr.f32.mxu0 0.0
        %v7087 = vand.u32 %v6741, 4294901760
        %7088 = vmatmul.mubr.f32.gmra.mrb[0].mxu0 %v7087
        %v7089 = vpop.f32.mrb[0].mxu0
        %v7090 = vadd.f32 %v6868, %v7089
        %v7091 = vpop.f32.mrb[0].mxu0
        %7092 = vmatprep.mubr.f32.mxu0 0.0
        %v7093 = vand.u32 %v6744, 4294901760
        %7094 = vmatmul.mubr.f32.gmra.mrb[0].mxu0 %v7093
        %v7095 = vpop.f32.mrb[0].mxu0
        %v7096 = vadd.f32 %v6878, %v7095
        %v7097 = vpop.f32.mrb[0].mxu0
        %7098 = vmatprep.mubr.f32.mxu0 0.0
        %v7099 = vand.u32 %v6747, 4294901760
        %7100 = vmatmul.mubr.f32.gmra.mrb[0].mxu0 %v7099
        %v7101 = vpop.f32.mrb[0].mxu0
        %v7102 = vadd.f32 %v6888, %v7101
        %v7103 = vpop.f32.mrb[0].mxu0
        %7104 = vmatprep.mubr.f32.mxu0 0.0
        %v7105 = vand.u32 %v6750, 4294901760
        %7106 = vmatmul.mubr.f32.gmra.mrb[0].mxu0 %v7105
        %v7107 = vpop.f32.mrb[0].mxu0
        %v7108 = vadd.f32 %v6898, %v7107
        %v7109 = vpop.f32.mrb[0].mxu0
        %7110 = vmatprep.mubr.f32.mxu0 0.0
        %v7111 = vand.u32 %v6753, 4294901760
        %7112 = vmatmul.mubr.f32.gmra.mrb[0].mxu0 %v7111
        %v7113 = vpop.f32.mrb[0].mxu0
        %v7114 = vadd.f32 %v6908, %v7113
        %v7115 = vpop.f32.mrb[0].mxu0
        %7116 = vmatprep.mubr.f32.mxu0 0.0
        %v7117 = vand.u32 %v6756, 4294901760
        %7118 = vmatmul.mubr.f32.gmra.mrb[0].mxu0 %v7117
        %v7119 = vpop.f32.mrb[0].mxu0
        %v7120 = vadd.f32 %v6918, %v7119
        %v7121 = vpop.f32.mrb[0].mxu0
        %7122 = vmatprep.mubr.f32.mxu0 0.0
        %v7123 = vand.u32 %v6759, 4294901760
        %7124 = vmatmul.mubr.f32.gmra.mrb[0].mxu0 %v7123
        %v7125 = vpop.f32.mrb[0].mxu0
        %v7126 = vadd.f32 %v6928, %v7125
        %v7127 = vpop.f32.mrb[0].mxu0
        %7128 = vmatprep.mubr.f32.mxu0 0.0
        %v7129 = vand.u32 %v6762, 4294901760
        %7130 = vmatmul.mubr.f32.gmra.mrb[0].mxu0 %v7129
        %v7131 = vpop.f32.mrb[0].mxu0
        %v7132 = vadd.f32 %v6938, %v7131
        %v7133 = vpop.f32.mrb[0].mxu0
        %7134 = vmatprep.mubr.f32.mxu0 0.0
        %v7135 = vand.u32 %v6765, 4294901760
        %7136 = vmatmul.mubr.f32.gmra.mrb[0].mxu0 %v7135
        %v7137 = vpop.f32.mrb[0].mxu0
        %v7138 = vadd.f32 %v6948, %v7137
        %v7139 = vpop.f32.mrb[0].mxu0
        %7140 = vmatprep.mubr.f32.mxu0 0.0
        %v7141 = vand.u32 %v6768, 4294901760
        %7142 = vmatmul.mubr.f32.gmra.mrb[0].mxu0 %v7141
        %v7143 = vpop.f32.mrb[0].mxu0
        %v7144 = vadd.f32 %v6958, %v7143
        %v7145 = vpop.f32.mrb[0].mxu0
        %7146 = vmatprep.mubr.f32.mxu0 0.0
        %v7147 = vand.u32 %v6771, 4294901760
        %7148 = vmatmul.mubr.f32.gmra.mrb[0].mxu0 %v7147
        %v7149 = vpop.f32.mrb[0].mxu0
        %v7150 = vadd.f32 %v6968, %v7149
        %v7151 = vpop.f32.mrb[0].mxu0
        %7152 = vmatprep.mubr.f32.mxu0 0.0
        %v7153 = vand.u32 %v6774, 4294901760
        %7154 = vmatmul.mubr.f32.gmra.mrb[0].mxu0 %v7153
        %v7155 = vpop.f32.mrb[0].mxu0
        %v7156 = vadd.f32 %v6978, %v7155
        %v7157 = vpop.f32.mrb[0].mxu0
        %7158 = vmatprep.mubr.f32.mxu0 0.0
        %v7159 = vand.u32 %v6777, 4294901760
        %7160 = vmatmul.mubr.f32.gmra.mrb[0].mxu0 %v7159
        %v7161 = vpop.f32.mrb[0].mxu0
        %v7162 = vadd.f32 %v6988, %v7161
        %v7163 = vpop.f32.mrb[0].mxu0
        %7164 = vmatprep.mubr.f32.mxu0 0.0
        %v7165 = vand.u32 %v6780, 4294901760
        %7166 = vmatmul.mubr.f32.gmra.mrb[0].mxu0 %v7165
        %v7167 = vpop.f32.mrb[0].mxu0
        %v7168 = vadd.f32 %v6998, %v7167
        %v7169 = vpop.f32.mrb[0].mxu0
        %7170 = vmatprep.mubr.f32.mxu0 0.0
        %v7171 = vand.u32 %v6783, 4294901760
        %7172 = vmatmul.mubr.f32.gmra.mrb[0].mxu0 %v7171
        %v7173 = vpop.f32.mrb[0].mxu0
        %v7174 = vadd.f32 %v7008, %v7173
        %v7175 = vpop.f32.mrb[0].mxu0
        %7176 = vdwg.mxu0
        %7177 = vmatprep.subr.mxu0 0.0
        %v7178 = vand.u32 %v6624, 4294901760
        %v7179 = vsub.f32 %v6624, %v7178
        %7180 = vmatpush1.msra.mxu0 %v7179
        %7181 = vmatprep.subr.mxu0 0.0
        %7182 = vmatpush1.msra.mxu0 0.0
        %7183 = vmatprep.subr.mxu0 0.0
        %7184 = vmatpush1.msra.mxu0 0.0
        %7185 = vmatprep.subr.mxu0 0.0
        %7186 = vmatpush1.msra.mxu0 0.0
        %7187 = vmatprep.subr.mxu0 0.0
        %7188 = vmatpush1.msra.mxu0 0.0
        %7189 = vmatprep.subr.mxu0 0.0
        %7190 = vmatpush1.msra.mxu0 0.0
        %7191 = vmatprep.subr.mxu0 0.0
        %7192 = vmatpush1.msra.mxu0 0.0
        %7193 = vmatprep.subr.mxu0 0.0
        %7194 = vmatpush1.msra.mxu0 0.0
        %7195 = vmatprep.subr.mxu0 0.0
        %7196 = vmatpush1.msra.mxu0 0.0
        %7197 = vmatprep.subr.mxu0 0.0
        %7198 = vmatpush1.msra.mxu0 0.0
        %7199 = vmatprep.subr.mxu0 0.0
        %7200 = vmatpush1.msra.mxu0 0.0
        %7201 = vmatprep.subr.mxu0 0.0
        %7202 = vmatpush1.msra.mxu0 0.0
        %7203 = vmatprep.subr.mxu0 0.0
        %7204 = vmatpush1.msra.mxu0 0.0
        %7205 = vmatprep.subr.mxu0 0.0
        %7206 = vmatpush1.msra.mxu0 0.0
        %7207 = vmatprep.subr.mxu0 0.0
        %7208 = vmatpush1.msra.mxu0 0.0
        %7209 = vmatprep.subr.mxu0 0.0
        %7210 = vmatpush1.msra.mxu0 0.0
        %7211 = vmatprep.subr.mxu0 0.0
        %7212 = vmatpush1.msra.mxu0 0.0
        %7213 = vmatprep.subr.mxu0 0.0
        %7214 = vmatpush1.msra.mxu0 0.0
        %7215 = vmatprep.subr.mxu0 0.0
        %7216 = vmatpush1.msra.mxu0 0.0
        %7217 = vmatprep.subr.mxu0 0.0
        %7218 = vmatpush1.msra.mxu0 0.0
        %7219 = vmatprep.subr.mxu0 0.0
        %7220 = vmatpush1.msra.mxu0 0.0
        %7221 = vmatprep.subr.mxu0 0.0
        %7222 = vmatpush1.msra.mxu0 0.0
        %7223 = vmatprep.subr.mxu0 0.0
        %7224 = vmatpush1.msra.mxu0 0.0
        %7225 = vmatprep.subr.mxu0 0.0
        %7226 = vmatpush1.msra.mxu0 0.0
        %7227 = vmatprep.subr.mxu0 0.0
        %7228 = vmatpush1.msra.mxu0 0.0
        %7229 = vmatprep.subr.mxu0 0.0
        %7230 = vmatpush1.msra.mxu0 0.0
        %7231 = vmatprep.subr.mxu0 0.0
        %7232 = vmatpush1.msra.mxu0 0.0
        %7233 = vmatprep.subr.mxu0 0.0
        %7234 = vmatpush1.msra.mxu0 0.0
        %7235 = vmatprep.subr.mxu0 0.0
        %7236 = vmatpush1.msra.mxu0 0.0
        %7237 = vmatprep.subr.mxu0 0.0
        %7238 = vmatpush1.msra.mxu0 0.0
        %7239 = vmatprep.subr.mxu0 0.0
        %7240 = vmatpush1.msra.mxu0 0.0
        %7241 = vmatprep.subr.mxu0 0.0
        %7242 = vmatpush1.msra.mxu0 0.0
        %7243 = vmatprep.mubr.f32.mxu0 0.0
        %v7244 = vand.u32 %v6738, 4294901760
        %v7245 = vsub.f32 %v6738, %v7244
        %7246 = vmatmul.mubr.f32.gmra.mrb[0].mxu0 %v7245
        %v7247 = vpop.f32.mrb[0].mxu0
        %v7248 = vadd.f32 %v7084, %v7247
        %v7249 = vpop.f32.mrb[0].mxu0
        %7250 = vmatprep.mubr.f32.mxu0 0.0
        %v7251 = vand.u32 %v6741, 4294901760
        %v7252 = vsub.f32 %v6741, %v7251
        %7253 = vmatmul.mubr.f32.gmra.mrb[0].mxu0 %v7252
        %v7254 = vpop.f32.mrb[0].mxu0
        %v7255 = vadd.f32 %v7090, %v7254
        %v7256 = vpop.f32.mrb[0].mxu0
        %7257 = vmatprep.mubr.f32.mxu0 0.0
        %v7258 = vand.u32 %v6744, 4294901760
        %v7259 = vsub.f32 %v6744, %v7258
        %7260 = vmatmul.mubr.f32.gmra.mrb[0].mxu0 %v7259
        %v7261 = vpop.f32.mrb[0].mxu0
        %v7262 = vadd.f32 %v7096, %v7261
        %v7263 = vpop.f32.mrb[0].mxu0
        %7264 = vmatprep.mubr.f32.mxu0 0.0
        %v7265 = vand.u32 %v6747, 4294901760
        %v7266 = vsub.f32 %v6747, %v7265
        %7267 = vmatmul.mubr.f32.gmra.mrb[0].mxu0 %v7266
        %v7268 = vpop.f32.mrb[0].mxu0
        %v7269 = vadd.f32 %v7102, %v7268
        %v7270 = vpop.f32.mrb[0].mxu0
        %7271 = vmatprep.mubr.f32.mxu0 0.0
        %v7272 = vand.u32 %v6750, 4294901760
        %v7273 = vsub.f32 %v6750, %v7272
        %7274 = vmatmul.mubr.f32.gmra.mrb[0].mxu0 %v7273
        %v7275 = vpop.f32.mrb[0].mxu0
        %v7276 = vadd.f32 %v7108, %v7275
        %v7277 = vpop.f32.mrb[0].mxu0
        %7278 = vmatprep.mubr.f32.mxu0 0.0
        %v7279 = vand.u32 %v6753, 4294901760
        %v7280 = vsub.f32 %v6753, %v7279
        %7281 = vmatmul.mubr.f32.gmra.mrb[0].mxu0 %v7280
        %v7282 = vpop.f32.mrb[0].mxu0
        %v7283 = vadd.f32 %v7114, %v7282
        %v7284 = vpop.f32.mrb[0].mxu0
        %7285 = vmatprep.mubr.f32.mxu0 0.0
        %v7286 = vand.u32 %v6756, 4294901760
        %v7287 = vsub.f32 %v6756, %v7286
        %7288 = vmatmul.mubr.f32.gmra.mrb[0].mxu0 %v7287
        %v7289 = vpop.f32.mrb[0].mxu0
        %v7290 = vadd.f32 %v7120, %v7289
        %v7291 = vpop.f32.mrb[0].mxu0
        %7292 = vmatprep.mubr.f32.mxu0 0.0
        %v7293 = vand.u32 %v6759, 4294901760
        %v7294 = vsub.f32 %v6759, %v7293
        %7295 = vmatmul.mubr.f32.gmra.mrb[0].mxu0 %v7294
        %v7296 = vpop.f32.mrb[0].mxu0
        %v7297 = vadd.f32 %v7126, %v7296
        %v7298 = vpop.f32.mrb[0].mxu0
        %7299 = vmatprep.mubr.f32.mxu0 0.0
        %v7300 = vand.u32 %v6762, 4294901760
        %v7301 = vsub.f32 %v6762, %v7300
        %7302 = vmatmul.mubr.f32.gmra.mrb[0].mxu0 %v7301
        %v7303 = vpop.f32.mrb[0].mxu0
        %v7304 = vadd.f32 %v7132, %v7303
        %v7305 = vpop.f32.mrb[0].mxu0
        %7306 = vmatprep.mubr.f32.mxu0 0.0
        %v7307 = vand.u32 %v6765, 4294901760
        %v7308 = vsub.f32 %v6765, %v7307
        %7309 = vmatmul.mubr.f32.gmra.mrb[0].mxu0 %v7308
        %v7310 = vpop.f32.mrb[0].mxu0
        %v7311 = vadd.f32 %v7138, %v7310
        %v7312 = vpop.f32.mrb[0].mxu0
        %7313 = vmatprep.mubr.f32.mxu0 0.0
        %v7314 = vand.u32 %v6768, 4294901760
        %v7315 = vsub.f32 %v6768, %v7314
        %7316 = vmatmul.mubr.f32.gmra.mrb[0].mxu0 %v7315
        %v7317 = vpop.f32.mrb[0].mxu0
        %v7318 = vadd.f32 %v7144, %v7317
        %v7319 = vpop.f32.mrb[0].mxu0
        %7320 = vmatprep.mubr.f32.mxu0 0.0
        %v7321 = vand.u32 %v6771, 4294901760
        %v7322 = vsub.f32 %v6771, %v7321
        %7323 = vmatmul.mubr.f32.gmra.mrb[0].mxu0 %v7322
        %v7324 = vpop.f32.mrb[0].mxu0
        %v7325 = vadd.f32 %v7150, %v7324
        %v7326 = vpop.f32.mrb[0].mxu0
        %7327 = vmatprep.mubr.f32.mxu0 0.0
        %v7328 = vand.u32 %v6774, 4294901760
        %v7329 = vsub.f32 %v6774, %v7328
        %7330 = vmatmul.mubr.f32.gmra.mrb[0].mxu0 %v7329
        %v7331 = vpop.f32.mrb[0].mxu0
        %v7332 = vadd.f32 %v7156, %v7331
        %v7333 = vpop.f32.mrb[0].mxu0
        %7334 = vmatprep.mubr.f32.mxu0 0.0
        %v7335 = vand.u32 %v6777, 4294901760
        %v7336 = vsub.f32 %v6777, %v7335
        %7337 = vmatmul.mubr.f32.gmra.mrb[0].mxu0 %v7336
        %v7338 = vpop.f32.mrb[0].mxu0
        %v7339 = vadd.f32 %v7162, %v7338
        %v7340 = vpop.f32.mrb[0].mxu0
        %7341 = vmatprep.mubr.f32.mxu0 0.0
        %v7342 = vand.u32 %v6780, 4294901760
        %v7343 = vsub.f32 %v6780, %v7342
        %7344 = vmatmul.mubr.f32.gmra.mrb[0].mxu0 %v7343
        %v7345 = vpop.f32.mrb[0].mxu0
        %v7346 = vadd.f32 %v7168, %v7345
        %v7347 = vpop.f32.mrb[0].mxu0
        %7348 = vmatprep.mubr.f32.mxu0 0.0
        %v7349 = vand.u32 %v6783, 4294901760
        %v7350 = vsub.f32 %v6783, %v7349
        %7351 = vmatmul.mubr.f32.gmra.mrb[0].mxu0 %v7350
        %v7352 = vpop.f32.mrb[0].mxu0
        %v7353 = vadd.f32 %v7174, %v7352
        %v7354 = vpop.f32.mrb[0].mxu0
        %7355 = vdwg.mxu0
        %7356 = vmatprep.subr.mxu0 0.0
        %v7357 = vand.u32 %v6624, 4294901760
        %7358 = vmatpush1.msra.mxu0 %v7357
        %7359 = vmatprep.subr.mxu0 0.0
        %7360 = vmatpush1.msra.mxu0 0.0
        %7361 = vmatprep.subr.mxu0 0.0
        %7362 = vmatpush1.msra.mxu0 0.0
        %7363 = vmatprep.subr.mxu0 0.0
        %7364 = vmatpush1.msra.mxu0 0.0
        %7365 = vmatprep.subr.mxu0 0.0
        %7366 = vmatpush1.msra.mxu0 0.0
        %7367 = vmatprep.subr.mxu0 0.0
        %7368 = vmatpush1.msra.mxu0 0.0
        %7369 = vmatprep.subr.mxu0 0.0
        %7370 = vmatpush1.msra.mxu0 0.0
        %7371 = vmatprep.subr.mxu0 0.0
        %7372 = vmatpush1.msra.mxu0 0.0
        %7373 = vmatprep.subr.mxu0 0.0
        %7374 = vmatpush1.msra.mxu0 0.0
        %7375 = vmatprep.subr.mxu0 0.0
        %7376 = vmatpush1.msra.mxu0 0.0
        %7377 = vmatprep.subr.mxu0 0.0
        %7378 = vmatpush1.msra.mxu0 0.0
        %7379 = vmatprep.subr.mxu0 0.0
        %7380 = vmatpush1.msra.mxu0 0.0
        %7381 = vmatprep.subr.mxu0 0.0
        %7382 = vmatpush1.msra.mxu0 0.0
        %7383 = vmatprep.subr.mxu0 0.0
        %7384 = vmatpush1.msra.mxu0 0.0
        %7385 = vmatprep.subr.mxu0 0.0
        %7386 = vmatpush1.msra.mxu0 0.0
        %7387 = vmatprep.subr.mxu0 0.0
        %7388 = vmatpush1.msra.mxu0 0.0
        %7389 = vmatprep.subr.mxu0 0.0
        %7390 = vmatpush1.msra.mxu0 0.0
        %7391 = vmatprep.subr.mxu0 0.0
        %7392 = vmatpush1.msra.mxu0 0.0
        %7393 = vmatprep.subr.mxu0 0.0
        %7394 = vmatpush1.msra.mxu0 0.0
        %7395 = vmatprep.subr.mxu0 0.0
        %7396 = vmatpush1.msra.mxu0 0.0
        %7397 = vmatprep.subr.mxu0 0.0
        %7398 = vmatpush1.msra.mxu0 0.0
        %7399 = vmatprep.subr.mxu0 0.0
        %7400 = vmatpush1.msra.mxu0 0.0
        %7401 = vmatprep.subr.mxu0 0.0
        %7402 = vmatpush1.msra.mxu0 0.0
        %7403 = vmatprep.subr.mxu0 0.0
        %7404 = vmatpush1.msra.mxu0 0.0
        %7405 = vmatprep.subr.mxu0 0.0
        %7406 = vmatpush1.msra.mxu0 0.0
        %7407 = vmatprep.subr.mxu0 0.0
        %7408 = vmatpush1.msra.mxu0 0.0
        %7409 = vmatprep.subr.mxu0 0.0
        %7410 = vmatpush1.msra.mxu0 0.0
        %7411 = vmatprep.subr.mxu0 0.0
        %7412 = vmatpush1.msra.mxu0 0.0
        %7413 = vmatprep.subr.mxu0 0.0
        %7414 = vmatpush1.msra.mxu0 0.0
        %7415 = vmatprep.subr.mxu0 0.0
        %7416 = vmatpush1.msra.mxu0 0.0
        %7417 = vmatprep.subr.mxu0 0.0
        %7418 = vmatpush1.msra.mxu0 0.0
        %7419 = vmatprep.subr.mxu0 0.0
        %7420 = vmatpush1.msra.mxu0 0.0
        %7421 = vmatprep.mubr.f32.mxu0 0.0
        %v7422 = vand.u32 %v6738, 4294901760
        %v7423 = vsub.f32 %v6738, %v7422
        %v7424 = vand.u32 %v7423, 4294901760
        %7425 = vmatmul.mubr.f32.gmra.mrb[0].mxu0 %v7424
        %v7426 = vpop.f32.mrb[0].mxu0
        %v7427 = vadd.f32 %v7248, %v7426
        %v7428 = vpop.f32.mrb[0].mxu0
        %7429 = vmatprep.mubr.f32.mxu0 0.0
        %v7430 = vand.u32 %v6741, 4294901760
        %v7431 = vsub.f32 %v6741, %v7430
        %v7432 = vand.u32 %v7431, 4294901760
        %7433 = vmatmul.mubr.f32.gmra.mrb[0].mxu0 %v7432
        %v7434 = vpop.f32.mrb[0].mxu0
        %v7435 = vadd.f32 %v7255, %v7434
        %v7436 = vpop.f32.mrb[0].mxu0
        %7437 = vmatprep.mubr.f32.mxu0 0.0
        %v7438 = vand.u32 %v6744, 4294901760
        %v7439 = vsub.f32 %v6744, %v7438
        %v7440 = vand.u32 %v7439, 4294901760
        %7441 = vmatmul.mubr.f32.gmra.mrb[0].mxu0 %v7440
        %v7442 = vpop.f32.mrb[0].mxu0
        %v7443 = vadd.f32 %v7262, %v7442
        %v7444 = vpop.f32.mrb[0].mxu0
        %7445 = vmatprep.mubr.f32.mxu0 0.0
        %v7446 = vand.u32 %v6747, 4294901760
        %v7447 = vsub.f32 %v6747, %v7446
        %v7448 = vand.u32 %v7447, 4294901760
        %7449 = vmatmul.mubr.f32.gmra.mrb[0].mxu0 %v7448
        %v7450 = vpop.f32.mrb[0].mxu0
        %v7451 = vadd.f32 %v7269, %v7450
        %v7452 = vpop.f32.mrb[0].mxu0
        %7453 = vmatprep.mubr.f32.mxu0 0.0
        %v7454 = vand.u32 %v6750, 4294901760
        %v7455 = vsub.f32 %v6750, %v7454
        %v7456 = vand.u32 %v7455, 4294901760
        %7457 = vmatmul.mubr.f32.gmra.mrb[0].mxu0 %v7456
        %v7458 = vpop.f32.mrb[0].mxu0
        %v7459 = vadd.f32 %v7276, %v7458
        %v7460 = vpop.f32.mrb[0].mxu0
        %7461 = vmatprep.mubr.f32.mxu0 0.0
        %v7462 = vand.u32 %v6753, 4294901760
        %v7463 = vsub.f32 %v6753, %v7462
        %v7464 = vand.u32 %v7463, 4294901760
        %7465 = vmatmul.mubr.f32.gmra.mrb[0].mxu0 %v7464
        %v7466 = vpop.f32.mrb[0].mxu0
        %v7467 = vadd.f32 %v7283, %v7466
        %v7468 = vpop.f32.mrb[0].mxu0
        %7469 = vmatprep.mubr.f32.mxu0 0.0
        %v7470 = vand.u32 %v6756, 4294901760
        %v7471 = vsub.f32 %v6756, %v7470
        %v7472 = vand.u32 %v7471, 4294901760
        %7473 = vmatmul.mubr.f32.gmra.mrb[0].mxu0 %v7472
        %v7474 = vpop.f32.mrb[0].mxu0
        %v7475 = vadd.f32 %v7290, %v7474
        %v7476 = vpop.f32.mrb[0].mxu0
        %7477 = vmatprep.mubr.f32.mxu0 0.0
        %v7478 = vand.u32 %v6759, 4294901760
        %v7479 = vsub.f32 %v6759, %v7478
        %v7480 = vand.u32 %v7479, 4294901760
        %7481 = vmatmul.mubr.f32.gmra.mrb[0].mxu0 %v7480
        %v7482 = vpop.f32.mrb[0].mxu0
        %v7483 = vadd.f32 %v7297, %v7482
        %v7484 = vpop.f32.mrb[0].mxu0
        %7485 = vmatprep.mubr.f32.mxu0 0.0
        %v7486 = vand.u32 %v6762, 4294901760
        %v7487 = vsub.f32 %v6762, %v7486
        %v7488 = vand.u32 %v7487, 4294901760
        %7489 = vmatmul.mubr.f32.gmra.mrb[0].mxu0 %v7488
        %v7490 = vpop.f32.mrb[0].mxu0
        %v7491 = vadd.f32 %v7304, %v7490
        %v7492 = vpop.f32.mrb[0].mxu0
        %7493 = vmatprep.mubr.f32.mxu0 0.0
        %v7494 = vand.u32 %v6765, 4294901760
        %v7495 = vsub.f32 %v6765, %v7494
        %v7496 = vand.u32 %v7495, 4294901760
        %7497 = vmatmul.mubr.f32.gmra.mrb[0].mxu0 %v7496
        %v7498 = vpop.f32.mrb[0].mxu0
        %v7499 = vadd.f32 %v7311, %v7498
        %v7500 = vpop.f32.mrb[0].mxu0
        %7501 = vmatprep.mubr.f32.mxu0 0.0
        %v7502 = vand.u32 %v6768, 4294901760
        %v7503 = vsub.f32 %v6768, %v7502
        %v7504 = vand.u32 %v7503, 4294901760
        %7505 = vmatmul.mubr.f32.gmra.mrb[0].mxu0 %v7504
        %v7506 = vpop.f32.mrb[0].mxu0
        %v7507 = vadd.f32 %v7318, %v7506
        %v7508 = vpop.f32.mrb[0].mxu0
        %7509 = vmatprep.mubr.f32.mxu0 0.0
        %v7510 = vand.u32 %v6771, 4294901760
        %v7511 = vsub.f32 %v6771, %v7510
        %v7512 = vand.u32 %v7511, 4294901760
        %7513 = vmatmul.mubr.f32.gmra.mrb[0].mxu0 %v7512
        %v7514 = vpop.f32.mrb[0].mxu0
        %v7515 = vadd.f32 %v7325, %v7514
        %v7516 = vpop.f32.mrb[0].mxu0
        %7517 = vmatprep.mubr.f32.mxu0 0.0
        %v7518 = vand.u32 %v6774, 4294901760
        %v7519 = vsub.f32 %v6774, %v7518
        %v7520 = vand.u32 %v7519, 4294901760
        %7521 = vmatmul.mubr.f32.gmra.mrb[0].mxu0 %v7520
        %v7522 = vpop.f32.mrb[0].mxu0
        %v7523 = vadd.f32 %v7332, %v7522
        %v7524 = vpop.f32.mrb[0].mxu0
        %7525 = vmatprep.mubr.f32.mxu0 0.0
        %v7526 = vand.u32 %v6777, 4294901760
        %v7527 = vsub.f32 %v6777, %v7526
        %v7528 = vand.u32 %v7527, 4294901760
        %7529 = vmatmul.mubr.f32.gmra.mrb[0].mxu0 %v7528
        %v7530 = vpop.f32.mrb[0].mxu0
        %v7531 = vadd.f32 %v7339, %v7530
        %v7532 = vpop.f32.mrb[0].mxu0
        %7533 = vmatprep.mubr.f32.mxu0 0.0
        %v7534 = vand.u32 %v6780, 4294901760
        %v7535 = vsub.f32 %v6780, %v7534
        %v7536 = vand.u32 %v7535, 4294901760
        %7537 = vmatmul.mubr.f32.gmra.mrb[0].mxu0 %v7536
        %v7538 = vpop.f32.mrb[0].mxu0
        %v7539 = vadd.f32 %v7346, %v7538
        %v7540 = vpop.f32.mrb[0].mxu0
        %7541 = vmatprep.mubr.f32.mxu0 0.0
        %v7542 = vand.u32 %v6783, 4294901760
        %v7543 = vsub.f32 %v6783, %v7542
        %v7544 = vand.u32 %v7543, 4294901760
        %7545 = vmatmul.mubr.f32.gmra.mrb[0].mxu0 %v7544
        %v7546 = vpop.f32.mrb[0].mxu0
        %v7547 = vadd.f32 %v7353, %v7546
        %v7548 = vpop.f32.mrb[0].mxu0
        %7549 = vdwg.mxu0
        %7550 = vmatprep.subr.mxu0 0.0
        %v7551 = vand.u32 %v6624, 4294901760
        %v7552 = vsub.f32 %v6624, %v7551
        %v7553 = vand.u32 %v7552, 4294901760
        %7554 = vmatpush1.msra.mxu0 %v7553
        %7555 = vmatprep.subr.mxu0 0.0
        %7556 = vmatpush1.msra.mxu0 0.0
        %7557 = vmatprep.subr.mxu0 0.0
        %7558 = vmatpush1.msra.mxu0 0.0
        %7559 = vmatprep.subr.mxu0 0.0
        %7560 = vmatpush1.msra.mxu0 0.0
        %7561 = vmatprep.subr.mxu0 0.0
        %7562 = vmatpush1.msra.mxu0 0.0
        %7563 = vmatprep.subr.mxu0 0.0
        %7564 = vmatpush1.msra.mxu0 0.0
        %7565 = vmatprep.subr.mxu0 0.0
        %7566 = vmatpush1.msra.mxu0 0.0
        %7567 = vmatprep.subr.mxu0 0.0
        %7568 = vmatpush1.msra.mxu0 0.0
        %7569 = vmatprep.subr.mxu0 0.0
        %7570 = vmatpush1.msra.mxu0 0.0
        %7571 = vmatprep.subr.mxu0 0.0
        %7572 = vmatpush1.msra.mxu0 0.0
        %7573 = vmatprep.subr.mxu0 0.0
        %7574 = vmatpush1.msra.mxu0 0.0
        %7575 = vmatprep.subr.mxu0 0.0
        %7576 = vmatpush1.msra.mxu0 0.0
        %7577 = vmatprep.subr.mxu0 0.0
        %7578 = vmatpush1.msra.mxu0 0.0
        %7579 = vmatprep.subr.mxu0 0.0
        %7580 = vmatpush1.msra.mxu0 0.0
        %7581 = vmatprep.subr.mxu0 0.0
        %7582 = vmatpush1.msra.mxu0 0.0
        %7583 = vmatprep.subr.mxu0 0.0
        %7584 = vmatpush1.msra.mxu0 0.0
        %7585 = vmatprep.subr.mxu0 0.0
        %7586 = vmatpush1.msra.mxu0 0.0
        %7587 = vmatprep.subr.mxu0 0.0
        %7588 = vmatpush1.msra.mxu0 0.0
        %7589 = vmatprep.subr.mxu0 0.0
        %7590 = vmatpush1.msra.mxu0 0.0
        %7591 = vmatprep.subr.mxu0 0.0
        %7592 = vmatpush1.msra.mxu0 0.0
        %7593 = vmatprep.subr.mxu0 0.0
        %7594 = vmatpush1.msra.mxu0 0.0
        %7595 = vmatprep.subr.mxu0 0.0
        %7596 = vmatpush1.msra.mxu0 0.0
        %7597 = vmatprep.subr.mxu0 0.0
        %7598 = vmatpush1.msra.mxu0 0.0
        %7599 = vmatprep.subr.mxu0 0.0
        %7600 = vmatpush1.msra.mxu0 0.0
        %7601 = vmatprep.subr.mxu0 0.0
        %7602 = vmatpush1.msra.mxu0 0.0
        %7603 = vmatprep.subr.mxu0 0.0
        %7604 = vmatpush1.msra.mxu0 0.0
        %7605 = vmatprep.subr.mxu0 0.0
        %7606 = vmatpush1.msra.mxu0 0.0
        %7607 = vmatprep.subr.mxu0 0.0
        %7608 = vmatpush1.msra.mxu0 0.0
        %7609 = vmatprep.subr.mxu0 0.0
        %7610 = vmatpush1.msra.mxu0 0.0
        %7611 = vmatprep.subr.mxu0 0.0
        %7612 = vmatpush1.msra.mxu0 0.0
        %7613 = vmatprep.subr.mxu0 0.0
        %7614 = vmatpush1.msra.mxu0 0.0
        %7615 = vmatprep.subr.mxu0 0.0
        %7616 = vmatpush1.msra.mxu0 0.0
        %7617 = vmatprep.mubr.f32.mxu0 0.0
        %v7618 = vand.u32 %v6738, 4294901760
        %7619 = vmatmul.mubr.f32.gmra.mrb[0].mxu0 %v7618
        %v7620 = vpop.f32.mrb[0].mxu0
        %v7621 = vadd.f32 %v7427, %v7620
        %v7622 = vpop.f32.mrb[0].mxu0
        %7623 = vmatprep.mubr.f32.mxu0 0.0
        %v7624 = vand.u32 %v6741, 4294901760
        %7625 = vmatmul.mubr.f32.gmra.mrb[0].mxu0 %v7624
        %v7626 = vpop.f32.mrb[0].mxu0
        %v7627 = vadd.f32 %v7435, %v7626
        %v7628 = vpop.f32.mrb[0].mxu0
        %7629 = vmatprep.mubr.f32.mxu0 0.0
        %v7630 = vand.u32 %v6744, 4294901760
        %7631 = vmatmul.mubr.f32.gmra.mrb[0].mxu0 %v7630
        %v7632 = vpop.f32.mrb[0].mxu0
        %v7633 = vadd.f32 %v7443, %v7632
        %v7634 = vpop.f32.mrb[0].mxu0
        %7635 = vmatprep.mubr.f32.mxu0 0.0
        %v7636 = vand.u32 %v6747, 4294901760
        %7637 = vmatmul.mubr.f32.gmra.mrb[0].mxu0 %v7636
        %v7638 = vpop.f32.mrb[0].mxu0
        %v7639 = vadd.f32 %v7451, %v7638
        %v7640 = vpop.f32.mrb[0].mxu0
        %7641 = vmatprep.mubr.f32.mxu0 0.0
        %v7642 = vand.u32 %v6750, 4294901760
        %7643 = vmatmul.mubr.f32.gmra.mrb[0].mxu0 %v7642
        %v7644 = vpop.f32.mrb[0].mxu0
        %v7645 = vadd.f32 %v7459, %v7644
        %v7646 = vpop.f32.mrb[0].mxu0
        %7647 = vmatprep.mubr.f32.mxu0 0.0
        %v7648 = vand.u32 %v6753, 4294901760
        %7649 = vmatmul.mubr.f32.gmra.mrb[0].mxu0 %v7648
        %v7650 = vpop.f32.mrb[0].mxu0
        %v7651 = vadd.f32 %v7467, %v7650
        %v7652 = vpop.f32.mrb[0].mxu0
        %7653 = vmatprep.mubr.f32.mxu0 0.0
        %v7654 = vand.u32 %v6756, 4294901760
        %7655 = vmatmul.mubr.f32.gmra.mrb[0].mxu0 %v7654
        %v7656 = vpop.f32.mrb[0].mxu0
        %v7657 = vadd.f32 %v7475, %v7656
        %v7658 = vpop.f32.mrb[0].mxu0
        %7659 = vmatprep.mubr.f32.mxu0 0.0
        %v7660 = vand.u32 %v6759, 4294901760
        %7661 = vmatmul.mubr.f32.gmra.mrb[0].mxu0 %v7660
        %v7662 = vpop.f32.mrb[0].mxu0
        %v7663 = vadd.f32 %v7483, %v7662
        %v7664 = vpop.f32.mrb[0].mxu0
        %7665 = vmatprep.mubr.f32.mxu0 0.0
        %v7666 = vand.u32 %v6762, 4294901760
        %7667 = vmatmul.mubr.f32.gmra.mrb[0].mxu0 %v7666
        %v7668 = vpop.f32.mrb[0].mxu0
        %v7669 = vadd.f32 %v7491, %v7668
        %v7670 = vpop.f32.mrb[0].mxu0
        %7671 = vmatprep.mubr.f32.mxu0 0.0
        %v7672 = vand.u32 %v6765, 4294901760
        %7673 = vmatmul.mubr.f32.gmra.mrb[0].mxu0 %v7672
        %v7674 = vpop.f32.mrb[0].mxu0
        %v7675 = vadd.f32 %v7499, %v7674
        %v7676 = vpop.f32.mrb[0].mxu0
        %7677 = vmatprep.mubr.f32.mxu0 0.0
        %v7678 = vand.u32 %v6768, 4294901760
        %7679 = vmatmul.mubr.f32.gmra.mrb[0].mxu0 %v7678
        %v7680 = vpop.f32.mrb[0].mxu0
        %v7681 = vadd.f32 %v7507, %v7680
        %v7682 = vpop.f32.mrb[0].mxu0
        %7683 = vmatprep.mubr.f32.mxu0 0.0
        %v7684 = vand.u32 %v6771, 4294901760
        %7685 = vmatmul.mubr.f32.gmra.mrb[0].mxu0 %v7684
        %v7686 = vpop.f32.mrb[0].mxu0
        %v7687 = vadd.f32 %v7515, %v7686
        %v7688 = vpop.f32.mrb[0].mxu0
        %7689 = vmatprep.mubr.f32.mxu0 0.0
        %v7690 = vand.u32 %v6774, 4294901760
        %7691 = vmatmul.mubr.f32.gmra.mrb[0].mxu0 %v7690
        %v7692 = vpop.f32.mrb[0].mxu0
        %v7693 = vadd.f32 %v7523, %v7692
        %v7694 = vpop.f32.mrb[0].mxu0
        %7695 = vmatprep.mubr.f32.mxu0 0.0
        %v7696 = vand.u32 %v6777, 4294901760
        %7697 = vmatmul.mubr.f32.gmra.mrb[0].mxu0 %v7696
        %v7698 = vpop.f32.mrb[0].mxu0
        %v7699 = vadd.f32 %v7531, %v7698
        %v7700 = vpop.f32.mrb[0].mxu0
        %7701 = vmatprep.mubr.f32.mxu0 0.0
        %v7702 = vand.u32 %v6780, 4294901760
        %7703 = vmatmul.mubr.f32.gmra.mrb[0].mxu0 %v7702
        %v7704 = vpop.f32.mrb[0].mxu0
        %v7705 = vadd.f32 %v7539, %v7704
        %v7706 = vpop.f32.mrb[0].mxu0
        %7707 = vmatprep.mubr.f32.mxu0 0.0
        %v7708 = vand.u32 %v6783, 4294901760
        %7709 = vmatmul.mubr.f32.gmra.mrb[0].mxu0 %v7708
        %v7710 = vpop.f32.mrb[0].mxu0
        %v7711 = vadd.f32 %v7547, %v7710
        %v7712 = vpop.f32.mrb[0].mxu0
        %7713 = vdwg.mxu0
        %7714 = vmatprep.subr.mxu0 0.0
        %v7715 = vand.u32 %v6624, 4294901760
        %7716 = vmatpush1.msra.mxu0 %v7715
        %7717 = vmatprep.subr.mxu0 0.0
        %7718 = vmatpush1.msra.mxu0 0.0
        %7719 = vmatprep.subr.mxu0 0.0
        %7720 = vmatpush1.msra.mxu0 0.0
        %7721 = vmatprep.subr.mxu0 0.0
        %7722 = vmatpush1.msra.mxu0 0.0
        %7723 = vmatprep.subr.mxu0 0.0
        %7724 = vmatpush1.msra.mxu0 0.0
        %7725 = vmatprep.subr.mxu0 0.0
        %7726 = vmatpush1.msra.mxu0 0.0
        %7727 = vmatprep.subr.mxu0 0.0
        %7728 = vmatpush1.msra.mxu0 0.0
        %7729 = vmatprep.subr.mxu0 0.0
        %7730 = vmatpush1.msra.mxu0 0.0
        %7731 = vmatprep.subr.mxu0 0.0
        %7732 = vmatpush1.msra.mxu0 0.0
        %7733 = vmatprep.subr.mxu0 0.0
        %7734 = vmatpush1.msra.mxu0 0.0
        %7735 = vmatprep.subr.mxu0 0.0
        %7736 = vmatpush1.msra.mxu0 0.0
        %7737 = vmatprep.subr.mxu0 0.0
        %7738 = vmatpush1.msra.mxu0 0.0
        %7739 = vmatprep.subr.mxu0 0.0
        %7740 = vmatpush1.msra.mxu0 0.0
        %7741 = vmatprep.subr.mxu0 0.0
        %7742 = vmatpush1.msra.mxu0 0.0
        %7743 = vmatprep.subr.mxu0 0.0
        %7744 = vmatpush1.msra.mxu0 0.0
        %7745 = vmatprep.subr.mxu0 0.0
        %7746 = vmatpush1.msra.mxu0 0.0
        %7747 = vmatprep.subr.mxu0 0.0
        %7748 = vmatpush1.msra.mxu0 0.0
        %7749 = vmatprep.subr.mxu0 0.0
        %7750 = vmatpush1.msra.mxu0 0.0
        %7751 = vmatprep.subr.mxu0 0.0
        %7752 = vmatpush1.msra.mxu0 0.0
        %7753 = vmatprep.subr.mxu0 0.0
        %7754 = vmatpush1.msra.mxu0 0.0
        %7755 = vmatprep.subr.mxu0 0.0
        %7756 = vmatpush1.msra.mxu0 0.0
        %7757 = vmatprep.subr.mxu0 0.0
        %7758 = vmatpush1.msra.mxu0 0.0
        %7759 = vmatprep.subr.mxu0 0.0
        %7760 = vmatpush1.msra.mxu0 0.0
        %7761 = vmatprep.subr.mxu0 0.0
        %7762 = vmatpush1.msra.mxu0 0.0
        %7763 = vmatprep.subr.mxu0 0.0
        %7764 = vmatpush1.msra.mxu0 0.0
        %7765 = vmatprep.subr.mxu0 0.0
        %7766 = vmatpush1.msra.mxu0 0.0
        %7767 = vmatprep.subr.mxu0 0.0
        %7768 = vmatpush1.msra.mxu0 0.0
        %7769 = vmatprep.subr.mxu0 0.0
        %7770 = vmatpush1.msra.mxu0 0.0
        %7771 = vmatprep.subr.mxu0 0.0
        %7772 = vmatpush1.msra.mxu0 0.0
        %7773 = vmatprep.subr.mxu0 0.0
        %7774 = vmatpush1.msra.mxu0 0.0
        %7775 = vmatprep.subr.mxu0 0.0
        %7776 = vmatpush1.msra.mxu0 0.0
        %7777 = vmatprep.subr.mxu0 0.0
        %7778 = vmatpush1.msra.mxu0 0.0
        %7779 = vmatprep.mubr.f32.mxu0 0.0
        %v7780 = vand.u32 %v6738, 4294901760
        %7781 = vmatmul.mubr.f32.gmra.mrb[0].mxu0 %v7780
        %v7782 = vpop.f32.mrb[0].mxu0
        %v7783 = vadd.f32 %v7621, %v7782
        %v7784 = vpop.f32.mrb[0].mxu0
        %7785 = vmatprep.mubr.f32.mxu0 0.0
        %v7786 = vand.u32 %v6741, 4294901760
        %7787 = vmatmul.mubr.f32.gmra.mrb[0].mxu0 %v7786
        %v7788 = vpop.f32.mrb[0].mxu0
        %v7789 = vadd.f32 %v7627, %v7788
        %v7790 = vpop.f32.mrb[0].mxu0
        %7791 = vmatprep.mubr.f32.mxu0 0.0
        %v7792 = vand.u32 %v6744, 4294901760
        %7793 = vmatmul.mubr.f32.gmra.mrb[0].mxu0 %v7792
        %v7794 = vpop.f32.mrb[0].mxu0
        %v7795 = vadd.f32 %v7633, %v7794
        %v7796 = vpop.f32.mrb[0].mxu0
        %7797 = vmatprep.mubr.f32.mxu0 0.0
        %v7798 = vand.u32 %v6747, 4294901760
        %7799 = vmatmul.mubr.f32.gmra.mrb[0].mxu0 %v7798
        %v7800 = vpop.f32.mrb[0].mxu0
        %v7801 = vadd.f32 %v7639, %v7800
        %v7802 = vpop.f32.mrb[0].mxu0
        %7803 = vmatprep.mubr.f32.mxu0 0.0
        %v7804 = vand.u32 %v6750, 4294901760
        %7805 = vmatmul.mubr.f32.gmra.mrb[0].mxu0 %v7804
        %v7806 = vpop.f32.mrb[0].mxu0
        %v7807 = vadd.f32 %v7645, %v7806
        %v7808 = vpop.f32.mrb[0].mxu0
        %7809 = vmatprep.mubr.f32.mxu0 0.0
        %v7810 = vand.u32 %v6753, 4294901760
        %7811 = vmatmul.mubr.f32.gmra.mrb[0].mxu0 %v7810
        %v7812 = vpop.f32.mrb[0].mxu0
        %v7813 = vadd.f32 %v7651, %v7812
        %v7814 = vpop.f32.mrb[0].mxu0
        %7815 = vmatprep.mubr.f32.mxu0 0.0
        %v7816 = vand.u32 %v6756, 4294901760
        %7817 = vmatmul.mubr.f32.gmra.mrb[0].mxu0 %v7816
        %v7818 = vpop.f32.mrb[0].mxu0
        %v7819 = vadd.f32 %v7657, %v7818
        %v7820 = vpop.f32.mrb[0].mxu0
        %7821 = vmatprep.mubr.f32.mxu0 0.0
        %v7822 = vand.u32 %v6759, 4294901760
        %7823 = vmatmul.mubr.f32.gmra.mrb[0].mxu0 %v7822
        %v7824 = vpop.f32.mrb[0].mxu0
        %v7825 = vadd.f32 %v7663, %v7824
        %v7826 = vpop.f32.mrb[0].mxu0
        %7827 = vmatprep.mubr.f32.mxu0 0.0
        %v7828 = vand.u32 %v6762, 4294901760
        %7829 = vmatmul.mubr.f32.gmra.mrb[0].mxu0 %v7828
        %v7830 = vpop.f32.mrb[0].mxu0
        %v7831 = vadd.f32 %v7669, %v7830
        %v7832 = vpop.f32.mrb[0].mxu0
        %7833 = vmatprep.mubr.f32.mxu0 0.0
        %v7834 = vand.u32 %v6765, 4294901760
        %7835 = vmatmul.mubr.f32.gmra.mrb[0].mxu0 %v7834
        %v7836 = vpop.f32.mrb[0].mxu0
        %v7837 = vadd.f32 %v7675, %v7836
        %v7838 = vpop.f32.mrb[0].mxu0
        %7839 = vmatprep.mubr.f32.mxu0 0.0
        %v7840 = vand.u32 %v6768, 4294901760
        %7841 = vmatmul.mubr.f32.gmra.mrb[0].mxu0 %v7840
        %v7842 = vpop.f32.mrb[0].mxu0
        %v7843 = vadd.f32 %v7681, %v7842
        %v7844 = vpop.f32.mrb[0].mxu0
        %7845 = vmatprep.mubr.f32.mxu0 0.0
        %v7846 = vand.u32 %v6771, 4294901760
        %7847 = vmatmul.mubr.f32.gmra.mrb[0].mxu0 %v7846
        %v7848 = vpop.f32.mrb[0].mxu0
        %v7849 = vadd.f32 %v7687, %v7848
        %v7850 = vpop.f32.mrb[0].mxu0
        %7851 = vmatprep.mubr.f32.mxu0 0.0
        %v7852 = vand.u32 %v6774, 4294901760
        %7853 = vmatmul.mubr.f32.gmra.mrb[0].mxu0 %v7852
        %v7854 = vpop.f32.mrb[0].mxu0
        %v7855 = vadd.f32 %v7693, %v7854
        %v7856 = vpop.f32.mrb[0].mxu0
        %7857 = vmatprep.mubr.f32.mxu0 0.0
        %v7858 = vand.u32 %v6777, 4294901760
        %7859 = vmatmul.mubr.f32.gmra.mrb[0].mxu0 %v7858
        %v7860 = vpop.f32.mrb[0].mxu0
        %v7861 = vadd.f32 %v7699, %v7860
        %v7862 = vpop.f32.mrb[0].mxu0
        %7863 = vmatprep.mubr.f32.mxu0 0.0
        %v7864 = vand.u32 %v6780, 4294901760
        %7865 = vmatmul.mubr.f32.gmra.mrb[0].mxu0 %v7864
        %v7866 = vpop.f32.mrb[0].mxu0
        %v7867 = vadd.f32 %v7705, %v7866
        %v7868 = vpop.f32.mrb[0].mxu0
        %7869 = vmatprep.mubr.f32.mxu0 0.0
        %v7870 = vand.u32 %v6783, 4294901760
        %7871 = vmatmul.mubr.f32.gmra.mrb[0].mxu0 %v7870
        %v7872 = vpop.f32.mrb[0].mxu0
        %v7873 = vadd.f32 %v7711, %v7872
        %v7874 = vpop.f32.mrb[0].mxu0
        %7875 = vdwg.mxu0
        %7876 = vset.pattern.permute.xlu0 1
        %7877 = vperm.xlu0 %7876, %v6592
        %v7878 = vpop.permute.xlu0 %7877
        %7880 = vset.pattern.permute.xlu0 1
        %7881 = vperm.xlu0 %7880, %v6593
        %v7882 = vpop.permute.xlu0 %7881
        %7884 = vset.pattern.permute.xlu0 1
        %7885 = vperm.xlu0 %7884, %v6594
        %v7886 = vpop.permute.xlu0 %7885
        %7888 = vset.pattern.permute.xlu0 1
        %7889 = vperm.xlu0 %7888, %v6595
        %v7890 = vpop.permute.xlu0 %7889
        %7892 = vset.pattern.permute.xlu0 1
        %7893 = vperm.xlu0 %7892, %v6596
        %v7894 = vpop.permute.xlu0 %7893
        %7896 = vset.pattern.permute.xlu0 1
        %7897 = vperm.xlu0 %7896, %v6597
        %v7898 = vpop.permute.xlu0 %7897
        %7900 = vset.pattern.permute.xlu0 1
        %7901 = vperm.xlu0 %7900, %v6598
        %v7902 = vpop.permute.xlu0 %7901
        %7904 = vset.pattern.permute.xlu0 1
        %7905 = vperm.xlu0 %7904, %v6599
        %v7906 = vpop.permute.xlu0 %7905
        %7908 = vset.pattern.permute.xlu0 1
        %7909 = vperm.xlu0 %7908, %v6600
        %v7910 = vpop.permute.xlu0 %7909
        %7912 = vset.pattern.permute.xlu0 1
        %7913 = vperm.xlu0 %7912, %v6601
        %v7914 = vpop.permute.xlu0 %7913
        %7916 = vset.pattern.permute.xlu0 1
        %7917 = vperm.xlu0 %7916, %v6602
        %v7918 = vpop.permute.xlu0 %7917
        %7920 = vset.pattern.permute.xlu0 1
        %7921 = vperm.xlu0 %7920, %v6603
        %v7922 = vpop.permute.xlu0 %7921
        %7924 = vset.pattern.permute.xlu0 1
        %7925 = vperm.xlu0 %7924, %v6604
        %v7926 = vpop.permute.xlu0 %7925
        %7928 = vset.pattern.permute.xlu0 1
        %7929 = vperm.xlu0 %7928, %v6605
        %v7930 = vpop.permute.xlu0 %7929
        %7932 = vset.pattern.permute.xlu0 1
        %7933 = vperm.xlu0 %7932, %v6606
        %v7934 = vpop.permute.xlu0 %7933
        %7936 = vset.pattern.permute.xlu0 1
        %7937 = vperm.xlu0 %7936, %v6607
        %v7938 = vpop.permute.xlu0 %7937
        %v7940 = vmul.f32 %v6625, %v7878
        %v7941 = vmul.f32 %v6626, %v7882
        %v7942 = vmul.f32 %v6627, %v7886
        %v7943 = vmul.f32 %v6628, %v7890
        %v7944 = vmul.f32 %v6629, %v7894
        %v7945 = vmul.f32 %v6630, %v7898
        %v7946 = vmul.f32 %v6631, %v7902
        %v7947 = vmul.f32 %v6632, %v7906
        %v7948 = vmul.f32 %v6633, %v7910
        %v7949 = vmul.f32 %v6634, %v7914
        %v7950 = vmul.f32 %v6635, %v7918
        %v7951 = vmul.f32 %v6636, %v7922
        %v7952 = vmul.f32 %v6637, %v7926
        %v7953 = vmul.f32 %v6638, %v7930
        %v7954 = vmul.f32 %v6639, %v7934
        %v7955 = vmul.f32 %v6640, %v7938
        %7972 = vrot.lane.b32.xlu0 %v7940, 96
        %v7973 = vpop.permute.xlu0 %7972
        %7974 = vrot.lane.b32.xlu0 %v7941, 96
        %v7975 = vpop.permute.xlu0 %7974
        %7976 = vrot.lane.b32.xlu0 %v7942, 96
        %v7977 = vpop.permute.xlu0 %7976
        %7978 = vrot.lane.b32.xlu0 %v7943, 96
        %v7979 = vpop.permute.xlu0 %7978
        %7980 = vrot.lane.b32.xlu0 %v7944, 96
        %v7981 = vpop.permute.xlu0 %7980
        %7982 = vrot.lane.b32.xlu0 %v7945, 96
        %v7983 = vpop.permute.xlu0 %7982
        %7984 = vrot.lane.b32.xlu0 %v7946, 96
        %v7985 = vpop.permute.xlu0 %7984
        %7986 = vrot.lane.b32.xlu0 %v7947, 96
        %v7987 = vpop.permute.xlu0 %7986
        %7988 = vrot.lane.b32.xlu0 %v7948, 96
        %v7989 = vpop.permute.xlu0 %7988
        %7990 = vrot.lane.b32.xlu0 %v7949, 96
        %v7991 = vpop.permute.xlu0 %7990
        %7992 = vrot.lane.b32.xlu0 %v7950, 96
        %v7993 = vpop.permute.xlu0 %7992
        %7994 = vrot.lane.b32.xlu0 %v7951, 96
        %v7995 = vpop.permute.xlu0 %7994
        %7996 = vrot.lane.b32.xlu0 %v7952, 96
        %v7997 = vpop.permute.xlu0 %7996
        %7998 = vrot.lane.b32.xlu0 %v7953, 96
        %v7999 = vpop.permute.xlu0 %7998
        %8000 = vrot.lane.b32.xlu0 %v7954, 96
        %v8001 = vpop.permute.xlu0 %8000
        %8002 = vrot.lane.b32.xlu0 %v7955, 96
        %v8003 = vpop.permute.xlu0 %8002
        %v8020 = vadd.f32 %v7783, %v7973
        %v8021 = vadd.f32 %v7789, %v7975
        %v8022 = vadd.f32 %v7795, %v7977
        %v8023 = vadd.f32 %v7801, %v7979
        %v8024 = vadd.f32 %v7807, %v7981
        %v8025 = vadd.f32 %v7813, %v7983
        %v8026 = vadd.f32 %v7819, %v7985
        %v8027 = vadd.f32 %v7825, %v7987
        %v8028 = vadd.f32 %v7831, %v7989
        %v8029 = vadd.f32 %v7837, %v7991
        %v8030 = vadd.f32 %v7843, %v7993
        %v8031 = vadd.f32 %v7849, %v7995
        %v8032 = vadd.f32 %v7855, %v7997
        %v8033 = vadd.f32 %v7861, %v7999
        %v8034 = vadd.f32 %v7867, %v8001
        %v8035 = vadd.f32 %v7873, %v8003
        %8036 = vset.pattern.permute.xlu0 2
        %8037 = vperm.xlu0 %8036, %v6592
        %v8038 = vpop.permute.xlu0 %8037
        %8040 = vset.pattern.permute.xlu0 2
        %8041 = vperm.xlu0 %8040, %v6593
        %v8042 = vpop.permute.xlu0 %8041
        %8044 = vset.pattern.permute.xlu0 2
        %8045 = vperm.xlu0 %8044, %v6594
        %v8046 = vpop.permute.xlu0 %8045
        %8048 = vset.pattern.permute.xlu0 2
        %8049 = vperm.xlu0 %8048, %v6595
        %v8050 = vpop.permute.xlu0 %8049
        %8052 = vset.pattern.permute.xlu0 2
        %8053 = vperm.xlu0 %8052, %v6596
        %v8054 = vpop.permute.xlu0 %8053
        %8056 = vset.pattern.permute.xlu0 2
        %8057 = vperm.xlu0 %8056, %v6597
        %v8058 = vpop.permute.xlu0 %8057
        %8060 = vset.pattern.permute.xlu0 2
        %8061 = vperm.xlu0 %8060, %v6598
        %v8062 = vpop.permute.xlu0 %8061
        %8064 = vset.pattern.permute.xlu0 2
        %8065 = vperm.xlu0 %8064, %v6599
        %v8066 = vpop.permute.xlu0 %8065
        %8068 = vset.pattern.permute.xlu0 2
        %8069 = vperm.xlu0 %8068, %v6600
        %v8070 = vpop.permute.xlu0 %8069
        %8072 = vset.pattern.permute.xlu0 2
        %8073 = vperm.xlu0 %8072, %v6601
        %v8074 = vpop.permute.xlu0 %8073
        %8076 = vset.pattern.permute.xlu0 2
        %8077 = vperm.xlu0 %8076, %v6602
        %v8078 = vpop.permute.xlu0 %8077
        %8080 = vset.pattern.permute.xlu0 2
        %8081 = vperm.xlu0 %8080, %v6603
        %v8082 = vpop.permute.xlu0 %8081
        %8084 = vset.pattern.permute.xlu0 2
        %8085 = vperm.xlu0 %8084, %v6604
        %v8086 = vpop.permute.xlu0 %8085
        %8088 = vset.pattern.permute.xlu0 2
        %8089 = vperm.xlu0 %8088, %v6605
        %v8090 = vpop.permute.xlu0 %8089
        %8092 = vset.pattern.permute.xlu0 2
        %8093 = vperm.xlu0 %8092, %v6606
        %v8094 = vpop.permute.xlu0 %8093
        %8096 = vset.pattern.permute.xlu0 2
        %8097 = vperm.xlu0 %8096, %v6607
        %v8098 = vpop.permute.xlu0 %8097
        %v8100 = vmul.f32 %v6625, %v8038
        %v8101 = vmul.f32 %v6626, %v8042
        %v8102 = vmul.f32 %v6627, %v8046
        %v8103 = vmul.f32 %v6628, %v8050
        %v8104 = vmul.f32 %v6629, %v8054
        %v8105 = vmul.f32 %v6630, %v8058
        %v8106 = vmul.f32 %v6631, %v8062
        %v8107 = vmul.f32 %v6632, %v8066
        %v8108 = vmul.f32 %v6633, %v8070
        %v8109 = vmul.f32 %v6634, %v8074
        %v8110 = vmul.f32 %v6635, %v8078
        %v8111 = vmul.f32 %v6636, %v8082
        %v8112 = vmul.f32 %v6637, %v8086
        %v8113 = vmul.f32 %v6638, %v8090
        %v8114 = vmul.f32 %v6639, %v8094
        %v8115 = vmul.f32 %v6640, %v8098
        %8132 = vrot.lane.b32.xlu0 %v8100, 64
        %v8133 = vpop.permute.xlu0 %8132
        %8134 = vrot.lane.b32.xlu0 %v8101, 64
        %v8135 = vpop.permute.xlu0 %8134
        %8136 = vrot.lane.b32.xlu0 %v8102, 64
        %v8137 = vpop.permute.xlu0 %8136
        %8138 = vrot.lane.b32.xlu0 %v8103, 64
        %v8139 = vpop.permute.xlu0 %8138
        %8140 = vrot.lane.b32.xlu0 %v8104, 64
        %v8141 = vpop.permute.xlu0 %8140
        %8142 = vrot.lane.b32.xlu0 %v8105, 64
        %v8143 = vpop.permute.xlu0 %8142
        %8144 = vrot.lane.b32.xlu0 %v8106, 64
        %v8145 = vpop.permute.xlu0 %8144
        %8146 = vrot.lane.b32.xlu0 %v8107, 64
        %v8147 = vpop.permute.xlu0 %8146
        %8148 = vrot.lane.b32.xlu0 %v8108, 64
        %v8149 = vpop.permute.xlu0 %8148
        %8150 = vrot.lane.b32.xlu0 %v8109, 64
        %v8151 = vpop.permute.xlu0 %8150
        %8152 = vrot.lane.b32.xlu0 %v8110, 64
        %v8153 = vpop.permute.xlu0 %8152
        %8154 = vrot.lane.b32.xlu0 %v8111, 64
        %v8155 = vpop.permute.xlu0 %8154
        %8156 = vrot.lane.b32.xlu0 %v8112, 64
        %v8157 = vpop.permute.xlu0 %8156
        %8158 = vrot.lane.b32.xlu0 %v8113, 64
        %v8159 = vpop.permute.xlu0 %8158
        %8160 = vrot.lane.b32.xlu0 %v8114, 64
        %v8161 = vpop.permute.xlu0 %8160
        %8162 = vrot.lane.b32.xlu0 %v8115, 64
        %v8163 = vpop.permute.xlu0 %8162
        %v8180 = vadd.f32 %v8020, %v8133
        %v8181 = vadd.f32 %v8021, %v8135
        %v8182 = vadd.f32 %v8022, %v8137
        %v8183 = vadd.f32 %v8023, %v8139
        %v8184 = vadd.f32 %v8024, %v8141
        %v8185 = vadd.f32 %v8025, %v8143
        %v8186 = vadd.f32 %v8026, %v8145
        %v8187 = vadd.f32 %v8027, %v8147
        %v8188 = vadd.f32 %v8028, %v8149
        %v8189 = vadd.f32 %v8029, %v8151
        %v8190 = vadd.f32 %v8030, %v8153
        %v8191 = vadd.f32 %v8031, %v8155
        %v8192 = vadd.f32 %v8032, %v8157
        %v8193 = vadd.f32 %v8033, %v8159
        %v8194 = vadd.f32 %v8034, %v8161
        %v8195 = vadd.f32 %v8035, %v8163
        %8196 = vset.pattern.permute.xlu0 3
        %8197 = vperm.xlu0 %8196, %v6592
        %v8198 = vpop.permute.xlu0 %8197
        %8200 = vset.pattern.permute.xlu0 3
        %8201 = vperm.xlu0 %8200, %v6593
        %v8202 = vpop.permute.xlu0 %8201
        %8204 = vset.pattern.permute.xlu0 3
        %8205 = vperm.xlu0 %8204, %v6594
        %v8206 = vpop.permute.xlu0 %8205
        %8208 = vset.pattern.permute.xlu0 3
        %8209 = vperm.xlu0 %8208, %v6595
        %v8210 = vpop.permute.xlu0 %8209
        %8212 = vset.pattern.permute.xlu0 3
        %8213 = vperm.xlu0 %8212, %v6596
        %v8214 = vpop.permute.xlu0 %8213
        %8216 = vset.pattern.permute.xlu0 3
        %8217 = vperm.xlu0 %8216, %v6597
        %v8218 = vpop.permute.xlu0 %8217
        %8220 = vset.pattern.permute.xlu0 3
        %8221 = vperm.xlu0 %8220, %v6598
        %v8222 = vpop.permute.xlu0 %8221
        %8224 = vset.pattern.permute.xlu0 3
        %8225 = vperm.xlu0 %8224, %v6599
        %v8226 = vpop.permute.xlu0 %8225
        %8228 = vset.pattern.permute.xlu0 3
        %8229 = vperm.xlu0 %8228, %v6600
        %v8230 = vpop.permute.xlu0 %8229
        %8232 = vset.pattern.permute.xlu0 3
        %8233 = vperm.xlu0 %8232, %v6601
        %v8234 = vpop.permute.xlu0 %8233
        %8236 = vset.pattern.permute.xlu0 3
        %8237 = vperm.xlu0 %8236, %v6602
        %v8238 = vpop.permute.xlu0 %8237
        %8240 = vset.pattern.permute.xlu0 3
        %8241 = vperm.xlu0 %8240, %v6603
        %v8242 = vpop.permute.xlu0 %8241
        %8244 = vset.pattern.permute.xlu0 3
        %8245 = vperm.xlu0 %8244, %v6604
        %v8246 = vpop.permute.xlu0 %8245
        %8248 = vset.pattern.permute.xlu0 3
        %8249 = vperm.xlu0 %8248, %v6605
        %v8250 = vpop.permute.xlu0 %8249
        %8252 = vset.pattern.permute.xlu0 3
        %8253 = vperm.xlu0 %8252, %v6606
        %v8254 = vpop.permute.xlu0 %8253
        %8256 = vset.pattern.permute.xlu0 3
        %8257 = vperm.xlu0 %8256, %v6607
        %v8258 = vpop.permute.xlu0 %8257
        %v8260 = vmul.f32 %v6625, %v8198
        %v8261 = vmul.f32 %v6626, %v8202
        %v8262 = vmul.f32 %v6627, %v8206
        %v8263 = vmul.f32 %v6628, %v8210
        %v8264 = vmul.f32 %v6629, %v8214
        %v8265 = vmul.f32 %v6630, %v8218
        %v8266 = vmul.f32 %v6631, %v8222
        %v8267 = vmul.f32 %v6632, %v8226
        %v8268 = vmul.f32 %v6633, %v8230
        %v8269 = vmul.f32 %v6634, %v8234
        %v8270 = vmul.f32 %v6635, %v8238
        %v8271 = vmul.f32 %v6636, %v8242
        %v8272 = vmul.f32 %v6637, %v8246
        %v8273 = vmul.f32 %v6638, %v8250
        %v8274 = vmul.f32 %v6639, %v8254
        %v8275 = vmul.f32 %v6640, %v8258
        %8292 = vrot.lane.b32.xlu0 %v8260, 32
        %v8293 = vpop.permute.xlu0 %8292
        %8294 = vrot.lane.b32.xlu0 %v8261, 32
        %v8295 = vpop.permute.xlu0 %8294
        %8296 = vrot.lane.b32.xlu0 %v8262, 32
        %v8297 = vpop.permute.xlu0 %8296
        %8298 = vrot.lane.b32.xlu0 %v8263, 32
        %v8299 = vpop.permute.xlu0 %8298
        %8300 = vrot.lane.b32.xlu0 %v8264, 32
        %v8301 = vpop.permute.xlu0 %8300
        %8302 = vrot.lane.b32.xlu0 %v8265, 32
        %v8303 = vpop.permute.xlu0 %8302
        %8304 = vrot.lane.b32.xlu0 %v8266, 32
        %v8305 = vpop.permute.xlu0 %8304
        %8306 = vrot.lane.b32.xlu0 %v8267, 32
        %v8307 = vpop.permute.xlu0 %8306
        %8308 = vrot.lane.b32.xlu0 %v8268, 32
        %v8309 = vpop.permute.xlu0 %8308
        %8310 = vrot.lane.b32.xlu0 %v8269, 32
        %v8311 = vpop.permute.xlu0 %8310
        %8312 = vrot.lane.b32.xlu0 %v8270, 32
        %v8313 = vpop.permute.xlu0 %8312
        %8314 = vrot.lane.b32.xlu0 %v8271, 32
        %v8315 = vpop.permute.xlu0 %8314
        %8316 = vrot.lane.b32.xlu0 %v8272, 32
        %v8317 = vpop.permute.xlu0 %8316
        %8318 = vrot.lane.b32.xlu0 %v8273, 32
        %v8319 = vpop.permute.xlu0 %8318
        %8320 = vrot.lane.b32.xlu0 %v8274, 32
        %v8321 = vpop.permute.xlu0 %8320
        %8322 = vrot.lane.b32.xlu0 %v8275, 32
        %v8323 = vpop.permute.xlu0 %8322
        %v8340 = vadd.f32 %v8180, %v8293
        %v8341 = vadd.f32 %v8181, %v8295
        %v8342 = vadd.f32 %v8182, %v8297
        %v8343 = vadd.f32 %v8183, %v8299
        %v8344 = vadd.f32 %v8184, %v8301
        %v8345 = vadd.f32 %v8185, %v8303
        %v8346 = vadd.f32 %v8186, %v8305
        %v8347 = vadd.f32 %v8187, %v8307
        %v8348 = vadd.f32 %v8188, %v8309
        %v8349 = vadd.f32 %v8189, %v8311
        %v8350 = vadd.f32 %v8190, %v8313
        %v8351 = vadd.f32 %v8191, %v8315
        %v8352 = vadd.f32 %v8192, %v8317
        %v8353 = vadd.f32 %v8193, %v8319
        %v8354 = vadd.f32 %v8194, %v8321
        %v8355 = vadd.f32 %v8195, %v8323
        %8356 = vst.msk [vmem:[%s9] sm:$0xff] %vm5897, %v8340
        %8357 = vst.msk [vmem:[%s9 + $0x8] sm:$0xff] %vm5897, %v8341
        %8358 = vst.msk [vmem:[%s9 + $0x10] sm:$0xff] %vm5897, %v8342
        %8359 = vst.msk [vmem:[%s9 + $0x18] sm:$0xff] %vm5897, %v8343
        %8360 = vst.msk [vmem:[%s9 + $0x20] sm:$0xff] %vm5897, %v8344
        %8361 = vst.msk [vmem:[%s9 + $0x28] sm:$0xff] %vm5897, %v8345
        %8362 = vst.msk [vmem:[%s9 + $0x30] sm:$0xff] %vm5897, %v8346
        %8363 = vst.msk [vmem:[%s9 + $0x38] sm:$0xff] %vm5897, %v8347
        %8364 = vst.msk [vmem:[%s9 + $0x40] sm:$0xff] %vm5897, %v8348
        %8365 = vst.msk [vmem:[%s9 + $0x48] sm:$0xff] %vm5897, %v8349
        %8366 = vst.msk [vmem:[%s9 + $0x50] sm:$0xff] %vm5897, %v8350
        %8367 = vst.msk [vmem:[%s9 + $0x58] sm:$0xff] %vm5897, %v8351
        %8368 = vst.msk [vmem:[%s9 + $0x60] sm:$0xff] %vm5897, %v8352
        %8369 = vst.msk [vmem:[%s9 + $0x68] sm:$0xff] %vm5897, %v8353
        %8370 = vst.msk [vmem:[%s9 + $0x70] sm:$0xff] %vm5897, %v8354
        %8371 = vst.msk [vmem:[%s9 + $0x78] sm:$0xff] %vm5897, %v8355
      $region64: #{tpu_custom_call.1} parent=55 // pred_fallthru
        _
      // Predicated region
      $region65: #{tpu_custom_call.1} parent=55 // pred_check
        %p8372 = pneg %p237
      $region66: #{tpu_custom_call.1} parent=55 // pred_check_branch
        %8374 = sbr.rel (%p8372) target = $region68
      $region67: #{tpu_custom_call.1} parent=55 // pred_region
        _
      $region68: #{tpu_custom_call.1} parent=55 // pred_fallthru
        _
      // Predicated region
      $region69: #{tpu_custom_call.1} parent=55 // pred_check
        %p8375 = pneg %p237
      $region70: #{tpu_custom_call.1} parent=55 // pred_check_branch
        %8377 = sbr.rel (%p8375) target = $region72
      $region71: #{tpu_custom_call.1} parent=55 // pred_region
        _
      $region72: #{tpu_custom_call.1} parent=55 // pred_fallthru
        _
    $region56: #{tpu_custom_call.1} parent=5 // pred_fallthru
      _
    %p8378 = scmp.le.s32.totalorder 2, %s15
    // Predicated region
    $region73: #{tpu_custom_call.1} parent=5 // pred_check
      %p8379 = pneg %p8378
    $region74: #{tpu_custom_call.1} parent=5 // pred_check_branch
      %8381 = sbr.rel (%p8379) target = $region76
    $region75: #{tpu_custom_call.1} parent=5 // pred_region
      %s8382 = ssub.s32 %s15, 2
    $region76: #{tpu_custom_call.1} parent=5 // pred_fallthru
      _
  $region6: #{tpu_custom_call.1} parent=0 // loop_footer
    %s19 = sadd.s32 1, %s15
  $region7: #{tpu_custom_call.1} parent=0 // loop_footer_branch
    %14 = sbr.rel target = $region3
  $region8: #{tpu_custom_call.1} parent=0 // loop_exit
    _

</llo_original>
